<compile_context>
chip_gen: v7x
topology: tpu7x:2x2x1
jax: 0.10.0
libtpu: 0.0.40
codegen_flags: <defaults>
</compile_context>

<pallas_src>
import jax
import jax.numpy as jnp
from jax.experimental import pallas as pl
from jax.experimental.pallas import tpu as pltpu

# ------------------------- configuration -------------------------
HINT_CHANNELS = 3
MODEL_CHANNELS = 32                      # C
TIME_EMBED_DIM = MODEL_CHANNELS * 4      # T
ADM_IN_CHANNELS = 16
NUM_SAMPLES_PER_RAY = 24                 # Np
DENSITY_CHANNELS = 16                    # extra density channels per tri-plane
GN_GROUPS = 32
GN_EPS = 1e-5
OUT_LANES = 128                          # lane-dense width of combined [feats | rgb] output
MAX_RAY_TILE = 1024                      # ~15 KiB VMEM per ray -> ~15 MiB per tile step


def _vmem_limit_bytes():
    # 48 MiB is safe on every generation (v7x has 64 MiB of VMEM per TensorCore);
    # use 3/4 of the queried capacity (~96 MiB on v5e/v6e) when available.
    try:
        cap = int(pltpu.get_tpu_info().vmem_capacity_bytes)
        return int(min(cap * 3 // 4, 100 * 1024 * 1024))
    except Exception:
        return 48 * 1024 * 1024


def _pick_ray_tile(rays_per_image, max_tile):
    """Largest multiple-of-8 divisor of rays_per_image that is <= max_tile."""
    tile = max(8, (min(rays_per_image, max_tile) // 8) * 8)
    while rays_per_image % tile:
        tile -= 8
    return tile


# ========================= Pallas kernels =========================

def _render_rays_kernel(pts_ref, dd_ref, mask_ref, mh_w1_ref, wstack_ref,
                        rows_ref, w2o_ref, b2o_ref, out_ref):
    """One grid step == one (image, ray-tile): mlp_head -> volume render -> map2rgb.
    rgb_pts / weights / comp stay VMEM/register resident; the combined
    [feats | rgb | 0-pad] block is stored 128 lanes wide (unmasked HBM writeback)."""
    nr, ns = dd_ref.shape                     # rays in this tile, samples per ray
    c = wstack_ref.shape[-1]                  # model channels

    mh_b1 = rows_ref[0:1, :]
    mh_b2 = rows_ref[1:2, :]
    m2r_b1 = rows_ref[2:3, :]
    bg = rows_ref[3:4, :]

    # --- mlp_head: 1x1 conv -> SiLU -> 1x1 conv over all (ray, sample) points ------
    # pts / W1 arrive in bf16; MXU matmul accumulates in f32.
    h = jnp.dot(pts_ref[...], mh_w1_ref[...],
                preferred_element_type=jnp.float32) + mh_b1
    h = h * jax.nn.sigmoid(h)                                       # SiLU
    rgb_pts = jnp.dot(h, wstack_ref[0], preferred_element_type=jnp.float32) + mh_b2
    rgb_pts = rgb_pts.reshape(nr, ns, c)      # leading-dim split only (layout-free)

    # --- nerfstudio get_weights + weighted composite + background blend ------------
    dd = dd_ref[...]                          # density * deltas (pre-multiplied in glue)
    alphas = 1.0 - jnp.exp(-dd)
    excl = jnp.dot(dd, mask_ref[...], preferred_element_type=jnp.float32)  # excl. cumsum (MXU)
    w = alphas * jnp.exp(-excl)
    acc = jnp.sum(w, axis=-1, keepdims=True)                        # (nr, 1)
    comp = jnp.sum(w[:, :, None] * rgb_pts, axis=1) + (1.0 - acc) * bg     # (nr, c)

    # --- map2rgb + lane-dense combined [feats | rgb] store --------------------------
    r1 = jnp.dot(comp, wstack_ref[1], preferred_element_type=jnp.float32) + m2r_b1
    r1 = r1 * jax.nn.sigmoid(r1)
    # full 128-lane store: rgb lands in lanes [c : c+hint], everything else is zero ...
    out_ref[...] = (jnp.dot(r1, w2o_ref[...], preferred_element_type=jnp.float32)
                    + b2o_ref[...]).astype(out_ref.dtype)
    # ... then feats overwrite lanes [0 : c] (cheap masked store, VMEM resident).
    out_ref[:, :c] = comp.astype(out_ref.dtype)


def pallas_render_rays(pts, dd, params, rays_per_image, max_ray_tile=MAX_RAY_TILE):
    """Fused mlp_head -> volume render -> map2rgb, gridded over (image, ray-tile)."""
    R, Np = dd.shape
    Cin = pts.shape[-1]
    C = params["mh_w2"].shape[1]
    Hn = params["m2r_w2"].shape[1]
    assert pts.shape[0] == R * Np
    assert R % rays_per_image == 0 and rays_per_image % 8 == 0
    assert C + Hn <= OUT_LANES
    n_img = R // rays_per_image
    tile = _pick_ray_tile(rays_per_image, max_ray_tile)
    n_tiles = rays_per_image // tile

    # constants hoisted out of the kernel body & collapsed into few operands
    row = jax.lax.broadcasted_iota(jnp.int32, (Np, Np), 0)
    col = jax.lax.broadcasted_iota(jnp.int32, (Np, Np), 1)
    cum_mask = (row < col).astype(jnp.float32)                 # strictly upper triangular
    rows_pack = jnp.zeros((8, C), jnp.float32)
    rows_pack = rows_pack.at[0].set(params["mh_b1"])
    rows_pack = rows_pack.at[1].set(params["mh_b2"])
    rows_pack = rows_pack.at[2].set(params["m2r_b1"])
    rows_pack = rows_pack.at[3].set(params["background_vec"])
    wstack = jnp.stack([params["mh_w2"], params["m2r_w1"]], axis=0)          # (2, C, C)
    w2_off = jnp.pad(params["m2r_w2"], ((0, 0), (C, OUT_LANES - C - Hn)))
    b2_off = jnp.pad(params["m2r_b2"].reshape(1, -1), ((0, 0), (C, OUT_LANES - C - Hn)))
    mh_w1 = params["mh_w1"].astype(pts.dtype)                  # bf16 alongside pts

    def cst(shp):
        return pl.BlockSpec(shp, lambda b, t: (0,) * len(shp))

    # TODO(synk): grid-invariant operands could also use pipeline_mode=pl.Buffered(1)
    # to drop their second VMEM buffer.
    out_comb = pl.pallas_call(
        _render_rays_kernel,
        out_shape=jax.ShapeDtypeStruct((R, OUT_LANES), jnp.float32),
        grid=(n_img, n_tiles),
        in_specs=[
            pl.BlockSpec((tile * Np, Cin), lambda b, t: (b * n_tiles + t, 0)),   # pts (bf16)
            pl.BlockSpec((tile, Np), lambda b, t: (b * n_tiles + t, 0)),         # density*deltas
            cst((Np, Np)),                                                       # cumsum mask
            cst((Cin, C)),                                                       # mlp_head W1
            cst((2, C, C)),                                                      # [mh_w2, m2r_w1]
            cst((8, C)),                                                         # packed bias rows
            cst((C, OUT_LANES)), cst((1, OUT_LANES)),                            # map2rgb W2/b2 (lane-padded)
        ],
        out_specs=pl.BlockSpec((tile, OUT_LANES), lambda b, t: (b * n_tiles + t, 0)),
        compiler_params=pltpu.CompilerParams(
            dimension_semantics=("parallel", "parallel"),
            vmem_limit_bytes=_vmem_limit_bytes()),
    )(pts, dd, cum_mask, mh_w1, wstack, rows_pack, w2_off, b2_off)
    return out_comb


def _global_desp_kernel(comp_ref, gng_ref, gnb_ref, cw_ref, cb_ref, lw_ref, lb_ref,
                        glob_ref):
    """Per image: GroupNorm(group size 1) -> SiLU -> zero conv -> avgpool -> Linear."""
    c = cw_ref.shape[0]
    comp = comp_ref[:, :c]                                        # feats lanes of the slab
    mu = jnp.mean(comp, axis=0, keepdims=True)                    # (1, c)
    diff = comp - mu
    var = jnp.mean(diff * diff, axis=0, keepdims=True)            # biased, two-pass
    ygn = diff * jax.lax.rsqrt(var + GN_EPS) * gng_ref[...] + gnb_ref[...]
    act = ygn * jax.nn.sigmoid(ygn)
    z = jnp.dot(act, cw_ref[...], preferred_element_type=jnp.float32) + cb_ref[...]
    pooled = jnp.mean(z, axis=0, keepdims=True)                   # (1, c)
    glob_ref[0] = (jnp.dot(pooled, lw_ref[...], preferred_element_type=jnp.float32)
                   + lb_ref[...]).astype(glob_ref.dtype)


def pallas_global_desp(out_comb, params, rays_per_image):
    """global_desp head over the per-image comp slab written by the render kernel."""
    R, L = out_comb.shape
    C = params["gd_cw"].shape[0]
    T = params["gd_lw"].shape[1]
    assert R % rays_per_image == 0
    # TODO(synk): GroupNorm with group size > 1 would need a per-group stat reduction;
    # with model_channels == 32 and 32 groups the group size is 1 (per-channel stats).
    assert C % GN_GROUPS == 0 and C // GN_GROUPS == 1
    n_img = R // rays_per_image

    def cst(shp):
        return pl.BlockSpec(shp, lambda b: (0,) * len(shp))

    glob = pl.pallas_call(
        _global_desp_kernel,
        out_shape=jax.ShapeDtypeStruct((n_img, 1, T), jnp.float32),
        grid=(n_img,),
        in_specs=[
            pl.BlockSpec((rays_per_image, L), lambda b: (b, 0)),
            cst((1, C)), cst((1, C)), cst((C, C)), cst((1, C)),
            cst((C, T)), cst((1, T)),
        ],
        out_specs=pl.BlockSpec((1, 1, T), lambda b: (b, 0, 0)),
        compiler_params=pltpu.CompilerParams(dimension_semantics=("parallel",)),
    )(out_comb,
      params["gd_gamma"].reshape(1, -1), params["gd_beta"].reshape(1, -1),
      params["gd_cw"], params["gd_cb"].reshape(1, -1),
      params["gd_lw"], params["gd_lb"].reshape(1, -1))
    return glob[:, 0, :]


# ========================= plain-JAX glue =========================

def nerf_encode(d):
    """NeRFEncoding(in_dim=3, num_frequencies=2, min_freq_exp=0, max_freq_exp=2) -> 12 dims."""
    scaled = 2.0 * jnp.pi * d
    freqs = 2.0 ** jnp.linspace(0.0, 2.0, 2)                    # [1., 4.]
    s = (scaled[..., None] * freqs).reshape(*d.shape[:-1], -1)  # (..., 6)
    return jnp.sin(jnp.concatenate([s, s + 0.5 * jnp.pi], axis=-1))


def bilinear_plane_sample(planes, coords):
    """F.grid_sample(mode='bilinear', align_corners=True, padding_mode='zeros'),
    expressed as four gathers (jnp.take_along_axis) + bilinear blend.
    planes: (P, Cp, Hi, Wi); coords: (P, Npts, 2) with (x, y) in [-1, 1] -> (P, Npts, Cp).
    """
    # TODO(synk): a Pallas scalar-prefetch gather kernel (corner indices in SMEM)
    # would fuse this into the render kernel and avoid the feat/pts HBM round trips.
    P, Cp, Hi, Wi = planes.shape
    gx, gy = coords[..., 0], coords[..., 1]
    ix = (gx + 1.0) * 0.5 * (Wi - 1)
    iy = (gy + 1.0) * 0.5 * (Hi - 1)
    ix0, iy0 = jnp.floor(ix), jnp.floor(iy)
    ix1, iy1 = ix0 + 1.0, iy0 + 1.0
    wx1, wy1 = ix - ix0, iy - iy0
    wx0, wy0 = 1.0 - wx1, 1.0 - wy1
    flat = jnp.transpose(planes.reshape(P, Cp, Hi * Wi), (0, 2, 1))   # (P, Hi*Wi, Cp)

    def corner(iy_, ix_, w_):
        valid = (ix_ >= 0) & (ix_ <= Wi - 1) & (iy_ >= 0) & (iy_ <= Hi - 1)
        idx = (jnp.clip(iy_, 0, Hi - 1).astype(jnp.int32) * Wi
               + jnp.clip(ix_, 0, Wi - 1).astype(jnp.int32))          # (P, Npts)
        vals = jnp.take_along_axis(flat, idx[..., None], axis=1)      # (P, Npts, Cp)
        w = jnp.where(valid, w_, 0.0)
        return vals * w[..., None]

    return (corner(iy0, ix0, wy0 * wx0) + corner(iy0, ix1, wy0 * wx1)
            + corner(iy1, ix0, wy1 * wx0) + corner(iy1, ix1, wy1 * wx1))


def sample_points(pose, intrinsic, dist, Hp, Wp, Np):
    """Pinhole rays + AABBBoxCollider2 near/far + spaced (Identity) sampling.

    TODO(synk): nerfstudio Cameras internals and SpacedSampler's train-time stratified
    jitter are omitted; deterministic evenly-spaced sampling is used instead.
    """
    def one(pose_i, intr_i, dist_i):
        focal = intr_i[0]
        res = intr_i[1] * 2.0
        cx = jnp.floor(res / 2.0)
        cy = cx
        idx_y = jnp.floor(jnp.arange(Hp, dtype=jnp.float32) * (res - 1.0) / (Hp - 1))
        idx_x = jnp.floor(jnp.arange(Wp, dtype=jnp.float32) * (res - 1.0) / (Wp - 1))
        yy = jnp.broadcast_to((idx_y + 0.5)[:, None], (Hp, Wp)).reshape(-1)
        xx = jnp.broadcast_to((idx_x + 0.5)[None, :], (Hp, Wp)).reshape(-1)
        dir_x = (xx - cx) / focal
        dir_y = -(yy - cy) / focal
        dirs_cam = jnp.stack([dir_x, dir_y, -jnp.ones_like(dir_x)], axis=-1)   # (HW, 3)
        Rm = pose_i[:3, :3]
        t = pose_i[:3, 3]
        dirs_w = dirs_cam @ Rm.T
        dirs_n = dirs_w / jnp.linalg.norm(dirs_w, axis=-1, keepdims=True)
        origins = jnp.broadcast_to(t, dirs_n.shape)

        aabb = jnp.array([[-1.0, -1.0, -1.0], [1.0, 1.0, 1.0]], jnp.float32)
        aabb = aabb - dist_i * jnp.array([[0.0, 0.0, 1.0], [0.0, 0.0, 1.0]], jnp.float32)

        # exact port of AABBBoxCollider2._intersect_with_aabb
        df = 1.0 / (dirs_n + 1e-6)
        t1 = (aabb[0, 0] - origins[:, 0]) * df[:, 0]
        t2 = (aabb[1, 0] - origins[:, 0]) * df[:, 0]
        t3 = (aabb[0, 1] - origins[:, 1]) * df[:, 1]
        t4 = (aabb[1, 1] - origins[:, 1]) * df[:, 1]
        t5 = (aabb[0, 2] - origins[:, 2]) * df[:, 2]
        t6 = (aabb[1, 2] - origins[:, 2]) * df[:, 2]
        nears = jnp.maximum(jnp.maximum(jnp.minimum(t1, t2), jnp.minimum(t3, t4)),
                            jnp.minimum(t5, t6))
        fars = jnp.minimum(jnp.minimum(jnp.maximum(t1, t2), jnp.maximum(t3, t4)),
                           jnp.maximum(t5, t6))
        nears = jnp.maximum(nears, 0.01)                        # near_plane clamp
        fars = jnp.maximum(fars, nears + 1e-6)

        s = jnp.linspace(0.0, 1.0, Np + 1)
        bins = nears[:, None] + s[None, :] * (fars - nears)[:, None]   # (HW, Np+1)
        starts, ends = bins[:, :-1], bins[:, 1:]
        deltas = ends - starts
        mids = 0.5 * (starts + ends)
        pos = origins[:, None, :] + dirs_n[:, None, :] * mids[..., None]   # (HW, Np, 3)
        pos_n = (pos - aabb[0]) / (aabb[1] - aabb[0])           # SceneBox.get_normalized_positions
        pos_n = pos_n * 2.0 - 1.0
        pos_n = pos_n.at[..., 1].multiply(-1.0)
        dirs_s = jnp.broadcast_to(dirs_n[:, None, :], (Hp * Wp, Np, 3))
        return pos_n, dirs_s, deltas

    return jax.vmap(one)(pose, intrinsic, dist)


def tri_generator_stub(x_nchw, w, emb=None):
    # TODO(synk): TriplaneGenerator14 is not defined in the source module; deterministic
    # stand-in (2x2 avg-pool + 1x1 projection, emb ignored) producing the three
    # (B, C+16, Hp, Wp) planes.
    del emb
    B, Cin, H, W = x_nchw.shape
    xp = x_nchw.reshape(B, Cin, H // 2, 2, W // 2, 2).mean(axis=(3, 5))
    xl = jnp.transpose(xp, (0, 2, 3, 1))
    planes = jnp.einsum("bhwc,cd->bhwd", xl, w)
    planes = jnp.transpose(planes, (0, 3, 1, 2))
    return tuple(jnp.split(planes, 3, axis=1))


# ========================= Render.forward =========================

def render_forward(params, x_t, timesteps, context, x, pose, intrinsic, dist, y):
    del x_t, timesteps, context          # unused by the torch forward (context = None)
    C = MODEL_CHANNELS
    Np = NUM_SAMPLES_PER_RAY

    # label_emb: Linear -> SiLU -> Linear.
    # TODO(synk): left to XLA per perf review (2x 16->128->128 MLP; pallas_call fixed
    # cost dominates) and currently ignored by the tri-generator stand-in anyway.
    h = y @ params["le_w1"] + params["le_b1"]
    label_emb = (h * jax.nn.sigmoid(h)) @ params["le_w2"] + params["le_b2"]

    yx, zx, zy = tri_generator_stub(x, params["tri_w"], label_emb)   # (B, C+16, Hp, Wp)
    B, Ctot, Hp, Wp = yx.shape
    HW = Hp * Wp

    positions, dirs, deltas = sample_points(pose, intrinsic, dist, Hp, Wp, Np)

    # tri-plane bilinear sampling of color+density (gather based, one pass per plane)
    plane_coords = jnp.stack(
        [positions[..., :2],
         jnp.stack([positions[..., 0], positions[..., 2]], axis=-1),
         positions[..., 1:]], axis=1)                              # (B, 3, HW, Np, 2)
    planes = jnp.stack([yx, zx, zy], axis=1)                       # (B, 3, C+16, Hp, Wp)
    feat = bilinear_plane_sample(planes.reshape(B * 3, Ctot, Hp, Wp),
                                 plane_coords.reshape(B * 3, HW * Np, 2))
    feat = feat.reshape(B, 3, HW * Np, Ctot).sum(axis=1)           # (B, HW*Np, C+16)

    density = jax.nn.relu(jnp.sum(feat[..., C:], axis=-1))         # (B, HW*Np)
    d_enc = nerf_encode(dirs).reshape(B, HW * Np, -1)              # (B, HW*Np, 12)
    pts = jnp.concatenate([feat[..., :C], d_enc], axis=-1)         # (B, HW*Np, C+12)
    dd = density.reshape(B * HW, Np) * deltas.reshape(B * HW, Np)  # pre-multiplied

    # fused mlp_head -> volume rendering -> map2rgb                 [Pallas]
    out_comb = pallas_render_rays(
        pts.reshape(B * HW * Np, C + 12).astype(jnp.bfloat16),     # halve pts DMA bytes
        dd, params, rays_per_image=HW)

    # global_desp head per image                                    [Pallas]
    global_feats = pallas_global_desp(out_comb, params, rays_per_image=HW)   # (B, T)

    feats_hwc = out_comb[:, :C].reshape(B, Hp, Wp, C)
    feats = jnp.transpose(feats_hwc, (0, 3, 1, 2))                 # NCHW, matches torch output
    rgb_out = jnp.transpose(
        out_comb[:, C:C + HINT_CHANNELS].reshape(B, Hp, Wp, HINT_CHANNELS), (0, 3, 1, 2))

    return [feats, global_feats], rgb_out


# ============================= main =============================

if __name__ == "__main__":
    key = jax.random.PRNGKey(0)
    keys = jax.random.split(key, 20)
    B = 2
    Hx = Wx = 16
    C = MODEL_CHANNELS
    T = TIME_EMBED_DIM

    def init(k, shape, scale=0.05):
        return scale * jax.random.normal(k, shape, dtype=jnp.float32)

    params = {
        "le_w1": init(keys[0], (ADM_IN_CHANNELS, T)),
        "le_b1": init(keys[1], (T,)),
        "le_w2": init(keys[2], (T, T)),
        "le_b2": init(keys[3], (T,)),
        "mh_w1": init(keys[4], (C + 12, C)),
        "mh_b1": init(keys[5], (C,)),
        "mh_w2": init(keys[6], (C, C)),
        "mh_b2": init(keys[7], (C,)),
        "m2r_w1": init(keys[8], (C, C)),
        "m2r_b1": init(keys[9], (C,)),
        "m2r_w2": init(keys[10], (C, HINT_CHANNELS)),
        "m2r_b2": init(keys[11], (HINT_CHANNELS,)),
        "gd_gamma": jnp.ones((C,), jnp.float32),
        "gd_beta": jnp.zeros((C,), jnp.float32),
        "gd_cw": jnp.zeros((C, C), jnp.float32),          # zero_module conv
        "gd_cb": jnp.zeros((C,), jnp.float32),
        "gd_lw": init(keys[12], (C, T)),
        "gd_lb": init(keys[13], (T,)),
        "background_vec": jnp.zeros((C,), jnp.float32),   # nn.Parameter(zeros)
        "tri_w": init(keys[14], (HINT_CHANNELS, 3 * (C + DENSITY_CHANNELS))),
    }

    x_t = jax.random.normal(keys[15], (B, 4, Hx, Wx), jnp.float32)   # unused by forward
    timesteps = jnp.arange(B, dtype=jnp.int32)                       # unused by forward
    context = None
    x = jax.random.normal(keys[16], (B, HINT_CHANNELS, Hx, Wx), jnp.float32)
    pose = jnp.broadcast_to(
        jnp.concatenate([jnp.eye(3, dtype=jnp.float32),
                         jnp.zeros((3, 1), jnp.float32)], axis=1)[None], (B, 3, 4))
    intrinsic = jnp.array([[64.0, 32.0], [64.0, 32.0]], jnp.float32)  # [focal, principal_pt]
    dist = jnp.array([2.0, 2.5], jnp.float32)
    y = jax.random.normal(keys[17], (B, ADM_IN_CHANNELS), jnp.float32)

    (feats, global_feats), rgb = render_forward(params, x_t, timesteps, context,
                                                x, pose, intrinsic, dist, y)
    jax.block_until_ready((feats, global_feats, rgb))
    assert feats.shape == (B, C, Hx // 2, Wx // 2)
    assert global_feats.shape == (B, T)
    assert rgb.shape == (B, HINT_CHANNELS, Hx // 2, Wx // 2)
    print("KERNEL_OK")
</pallas_src>

<mosaic_0001>
module attributes {stable_mosaic.version = 11 : i64} {
  func.func @_render_rays_kernel(%arg0: i32, %arg1: i32, %arg2: memref<1536x44xbf16, #tpu.memory_space<vmem>>, %arg3: memref<64x24xf32, #tpu.memory_space<vmem>>, %arg4: memref<24x24xf32, #tpu.memory_space<vmem>>, %arg5: memref<44x32xbf16, #tpu.memory_space<vmem>>, %arg6: memref<2x32x32xf32, #tpu.memory_space<vmem>>, %arg7: memref<8x32xf32, #tpu.memory_space<vmem>>, %arg8: memref<32x128xf32, #tpu.memory_space<vmem>>, %arg9: memref<1x128xf32, #tpu.memory_space<vmem>>, %arg10: memref<64x128xf32, #tpu.memory_space<vmem>>) attributes {dimension_semantics = [#tpu.dimension_semantics<parallel>, #tpu.dimension_semantics<parallel>], iteration_bounds = array<i64: 2, 1>, scalar_prefetch = 0 : i64, scratch_operands = 0 : i64, tpu.core_type = #tpu.core_type<tc>, window_params = [{transform_indices = @transform_0, window_bounds = array<i64: 1536, 44>}, {transform_indices = @transform_1, window_bounds = array<i64: 64, 24>}, {pipeline_mode = #tpu.pipeline_mode<synchronous>, transform_indices = @transform_2, window_bounds = array<i64: 24, 24>}, {pipeline_mode = #tpu.pipeline_mode<synchronous>, transform_indices = @transform_3, window_bounds = array<i64: 44, 32>}, {pipeline_mode = #tpu.pipeline_mode<synchronous>, transform_indices = @transform_4, window_bounds = array<i64: 2, 32, 32>}, {pipeline_mode = #tpu.pipeline_mode<synchronous>, transform_indices = @transform_5, window_bounds = array<i64: 8, 32>}, {pipeline_mode = #tpu.pipeline_mode<synchronous>, transform_indices = @transform_6, window_bounds = array<i64: 32, 128>}, {pipeline_mode = #tpu.pipeline_mode<synchronous>, transform_indices = @transform_7, window_bounds = array<i64: 1, 128>}, {transform_indices = @transform_8, window_bounds = array<i64: 64, 128>}]} {
    %c0 = arith.constant 0 : index
    %c0_0 = arith.constant 0 : index
    %0 = vector.load %arg7[%c0, %c0_0] : memref<8x32xf32, #tpu.memory_space<vmem>>, vector<1x32xf32>
    %c1 = arith.constant 1 : index
    %c0_1 = arith.constant 0 : index
    %1 = vector.load %arg7[%c1, %c0_1] : memref<8x32xf32, #tpu.memory_space<vmem>>, vector<1x32xf32>
    %c2 = arith.constant 2 : index
    %c0_2 = arith.constant 0 : index
    %2 = vector.load %arg7[%c2, %c0_2] : memref<8x32xf32, #tpu.memory_space<vmem>>, vector<1x32xf32>
    %c3 = arith.constant 3 : index
    %c0_3 = arith.constant 0 : index
    %3 = vector.load %arg7[%c3, %c0_3] : memref<8x32xf32, #tpu.memory_space<vmem>>, vector<1x32xf32>
    %c0_4 = arith.constant 0 : index
    %c0_5 = arith.constant 0 : index
    %4 = vector.load %arg2[%c0_4, %c0_5] : memref<1536x44xbf16, #tpu.memory_space<vmem>>, vector<1536x44xbf16>
    %c0_6 = arith.constant 0 : index
    %c0_7 = arith.constant 0 : index
    %5 = vector.load %arg5[%c0_6, %c0_7] : memref<44x32xbf16, #tpu.memory_space<vmem>>, vector<44x32xbf16>
    %cst = arith.constant dense<0.000000e+00> : vector<1536x32xf32>
    %6 = tpu.matmul %4, %5, %cst {dimension_numbers = #tpu.dot_dimension_numbers<[1], [0], [0], [1], [0, 0, 1, 1], [], []>} : vector<1536x44xbf16>, vector<44x32xbf16>, vector<1536x32xf32> -> vector<1536x32xf32>
    %7 = vector.broadcast %0 : vector<1x32xf32> to vector<1536x32xf32>
    %8 = arith.addf %6, %7 : vector<1536x32xf32>
    %9 = arith.negf %8 : vector<1536x32xf32>
    %10 = math.exp %9 : vector<1536x32xf32>
    %cst_8 = arith.constant 1.000000e+00 : f32
    %11 = vector.broadcast %cst_8 : f32 to vector<1536x32xf32>
    %12 = arith.addf %11, %10 : vector<1536x32xf32>
    %13 = arith.divf %11, %12 : vector<1536x32xf32>
    %14 = arith.mulf %8, %13 : vector<1536x32xf32>
    %c0_9 = arith.constant 0 : index
    %c0_10 = arith.constant 0 : index
    %c0_11 = arith.constant 0 : index
    %15 = vector.load %arg6[%c0_9, %c0_10, %c0_11] : memref<2x32x32xf32, #tpu.memory_space<vmem>>, vector<1x32x32xf32>
    %16 = vector.shape_cast %15 : vector<1x32x32xf32> to vector<32x32xf32>
    %cst_12 = arith.constant dense<0.000000e+00> : vector<1536x32xf32>
    %17 = tpu.matmul %14, %16, %cst_12 {dimension_numbers = #tpu.dot_dimension_numbers<[1], [0], [0], [1], [0, 0, 1, 1], [], []>} : vector<1536x32xf32>, vector<32x32xf32>, vector<1536x32xf32> -> vector<1536x32xf32>
    %18 = vector.broadcast %1 : vector<1x32xf32> to vector<1536x32xf32>
    %19 = arith.addf %17, %18 : vector<1536x32xf32>
    %20 = vector.shape_cast %19 : vector<1536x32xf32> to vector<64x24x32xf32>
    %c0_13 = arith.constant 0 : index
    %c0_14 = arith.constant 0 : index
    %21 = vector.load %arg3[%c0_13, %c0_14] : memref<64x24xf32, #tpu.memory_space<vmem>>, vector<64x24xf32>
    %cst_15 = arith.constant 0.000000e+00 : f32
    %22 = vector.broadcast %cst_15 : f32 to vector<64x24xf32>
    %23 = arith.subf %22, %21 : vector<64x24xf32>
    %24 = math.exp %23 : vector<64x24xf32>
    %cst_16 = arith.constant 1.000000e+00 : f32
    %25 = vector.broadcast %cst_16 : f32 to vector<64x24xf32>
    %26 = arith.subf %25, %24 : vector<64x24xf32>
    %c0_17 = arith.constant 0 : index
    %c0_18 = arith.constant 0 : index
    %27 = vector.load %arg4[%c0_17, %c0_18] : memref<24x24xf32, #tpu.memory_space<vmem>>, vector<24x24xf32>
    %cst_19 = arith.constant dense<0.000000e+00> : vector<64x24xf32>
    %28 = tpu.matmul %21, %27, %cst_19 {dimension_numbers = #tpu.dot_dimension_numbers<[1], [0], [0], [1], [0, 0, 1, 1], [], []>} : vector<64x24xf32>, vector<24x24xf32>, vector<64x24xf32> -> vector<64x24xf32>
    %cst_20 = arith.constant 0.000000e+00 : f32
    %29 = vector.broadcast %cst_20 : f32 to vector<64x24xf32>
    %30 = arith.subf %29, %28 : vector<64x24xf32>
    %31 = math.exp %30 : vector<64x24xf32>
    %32 = arith.mulf %26, %31 : vector<64x24xf32>
    %cst_21 = arith.constant dense<0.000000e+00> : vector<64xf32>
    %33 = vector.multi_reduction <add>, %32, %cst_21 [1] : vector<64x24xf32> to vector<64xf32>
    %34 = vector.shape_cast %33 : vector<64xf32> to vector<64x1xf32>
    %35 = vector.shape_cast %32 : vector<64x24xf32> to vector<64x24x1xf32>
    %36 = vector.broadcast %35 : vector<64x24x1xf32> to vector<64x24x32xf32>
    %37 = arith.mulf %36, %20 : vector<64x24x32xf32>
    %cst_22 = arith.constant dense<0.000000e+00> : vector<64x32xf32>
    %38 = vector.multi_reduction <add>, %37, %cst_22 [1] : vector<64x24x32xf32> to vector<64x32xf32>
    %cst_23 = arith.constant 1.000000e+00 : f32
    %39 = vector.broadcast %cst_23 : f32 to vector<64x1xf32>
    %40 = arith.subf %39, %34 : vector<64x1xf32>
    %41 = vector.broadcast %40 : vector<64x1xf32> to vector<64x32xf32>
    %42 = vector.broadcast %3 : vector<1x32xf32> to vector<64x32xf32>
    %43 = arith.mulf %41, %42 : vector<64x32xf32>
    %44 = arith.addf %38, %43 : vector<64x32xf32>
    %c1_24 = arith.constant 1 : index
    %c0_25 = arith.constant 0 : index
    %c0_26 = arith.constant 0 : index
    %45 = vector.load %arg6[%c1_24, %c0_25, %c0_26] : memref<2x32x32xf32, #tpu.memory_space<vmem>>, vector<1x32x32xf32>
    %46 = vector.shape_cast %45 : vector<1x32x32xf32> to vector<32x32xf32>
    %cst_27 = arith.constant dense<0.000000e+00> : vector<64x32xf32>
    %47 = tpu.matmul %44, %46, %cst_27 {dimension_numbers = #tpu.dot_dimension_numbers<[1], [0], [0], [1], [0, 0, 1, 1], [], []>} : vector<64x32xf32>, vector<32x32xf32>, vector<64x32xf32> -> vector<64x32xf32>
    %48 = vector.broadcast %2 : vector<1x32xf32> to vector<64x32xf32>
    %49 = arith.addf %47, %48 : vector<64x32xf32>
    %50 = arith.negf %49 : vector<64x32xf32>
    %51 = math.exp %50 : vector<64x32xf32>
    %cst_28 = arith.constant 1.000000e+00 : f32
    %52 = vector.broadcast %cst_28 : f32 to vector<64x32xf32>
    %53 = arith.addf %52, %51 : vector<64x32xf32>
    %54 = arith.divf %52, %53 : vector<64x32xf32>
    %55 = arith.mulf %49, %54 : vector<64x32xf32>
    %c0_29 = arith.constant 0 : index
    %c0_30 = arith.constant 0 : index
    %56 = vector.load %arg8[%c0_29, %c0_30] : memref<32x128xf32, #tpu.memory_space<vmem>>, vector<32x128xf32>
    %cst_31 = arith.constant dense<0.000000e+00> : vector<64x128xf32>
    %57 = tpu.matmul %55, %56, %cst_31 {dimension_numbers = #tpu.dot_dimension_numbers<[1], [0], [0], [1], [0, 0, 1, 1], [], []>} : vector<64x32xf32>, vector<32x128xf32>, vector<64x128xf32> -> vector<64x128xf32>
    %c0_32 = arith.constant 0 : index
    %c0_33 = arith.constant 0 : index
    %58 = vector.load %arg9[%c0_32, %c0_33] : memref<1x128xf32, #tpu.memory_space<vmem>>, vector<1x128xf32>
    %59 = vector.broadcast %58 : vector<1x128xf32> to vector<64x128xf32>
    %60 = arith.addf %57, %59 : vector<64x128xf32>
    %c0_34 = arith.constant 0 : index
    %c0_35 = arith.constant 0 : index
    %61 = vector.load %arg10[%c0_34, %c0_35] : memref<64x128xf32, #tpu.memory_space<vmem>>, vector<64x128xf32>
    tpu.vector_store %arg10[%c0_34, %c0_35], %60 {strides = array<i32>} : memref<64x128xf32, #tpu.memory_space<vmem>>, vector<64x128xf32>,
    %c0_36 = arith.constant 0 : index
    %c0_37 = arith.constant 0 : index
    %62 = vector.load %arg10[%c0_36, %c0_37] : memref<64x128xf32, #tpu.memory_space<vmem>>, vector<64x32xf32>
    tpu.vector_store %arg10[%c0_36, %c0_37], %44 {strides = array<i32>} : memref<64x128xf32, #tpu.memory_space<vmem>>, vector<64x32xf32>,
    return
  }
  func.func @transform_0(%arg0: i32, %arg1: i32) -> (i32, i32) {
    %c1_i32 = arith.constant 1 : i32
    %0 = arith.muli %arg0, %c1_i32 : i32
    %1 = arith.addi %0, %arg1 : i32
    %c0_i32 = arith.constant 0 : i32
    %c0_i32_0 = arith.constant 0 : i32
    return %1, %c0_i32 : i32, i32
  }
  func.func @transform_1(%arg0: i32, %arg1: i32) -> (i32, i32) {
    %c1_i32 = arith.constant 1 : i32
    %0 = arith.muli %arg0, %c1_i32 : i32
    %1 = arith.addi %0, %arg1 : i32
    %c0_i32 = arith.constant 0 : i32
    %c0_i32_0 = arith.constant 0 : i32
    return %1, %c0_i32 : i32, i32
  }
  func.func @transform_2(%arg0: i32, %arg1: i32) -> (i32, i32) {
    %c0_i32 = arith.constant 0 : i32
    %c0_i32_0 = arith.constant 0 : i32
    %c0_i32_1 = arith.constant 0 : i32
    return %c0_i32, %c0_i32_0 : i32, i32
  }
  func.func @transform_3(%arg0: i32, %arg1: i32) -> (i32, i32) {
    %c0_i32 = arith.constant 0 : i32
    %c0_i32_0 = arith.constant 0 : i32
    %c0_i32_1 = arith.constant 0 : i32
    return %c0_i32, %c0_i32_0 : i32, i32
  }
  func.func @transform_4(%arg0: i32, %arg1: i32) -> (i32, i32, i32) {
    %c0_i32 = arith.constant 0 : i32
    %c0_i32_0 = arith.constant 0 : i32
    %c0_i32_1 = arith.constant 0 : i32
    %c0_i32_2 = arith.constant 0 : i32
    return %c0_i32, %c0_i32_0, %c0_i32_1 : i32, i32, i32
  }
  func.func @transform_5(%arg0: i32, %arg1: i32) -> (i32, i32) {
    %c0_i32 = arith.constant 0 : i32
    %c0_i32_0 = arith.constant 0 : i32
    %c0_i32_1 = arith.constant 0 : i32
    return %c0_i32, %c0_i32_0 : i32, i32
  }
  func.func @transform_6(%arg0: i32, %arg1: i32) -> (i32, i32) {
    %c0_i32 = arith.constant 0 : i32
    %c0_i32_0 = arith.constant 0 : i32
    %c0_i32_1 = arith.constant 0 : i32
    return %c0_i32, %c0_i32_0 : i32, i32
  }
  func.func @transform_7(%arg0: i32, %arg1: i32) -> (i32, i32) {
    %c0_i32 = arith.constant 0 : i32
    %c0_i32_0 = arith.constant 0 : i32
    %c0_i32_1 = arith.constant 0 : i32
    return %c0_i32, %c0_i32_0 : i32, i32
  }
  func.func @transform_8(%arg0: i32, %arg1: i32) -> (i32, i32) {
    %c1_i32 = arith.constant 1 : i32
    %0 = arith.muli %arg0, %c1_i32 : i32
    %1 = arith.addi %0, %arg1 : i32
    %c0_i32 = arith.constant 0 : i32
    %c0_i32_0 = arith.constant 0 : i32
    return %1, %c0_i32 : i32, i32
  }
}

</mosaic_0001>

<llo_original>
// kernel: tpu_custom_call.1
$region0: #{tpu_custom_call.1}
  #allocation0 [shape = 'u32[]', space=smem, size = 0x4, offset = 0x4, fixed_abs, tag = 'smem constant byte address 0x4 - core index']
  #allocation1 [shape = 'u32[144,128]{1,0:T(1,128)}', space=vmem, size = 0x12000, scoped, tag = 'internal scratch']
  %s0 = inlined_call_operand.vmem [shape: bf16[3072,44], index: 0, kind: input, shape index: {}]
  %s1 = inlined_call_operand.vmem [shape: f32[128,24], index: 1, kind: input, shape index: {}]
  %s2 = inlined_call_operand.vmem [shape: f32[24,24], index: 2, kind: input, shape index: {}]
  %s3 = inlined_call_operand.vmem [shape: bf16[44,32], index: 3, kind: input, shape index: {}]
  %s4 = inlined_call_operand.vmem [shape: f32[2,32,32], index: 4, kind: input, shape index: {}]
  %s5 = inlined_call_operand.vmem [shape: f32[8,32], index: 5, kind: input, shape index: {}]
  %s6 = inlined_call_operand.vmem [shape: f32[32,128], index: 6, kind: input, shape index: {}]
  %s7 = inlined_call_operand.vmem [shape: f32[1,128], index: 7, kind: input, shape index: {}]
  %s8 = inlined_call_operand.hbm [shape: f32[128,128], index: 8, kind: output, shape index: {}]
  %s9 = sld [smem:[#allocation0]]
  $region65: #{tpu_custom_call.1} parent=0
    _
  %s11 = ssub.s32 1, %s9
  %s12 = scalar_select 0, %s11, %s9
  $region1: #{tpu_custom_call.1} parent=0
    #allocation2 [shape = 'u8[65536]{0}', space=vmem, size = 0x10000, scoped, tag = 'output window, operand 0']
    #allocation3 [shape = 's32[2]{0}', space=sflag, size = 0x8, scoped, tag = 'scoped memory for tpu_custom_call.1']
    %13 = vsyncpa [#allocation3], 0
    %s14 = scalar_lea.sflag [#allocation3], 1
    %15 = vsyncpa %s14, 0
    loop: start=0, step=1, limit=4
    $region2: #{tpu_custom_call.1} parent=1 // loop_pre_header
      _
    $region3: #{tpu_custom_call.1} parent=1 // loop_header
      %s17 = sphi 0, %s21
      %p18 = scmp.ge.s32.totalorder %s17, 4
      %s24 = sphi 0, %s36
      %s25 = sphi 0, %s32
      %s26 = sphi 0, %s24
      %s27 = sphi 0, %s25
      %s28 = sphi 0, %s26
      %s29 = sphi 0, %s27
      %s41 = sphi 0, %s43
      %s44 = sphi 0, %s41
      %s45 = sphi 0, %s44
      %s61 = sphi 0, %s45
      %s69 = sphi 0, %s71
      %s72 = sphi 0, %s69
      %s73 = sphi 0, %s72
      %s89 = sphi 0, %s73
      %s93 = sphi 0, %s93
      %s95 = sphi 0, %s93
      %s96 = sphi 0, %s95
      %s110 = sphi 0, %s96
      %s114 = sphi 0, %s114
      %s116 = sphi 0, %s114
      %s117 = sphi 0, %s116
      %s131 = sphi 0, %s117
      %s135 = sphi 0, %s135
      %s137 = sphi 0, %s135
      %s138 = sphi 0, %s137
      %s152 = sphi 0, %s138
      %s156 = sphi 0, %s156
      %s158 = sphi 0, %s156
      %s159 = sphi 0, %s158
      %s173 = sphi 0, %s159
      %s177 = sphi 0, %s177
      %s179 = sphi 0, %s177
      %s180 = sphi 0, %s179
      %s194 = sphi 0, %s180
      %s198 = sphi 0, %s198
      %s200 = sphi 0, %s198
      %s201 = sphi 0, %s200
      %s215 = sphi 0, %s201
      %s223 = sphi 0, %s225
      %s226 = sphi 0, %s223
      %s227 = sphi 0, %s226
      %s243 = sphi 0, %s227
    $region4: #{tpu_custom_call.1} parent=1 // loop_header_branch
      %20 = sbr.rel (%p18) target = $region8
    $region5: #{tpu_custom_call.1} parent=1 // loop_body
      %s22 = ssub.s32 %s17, 1
      %s23 = ssub.s32 %s17, 2
      %s30 = sadd.s32 1, %s25
      %p31 = scmp.ge.s32.totalorder %s30, 1
      %s32 = scalar_select %p31, 0, %s30
      %s33 = sadd.s32 1, %s24
      %s34 = scalar_select %p31, %s33, %s24
      %p35 = scmp.ge.s32.totalorder %s34, 2
      %s36 = scalar_select %p35, 0, %s34
      %s37 = sadd.s32 %s24, %s25
      %s38 = sadd.s32 %s36, %s32
      %s39 = ssub.s32 %s37, %s38
      %p40 = scmp.eq.s32.totalorder %s39, 0
      %s42 = sadd.s32 %s41, 1
      %s43 = scalar_select %p40, %s41, %s42
      %p46 = pneg %p40
      %p47 = scmp.eq.s32.totalorder %s17, 1
      %p48 = por %p46, %p47
      %p49 = scmp.ne.s32.totalorder %s41, %s44
      %p50 = scmp.eq.s32.totalorder %s17, 0
      %p51 = por %p49, %p50
      %p52 = scmp.ne.s32.totalorder %s41, %s44
      %p53 = scmp.eq.s32.totalorder %s22, 1
      %p54 = por %p52, %p53
      %p55 = scmp.ne.s32.totalorder %s44, %s45
      %p56 = scmp.eq.s32.totalorder %s22, 0
      %p57 = por %p55, %p56
      %p58 = scmp.ne.s32.totalorder %s44, %s45
      %p59 = scmp.eq.s32.totalorder %s23, 1
      %p60 = por %p58, %p59
      %p62 = scmp.ne.s32.totalorder %s45, %s61
      %p63 = scmp.eq.s32.totalorder %s23, 0
      %p64 = por %p62, %p63
      %s65 = sadd.s32 %s24, %s25
      %s66 = sadd.s32 %s36, %s32
      %s67 = ssub.s32 %s65, %s66
      %p68 = scmp.eq.s32.totalorder %s67, 0
      %s70 = sadd.s32 %s69, 1
      %s71 = scalar_select %p68, %s69, %s70
      %p74 = pneg %p68
      %p75 = scmp.eq.s32.totalorder %s17, 1
      %p76 = por %p74, %p75
      %p77 = scmp.ne.s32.totalorder %s69, %s72
      %p78 = scmp.eq.s32.totalorder %s17, 0
      %p79 = por %p77, %p78
      %p80 = scmp.ne.s32.totalorder %s69, %s72
      %p81 = scmp.eq.s32.totalorder %s22, 1
      %p82 = por %p80, %p81
      %p83 = scmp.ne.s32.totalorder %s72, %s73
      %p84 = scmp.eq.s32.totalorder %s22, 0
      %p85 = por %p83, %p84
      %p86 = scmp.ne.s32.totalorder %s72, %s73
      %p87 = scmp.eq.s32.totalorder %s23, 1
      %p88 = por %p86, %p87
      %p90 = scmp.ne.s32.totalorder %s73, %s89
      %p91 = scmp.eq.s32.totalorder %s23, 0
      %p92 = por %p90, %p91
      %s94 = sadd.s32 %s93, 1
      %p97 = scmp.eq.s32.totalorder %s17, 1
      %p98 = scmp.ne.s32.totalorder %s93, %s95
      %p99 = scmp.eq.s32.totalorder %s17, 0
      %p100 = por %p98, %p99
      %p101 = scmp.ne.s32.totalorder %s93, %s95
      %p102 = scmp.eq.s32.totalorder %s22, 1
      %p103 = por %p101, %p102
      %p104 = scmp.ne.s32.totalorder %s95, %s96
      %p105 = scmp.eq.s32.totalorder %s22, 0
      %p106 = por %p104, %p105
      %p107 = scmp.ne.s32.totalorder %s95, %s96
      %p108 = scmp.eq.s32.totalorder %s23, 1
      %p109 = por %p107, %p108
      %p111 = scmp.ne.s32.totalorder %s96, %s110
      %p112 = scmp.eq.s32.totalorder %s23, 0
      %p113 = por %p111, %p112
      %s115 = sadd.s32 %s114, 1
      %p118 = scmp.eq.s32.totalorder %s17, 1
      %p119 = scmp.ne.s32.totalorder %s114, %s116
      %p120 = scmp.eq.s32.totalorder %s17, 0
      %p121 = por %p119, %p120
      %p122 = scmp.ne.s32.totalorder %s114, %s116
      %p123 = scmp.eq.s32.totalorder %s22, 1
      %p124 = por %p122, %p123
      %p125 = scmp.ne.s32.totalorder %s116, %s117
      %p126 = scmp.eq.s32.totalorder %s22, 0
      %p127 = por %p125, %p126
      %p128 = scmp.ne.s32.totalorder %s116, %s117
      %p129 = scmp.eq.s32.totalorder %s23, 1
      %p130 = por %p128, %p129
      %p132 = scmp.ne.s32.totalorder %s117, %s131
      %p133 = scmp.eq.s32.totalorder %s23, 0
      %p134 = por %p132, %p133
      %s136 = sadd.s32 %s135, 1
      %p139 = scmp.eq.s32.totalorder %s17, 1
      %p140 = scmp.ne.s32.totalorder %s135, %s137
      %p141 = scmp.eq.s32.totalorder %s17, 0
      %p142 = por %p140, %p141
      %p143 = scmp.ne.s32.totalorder %s135, %s137
      %p144 = scmp.eq.s32.totalorder %s22, 1
      %p145 = por %p143, %p144
      %p146 = scmp.ne.s32.totalorder %s137, %s138
      %p147 = scmp.eq.s32.totalorder %s22, 0
      %p148 = por %p146, %p147
      %p149 = scmp.ne.s32.totalorder %s137, %s138
      %p150 = scmp.eq.s32.totalorder %s23, 1
      %p151 = por %p149, %p150
      %p153 = scmp.ne.s32.totalorder %s138, %s152
      %p154 = scmp.eq.s32.totalorder %s23, 0
      %p155 = por %p153, %p154
      %s157 = sadd.s32 %s156, 1
      %p160 = scmp.eq.s32.totalorder %s17, 1
      %p161 = scmp.ne.s32.totalorder %s156, %s158
      %p162 = scmp.eq.s32.totalorder %s17, 0
      %p163 = por %p161, %p162
      %p164 = scmp.ne.s32.totalorder %s156, %s158
      %p165 = scmp.eq.s32.totalorder %s22, 1
      %p166 = por %p164, %p165
      %p167 = scmp.ne.s32.totalorder %s158, %s159
      %p168 = scmp.eq.s32.totalorder %s22, 0
      %p169 = por %p167, %p168
      %p170 = scmp.ne.s32.totalorder %s158, %s159
      %p171 = scmp.eq.s32.totalorder %s23, 1
      %p172 = por %p170, %p171
      %p174 = scmp.ne.s32.totalorder %s159, %s173
      %p175 = scmp.eq.s32.totalorder %s23, 0
      %p176 = por %p174, %p175
      %s178 = sadd.s32 %s177, 1
      %p181 = scmp.eq.s32.totalorder %s17, 1
      %p182 = scmp.ne.s32.totalorder %s177, %s179
      %p183 = scmp.eq.s32.totalorder %s17, 0
      %p184 = por %p182, %p183
      %p185 = scmp.ne.s32.totalorder %s177, %s179
      %p186 = scmp.eq.s32.totalorder %s22, 1
      %p187 = por %p185, %p186
      %p188 = scmp.ne.s32.totalorder %s179, %s180
      %p189 = scmp.eq.s32.totalorder %s22, 0
      %p190 = por %p188, %p189
      %p191 = scmp.ne.s32.totalorder %s179, %s180
      %p192 = scmp.eq.s32.totalorder %s23, 1
      %p193 = por %p191, %p192
      %p195 = scmp.ne.s32.totalorder %s180, %s194
      %p196 = scmp.eq.s32.totalorder %s23, 0
      %p197 = por %p195, %p196
      %s199 = sadd.s32 %s198, 1
      %p202 = scmp.eq.s32.totalorder %s17, 1
      %p203 = scmp.ne.s32.totalorder %s198, %s200
      %p204 = scmp.eq.s32.totalorder %s17, 0
      %p205 = por %p203, %p204
      %p206 = scmp.ne.s32.totalorder %s198, %s200
      %p207 = scmp.eq.s32.totalorder %s22, 1
      %p208 = por %p206, %p207
      %p209 = scmp.ne.s32.totalorder %s200, %s201
      %p210 = scmp.eq.s32.totalorder %s22, 0
      %p211 = por %p209, %p210
      %p212 = scmp.ne.s32.totalorder %s200, %s201
      %p213 = scmp.eq.s32.totalorder %s23, 1
      %p214 = por %p212, %p213
      %p216 = scmp.ne.s32.totalorder %s201, %s215
      %p217 = scmp.eq.s32.totalorder %s23, 0
      %p218 = por %p216, %p217
      %s219 = sadd.s32 %s24, %s25
      %s220 = sadd.s32 %s36, %s32
      %s221 = ssub.s32 %s219, %s220
      %p222 = scmp.eq.s32.totalorder %s221, 0
      %s224 = sadd.s32 %s223, 1
      %s225 = scalar_select %p222, %s223, %s224
      %p228 = pneg %p222
      %p229 = scmp.eq.s32.totalorder %s17, 1
      %p230 = por %p228, %p229
      %p231 = scmp.ne.s32.totalorder %s223, %s226
      %p232 = scmp.eq.s32.totalorder %s17, 0
      %p233 = por %p231, %p232
      %p234 = scmp.ne.s32.totalorder %s223, %s226
      %p235 = scmp.eq.s32.totalorder %s22, 1
      %p236 = por %p234, %p235
      %p237 = scmp.ne.s32.totalorder %s226, %s227
      %p238 = scmp.eq.s32.totalorder %s22, 0
      %p239 = por %p237, %p238
      %p240 = scmp.ne.s32.totalorder %s226, %s227
      %p241 = scmp.eq.s32.totalorder %s23, 1
      %p242 = por %p240, %p241
      %p244 = scmp.ne.s32.totalorder %s227, %s243
      %p245 = scmp.eq.s32.totalorder %s23, 0
      %p246 = por %p244, %p245
      %p247 = scmp.le.s32.totalorder 1, %s17
      %p248 = scmp.lt.s32.totalorder %s17, 3
      %p249 = pnand %p247, %p248
      %p250 = pneg %p249
      // Predicated region
      $region9: #{tpu_custom_call.1} parent=5 // pred_check
        _
      $region10: #{tpu_custom_call.1} parent=5 // pred_check_branch
        %252 = sbr.rel (%p249) target = $region12
      $region11: #{tpu_custom_call.1} parent=5 // pred_region
        %s253 = ssub.s32 %s17, 1
        // Predicated region
        $region13: #{tpu_custom_call.1} parent=11 // pred_check
          %p254 = pneg %p106
        $region14: #{tpu_custom_call.1} parent=11 // pred_check_branch
          %256 = sbr.rel (%p254) target = $region16
        $region15: #{tpu_custom_call.1} parent=11 // pred_region
          _
        $region16: #{tpu_custom_call.1} parent=11 // pred_fallthru
          _
        // Predicated region
        $region17: #{tpu_custom_call.1} parent=11 // pred_check
          %p257 = pneg %p127
        $region18: #{tpu_custom_call.1} parent=11 // pred_check_branch
          %259 = sbr.rel (%p257) target = $region20
        $region19: #{tpu_custom_call.1} parent=11 // pred_region
          _
        $region20: #{tpu_custom_call.1} parent=11 // pred_fallthru
          _
        // Predicated region
        $region21: #{tpu_custom_call.1} parent=11 // pred_check
          %p260 = pneg %p148
        $region22: #{tpu_custom_call.1} parent=11 // pred_check_branch
          %262 = sbr.rel (%p260) target = $region24
        $region23: #{tpu_custom_call.1} parent=11 // pred_region
          _
        $region24: #{tpu_custom_call.1} parent=11 // pred_fallthru
          _
        // Predicated region
        $region25: #{tpu_custom_call.1} parent=11 // pred_check
          %p263 = pneg %p169
        $region26: #{tpu_custom_call.1} parent=11 // pred_check_branch
          %265 = sbr.rel (%p263) target = $region28
        $region27: #{tpu_custom_call.1} parent=11 // pred_region
          _
        $region28: #{tpu_custom_call.1} parent=11 // pred_fallthru
          _
        // Predicated region
        $region29: #{tpu_custom_call.1} parent=11 // pred_check
          %p266 = pneg %p190
        $region30: #{tpu_custom_call.1} parent=11 // pred_check_branch
          %268 = sbr.rel (%p266) target = $region32
        $region31: #{tpu_custom_call.1} parent=11 // pred_region
          _
        $region32: #{tpu_custom_call.1} parent=11 // pred_fallthru
          _
        // Predicated region
        $region33: #{tpu_custom_call.1} parent=11 // pred_check
          %p269 = pneg %p211
        $region34: #{tpu_custom_call.1} parent=11 // pred_check_branch
          %271 = sbr.rel (%p269) target = $region36
        $region35: #{tpu_custom_call.1} parent=11 // pred_region
          _
        $region36: #{tpu_custom_call.1} parent=11 // pred_fallthru
          _
      $region12: #{tpu_custom_call.1} parent=5 // pred_fallthru
        _
      %p272 = scmp.lt.s32.totalorder %s17, 2
      // Predicated region
      $region37: #{tpu_custom_call.1} parent=5 // pred_check
        %p273 = pneg %p272
      $region38: #{tpu_custom_call.1} parent=5 // pred_check_branch
        %275 = sbr.rel (%p273) target = $region40
      $region39: #{tpu_custom_call.1} parent=5 // pred_region
        // Predicated region
        $region41: #{tpu_custom_call.1} parent=39 // pred_check
          %p276 = pneg %p51
        $region42: #{tpu_custom_call.1} parent=39 // pred_check_branch
          %278 = sbr.rel (%p276) target = $region44
        $region43: #{tpu_custom_call.1} parent=39 // pred_region
          %s279 = sadd.s32 %s24, %s25
          %s280 = smul.u32 192, %s279
          %p281 = scmp.lt.s32.totalorder %s280, 383
          %s282 = scalar_select %p281, %s280, 383
          %s283 = smul.addr %s282, 4
          %s284 = scalar_lea.vmem %s0, %s283
          %s285 = sadd.s32 %s24, %s25
          %s286 = smul.u32 192, %s285
        $region44: #{tpu_custom_call.1} parent=39 // pred_fallthru
          _
        // Predicated region
        $region45: #{tpu_custom_call.1} parent=39 // pred_check
          %p287 = pneg %p79
        $region46: #{tpu_custom_call.1} parent=39 // pred_check_branch
          %289 = sbr.rel (%p287) target = $region48
        $region47: #{tpu_custom_call.1} parent=39 // pred_region
          %s290 = sadd.s32 %s24, %s25
          %s291 = smul.u32 8, %s290
          %p292 = scmp.lt.s32.totalorder %s291, 15
          %s293 = scalar_select %p292, %s291, 15
          %s294 = smul.addr %s293, 8
          %s295 = scalar_lea.vmem %s1, %s294
          %s296 = sadd.s32 %s24, %s25
          %s297 = smul.u32 8, %s296
        $region48: #{tpu_custom_call.1} parent=39 // pred_fallthru
          _
      $region40: #{tpu_custom_call.1} parent=5 // pred_fallthru
        _
      %p298 = scmp.le.s32.totalorder 1, %s17
      %p299 = scmp.lt.s32.totalorder %s17, 3
      %p300 = pnand %p298, %p299
      %p301 = pneg %p300
      // Predicated region
      $region49: #{tpu_custom_call.1} parent=5 // pred_check
        _
      $region50: #{tpu_custom_call.1} parent=5 // pred_check_branch
        %303 = sbr.rel (%p300) target = $region52
      $region51: #{tpu_custom_call.1} parent=5 // pred_region
        %s304 = ssub.s32 %s17, 1
        %s305 = sadd.s32 %s26, %s27
        %s306 = smul.u32 192, %s305
        %p307 = scmp.lt.s32.totalorder %s306, 383
        %s308 = scalar_select %p307, %s306, 383
        %s309 = smul.addr %s308, 4
        %s310 = scalar_lea.vmem %s0, %s309
        %p311 = pneg %p57
        %p312 = pneg %p54
        %s313 = sadd.s32 %s26, %s27
        %s314 = smul.u32 8, %s313
        %p315 = scmp.lt.s32.totalorder %s314, 15
        %s316 = scalar_select %p315, %s314, 15
        %s317 = smul.addr %s316, 8
        %s318 = scalar_lea.vmem %s1, %s317
        %p319 = pneg %p85
        %p320 = pneg %p82
        %p321 = pneg %p106
        %p322 = pneg %p103
        %p323 = pneg %p127
        %p324 = pneg %p124
        %p325 = pneg %p148
        %p326 = pneg %p145
        %p327 = pneg %p169
        %p328 = pneg %p166
        %p329 = pneg %p190
        %p330 = pneg %p187
        %p331 = pneg %p211
        %p332 = pneg %p208
        %p333 = pneg %p239
        %p334 = pneg %p236
        %s335 = sand.u32 %s226, 1
        %s336 = scalar_lea.sflag [#allocation3], %s335
        %s337 = sand.u32 %s226, 1
        %s338 = smul.addr %s337, 64
        %s339 = scalar_lea.vmem [#allocation2], %s338
        %s340 = sadd.s32 %s26, %s27
        %s341 = smul.u32 192, %s340
        %p342 = scmp.lt.s32.totalorder %s341, 383
        %s343 = scalar_select %p342, %s341, 383
        %s344 = smul.addr %s343, 4
        %s345 = scalar_lea.vmem %s0, %s344
        %s346 = sadd.s32 %s26, %s27
        %s347 = smul.u32 192, %s346
        %s348 = sadd.s32 %s26, %s27
        %s349 = smul.u32 8, %s348
        %p350 = scmp.lt.s32.totalorder %s349, 15
        %s351 = scalar_select %p350, %s349, 15
        %s352 = smul.addr %s351, 8
        %s353 = scalar_lea.vmem %s1, %s352
        %s354 = sadd.s32 %s26, %s27
        %s355 = smul.u32 8, %s354
        %s356 = sadd.s32 %s26, %s27
        %s357 = smul.u32 8, %s356
        %v359 = vld [vmem:[%s5] sm:$0x1]
        %v360 = vld [vmem:[%s5 + $0x1] sm:$0x1]
        %v361 = vld [vmem:[%s5 + $0x2] sm:$0x1]
        %v362 = vld [vmem:[%s5 + $0x3] sm:$0x1]
        %v363 = vld [vmem:[%s345] sm:$0xf]
        %v364 = vld [vmem:[%s345 + $0x4] sm:$0xf]
        %v365 = vld [vmem:[%s345 + $0x8] sm:$0xf]
        %v366 = vld [vmem:[%s345 + $0xc] sm:$0xf]
        %v367 = vld [vmem:[%s345 + $0x10] sm:$0xf]
        %v368 = vld [vmem:[%s345 + $0x14] sm:$0xf]
        %v369 = vld [vmem:[%s345 + $0x18] sm:$0xf]
        %v370 = vld [vmem:[%s345 + $0x1c] sm:$0xf]
        %v371 = vld [vmem:[%s345 + $0x20] sm:$0xf]
        %v372 = vld [vmem:[%s345 + $0x24] sm:$0xf]
        %v373 = vld [vmem:[%s345 + $0x28] sm:$0xf]
        %v374 = vld [vmem:[%s345 + $0x2c] sm:$0xf]
        %v375 = vld [vmem:[%s345 + $0x30] sm:$0xf]
        %v376 = vld [vmem:[%s345 + $0x34] sm:$0xf]
        %v377 = vld [vmem:[%s345 + $0x38] sm:$0xf]
        %v378 = vld [vmem:[%s345 + $0x3c] sm:$0xf]
        %v379 = vld [vmem:[%s345 + $0x40] sm:$0xf]
        %v380 = vld [vmem:[%s345 + $0x44] sm:$0xf]
        %v381 = vld [vmem:[%s345 + $0x48] sm:$0xf]
        %v382 = vld [vmem:[%s345 + $0x4c] sm:$0xf]
        %v383 = vld [vmem:[%s345 + $0x50] sm:$0xf]
        %v384 = vld [vmem:[%s345 + $0x54] sm:$0xf]
        %v385 = vld [vmem:[%s345 + $0x58] sm:$0xf]
        %v386 = vld [vmem:[%s345 + $0x5c] sm:$0xf]
        %v387 = vld [vmem:[%s345 + $0x60] sm:$0xf]
        %v388 = vld [vmem:[%s345 + $0x64] sm:$0xf]
        %v389 = vld [vmem:[%s345 + $0x68] sm:$0xf]
        %v390 = vld [vmem:[%s345 + $0x6c] sm:$0xf]
        %v391 = vld [vmem:[%s345 + $0x70] sm:$0xf]
        %v392 = vld [vmem:[%s345 + $0x74] sm:$0xf]
        %v393 = vld [vmem:[%s345 + $0x78] sm:$0xf]
        %v394 = vld [vmem:[%s345 + $0x7c] sm:$0xf]
        %v395 = vld [vmem:[%s345 + $0x80] sm:$0xf]
        %v396 = vld [vmem:[%s345 + $0x84] sm:$0xf]
        %v397 = vld [vmem:[%s345 + $0x88] sm:$0xf]
        %v398 = vld [vmem:[%s345 + $0x8c] sm:$0xf]
        %v399 = vld [vmem:[%s345 + $0x90] sm:$0xf]
        %v400 = vld [vmem:[%s345 + $0x94] sm:$0xf]
        %v401 = vld [vmem:[%s345 + $0x98] sm:$0xf]
        %v402 = vld [vmem:[%s345 + $0x9c] sm:$0xf]
        %v403 = vld [vmem:[%s345 + $0xa0] sm:$0xf]
        %v404 = vld [vmem:[%s345 + $0xa4] sm:$0xf]
        %v405 = vld [vmem:[%s345 + $0xa8] sm:$0xf]
        %v406 = vld [vmem:[%s345 + $0xac] sm:$0xf]
        %v407 = vld [vmem:[%s345 + $0xb0] sm:$0xf]
        %v408 = vld [vmem:[%s345 + $0xb4] sm:$0xf]
        %v409 = vld [vmem:[%s345 + $0xb8] sm:$0xf]
        %v410 = vld [vmem:[%s345 + $0xbc] sm:$0xf]
        %v411 = vld [vmem:[%s345 + $0xc0] sm:$0xf]
        %v412 = vld [vmem:[%s345 + $0xc4] sm:$0xf]
        %v413 = vld [vmem:[%s345 + $0xc8] sm:$0xf]
        %v414 = vld [vmem:[%s345 + $0xcc] sm:$0xf]
        %v415 = vld [vmem:[%s345 + $0xd0] sm:$0xf]
        %v416 = vld [vmem:[%s345 + $0xd4] sm:$0xf]
        %v417 = vld [vmem:[%s345 + $0xd8] sm:$0xf]
        %v418 = vld [vmem:[%s345 + $0xdc] sm:$0xf]
        %v419 = vld [vmem:[%s345 + $0xe0] sm:$0xf]
        %v420 = vld [vmem:[%s345 + $0xe4] sm:$0xf]
        %v421 = vld [vmem:[%s345 + $0xe8] sm:$0xf]
        %v422 = vld [vmem:[%s345 + $0xec] sm:$0xf]
        %v423 = vld [vmem:[%s345 + $0xf0] sm:$0xf]
        %v424 = vld [vmem:[%s345 + $0xf4] sm:$0xf]
        %v425 = vld [vmem:[%s345 + $0xf8] sm:$0xf]
        %v426 = vld [vmem:[%s345 + $0xfc] sm:$0xf]
        %v427 = vld [vmem:[%s345 + $0x100] sm:$0xf]
        %v428 = vld [vmem:[%s345 + $0x104] sm:$0xf]
        %v429 = vld [vmem:[%s345 + $0x108] sm:$0xf]
        %v430 = vld [vmem:[%s345 + $0x10c] sm:$0xf]
        %v431 = vld [vmem:[%s345 + $0x110] sm:$0xf]
        %v432 = vld [vmem:[%s345 + $0x114] sm:$0xf]
        %v433 = vld [vmem:[%s345 + $0x118] sm:$0xf]
        %v434 = vld [vmem:[%s345 + $0x11c] sm:$0xf]
        %v435 = vld [vmem:[%s345 + $0x120] sm:$0xf]
        %v436 = vld [vmem:[%s345 + $0x124] sm:$0xf]
        %v437 = vld [vmem:[%s345 + $0x128] sm:$0xf]
        %v438 = vld [vmem:[%s345 + $0x12c] sm:$0xf]
        %v439 = vld [vmem:[%s345 + $0x130] sm:$0xf]
        %v440 = vld [vmem:[%s345 + $0x134] sm:$0xf]
        %v441 = vld [vmem:[%s345 + $0x138] sm:$0xf]
        %v442 = vld [vmem:[%s345 + $0x13c] sm:$0xf]
        %v443 = vld [vmem:[%s345 + $0x140] sm:$0xf]
        %v444 = vld [vmem:[%s345 + $0x144] sm:$0xf]
        %v445 = vld [vmem:[%s345 + $0x148] sm:$0xf]
        %v446 = vld [vmem:[%s345 + $0x14c] sm:$0xf]
        %v447 = vld [vmem:[%s345 + $0x150] sm:$0xf]
        %v448 = vld [vmem:[%s345 + $0x154] sm:$0xf]
        %v449 = vld [vmem:[%s345 + $0x158] sm:$0xf]
        %v450 = vld [vmem:[%s345 + $0x15c] sm:$0xf]
        %v451 = vld [vmem:[%s345 + $0x160] sm:$0xf]
        %v452 = vld [vmem:[%s345 + $0x164] sm:$0xf]
        %v453 = vld [vmem:[%s345 + $0x168] sm:$0xf]
        %v454 = vld [vmem:[%s345 + $0x16c] sm:$0xf]
        %v455 = vld [vmem:[%s345 + $0x170] sm:$0xf]
        %v456 = vld [vmem:[%s345 + $0x174] sm:$0xf]
        %v457 = vld [vmem:[%s345 + $0x178] sm:$0xf]
        %v458 = vld [vmem:[%s345 + $0x17c] sm:$0xf]
        %v459 = vld [vmem:[%s345 + $0x180] sm:$0xf]
        %v460 = vld [vmem:[%s345 + $0x184] sm:$0xf]
        %v461 = vld [vmem:[%s345 + $0x188] sm:$0xf]
        %v462 = vld [vmem:[%s345 + $0x18c] sm:$0xf]
        %v463 = vld [vmem:[%s345 + $0x190] sm:$0xf]
        %v464 = vld [vmem:[%s345 + $0x194] sm:$0xf]
        %v465 = vld [vmem:[%s345 + $0x198] sm:$0xf]
        %v466 = vld [vmem:[%s345 + $0x19c] sm:$0xf]
        %v467 = vld [vmem:[%s345 + $0x1a0] sm:$0xf]
        %v468 = vld [vmem:[%s345 + $0x1a4] sm:$0xf]
        %v469 = vld [vmem:[%s345 + $0x1a8] sm:$0xf]
        %v470 = vld [vmem:[%s345 + $0x1ac] sm:$0xf]
        %v471 = vld [vmem:[%s345 + $0x1b0] sm:$0xf]
        %v472 = vld [vmem:[%s345 + $0x1b4] sm:$0xf]
        %v473 = vld [vmem:[%s345 + $0x1b8] sm:$0xf]
        %v474 = vld [vmem:[%s345 + $0x1bc] sm:$0xf]
        %v475 = vld [vmem:[%s345 + $0x1c0] sm:$0xf]
        %v476 = vld [vmem:[%s345 + $0x1c4] sm:$0xf]
        %v477 = vld [vmem:[%s345 + $0x1c8] sm:$0xf]
        %v478 = vld [vmem:[%s345 + $0x1cc] sm:$0xf]
        %v479 = vld [vmem:[%s345 + $0x1d0] sm:$0xf]
        %v480 = vld [vmem:[%s345 + $0x1d4] sm:$0xf]
        %v481 = vld [vmem:[%s345 + $0x1d8] sm:$0xf]
        %v482 = vld [vmem:[%s345 + $0x1dc] sm:$0xf]
        %v483 = vld [vmem:[%s345 + $0x1e0] sm:$0xf]
        %v484 = vld [vmem:[%s345 + $0x1e4] sm:$0xf]
        %v485 = vld [vmem:[%s345 + $0x1e8] sm:$0xf]
        %v486 = vld [vmem:[%s345 + $0x1ec] sm:$0xf]
        %v487 = vld [vmem:[%s345 + $0x1f0] sm:$0xf]
        %v488 = vld [vmem:[%s345 + $0x1f4] sm:$0xf]
        %v489 = vld [vmem:[%s345 + $0x1f8] sm:$0xf]
        %v490 = vld [vmem:[%s345 + $0x1fc] sm:$0xf]
        %v491 = vld [vmem:[%s345 + $0x200] sm:$0xf]
        %v492 = vld [vmem:[%s345 + $0x204] sm:$0xf]
        %v493 = vld [vmem:[%s345 + $0x208] sm:$0xf]
        %v494 = vld [vmem:[%s345 + $0x20c] sm:$0xf]
        %v495 = vld [vmem:[%s345 + $0x210] sm:$0xf]
        %v496 = vld [vmem:[%s345 + $0x214] sm:$0xf]
        %v497 = vld [vmem:[%s345 + $0x218] sm:$0xf]
        %v498 = vld [vmem:[%s345 + $0x21c] sm:$0xf]
        %v499 = vld [vmem:[%s345 + $0x220] sm:$0xf]
        %v500 = vld [vmem:[%s345 + $0x224] sm:$0xf]
        %v501 = vld [vmem:[%s345 + $0x228] sm:$0xf]
        %v502 = vld [vmem:[%s345 + $0x22c] sm:$0xf]
        %v503 = vld [vmem:[%s345 + $0x230] sm:$0xf]
        %v504 = vld [vmem:[%s345 + $0x234] sm:$0xf]
        %v505 = vld [vmem:[%s345 + $0x238] sm:$0xf]
        %v506 = vld [vmem:[%s345 + $0x23c] sm:$0xf]
        %v507 = vld [vmem:[%s345 + $0x240] sm:$0xf]
        %v508 = vld [vmem:[%s345 + $0x244] sm:$0xf]
        %v509 = vld [vmem:[%s345 + $0x248] sm:$0xf]
        %v510 = vld [vmem:[%s345 + $0x24c] sm:$0xf]
        %v511 = vld [vmem:[%s345 + $0x250] sm:$0xf]
        %v512 = vld [vmem:[%s345 + $0x254] sm:$0xf]
        %v513 = vld [vmem:[%s345 + $0x258] sm:$0xf]
        %v514 = vld [vmem:[%s345 + $0x25c] sm:$0xf]
        %v515 = vld [vmem:[%s345 + $0x260] sm:$0xf]
        %v516 = vld [vmem:[%s345 + $0x264] sm:$0xf]
        %v517 = vld [vmem:[%s345 + $0x268] sm:$0xf]
        %v518 = vld [vmem:[%s345 + $0x26c] sm:$0xf]
        %v519 = vld [vmem:[%s345 + $0x270] sm:$0xf]
        %v520 = vld [vmem:[%s345 + $0x274] sm:$0xf]
        %v521 = vld [vmem:[%s345 + $0x278] sm:$0xf]
        %v522 = vld [vmem:[%s345 + $0x27c] sm:$0xf]
        %v523 = vld [vmem:[%s345 + $0x280] sm:$0xf]
        %v524 = vld [vmem:[%s345 + $0x284] sm:$0xf]
        %v525 = vld [vmem:[%s345 + $0x288] sm:$0xf]
        %v526 = vld [vmem:[%s345 + $0x28c] sm:$0xf]
        %v527 = vld [vmem:[%s345 + $0x290] sm:$0xf]
        %v528 = vld [vmem:[%s345 + $0x294] sm:$0xf]
        %v529 = vld [vmem:[%s345 + $0x298] sm:$0xf]
        %v530 = vld [vmem:[%s345 + $0x29c] sm:$0xf]
        %v531 = vld [vmem:[%s345 + $0x2a0] sm:$0xf]
        %v532 = vld [vmem:[%s345 + $0x2a4] sm:$0xf]
        %v533 = vld [vmem:[%s345 + $0x2a8] sm:$0xf]
        %v534 = vld [vmem:[%s345 + $0x2ac] sm:$0xf]
        %v535 = vld [vmem:[%s345 + $0x2b0] sm:$0xf]
        %v536 = vld [vmem:[%s345 + $0x2b4] sm:$0xf]
        %v537 = vld [vmem:[%s345 + $0x2b8] sm:$0xf]
        %v538 = vld [vmem:[%s345 + $0x2bc] sm:$0xf]
        %v539 = vld [vmem:[%s345 + $0x2c0] sm:$0xf]
        %v540 = vld [vmem:[%s345 + $0x2c4] sm:$0xf]
        %v541 = vld [vmem:[%s345 + $0x2c8] sm:$0xf]
        %v542 = vld [vmem:[%s345 + $0x2cc] sm:$0xf]
        %v543 = vld [vmem:[%s345 + $0x2d0] sm:$0xf]
        %v544 = vld [vmem:[%s345 + $0x2d4] sm:$0xf]
        %v545 = vld [vmem:[%s345 + $0x2d8] sm:$0xf]
        %v546 = vld [vmem:[%s345 + $0x2dc] sm:$0xf]
        %v547 = vld [vmem:[%s345 + $0x2e0] sm:$0xf]
        %v548 = vld [vmem:[%s345 + $0x2e4] sm:$0xf]
        %v549 = vld [vmem:[%s345 + $0x2e8] sm:$0xf]
        %v550 = vld [vmem:[%s345 + $0x2ec] sm:$0xf]
        %v551 = vld [vmem:[%s345 + $0x2f0] sm:$0xf]
        %v552 = vld [vmem:[%s345 + $0x2f4] sm:$0xf]
        %v553 = vld [vmem:[%s345 + $0x2f8] sm:$0xf]
        %v554 = vld [vmem:[%s345 + $0x2fc] sm:$0xf]
        %v555 = vld [vmem:[%s3] sm:$0xf]
        %v556 = vld [vmem:[%s3 + $0x4] sm:$0xf]
        %v557 = vld [vmem:[%s3 + $0x8] sm:$0xf]
        %v558 = vld [vmem:[%s3 + $0xc] sm:$0xf]
        %v559 = vld [vmem:[%s3 + $0x10] sm:$0xf]
        %v560 = vld [vmem:[%s3 + $0x14] sm:$0x3]
        %v561 = vlaneseq
        %v562 = vshrl.u32 %v561, 7
        %v563 = vsub.s32 0, %v562
        %v564 = vrot.slane %v359, %v563
        %v757 = vunpack.c.l.b16 %v363
        %v758 = vunpack.c.l.b16 %v364
        %v759 = vunpack.c.l.b16 %v365
        %v760 = vunpack.c.l.b16 %v366
        %v761 = vunpack.c.l.b16 %v367
        %v762 = vunpack.c.l.b16 %v368
        %v763 = vunpack.c.l.b16 %v369
        %v764 = vunpack.c.l.b16 %v370
        %v765 = vunpack.c.l.b16 %v371
        %v766 = vunpack.c.l.b16 %v372
        %v767 = vunpack.c.l.b16 %v373
        %v768 = vunpack.c.l.b16 %v374
        %v769 = vunpack.c.l.b16 %v375
        %v770 = vunpack.c.l.b16 %v376
        %v771 = vunpack.c.l.b16 %v377
        %v772 = vunpack.c.l.b16 %v378
        %v773 = vunpack.c.l.b16 %v379
        %v774 = vunpack.c.l.b16 %v380
        %v775 = vunpack.c.l.b16 %v381
        %v776 = vunpack.c.l.b16 %v382
        %v777 = vunpack.c.l.b16 %v383
        %v778 = vunpack.c.l.b16 %v384
        %v779 = vunpack.c.l.b16 %v385
        %v780 = vunpack.c.l.b16 %v386
        %v781 = vunpack.c.l.b16 %v387
        %v782 = vunpack.c.l.b16 %v388
        %v783 = vunpack.c.l.b16 %v389
        %v784 = vunpack.c.l.b16 %v390
        %v785 = vunpack.c.l.b16 %v391
        %v786 = vunpack.c.l.b16 %v392
        %v787 = vunpack.c.l.b16 %v393
        %v788 = vunpack.c.l.b16 %v394
        %v789 = vunpack.c.l.b16 %v395
        %v790 = vunpack.c.l.b16 %v396
        %v791 = vunpack.c.l.b16 %v397
        %v792 = vunpack.c.l.b16 %v398
        %v793 = vunpack.c.l.b16 %v399
        %v794 = vunpack.c.l.b16 %v400
        %v795 = vunpack.c.l.b16 %v401
        %v796 = vunpack.c.l.b16 %v402
        %v797 = vunpack.c.l.b16 %v403
        %v798 = vunpack.c.l.b16 %v404
        %v799 = vunpack.c.l.b16 %v405
        %v800 = vunpack.c.l.b16 %v406
        %v801 = vunpack.c.l.b16 %v407
        %v802 = vunpack.c.l.b16 %v408
        %v803 = vunpack.c.l.b16 %v409
        %v804 = vunpack.c.l.b16 %v410
        %v805 = vunpack.c.l.b16 %v411
        %v806 = vunpack.c.l.b16 %v412
        %v807 = vunpack.c.l.b16 %v413
        %v808 = vunpack.c.l.b16 %v414
        %v809 = vunpack.c.l.b16 %v415
        %v810 = vunpack.c.l.b16 %v416
        %v811 = vunpack.c.l.b16 %v417
        %v812 = vunpack.c.l.b16 %v418
        %v813 = vunpack.c.l.b16 %v419
        %v814 = vunpack.c.l.b16 %v420
        %v815 = vunpack.c.l.b16 %v421
        %v816 = vunpack.c.l.b16 %v422
        %v817 = vunpack.c.l.b16 %v423
        %v818 = vunpack.c.l.b16 %v424
        %v819 = vunpack.c.l.b16 %v425
        %v820 = vunpack.c.l.b16 %v426
        %v821 = vunpack.c.l.b16 %v427
        %v822 = vunpack.c.l.b16 %v428
        %v823 = vunpack.c.l.b16 %v429
        %v824 = vunpack.c.l.b16 %v430
        %v825 = vunpack.c.l.b16 %v431
        %v826 = vunpack.c.l.b16 %v432
        %v827 = vunpack.c.l.b16 %v433
        %v828 = vunpack.c.l.b16 %v434
        %v829 = vunpack.c.l.b16 %v435
        %v830 = vunpack.c.l.b16 %v436
        %v831 = vunpack.c.l.b16 %v437
        %v832 = vunpack.c.l.b16 %v438
        %v833 = vunpack.c.l.b16 %v439
        %v834 = vunpack.c.l.b16 %v440
        %v835 = vunpack.c.l.b16 %v441
        %v836 = vunpack.c.l.b16 %v442
        %v837 = vunpack.c.l.b16 %v443
        %v838 = vunpack.c.l.b16 %v444
        %v839 = vunpack.c.l.b16 %v445
        %v840 = vunpack.c.l.b16 %v446
        %v841 = vunpack.c.l.b16 %v447
        %v842 = vunpack.c.l.b16 %v448
        %v843 = vunpack.c.l.b16 %v449
        %v844 = vunpack.c.l.b16 %v450
        %v845 = vunpack.c.l.b16 %v451
        %v846 = vunpack.c.l.b16 %v452
        %v847 = vunpack.c.l.b16 %v453
        %v848 = vunpack.c.l.b16 %v454
        %v849 = vunpack.c.l.b16 %v455
        %v850 = vunpack.c.l.b16 %v456
        %v851 = vunpack.c.l.b16 %v457
        %v852 = vunpack.c.l.b16 %v458
        %v853 = vunpack.c.l.b16 %v459
        %v854 = vunpack.c.l.b16 %v460
        %v855 = vunpack.c.l.b16 %v461
        %v856 = vunpack.c.l.b16 %v462
        %v857 = vunpack.c.l.b16 %v463
        %v858 = vunpack.c.l.b16 %v464
        %v859 = vunpack.c.l.b16 %v465
        %v860 = vunpack.c.l.b16 %v466
        %v861 = vunpack.c.l.b16 %v467
        %v862 = vunpack.c.l.b16 %v468
        %v863 = vunpack.c.l.b16 %v469
        %v864 = vunpack.c.l.b16 %v470
        %v865 = vunpack.c.l.b16 %v471
        %v866 = vunpack.c.l.b16 %v472
        %v867 = vunpack.c.l.b16 %v473
        %v868 = vunpack.c.l.b16 %v474
        %v869 = vunpack.c.l.b16 %v475
        %v870 = vunpack.c.l.b16 %v476
        %v871 = vunpack.c.l.b16 %v477
        %v872 = vunpack.c.l.b16 %v478
        %v873 = vunpack.c.l.b16 %v479
        %v874 = vunpack.c.l.b16 %v480
        %v875 = vunpack.c.l.b16 %v481
        %v876 = vunpack.c.l.b16 %v482
        %v877 = vunpack.c.l.b16 %v483
        %v878 = vunpack.c.l.b16 %v484
        %v879 = vunpack.c.l.b16 %v485
        %v880 = vunpack.c.l.b16 %v486
        %v881 = vunpack.c.l.b16 %v487
        %v882 = vunpack.c.l.b16 %v488
        %v883 = vunpack.c.l.b16 %v489
        %v884 = vunpack.c.l.b16 %v490
        %v885 = vunpack.c.l.b16 %v491
        %v886 = vunpack.c.l.b16 %v492
        %v887 = vunpack.c.l.b16 %v493
        %v888 = vunpack.c.l.b16 %v494
        %v889 = vunpack.c.l.b16 %v495
        %v890 = vunpack.c.l.b16 %v496
        %v891 = vunpack.c.l.b16 %v497
        %v892 = vunpack.c.l.b16 %v498
        %v893 = vunpack.c.l.b16 %v499
        %v894 = vunpack.c.l.b16 %v500
        %v895 = vunpack.c.l.b16 %v501
        %v896 = vunpack.c.l.b16 %v502
        %v897 = vunpack.c.l.b16 %v503
        %v898 = vunpack.c.l.b16 %v504
        %v899 = vunpack.c.l.b16 %v505
        %v900 = vunpack.c.l.b16 %v506
        %v901 = vunpack.c.l.b16 %v507
        %v902 = vunpack.c.l.b16 %v508
        %v903 = vunpack.c.l.b16 %v509
        %v904 = vunpack.c.l.b16 %v510
        %v905 = vunpack.c.l.b16 %v511
        %v906 = vunpack.c.l.b16 %v512
        %v907 = vunpack.c.l.b16 %v513
        %v908 = vunpack.c.l.b16 %v514
        %v909 = vunpack.c.l.b16 %v515
        %v910 = vunpack.c.l.b16 %v516
        %v911 = vunpack.c.l.b16 %v517
        %v912 = vunpack.c.l.b16 %v518
        %v913 = vunpack.c.l.b16 %v519
        %v914 = vunpack.c.l.b16 %v520
        %v915 = vunpack.c.l.b16 %v521
        %v916 = vunpack.c.l.b16 %v522
        %v917 = vunpack.c.l.b16 %v523
        %v918 = vunpack.c.l.b16 %v524
        %v919 = vunpack.c.l.b16 %v525
        %v920 = vunpack.c.l.b16 %v526
        %v921 = vunpack.c.l.b16 %v527
        %v922 = vunpack.c.l.b16 %v528
        %v923 = vunpack.c.l.b16 %v529
        %v924 = vunpack.c.l.b16 %v530
        %v925 = vunpack.c.l.b16 %v531
        %v926 = vunpack.c.l.b16 %v532
        %v927 = vunpack.c.l.b16 %v533
        %v928 = vunpack.c.l.b16 %v534
        %v929 = vunpack.c.l.b16 %v535
        %v930 = vunpack.c.l.b16 %v536
        %v931 = vunpack.c.l.b16 %v537
        %v932 = vunpack.c.l.b16 %v538
        %v933 = vunpack.c.l.b16 %v539
        %v934 = vunpack.c.l.b16 %v540
        %v935 = vunpack.c.l.b16 %v541
        %v936 = vunpack.c.l.b16 %v542
        %v937 = vunpack.c.l.b16 %v543
        %v938 = vunpack.c.l.b16 %v544
        %v939 = vunpack.c.l.b16 %v545
        %v940 = vunpack.c.l.b16 %v546
        %v941 = vunpack.c.l.b16 %v547
        %v942 = vunpack.c.l.b16 %v548
        %v943 = vunpack.c.l.b16 %v549
        %v944 = vunpack.c.l.b16 %v550
        %v945 = vunpack.c.l.b16 %v551
        %v946 = vunpack.c.l.b16 %v552
        %v947 = vunpack.c.l.b16 %v553
        %v948 = vunpack.c.l.b16 %v554
        %v949 = vpack.c.b16 %v758, %v757
        %v950 = vpack.c.b16 %v760, %v759
        %v951 = vpack.c.b16 %v762, %v761
        %v952 = vpack.c.b16 %v764, %v763
        %v953 = vpack.c.b16 %v766, %v765
        %v954 = vpack.c.b16 %v768, %v767
        %v955 = vpack.c.b16 %v770, %v769
        %v956 = vpack.c.b16 %v772, %v771
        %v957 = vpack.c.b16 %v774, %v773
        %v958 = vpack.c.b16 %v776, %v775
        %v959 = vpack.c.b16 %v778, %v777
        %v960 = vpack.c.b16 %v780, %v779
        %v961 = vpack.c.b16 %v782, %v781
        %v962 = vpack.c.b16 %v784, %v783
        %v963 = vpack.c.b16 %v786, %v785
        %v964 = vpack.c.b16 %v788, %v787
        %v965 = vpack.c.b16 %v790, %v789
        %v966 = vpack.c.b16 %v792, %v791
        %v967 = vpack.c.b16 %v794, %v793
        %v968 = vpack.c.b16 %v796, %v795
        %v969 = vpack.c.b16 %v798, %v797
        %v970 = vpack.c.b16 %v800, %v799
        %v971 = vpack.c.b16 %v802, %v801
        %v972 = vpack.c.b16 %v804, %v803
        %v973 = vpack.c.b16 %v806, %v805
        %v974 = vpack.c.b16 %v808, %v807
        %v975 = vpack.c.b16 %v810, %v809
        %v976 = vpack.c.b16 %v812, %v811
        %v977 = vpack.c.b16 %v814, %v813
        %v978 = vpack.c.b16 %v816, %v815
        %v979 = vpack.c.b16 %v818, %v817
        %v980 = vpack.c.b16 %v820, %v819
        %v981 = vpack.c.b16 %v822, %v821
        %v982 = vpack.c.b16 %v824, %v823
        %v983 = vpack.c.b16 %v826, %v825
        %v984 = vpack.c.b16 %v828, %v827
        %v985 = vpack.c.b16 %v830, %v829
        %v986 = vpack.c.b16 %v832, %v831
        %v987 = vpack.c.b16 %v834, %v833
        %v988 = vpack.c.b16 %v836, %v835
        %v989 = vpack.c.b16 %v838, %v837
        %v990 = vpack.c.b16 %v840, %v839
        %v991 = vpack.c.b16 %v842, %v841
        %v992 = vpack.c.b16 %v844, %v843
        %v993 = vpack.c.b16 %v846, %v845
        %v994 = vpack.c.b16 %v848, %v847
        %v995 = vpack.c.b16 %v850, %v849
        %v996 = vpack.c.b16 %v852, %v851
        %v997 = vpack.c.b16 %v854, %v853
        %v998 = vpack.c.b16 %v856, %v855
        %v999 = vpack.c.b16 %v858, %v857
        %v1000 = vpack.c.b16 %v860, %v859
        %v1001 = vpack.c.b16 %v862, %v861
        %v1002 = vpack.c.b16 %v864, %v863
        %v1003 = vpack.c.b16 %v866, %v865
        %v1004 = vpack.c.b16 %v868, %v867
        %v1005 = vpack.c.b16 %v870, %v869
        %v1006 = vpack.c.b16 %v872, %v871
        %v1007 = vpack.c.b16 %v874, %v873
        %v1008 = vpack.c.b16 %v876, %v875
        %v1009 = vpack.c.b16 %v878, %v877
        %v1010 = vpack.c.b16 %v880, %v879
        %v1011 = vpack.c.b16 %v882, %v881
        %v1012 = vpack.c.b16 %v884, %v883
        %v1013 = vpack.c.b16 %v886, %v885
        %v1014 = vpack.c.b16 %v888, %v887
        %v1015 = vpack.c.b16 %v890, %v889
        %v1016 = vpack.c.b16 %v892, %v891
        %v1017 = vpack.c.b16 %v894, %v893
        %v1018 = vpack.c.b16 %v896, %v895
        %v1019 = vpack.c.b16 %v898, %v897
        %v1020 = vpack.c.b16 %v900, %v899
        %v1021 = vpack.c.b16 %v902, %v901
        %v1022 = vpack.c.b16 %v904, %v903
        %v1023 = vpack.c.b16 %v906, %v905
        %v1024 = vpack.c.b16 %v908, %v907
        %v1025 = vpack.c.b16 %v910, %v909
        %v1026 = vpack.c.b16 %v912, %v911
        %v1027 = vpack.c.b16 %v914, %v913
        %v1028 = vpack.c.b16 %v916, %v915
        %v1029 = vpack.c.b16 %v918, %v917
        %v1030 = vpack.c.b16 %v920, %v919
        %v1031 = vpack.c.b16 %v922, %v921
        %v1032 = vpack.c.b16 %v924, %v923
        %v1033 = vpack.c.b16 %v926, %v925
        %v1034 = vpack.c.b16 %v928, %v927
        %v1035 = vpack.c.b16 %v930, %v929
        %v1036 = vpack.c.b16 %v932, %v931
        %v1037 = vpack.c.b16 %v934, %v933
        %v1038 = vpack.c.b16 %v936, %v935
        %v1039 = vpack.c.b16 %v938, %v937
        %v1040 = vpack.c.b16 %v940, %v939
        %v1041 = vpack.c.b16 %v942, %v941
        %v1042 = vpack.c.b16 %v944, %v943
        %v1043 = vpack.c.b16 %v946, %v945
        %v1044 = vpack.c.b16 %v948, %v947
        %v1051 = vunpack.c.l.b16 %v555
        %v1052 = vunpack.c.l.b16 %v556
        %v1053 = vunpack.c.l.b16 %v557
        %v1054 = vunpack.c.l.b16 %v558
        %v1055 = vunpack.c.l.b16 %v559
        %v1056 = vunpack.c.l.b16 %v560
        %v1057 = vpack.c.b16 %v1052, %v1051
        %v1058 = vpack.c.b16 %v1054, %v1053
        %v1059 = vpack.c.b16 %v1056, %v1055
        %vm1062 = vcmask 359424
        %v1064 = vsel %vm1062, %v949, 0
        %v1067 = vsel %vm1062, %v950, 0
        %v1070 = vsel %vm1062, %v951, 0
        %v1073 = vsel %vm1062, %v952, 0
        %v1076 = vsel %vm1062, %v953, 0
        %v1079 = vsel %vm1062, %v954, 0
        %v1082 = vsel %vm1062, %v955, 0
        %v1085 = vsel %vm1062, %v956, 0
        %v1088 = vsel %vm1062, %v957, 0
        %v1091 = vsel %vm1062, %v958, 0
        %v1094 = vsel %vm1062, %v959, 0
        %v1097 = vsel %vm1062, %v960, 0
        %v1100 = vsel %vm1062, %v961, 0
        %v1103 = vsel %vm1062, %v962, 0
        %v1106 = vsel %vm1062, %v963, 0
        %v1109 = vsel %vm1062, %v964, 0
        %v1112 = vsel %vm1062, %v965, 0
        %v1115 = vsel %vm1062, %v966, 0
        %v1118 = vsel %vm1062, %v967, 0
        %v1121 = vsel %vm1062, %v968, 0
        %v1124 = vsel %vm1062, %v969, 0
        %v1127 = vsel %vm1062, %v970, 0
        %v1130 = vsel %vm1062, %v971, 0
        %v1133 = vsel %vm1062, %v972, 0
        %v1136 = vsel %vm1062, %v973, 0
        %v1139 = vsel %vm1062, %v974, 0
        %v1142 = vsel %vm1062, %v975, 0
        %v1145 = vsel %vm1062, %v976, 0
        %v1148 = vsel %vm1062, %v977, 0
        %v1151 = vsel %vm1062, %v978, 0
        %v1154 = vsel %vm1062, %v979, 0
        %v1157 = vsel %vm1062, %v980, 0
        %v1160 = vsel %vm1062, %v981, 0
        %v1163 = vsel %vm1062, %v982, 0
        %v1166 = vsel %vm1062, %v983, 0
        %v1169 = vsel %vm1062, %v984, 0
        %v1172 = vsel %vm1062, %v985, 0
        %v1175 = vsel %vm1062, %v986, 0
        %v1178 = vsel %vm1062, %v987, 0
        %v1181 = vsel %vm1062, %v988, 0
        %v1184 = vsel %vm1062, %v989, 0
        %v1187 = vsel %vm1062, %v990, 0
        %v1190 = vsel %vm1062, %v991, 0
        %v1193 = vsel %vm1062, %v992, 0
        %v1196 = vsel %vm1062, %v993, 0
        %v1199 = vsel %vm1062, %v994, 0
        %v1202 = vsel %vm1062, %v995, 0
        %v1205 = vsel %vm1062, %v996, 0
        %v1208 = vsel %vm1062, %v997, 0
        %v1211 = vsel %vm1062, %v998, 0
        %v1214 = vsel %vm1062, %v999, 0
        %v1217 = vsel %vm1062, %v1000, 0
        %v1220 = vsel %vm1062, %v1001, 0
        %v1223 = vsel %vm1062, %v1002, 0
        %v1226 = vsel %vm1062, %v1003, 0
        %v1229 = vsel %vm1062, %v1004, 0
        %v1232 = vsel %vm1062, %v1005, 0
        %v1235 = vsel %vm1062, %v1006, 0
        %v1238 = vsel %vm1062, %v1007, 0
        %v1241 = vsel %vm1062, %v1008, 0
        %v1244 = vsel %vm1062, %v1009, 0
        %v1247 = vsel %vm1062, %v1010, 0
        %v1250 = vsel %vm1062, %v1011, 0
        %v1253 = vsel %vm1062, %v1012, 0
        %v1256 = vsel %vm1062, %v1013, 0
        %v1259 = vsel %vm1062, %v1014, 0
        %v1262 = vsel %vm1062, %v1015, 0
        %v1265 = vsel %vm1062, %v1016, 0
        %v1268 = vsel %vm1062, %v1017, 0
        %v1271 = vsel %vm1062, %v1018, 0
        %v1274 = vsel %vm1062, %v1019, 0
        %v1277 = vsel %vm1062, %v1020, 0
        %v1280 = vsel %vm1062, %v1021, 0
        %v1283 = vsel %vm1062, %v1022, 0
        %v1286 = vsel %vm1062, %v1023, 0
        %v1289 = vsel %vm1062, %v1024, 0
        %v1292 = vsel %vm1062, %v1025, 0
        %v1295 = vsel %vm1062, %v1026, 0
        %v1298 = vsel %vm1062, %v1027, 0
        %v1301 = vsel %vm1062, %v1028, 0
        %v1304 = vsel %vm1062, %v1029, 0
        %v1307 = vsel %vm1062, %v1030, 0
        %v1310 = vsel %vm1062, %v1031, 0
        %v1313 = vsel %vm1062, %v1032, 0
        %v1316 = vsel %vm1062, %v1033, 0
        %v1319 = vsel %vm1062, %v1034, 0
        %v1322 = vsel %vm1062, %v1035, 0
        %v1325 = vsel %vm1062, %v1036, 0
        %v1328 = vsel %vm1062, %v1037, 0
        %v1331 = vsel %vm1062, %v1038, 0
        %v1334 = vsel %vm1062, %v1039, 0
        %v1337 = vsel %vm1062, %v1040, 0
        %v1340 = vsel %vm1062, %v1041, 0
        %v1343 = vsel %vm1062, %v1042, 0
        %v1346 = vsel %vm1062, %v1043, 0
        %v1349 = vsel %vm1062, %v1044, 0
        %vm1351 = vcmask 1045504
        %v1353 = vsel %vm1351, %v1059, 0
        %1355 = vmatprep.subr.bf16.mxu0 0
        %1356 = vmatpush1.bf16.msra.mxu0 %v1057
        %1357 = vmatprep.subr.bf16.mxu0 0
        %1358 = vmatpush1.bf16.msra.mxu0 %v1058
        %1359 = vmatprep.subr.bf16.mxu0 0
        %1360 = vmatpush1.bf16.msra.mxu0 %v1353
        %1361 = vmatprep.subr.bf16.mxu0 0
        %1362 = vmatpush1.bf16.msra.mxu0 0
        %1363 = vmatprep.subr.bf16.mxu0 0
        %1364 = vmatpush1.bf16.msra.mxu0 0
        %1365 = vmatprep.subr.bf16.mxu0 0
        %1366 = vmatpush1.bf16.msra.mxu0 0
        %1367 = vmatprep.subr.bf16.mxu0 0
        %1368 = vmatpush1.bf16.msra.mxu0 0
        %1369 = vmatprep.subr.bf16.mxu0 0
        %1370 = vmatpush1.bf16.msra.mxu0 0
        %1371 = vmatprep.subr.bf16.mxu0 0
        %1372 = vmatpush1.bf16.msra.mxu0 0
        %1373 = vmatprep.subr.bf16.mxu0 0
        %1374 = vmatpush1.bf16.msra.mxu0 0
        %1375 = vmatprep.subr.bf16.mxu0 0
        %1376 = vmatpush1.bf16.msra.mxu0 0
        %1377 = vmatprep.subr.bf16.mxu0 0
        %1378 = vmatpush1.bf16.msra.mxu0 0
        %1379 = vmatprep.subr.bf16.mxu0 0
        %1380 = vmatpush1.bf16.msra.mxu0 0
        %1381 = vmatprep.subr.bf16.mxu0 0
        %1382 = vmatpush1.bf16.msra.mxu0 0
        %1383 = vmatprep.subr.bf16.mxu0 0
        %1384 = vmatpush1.bf16.msra.mxu0 0
        %1385 = vmatprep.subr.bf16.mxu0 0
        %1386 = vmatpush1.bf16.msra.mxu0 0
        %1387 = vmatprep.mubr.bf16.mxu0 0
        %1388 = vmatmul.mubr.bf16.gmra.mrb[0].mxu0 %v1064
        %v1389 = vpop.f32.mrb[0].mxu0
        %v1390 = vadd.f32 %v564, %v1389
        %v1391 = vpop.f32.mrb[0].mxu0
        %v1392 = vpop.f32.mrb[0].mxu0
        %v1393 = vadd.f32 %v564, %v1392
        %v1394 = vpop.f32.mrb[0].mxu0
        %1395 = vmatprep.mubr.bf16.mxu0 0
        %1396 = vmatmul.mubr.bf16.gmra.mrb[0].mxu0 %v1067
        %v1397 = vpop.f32.mrb[0].mxu0
        %v1398 = vadd.f32 %v564, %v1397
        %v1399 = vpop.f32.mrb[0].mxu0
        %v1400 = vpop.f32.mrb[0].mxu0
        %v1401 = vadd.f32 %v564, %v1400
        %v1402 = vpop.f32.mrb[0].mxu0
        %1403 = vmatprep.mubr.bf16.mxu0 0
        %1404 = vmatmul.mubr.bf16.gmra.mrb[0].mxu0 %v1070
        %v1405 = vpop.f32.mrb[0].mxu0
        %v1406 = vadd.f32 %v564, %v1405
        %v1407 = vpop.f32.mrb[0].mxu0
        %v1408 = vpop.f32.mrb[0].mxu0
        %v1409 = vadd.f32 %v564, %v1408
        %v1410 = vpop.f32.mrb[0].mxu0
        %1411 = vmatprep.mubr.bf16.mxu0 0
        %1412 = vmatmul.mubr.bf16.gmra.mrb[0].mxu0 %v1073
        %v1413 = vpop.f32.mrb[0].mxu0
        %v1414 = vadd.f32 %v564, %v1413
        %v1415 = vpop.f32.mrb[0].mxu0
        %v1416 = vpop.f32.mrb[0].mxu0
        %v1417 = vadd.f32 %v564, %v1416
        %v1418 = vpop.f32.mrb[0].mxu0
        %1419 = vmatprep.mubr.bf16.mxu0 0
        %1420 = vmatmul.mubr.bf16.gmra.mrb[0].mxu0 %v1076
        %v1421 = vpop.f32.mrb[0].mxu0
        %v1422 = vadd.f32 %v564, %v1421
        %v1423 = vpop.f32.mrb[0].mxu0
        %v1424 = vpop.f32.mrb[0].mxu0
        %v1425 = vadd.f32 %v564, %v1424
        %v1426 = vpop.f32.mrb[0].mxu0
        %1427 = vmatprep.mubr.bf16.mxu0 0
        %1428 = vmatmul.mubr.bf16.gmra.mrb[0].mxu0 %v1079
        %v1429 = vpop.f32.mrb[0].mxu0
        %v1430 = vadd.f32 %v564, %v1429
        %v1431 = vpop.f32.mrb[0].mxu0
        %v1432 = vpop.f32.mrb[0].mxu0
        %v1433 = vadd.f32 %v564, %v1432
        %v1434 = vpop.f32.mrb[0].mxu0
        %1435 = vmatprep.mubr.bf16.mxu0 0
        %1436 = vmatmul.mubr.bf16.gmra.mrb[0].mxu0 %v1082
        %v1437 = vpop.f32.mrb[0].mxu0
        %v1438 = vadd.f32 %v564, %v1437
        %v1439 = vpop.f32.mrb[0].mxu0
        %v1440 = vpop.f32.mrb[0].mxu0
        %v1441 = vadd.f32 %v564, %v1440
        %v1442 = vpop.f32.mrb[0].mxu0
        %1443 = vmatprep.mubr.bf16.mxu0 0
        %1444 = vmatmul.mubr.bf16.gmra.mrb[0].mxu0 %v1085
        %v1445 = vpop.f32.mrb[0].mxu0
        %v1446 = vadd.f32 %v564, %v1445
        %v1447 = vpop.f32.mrb[0].mxu0
        %v1448 = vpop.f32.mrb[0].mxu0
        %v1449 = vadd.f32 %v564, %v1448
        %v1450 = vpop.f32.mrb[0].mxu0
        %1451 = vmatprep.mubr.bf16.mxu0 0
        %1452 = vmatmul.mubr.bf16.gmra.mrb[0].mxu0 %v1088
        %v1453 = vpop.f32.mrb[0].mxu0
        %v1454 = vadd.f32 %v564, %v1453
        %v1455 = vpop.f32.mrb[0].mxu0
        %v1456 = vpop.f32.mrb[0].mxu0
        %v1457 = vadd.f32 %v564, %v1456
        %v1458 = vpop.f32.mrb[0].mxu0
        %1459 = vmatprep.mubr.bf16.mxu0 0
        %1460 = vmatmul.mubr.bf16.gmra.mrb[0].mxu0 %v1091
        %v1461 = vpop.f32.mrb[0].mxu0
        %v1462 = vadd.f32 %v564, %v1461
        %v1463 = vpop.f32.mrb[0].mxu0
        %v1464 = vpop.f32.mrb[0].mxu0
        %v1465 = vadd.f32 %v564, %v1464
        %v1466 = vpop.f32.mrb[0].mxu0
        %1467 = vmatprep.mubr.bf16.mxu0 0
        %1468 = vmatmul.mubr.bf16.gmra.mrb[0].mxu0 %v1094
        %v1469 = vpop.f32.mrb[0].mxu0
        %v1470 = vadd.f32 %v564, %v1469
        %v1471 = vpop.f32.mrb[0].mxu0
        %v1472 = vpop.f32.mrb[0].mxu0
        %v1473 = vadd.f32 %v564, %v1472
        %v1474 = vpop.f32.mrb[0].mxu0
        %1475 = vmatprep.mubr.bf16.mxu0 0
        %1476 = vmatmul.mubr.bf16.gmra.mrb[0].mxu0 %v1097
        %v1477 = vpop.f32.mrb[0].mxu0
        %v1478 = vadd.f32 %v564, %v1477
        %v1479 = vpop.f32.mrb[0].mxu0
        %v1480 = vpop.f32.mrb[0].mxu0
        %v1481 = vadd.f32 %v564, %v1480
        %v1482 = vpop.f32.mrb[0].mxu0
        %1483 = vmatprep.mubr.bf16.mxu0 0
        %1484 = vmatmul.mubr.bf16.gmra.mrb[0].mxu0 %v1100
        %v1485 = vpop.f32.mrb[0].mxu0
        %v1486 = vadd.f32 %v564, %v1485
        %v1487 = vpop.f32.mrb[0].mxu0
        %v1488 = vpop.f32.mrb[0].mxu0
        %v1489 = vadd.f32 %v564, %v1488
        %v1490 = vpop.f32.mrb[0].mxu0
        %1491 = vmatprep.mubr.bf16.mxu0 0
        %1492 = vmatmul.mubr.bf16.gmra.mrb[0].mxu0 %v1103
        %v1493 = vpop.f32.mrb[0].mxu0
        %v1494 = vadd.f32 %v564, %v1493
        %v1495 = vpop.f32.mrb[0].mxu0
        %v1496 = vpop.f32.mrb[0].mxu0
        %v1497 = vadd.f32 %v564, %v1496
        %v1498 = vpop.f32.mrb[0].mxu0
        %1499 = vmatprep.mubr.bf16.mxu0 0
        %1500 = vmatmul.mubr.bf16.gmra.mrb[0].mxu0 %v1106
        %v1501 = vpop.f32.mrb[0].mxu0
        %v1502 = vadd.f32 %v564, %v1501
        %v1503 = vpop.f32.mrb[0].mxu0
        %v1504 = vpop.f32.mrb[0].mxu0
        %v1505 = vadd.f32 %v564, %v1504
        %v1506 = vpop.f32.mrb[0].mxu0
        %1507 = vmatprep.mubr.bf16.mxu0 0
        %1508 = vmatmul.mubr.bf16.gmra.mrb[0].mxu0 %v1109
        %v1509 = vpop.f32.mrb[0].mxu0
        %v1510 = vadd.f32 %v564, %v1509
        %v1511 = vpop.f32.mrb[0].mxu0
        %v1512 = vpop.f32.mrb[0].mxu0
        %v1513 = vadd.f32 %v564, %v1512
        %v1514 = vpop.f32.mrb[0].mxu0
        %1515 = vmatprep.mubr.bf16.mxu0 0
        %1516 = vmatmul.mubr.bf16.gmra.mrb[0].mxu0 %v1112
        %v1517 = vpop.f32.mrb[0].mxu0
        %v1518 = vadd.f32 %v564, %v1517
        %v1519 = vpop.f32.mrb[0].mxu0
        %v1520 = vpop.f32.mrb[0].mxu0
        %v1521 = vadd.f32 %v564, %v1520
        %v1522 = vpop.f32.mrb[0].mxu0
        %1523 = vmatprep.mubr.bf16.mxu0 0
        %1524 = vmatmul.mubr.bf16.gmra.mrb[0].mxu0 %v1115
        %v1525 = vpop.f32.mrb[0].mxu0
        %v1526 = vadd.f32 %v564, %v1525
        %v1527 = vpop.f32.mrb[0].mxu0
        %v1528 = vpop.f32.mrb[0].mxu0
        %v1529 = vadd.f32 %v564, %v1528
        %v1530 = vpop.f32.mrb[0].mxu0
        %1531 = vmatprep.mubr.bf16.mxu0 0
        %1532 = vmatmul.mubr.bf16.gmra.mrb[0].mxu0 %v1118
        %v1533 = vpop.f32.mrb[0].mxu0
        %v1534 = vadd.f32 %v564, %v1533
        %v1535 = vpop.f32.mrb[0].mxu0
        %v1536 = vpop.f32.mrb[0].mxu0
        %v1537 = vadd.f32 %v564, %v1536
        %v1538 = vpop.f32.mrb[0].mxu0
        %1539 = vmatprep.mubr.bf16.mxu0 0
        %1540 = vmatmul.mubr.bf16.gmra.mrb[0].mxu0 %v1121
        %v1541 = vpop.f32.mrb[0].mxu0
        %v1542 = vadd.f32 %v564, %v1541
        %v1543 = vpop.f32.mrb[0].mxu0
        %v1544 = vpop.f32.mrb[0].mxu0
        %v1545 = vadd.f32 %v564, %v1544
        %v1546 = vpop.f32.mrb[0].mxu0
        %1547 = vmatprep.mubr.bf16.mxu0 0
        %1548 = vmatmul.mubr.bf16.gmra.mrb[0].mxu0 %v1124
        %v1549 = vpop.f32.mrb[0].mxu0
        %v1550 = vadd.f32 %v564, %v1549
        %v1551 = vpop.f32.mrb[0].mxu0
        %v1552 = vpop.f32.mrb[0].mxu0
        %v1553 = vadd.f32 %v564, %v1552
        %v1554 = vpop.f32.mrb[0].mxu0
        %1555 = vmatprep.mubr.bf16.mxu0 0
        %1556 = vmatmul.mubr.bf16.gmra.mrb[0].mxu0 %v1127
        %v1557 = vpop.f32.mrb[0].mxu0
        %v1558 = vadd.f32 %v564, %v1557
        %v1559 = vpop.f32.mrb[0].mxu0
        %v1560 = vpop.f32.mrb[0].mxu0
        %v1561 = vadd.f32 %v564, %v1560
        %v1562 = vpop.f32.mrb[0].mxu0
        %1563 = vmatprep.mubr.bf16.mxu0 0
        %1564 = vmatmul.mubr.bf16.gmra.mrb[0].mxu0 %v1130
        %v1565 = vpop.f32.mrb[0].mxu0
        %v1566 = vadd.f32 %v564, %v1565
        %v1567 = vpop.f32.mrb[0].mxu0
        %v1568 = vpop.f32.mrb[0].mxu0
        %v1569 = vadd.f32 %v564, %v1568
        %v1570 = vpop.f32.mrb[0].mxu0
        %1571 = vmatprep.mubr.bf16.mxu0 0
        %1572 = vmatmul.mubr.bf16.gmra.mrb[0].mxu0 %v1133
        %v1573 = vpop.f32.mrb[0].mxu0
        %v1574 = vadd.f32 %v564, %v1573
        %v1575 = vpop.f32.mrb[0].mxu0
        %v1576 = vpop.f32.mrb[0].mxu0
        %v1577 = vadd.f32 %v564, %v1576
        %v1578 = vpop.f32.mrb[0].mxu0
        %1579 = vmatprep.mubr.bf16.mxu0 0
        %1580 = vmatmul.mubr.bf16.gmra.mrb[0].mxu0 %v1136
        %v1581 = vpop.f32.mrb[0].mxu0
        %v1582 = vadd.f32 %v564, %v1581
        %v1583 = vpop.f32.mrb[0].mxu0
        %v1584 = vpop.f32.mrb[0].mxu0
        %v1585 = vadd.f32 %v564, %v1584
        %v1586 = vpop.f32.mrb[0].mxu0
        %1587 = vmatprep.mubr.bf16.mxu0 0
        %1588 = vmatmul.mubr.bf16.gmra.mrb[0].mxu0 %v1139
        %v1589 = vpop.f32.mrb[0].mxu0
        %v1590 = vadd.f32 %v564, %v1589
        %v1591 = vpop.f32.mrb[0].mxu0
        %v1592 = vpop.f32.mrb[0].mxu0
        %v1593 = vadd.f32 %v564, %v1592
        %v1594 = vpop.f32.mrb[0].mxu0
        %1595 = vmatprep.mubr.bf16.mxu0 0
        %1596 = vmatmul.mubr.bf16.gmra.mrb[0].mxu0 %v1142
        %v1597 = vpop.f32.mrb[0].mxu0
        %v1598 = vadd.f32 %v564, %v1597
        %v1599 = vpop.f32.mrb[0].mxu0
        %v1600 = vpop.f32.mrb[0].mxu0
        %v1601 = vadd.f32 %v564, %v1600
        %v1602 = vpop.f32.mrb[0].mxu0
        %1603 = vmatprep.mubr.bf16.mxu0 0
        %1604 = vmatmul.mubr.bf16.gmra.mrb[0].mxu0 %v1145
        %v1605 = vpop.f32.mrb[0].mxu0
        %v1606 = vadd.f32 %v564, %v1605
        %v1607 = vpop.f32.mrb[0].mxu0
        %v1608 = vpop.f32.mrb[0].mxu0
        %v1609 = vadd.f32 %v564, %v1608
        %v1610 = vpop.f32.mrb[0].mxu0
        %1611 = vmatprep.mubr.bf16.mxu0 0
        %1612 = vmatmul.mubr.bf16.gmra.mrb[0].mxu0 %v1148
        %v1613 = vpop.f32.mrb[0].mxu0
        %v1614 = vadd.f32 %v564, %v1613
        %v1615 = vpop.f32.mrb[0].mxu0
        %v1616 = vpop.f32.mrb[0].mxu0
        %v1617 = vadd.f32 %v564, %v1616
        %v1618 = vpop.f32.mrb[0].mxu0
        %1619 = vmatprep.mubr.bf16.mxu0 0
        %1620 = vmatmul.mubr.bf16.gmra.mrb[0].mxu0 %v1151
        %v1621 = vpop.f32.mrb[0].mxu0
        %v1622 = vadd.f32 %v564, %v1621
        %v1623 = vpop.f32.mrb[0].mxu0
        %v1624 = vpop.f32.mrb[0].mxu0
        %v1625 = vadd.f32 %v564, %v1624
        %v1626 = vpop.f32.mrb[0].mxu0
        %1627 = vmatprep.mubr.bf16.mxu0 0
        %1628 = vmatmul.mubr.bf16.gmra.mrb[0].mxu0 %v1154
        %v1629 = vpop.f32.mrb[0].mxu0
        %v1630 = vadd.f32 %v564, %v1629
        %v1631 = vpop.f32.mrb[0].mxu0
        %v1632 = vpop.f32.mrb[0].mxu0
        %v1633 = vadd.f32 %v564, %v1632
        %v1634 = vpop.f32.mrb[0].mxu0
        %1635 = vmatprep.mubr.bf16.mxu0 0
        %1636 = vmatmul.mubr.bf16.gmra.mrb[0].mxu0 %v1157
        %v1637 = vpop.f32.mrb[0].mxu0
        %v1638 = vadd.f32 %v564, %v1637
        %v1639 = vpop.f32.mrb[0].mxu0
        %v1640 = vpop.f32.mrb[0].mxu0
        %v1641 = vadd.f32 %v564, %v1640
        %v1642 = vpop.f32.mrb[0].mxu0
        %1643 = vmatprep.mubr.bf16.mxu0 0
        %1644 = vmatmul.mubr.bf16.gmra.mrb[0].mxu0 %v1160
        %v1645 = vpop.f32.mrb[0].mxu0
        %v1646 = vadd.f32 %v564, %v1645
        %v1647 = vpop.f32.mrb[0].mxu0
        %v1648 = vpop.f32.mrb[0].mxu0
        %v1649 = vadd.f32 %v564, %v1648
        %v1650 = vpop.f32.mrb[0].mxu0
        %1651 = vmatprep.mubr.bf16.mxu0 0
        %1652 = vmatmul.mubr.bf16.gmra.mrb[0].mxu0 %v1163
        %v1653 = vpop.f32.mrb[0].mxu0
        %v1654 = vadd.f32 %v564, %v1653
        %v1655 = vpop.f32.mrb[0].mxu0
        %v1656 = vpop.f32.mrb[0].mxu0
        %v1657 = vadd.f32 %v564, %v1656
        %v1658 = vpop.f32.mrb[0].mxu0
        %1659 = vmatprep.mubr.bf16.mxu0 0
        %1660 = vmatmul.mubr.bf16.gmra.mrb[0].mxu0 %v1166
        %v1661 = vpop.f32.mrb[0].mxu0
        %v1662 = vadd.f32 %v564, %v1661
        %v1663 = vpop.f32.mrb[0].mxu0
        %v1664 = vpop.f32.mrb[0].mxu0
        %v1665 = vadd.f32 %v564, %v1664
        %v1666 = vpop.f32.mrb[0].mxu0
        %1667 = vmatprep.mubr.bf16.mxu0 0
        %1668 = vmatmul.mubr.bf16.gmra.mrb[0].mxu0 %v1169
        %v1669 = vpop.f32.mrb[0].mxu0
        %v1670 = vadd.f32 %v564, %v1669
        %v1671 = vpop.f32.mrb[0].mxu0
        %v1672 = vpop.f32.mrb[0].mxu0
        %v1673 = vadd.f32 %v564, %v1672
        %v1674 = vpop.f32.mrb[0].mxu0
        %1675 = vmatprep.mubr.bf16.mxu0 0
        %1676 = vmatmul.mubr.bf16.gmra.mrb[0].mxu0 %v1172
        %v1677 = vpop.f32.mrb[0].mxu0
        %v1678 = vadd.f32 %v564, %v1677
        %v1679 = vpop.f32.mrb[0].mxu0
        %v1680 = vpop.f32.mrb[0].mxu0
        %v1681 = vadd.f32 %v564, %v1680
        %v1682 = vpop.f32.mrb[0].mxu0
        %1683 = vmatprep.mubr.bf16.mxu0 0
        %1684 = vmatmul.mubr.bf16.gmra.mrb[0].mxu0 %v1175
        %v1685 = vpop.f32.mrb[0].mxu0
        %v1686 = vadd.f32 %v564, %v1685
        %v1687 = vpop.f32.mrb[0].mxu0
        %v1688 = vpop.f32.mrb[0].mxu0
        %v1689 = vadd.f32 %v564, %v1688
        %v1690 = vpop.f32.mrb[0].mxu0
        %1691 = vmatprep.mubr.bf16.mxu0 0
        %1692 = vmatmul.mubr.bf16.gmra.mrb[0].mxu0 %v1178
        %v1693 = vpop.f32.mrb[0].mxu0
        %v1694 = vadd.f32 %v564, %v1693
        %v1695 = vpop.f32.mrb[0].mxu0
        %v1696 = vpop.f32.mrb[0].mxu0
        %v1697 = vadd.f32 %v564, %v1696
        %v1698 = vpop.f32.mrb[0].mxu0
        %1699 = vmatprep.mubr.bf16.mxu0 0
        %1700 = vmatmul.mubr.bf16.gmra.mrb[0].mxu0 %v1181
        %v1701 = vpop.f32.mrb[0].mxu0
        %v1702 = vadd.f32 %v564, %v1701
        %v1703 = vpop.f32.mrb[0].mxu0
        %v1704 = vpop.f32.mrb[0].mxu0
        %v1705 = vadd.f32 %v564, %v1704
        %v1706 = vpop.f32.mrb[0].mxu0
        %1707 = vmatprep.mubr.bf16.mxu0 0
        %1708 = vmatmul.mubr.bf16.gmra.mrb[0].mxu0 %v1184
        %v1709 = vpop.f32.mrb[0].mxu0
        %v1710 = vadd.f32 %v564, %v1709
        %v1711 = vpop.f32.mrb[0].mxu0
        %v1712 = vpop.f32.mrb[0].mxu0
        %v1713 = vadd.f32 %v564, %v1712
        %v1714 = vpop.f32.mrb[0].mxu0
        %1715 = vmatprep.mubr.bf16.mxu0 0
        %1716 = vmatmul.mubr.bf16.gmra.mrb[0].mxu0 %v1187
        %v1717 = vpop.f32.mrb[0].mxu0
        %v1718 = vadd.f32 %v564, %v1717
        %v1719 = vpop.f32.mrb[0].mxu0
        %v1720 = vpop.f32.mrb[0].mxu0
        %v1721 = vadd.f32 %v564, %v1720
        %v1722 = vpop.f32.mrb[0].mxu0
        %1723 = vmatprep.mubr.bf16.mxu0 0
        %1724 = vmatmul.mubr.bf16.gmra.mrb[0].mxu0 %v1190
        %v1725 = vpop.f32.mrb[0].mxu0
        %v1726 = vadd.f32 %v564, %v1725
        %v1727 = vpop.f32.mrb[0].mxu0
        %v1728 = vpop.f32.mrb[0].mxu0
        %v1729 = vadd.f32 %v564, %v1728
        %v1730 = vpop.f32.mrb[0].mxu0
        %1731 = vmatprep.mubr.bf16.mxu0 0
        %1732 = vmatmul.mubr.bf16.gmra.mrb[0].mxu0 %v1193
        %v1733 = vpop.f32.mrb[0].mxu0
        %v1734 = vadd.f32 %v564, %v1733
        %v1735 = vpop.f32.mrb[0].mxu0
        %v1736 = vpop.f32.mrb[0].mxu0
        %v1737 = vadd.f32 %v564, %v1736
        %v1738 = vpop.f32.mrb[0].mxu0
        %1739 = vmatprep.mubr.bf16.mxu0 0
        %1740 = vmatmul.mubr.bf16.gmra.mrb[0].mxu0 %v1196
        %v1741 = vpop.f32.mrb[0].mxu0
        %v1742 = vadd.f32 %v564, %v1741
        %v1743 = vpop.f32.mrb[0].mxu0
        %v1744 = vpop.f32.mrb[0].mxu0
        %v1745 = vadd.f32 %v564, %v1744
        %v1746 = vpop.f32.mrb[0].mxu0
        %1747 = vmatprep.mubr.bf16.mxu0 0
        %1748 = vmatmul.mubr.bf16.gmra.mrb[0].mxu0 %v1199
        %v1749 = vpop.f32.mrb[0].mxu0
        %v1750 = vadd.f32 %v564, %v1749
        %v1751 = vpop.f32.mrb[0].mxu0
        %v1752 = vpop.f32.mrb[0].mxu0
        %v1753 = vadd.f32 %v564, %v1752
        %v1754 = vpop.f32.mrb[0].mxu0
        %1755 = vmatprep.mubr.bf16.mxu0 0
        %1756 = vmatmul.mubr.bf16.gmra.mrb[0].mxu0 %v1202
        %v1757 = vpop.f32.mrb[0].mxu0
        %v1758 = vadd.f32 %v564, %v1757
        %v1759 = vpop.f32.mrb[0].mxu0
        %v1760 = vpop.f32.mrb[0].mxu0
        %v1761 = vadd.f32 %v564, %v1760
        %v1762 = vpop.f32.mrb[0].mxu0
        %1763 = vmatprep.mubr.bf16.mxu0 0
        %1764 = vmatmul.mubr.bf16.gmra.mrb[0].mxu0 %v1205
        %v1765 = vpop.f32.mrb[0].mxu0
        %v1766 = vadd.f32 %v564, %v1765
        %v1767 = vpop.f32.mrb[0].mxu0
        %v1768 = vpop.f32.mrb[0].mxu0
        %v1769 = vadd.f32 %v564, %v1768
        %v1770 = vpop.f32.mrb[0].mxu0
        %1771 = vmatprep.mubr.bf16.mxu0 0
        %1772 = vmatmul.mubr.bf16.gmra.mrb[0].mxu0 %v1208
        %v1773 = vpop.f32.mrb[0].mxu0
        %v1774 = vadd.f32 %v564, %v1773
        %v1775 = vpop.f32.mrb[0].mxu0
        %v1776 = vpop.f32.mrb[0].mxu0
        %v1777 = vadd.f32 %v564, %v1776
        %v1778 = vpop.f32.mrb[0].mxu0
        %1779 = vmatprep.mubr.bf16.mxu0 0
        %1780 = vmatmul.mubr.bf16.gmra.mrb[0].mxu0 %v1211
        %v1781 = vpop.f32.mrb[0].mxu0
        %v1782 = vadd.f32 %v564, %v1781
        %v1783 = vpop.f32.mrb[0].mxu0
        %v1784 = vpop.f32.mrb[0].mxu0
        %v1785 = vadd.f32 %v564, %v1784
        %v1786 = vpop.f32.mrb[0].mxu0
        %1787 = vmatprep.mubr.bf16.mxu0 0
        %1788 = vmatmul.mubr.bf16.gmra.mrb[0].mxu0 %v1214
        %v1789 = vpop.f32.mrb[0].mxu0
        %v1790 = vadd.f32 %v564, %v1789
        %v1791 = vpop.f32.mrb[0].mxu0
        %v1792 = vpop.f32.mrb[0].mxu0
        %v1793 = vadd.f32 %v564, %v1792
        %v1794 = vpop.f32.mrb[0].mxu0
        %1795 = vmatprep.mubr.bf16.mxu0 0
        %1796 = vmatmul.mubr.bf16.gmra.mrb[0].mxu0 %v1217
        %v1797 = vpop.f32.mrb[0].mxu0
        %v1798 = vadd.f32 %v564, %v1797
        %v1799 = vpop.f32.mrb[0].mxu0
        %v1800 = vpop.f32.mrb[0].mxu0
        %v1801 = vadd.f32 %v564, %v1800
        %v1802 = vpop.f32.mrb[0].mxu0
        %1803 = vmatprep.mubr.bf16.mxu0 0
        %1804 = vmatmul.mubr.bf16.gmra.mrb[0].mxu0 %v1220
        %v1805 = vpop.f32.mrb[0].mxu0
        %v1806 = vadd.f32 %v564, %v1805
        %v1807 = vpop.f32.mrb[0].mxu0
        %v1808 = vpop.f32.mrb[0].mxu0
        %v1809 = vadd.f32 %v564, %v1808
        %v1810 = vpop.f32.mrb[0].mxu0
        %1811 = vmatprep.mubr.bf16.mxu0 0
        %1812 = vmatmul.mubr.bf16.gmra.mrb[0].mxu0 %v1223
        %v1813 = vpop.f32.mrb[0].mxu0
        %v1814 = vadd.f32 %v564, %v1813
        %v1815 = vpop.f32.mrb[0].mxu0
        %v1816 = vpop.f32.mrb[0].mxu0
        %v1817 = vadd.f32 %v564, %v1816
        %v1818 = vpop.f32.mrb[0].mxu0
        %1819 = vmatprep.mubr.bf16.mxu0 0
        %1820 = vmatmul.mubr.bf16.gmra.mrb[0].mxu0 %v1226
        %v1821 = vpop.f32.mrb[0].mxu0
        %v1822 = vadd.f32 %v564, %v1821
        %v1823 = vpop.f32.mrb[0].mxu0
        %v1824 = vpop.f32.mrb[0].mxu0
        %v1825 = vadd.f32 %v564, %v1824
        %v1826 = vpop.f32.mrb[0].mxu0
        %1827 = vmatprep.mubr.bf16.mxu0 0
        %1828 = vmatmul.mubr.bf16.gmra.mrb[0].mxu0 %v1229
        %v1829 = vpop.f32.mrb[0].mxu0
        %v1830 = vadd.f32 %v564, %v1829
        %v1831 = vpop.f32.mrb[0].mxu0
        %v1832 = vpop.f32.mrb[0].mxu0
        %v1833 = vadd.f32 %v564, %v1832
        %v1834 = vpop.f32.mrb[0].mxu0
        %1835 = vmatprep.mubr.bf16.mxu0 0
        %1836 = vmatmul.mubr.bf16.gmra.mrb[0].mxu0 %v1232
        %v1837 = vpop.f32.mrb[0].mxu0
        %v1838 = vadd.f32 %v564, %v1837
        %v1839 = vpop.f32.mrb[0].mxu0
        %v1840 = vpop.f32.mrb[0].mxu0
        %v1841 = vadd.f32 %v564, %v1840
        %v1842 = vpop.f32.mrb[0].mxu0
        %1843 = vmatprep.mubr.bf16.mxu0 0
        %1844 = vmatmul.mubr.bf16.gmra.mrb[0].mxu0 %v1235
        %v1845 = vpop.f32.mrb[0].mxu0
        %v1846 = vadd.f32 %v564, %v1845
        %v1847 = vpop.f32.mrb[0].mxu0
        %v1848 = vpop.f32.mrb[0].mxu0
        %v1849 = vadd.f32 %v564, %v1848
        %v1850 = vpop.f32.mrb[0].mxu0
        %1851 = vmatprep.mubr.bf16.mxu0 0
        %1852 = vmatmul.mubr.bf16.gmra.mrb[0].mxu0 %v1238
        %v1853 = vpop.f32.mrb[0].mxu0
        %v1854 = vadd.f32 %v564, %v1853
        %v1855 = vpop.f32.mrb[0].mxu0
        %v1856 = vpop.f32.mrb[0].mxu0
        %v1857 = vadd.f32 %v564, %v1856
        %v1858 = vpop.f32.mrb[0].mxu0
        %1859 = vmatprep.mubr.bf16.mxu0 0
        %1860 = vmatmul.mubr.bf16.gmra.mrb[0].mxu0 %v1241
        %v1861 = vpop.f32.mrb[0].mxu0
        %v1862 = vadd.f32 %v564, %v1861
        %v1863 = vpop.f32.mrb[0].mxu0
        %v1864 = vpop.f32.mrb[0].mxu0
        %v1865 = vadd.f32 %v564, %v1864
        %v1866 = vpop.f32.mrb[0].mxu0
        %1867 = vmatprep.mubr.bf16.mxu0 0
        %1868 = vmatmul.mubr.bf16.gmra.mrb[0].mxu0 %v1244
        %v1869 = vpop.f32.mrb[0].mxu0
        %v1870 = vadd.f32 %v564, %v1869
        %v1871 = vpop.f32.mrb[0].mxu0
        %v1872 = vpop.f32.mrb[0].mxu0
        %v1873 = vadd.f32 %v564, %v1872
        %v1874 = vpop.f32.mrb[0].mxu0
        %1875 = vmatprep.mubr.bf16.mxu0 0
        %1876 = vmatmul.mubr.bf16.gmra.mrb[0].mxu0 %v1247
        %v1877 = vpop.f32.mrb[0].mxu0
        %v1878 = vadd.f32 %v564, %v1877
        %v1879 = vpop.f32.mrb[0].mxu0
        %v1880 = vpop.f32.mrb[0].mxu0
        %v1881 = vadd.f32 %v564, %v1880
        %v1882 = vpop.f32.mrb[0].mxu0
        %1883 = vmatprep.mubr.bf16.mxu0 0
        %1884 = vmatmul.mubr.bf16.gmra.mrb[0].mxu0 %v1250
        %v1885 = vpop.f32.mrb[0].mxu0
        %v1886 = vadd.f32 %v564, %v1885
        %v1887 = vpop.f32.mrb[0].mxu0
        %v1888 = vpop.f32.mrb[0].mxu0
        %v1889 = vadd.f32 %v564, %v1888
        %v1890 = vpop.f32.mrb[0].mxu0
        %1891 = vmatprep.mubr.bf16.mxu0 0
        %1892 = vmatmul.mubr.bf16.gmra.mrb[0].mxu0 %v1253
        %v1893 = vpop.f32.mrb[0].mxu0
        %v1894 = vadd.f32 %v564, %v1893
        %v1895 = vpop.f32.mrb[0].mxu0
        %v1896 = vpop.f32.mrb[0].mxu0
        %v1897 = vadd.f32 %v564, %v1896
        %v1898 = vpop.f32.mrb[0].mxu0
        %1899 = vmatprep.mubr.bf16.mxu0 0
        %1900 = vmatmul.mubr.bf16.gmra.mrb[0].mxu0 %v1256
        %v1901 = vpop.f32.mrb[0].mxu0
        %v1902 = vadd.f32 %v564, %v1901
        %v1903 = vpop.f32.mrb[0].mxu0
        %v1904 = vpop.f32.mrb[0].mxu0
        %v1905 = vadd.f32 %v564, %v1904
        %v1906 = vpop.f32.mrb[0].mxu0
        %1907 = vmatprep.mubr.bf16.mxu0 0
        %1908 = vmatmul.mubr.bf16.gmra.mrb[0].mxu0 %v1259
        %v1909 = vpop.f32.mrb[0].mxu0
        %v1910 = vadd.f32 %v564, %v1909
        %v1911 = vpop.f32.mrb[0].mxu0
        %v1912 = vpop.f32.mrb[0].mxu0
        %v1913 = vadd.f32 %v564, %v1912
        %v1914 = vpop.f32.mrb[0].mxu0
        %1915 = vmatprep.mubr.bf16.mxu0 0
        %1916 = vmatmul.mubr.bf16.gmra.mrb[0].mxu0 %v1262
        %v1917 = vpop.f32.mrb[0].mxu0
        %v1918 = vadd.f32 %v564, %v1917
        %v1919 = vpop.f32.mrb[0].mxu0
        %v1920 = vpop.f32.mrb[0].mxu0
        %v1921 = vadd.f32 %v564, %v1920
        %v1922 = vpop.f32.mrb[0].mxu0
        %1923 = vmatprep.mubr.bf16.mxu0 0
        %1924 = vmatmul.mubr.bf16.gmra.mrb[0].mxu0 %v1265
        %v1925 = vpop.f32.mrb[0].mxu0
        %v1926 = vadd.f32 %v564, %v1925
        %v1927 = vpop.f32.mrb[0].mxu0
        %v1928 = vpop.f32.mrb[0].mxu0
        %v1929 = vadd.f32 %v564, %v1928
        %v1930 = vpop.f32.mrb[0].mxu0
        %1931 = vmatprep.mubr.bf16.mxu0 0
        %1932 = vmatmul.mubr.bf16.gmra.mrb[0].mxu0 %v1268
        %v1933 = vpop.f32.mrb[0].mxu0
        %v1934 = vadd.f32 %v564, %v1933
        %v1935 = vpop.f32.mrb[0].mxu0
        %v1936 = vpop.f32.mrb[0].mxu0
        %v1937 = vadd.f32 %v564, %v1936
        %v1938 = vpop.f32.mrb[0].mxu0
        %1939 = vmatprep.mubr.bf16.mxu0 0
        %1940 = vmatmul.mubr.bf16.gmra.mrb[0].mxu0 %v1271
        %v1941 = vpop.f32.mrb[0].mxu0
        %v1942 = vadd.f32 %v564, %v1941
        %v1943 = vpop.f32.mrb[0].mxu0
        %v1944 = vpop.f32.mrb[0].mxu0
        %v1945 = vadd.f32 %v564, %v1944
        %v1946 = vpop.f32.mrb[0].mxu0
        %1947 = vmatprep.mubr.bf16.mxu0 0
        %1948 = vmatmul.mubr.bf16.gmra.mrb[0].mxu0 %v1274
        %v1949 = vpop.f32.mrb[0].mxu0
        %v1950 = vadd.f32 %v564, %v1949
        %v1951 = vpop.f32.mrb[0].mxu0
        %v1952 = vpop.f32.mrb[0].mxu0
        %v1953 = vadd.f32 %v564, %v1952
        %v1954 = vpop.f32.mrb[0].mxu0
        %1955 = vmatprep.mubr.bf16.mxu0 0
        %1956 = vmatmul.mubr.bf16.gmra.mrb[0].mxu0 %v1277
        %v1957 = vpop.f32.mrb[0].mxu0
        %v1958 = vadd.f32 %v564, %v1957
        %v1959 = vpop.f32.mrb[0].mxu0
        %v1960 = vpop.f32.mrb[0].mxu0
        %v1961 = vadd.f32 %v564, %v1960
        %v1962 = vpop.f32.mrb[0].mxu0
        %1963 = vmatprep.mubr.bf16.mxu0 0
        %1964 = vmatmul.mubr.bf16.gmra.mrb[0].mxu0 %v1280
        %v1965 = vpop.f32.mrb[0].mxu0
        %v1966 = vadd.f32 %v564, %v1965
        %v1967 = vpop.f32.mrb[0].mxu0
        %v1968 = vpop.f32.mrb[0].mxu0
        %v1969 = vadd.f32 %v564, %v1968
        %v1970 = vpop.f32.mrb[0].mxu0
        %1971 = vmatprep.mubr.bf16.mxu0 0
        %1972 = vmatmul.mubr.bf16.gmra.mrb[0].mxu0 %v1283
        %v1973 = vpop.f32.mrb[0].mxu0
        %v1974 = vadd.f32 %v564, %v1973
        %v1975 = vpop.f32.mrb[0].mxu0
        %v1976 = vpop.f32.mrb[0].mxu0
        %v1977 = vadd.f32 %v564, %v1976
        %v1978 = vpop.f32.mrb[0].mxu0
        %1979 = vmatprep.mubr.bf16.mxu0 0
        %1980 = vmatmul.mubr.bf16.gmra.mrb[0].mxu0 %v1286
        %v1981 = vpop.f32.mrb[0].mxu0
        %v1982 = vadd.f32 %v564, %v1981
        %v1983 = vpop.f32.mrb[0].mxu0
        %v1984 = vpop.f32.mrb[0].mxu0
        %v1985 = vadd.f32 %v564, %v1984
        %v1986 = vpop.f32.mrb[0].mxu0
        %1987 = vmatprep.mubr.bf16.mxu0 0
        %1988 = vmatmul.mubr.bf16.gmra.mrb[0].mxu0 %v1289
        %v1989 = vpop.f32.mrb[0].mxu0
        %v1990 = vadd.f32 %v564, %v1989
        %v1991 = vpop.f32.mrb[0].mxu0
        %v1992 = vpop.f32.mrb[0].mxu0
        %v1993 = vadd.f32 %v564, %v1992
        %v1994 = vpop.f32.mrb[0].mxu0
        %1995 = vmatprep.mubr.bf16.mxu0 0
        %1996 = vmatmul.mubr.bf16.gmra.mrb[0].mxu0 %v1292
        %v1997 = vpop.f32.mrb[0].mxu0
        %v1998 = vadd.f32 %v564, %v1997
        %v1999 = vpop.f32.mrb[0].mxu0
        %v2000 = vpop.f32.mrb[0].mxu0
        %v2001 = vadd.f32 %v564, %v2000
        %v2002 = vpop.f32.mrb[0].mxu0
        %2003 = vmatprep.mubr.bf16.mxu0 0
        %2004 = vmatmul.mubr.bf16.gmra.mrb[0].mxu0 %v1295
        %v2005 = vpop.f32.mrb[0].mxu0
        %v2006 = vadd.f32 %v564, %v2005
        %v2007 = vpop.f32.mrb[0].mxu0
        %v2008 = vpop.f32.mrb[0].mxu0
        %v2009 = vadd.f32 %v564, %v2008
        %v2010 = vpop.f32.mrb[0].mxu0
        %2011 = vmatprep.mubr.bf16.mxu0 0
        %2012 = vmatmul.mubr.bf16.gmra.mrb[0].mxu0 %v1298
        %v2013 = vpop.f32.mrb[0].mxu0
        %v2014 = vadd.f32 %v564, %v2013
        %v2015 = vpop.f32.mrb[0].mxu0
        %v2016 = vpop.f32.mrb[0].mxu0
        %v2017 = vadd.f32 %v564, %v2016
        %v2018 = vpop.f32.mrb[0].mxu0
        %2019 = vmatprep.mubr.bf16.mxu0 0
        %2020 = vmatmul.mubr.bf16.gmra.mrb[0].mxu0 %v1301
        %v2021 = vpop.f32.mrb[0].mxu0
        %v2022 = vadd.f32 %v564, %v2021
        %v2023 = vpop.f32.mrb[0].mxu0
        %v2024 = vpop.f32.mrb[0].mxu0
        %v2025 = vadd.f32 %v564, %v2024
        %v2026 = vpop.f32.mrb[0].mxu0
        %2027 = vmatprep.mubr.bf16.mxu0 0
        %2028 = vmatmul.mubr.bf16.gmra.mrb[0].mxu0 %v1304
        %v2029 = vpop.f32.mrb[0].mxu0
        %v2030 = vadd.f32 %v564, %v2029
        %v2031 = vpop.f32.mrb[0].mxu0
        %v2032 = vpop.f32.mrb[0].mxu0
        %v2033 = vadd.f32 %v564, %v2032
        %v2034 = vpop.f32.mrb[0].mxu0
        %2035 = vmatprep.mubr.bf16.mxu0 0
        %2036 = vmatmul.mubr.bf16.gmra.mrb[0].mxu0 %v1307
        %v2037 = vpop.f32.mrb[0].mxu0
        %v2038 = vadd.f32 %v564, %v2037
        %v2039 = vpop.f32.mrb[0].mxu0
        %v2040 = vpop.f32.mrb[0].mxu0
        %v2041 = vadd.f32 %v564, %v2040
        %v2042 = vpop.f32.mrb[0].mxu0
        %2043 = vmatprep.mubr.bf16.mxu0 0
        %2044 = vmatmul.mubr.bf16.gmra.mrb[0].mxu0 %v1310
        %v2045 = vpop.f32.mrb[0].mxu0
        %v2046 = vadd.f32 %v564, %v2045
        %v2047 = vpop.f32.mrb[0].mxu0
        %v2048 = vpop.f32.mrb[0].mxu0
        %v2049 = vadd.f32 %v564, %v2048
        %v2050 = vpop.f32.mrb[0].mxu0
        %2051 = vmatprep.mubr.bf16.mxu0 0
        %2052 = vmatmul.mubr.bf16.gmra.mrb[0].mxu0 %v1313
        %v2053 = vpop.f32.mrb[0].mxu0
        %v2054 = vadd.f32 %v564, %v2053
        %v2055 = vpop.f32.mrb[0].mxu0
        %v2056 = vpop.f32.mrb[0].mxu0
        %v2057 = vadd.f32 %v564, %v2056
        %v2058 = vpop.f32.mrb[0].mxu0
        %2059 = vmatprep.mubr.bf16.mxu0 0
        %2060 = vmatmul.mubr.bf16.gmra.mrb[0].mxu0 %v1316
        %v2061 = vpop.f32.mrb[0].mxu0
        %v2062 = vadd.f32 %v564, %v2061
        %v2063 = vpop.f32.mrb[0].mxu0
        %v2064 = vpop.f32.mrb[0].mxu0
        %v2065 = vadd.f32 %v564, %v2064
        %v2066 = vpop.f32.mrb[0].mxu0
        %2067 = vmatprep.mubr.bf16.mxu0 0
        %2068 = vmatmul.mubr.bf16.gmra.mrb[0].mxu0 %v1319
        %v2069 = vpop.f32.mrb[0].mxu0
        %v2070 = vadd.f32 %v564, %v2069
        %v2071 = vpop.f32.mrb[0].mxu0
        %v2072 = vpop.f32.mrb[0].mxu0
        %v2073 = vadd.f32 %v564, %v2072
        %v2074 = vpop.f32.mrb[0].mxu0
        %2075 = vmatprep.mubr.bf16.mxu0 0
        %2076 = vmatmul.mubr.bf16.gmra.mrb[0].mxu0 %v1322
        %v2077 = vpop.f32.mrb[0].mxu0
        %v2078 = vadd.f32 %v564, %v2077
        %v2079 = vpop.f32.mrb[0].mxu0
        %v2080 = vpop.f32.mrb[0].mxu0
        %v2081 = vadd.f32 %v564, %v2080
        %v2082 = vpop.f32.mrb[0].mxu0
        %2083 = vmatprep.mubr.bf16.mxu0 0
        %2084 = vmatmul.mubr.bf16.gmra.mrb[0].mxu0 %v1325
        %v2085 = vpop.f32.mrb[0].mxu0
        %v2086 = vadd.f32 %v564, %v2085
        %v2087 = vpop.f32.mrb[0].mxu0
        %v2088 = vpop.f32.mrb[0].mxu0
        %v2089 = vadd.f32 %v564, %v2088
        %v2090 = vpop.f32.mrb[0].mxu0
        %2091 = vmatprep.mubr.bf16.mxu0 0
        %2092 = vmatmul.mubr.bf16.gmra.mrb[0].mxu0 %v1328
        %v2093 = vpop.f32.mrb[0].mxu0
        %v2094 = vadd.f32 %v564, %v2093
        %v2095 = vpop.f32.mrb[0].mxu0
        %v2096 = vpop.f32.mrb[0].mxu0
        %v2097 = vadd.f32 %v564, %v2096
        %v2098 = vpop.f32.mrb[0].mxu0
        %2099 = vmatprep.mubr.bf16.mxu0 0
        %2100 = vmatmul.mubr.bf16.gmra.mrb[0].mxu0 %v1331
        %v2101 = vpop.f32.mrb[0].mxu0
        %v2102 = vadd.f32 %v564, %v2101
        %v2103 = vpop.f32.mrb[0].mxu0
        %v2104 = vpop.f32.mrb[0].mxu0
        %v2105 = vadd.f32 %v564, %v2104
        %v2106 = vpop.f32.mrb[0].mxu0
        %2107 = vmatprep.mubr.bf16.mxu0 0
        %2108 = vmatmul.mubr.bf16.gmra.mrb[0].mxu0 %v1334
        %v2109 = vpop.f32.mrb[0].mxu0
        %v2110 = vadd.f32 %v564, %v2109
        %v2111 = vpop.f32.mrb[0].mxu0
        %v2112 = vpop.f32.mrb[0].mxu0
        %v2113 = vadd.f32 %v564, %v2112
        %v2114 = vpop.f32.mrb[0].mxu0
        %2115 = vmatprep.mubr.bf16.mxu0 0
        %2116 = vmatmul.mubr.bf16.gmra.mrb[0].mxu0 %v1337
        %v2117 = vpop.f32.mrb[0].mxu0
        %v2118 = vadd.f32 %v564, %v2117
        %v2119 = vpop.f32.mrb[0].mxu0
        %v2120 = vpop.f32.mrb[0].mxu0
        %v2121 = vadd.f32 %v564, %v2120
        %v2122 = vpop.f32.mrb[0].mxu0
        %2123 = vmatprep.mubr.bf16.mxu0 0
        %2124 = vmatmul.mubr.bf16.gmra.mrb[0].mxu0 %v1340
        %v2125 = vpop.f32.mrb[0].mxu0
        %v2126 = vadd.f32 %v564, %v2125
        %v2127 = vpop.f32.mrb[0].mxu0
        %v2128 = vpop.f32.mrb[0].mxu0
        %v2129 = vadd.f32 %v564, %v2128
        %v2130 = vpop.f32.mrb[0].mxu0
        %2131 = vmatprep.mubr.bf16.mxu0 0
        %2132 = vmatmul.mubr.bf16.gmra.mrb[0].mxu0 %v1343
        %v2133 = vpop.f32.mrb[0].mxu0
        %v2134 = vadd.f32 %v564, %v2133
        %v2135 = vpop.f32.mrb[0].mxu0
        %v2136 = vpop.f32.mrb[0].mxu0
        %v2137 = vadd.f32 %v564, %v2136
        %v2138 = vpop.f32.mrb[0].mxu0
        %2139 = vmatprep.mubr.bf16.mxu0 0
        %2140 = vmatmul.mubr.bf16.gmra.mrb[0].mxu0 %v1346
        %v2141 = vpop.f32.mrb[0].mxu0
        %v2142 = vadd.f32 %v564, %v2141
        %v2143 = vpop.f32.mrb[0].mxu0
        %v2144 = vpop.f32.mrb[0].mxu0
        %v2145 = vadd.f32 %v564, %v2144
        %v2146 = vpop.f32.mrb[0].mxu0
        %2147 = vmatprep.mubr.bf16.mxu0 0
        %2148 = vmatmul.mubr.bf16.gmra.mrb[0].mxu0 %v1349
        %v2149 = vpop.f32.mrb[0].mxu0
        %v2150 = vadd.f32 %v564, %v2149
        %v2151 = vpop.f32.mrb[0].mxu0
        %v2152 = vpop.f32.mrb[0].mxu0
        %v2153 = vadd.f32 %v564, %v2152
        %v2154 = vpop.f32.mrb[0].mxu0
        %2155 = vdwg.mxu0
        %v2156 = vxor.u32 %v1390, 2147483648
        %v2157 = vxor.u32 %v1393, 2147483648
        %v2158 = vxor.u32 %v1398, 2147483648
        %v2159 = vxor.u32 %v1401, 2147483648
        %v2160 = vxor.u32 %v1406, 2147483648
        %v2161 = vxor.u32 %v1409, 2147483648
        %v2162 = vxor.u32 %v1414, 2147483648
        %v2163 = vxor.u32 %v1417, 2147483648
        %v2164 = vxor.u32 %v1422, 2147483648
        %v2165 = vxor.u32 %v1425, 2147483648
        %v2166 = vxor.u32 %v1430, 2147483648
        %v2167 = vxor.u32 %v1433, 2147483648
        %v2168 = vxor.u32 %v1438, 2147483648
        %v2169 = vxor.u32 %v1441, 2147483648
        %v2170 = vxor.u32 %v1446, 2147483648
        %v2171 = vxor.u32 %v1449, 2147483648
        %v2172 = vxor.u32 %v1454, 2147483648
        %v2173 = vxor.u32 %v1457, 2147483648
        %v2174 = vxor.u32 %v1462, 2147483648
        %v2175 = vxor.u32 %v1465, 2147483648
        %v2176 = vxor.u32 %v1470, 2147483648
        %v2177 = vxor.u32 %v1473, 2147483648
        %v2178 = vxor.u32 %v1478, 2147483648
        %v2179 = vxor.u32 %v1481, 2147483648
        %v2180 = vxor.u32 %v1486, 2147483648
        %v2181 = vxor.u32 %v1489, 2147483648
        %v2182 = vxor.u32 %v1494, 2147483648
        %v2183 = vxor.u32 %v1497, 2147483648
        %v2184 = vxor.u32 %v1502, 2147483648
        %v2185 = vxor.u32 %v1505, 2147483648
        %v2186 = vxor.u32 %v1510, 2147483648
        %v2187 = vxor.u32 %v1513, 2147483648
        %v2188 = vxor.u32 %v1518, 2147483648
        %v2189 = vxor.u32 %v1521, 2147483648
        %v2190 = vxor.u32 %v1526, 2147483648
        %v2191 = vxor.u32 %v1529, 2147483648
        %v2192 = vxor.u32 %v1534, 2147483648
        %v2193 = vxor.u32 %v1537, 2147483648
        %v2194 = vxor.u32 %v1542, 2147483648
        %v2195 = vxor.u32 %v1545, 2147483648
        %v2196 = vxor.u32 %v1550, 2147483648
        %v2197 = vxor.u32 %v1553, 2147483648
        %v2198 = vxor.u32 %v1558, 2147483648
        %v2199 = vxor.u32 %v1561, 2147483648
        %v2200 = vxor.u32 %v1566, 2147483648
        %v2201 = vxor.u32 %v1569, 2147483648
        %v2202 = vxor.u32 %v1574, 2147483648
        %v2203 = vxor.u32 %v1577, 2147483648
        %v2204 = vxor.u32 %v1582, 2147483648
        %v2205 = vxor.u32 %v1585, 2147483648
        %v2206 = vxor.u32 %v1590, 2147483648
        %v2207 = vxor.u32 %v1593, 2147483648
        %v2208 = vxor.u32 %v1598, 2147483648
        %v2209 = vxor.u32 %v1601, 2147483648
        %v2210 = vxor.u32 %v1606, 2147483648
        %v2211 = vxor.u32 %v1609, 2147483648
        %v2212 = vxor.u32 %v1614, 2147483648
        %v2213 = vxor.u32 %v1617, 2147483648
        %v2214 = vxor.u32 %v1622, 2147483648
        %v2215 = vxor.u32 %v1625, 2147483648
        %v2216 = vxor.u32 %v1630, 2147483648
        %v2217 = vxor.u32 %v1633, 2147483648
        %v2218 = vxor.u32 %v1638, 2147483648
        %v2219 = vxor.u32 %v1641, 2147483648
        %v2220 = vxor.u32 %v1646, 2147483648
        %v2221 = vxor.u32 %v1649, 2147483648
        %v2222 = vxor.u32 %v1654, 2147483648
        %v2223 = vxor.u32 %v1657, 2147483648
        %v2224 = vxor.u32 %v1662, 2147483648
        %v2225 = vxor.u32 %v1665, 2147483648
        %v2226 = vxor.u32 %v1670, 2147483648
        %v2227 = vxor.u32 %v1673, 2147483648
        %v2228 = vxor.u32 %v1678, 2147483648
        %v2229 = vxor.u32 %v1681, 2147483648
        %v2230 = vxor.u32 %v1686, 2147483648
        %v2231 = vxor.u32 %v1689, 2147483648
        %v2232 = vxor.u32 %v1694, 2147483648
        %v2233 = vxor.u32 %v1697, 2147483648
        %v2234 = vxor.u32 %v1702, 2147483648
        %v2235 = vxor.u32 %v1705, 2147483648
        %v2236 = vxor.u32 %v1710, 2147483648
        %v2237 = vxor.u32 %v1713, 2147483648
        %v2238 = vxor.u32 %v1718, 2147483648
        %v2239 = vxor.u32 %v1721, 2147483648
        %v2240 = vxor.u32 %v1726, 2147483648
        %v2241 = vxor.u32 %v1729, 2147483648
        %v2242 = vxor.u32 %v1734, 2147483648
        %v2243 = vxor.u32 %v1737, 2147483648
        %v2244 = vxor.u32 %v1742, 2147483648
        %v2245 = vxor.u32 %v1745, 2147483648
        %v2246 = vxor.u32 %v1750, 2147483648
        %v2247 = vxor.u32 %v1753, 2147483648
        %v2248 = vxor.u32 %v1758, 2147483648
        %v2249 = vxor.u32 %v1761, 2147483648
        %v2250 = vxor.u32 %v1766, 2147483648
        %v2251 = vxor.u32 %v1769, 2147483648
        %v2252 = vxor.u32 %v1774, 2147483648
        %v2253 = vxor.u32 %v1777, 2147483648
        %v2254 = vxor.u32 %v1782, 2147483648
        %v2255 = vxor.u32 %v1785, 2147483648
        %v2256 = vxor.u32 %v1790, 2147483648
        %v2257 = vxor.u32 %v1793, 2147483648
        %v2258 = vxor.u32 %v1798, 2147483648
        %v2259 = vxor.u32 %v1801, 2147483648
        %v2260 = vxor.u32 %v1806, 2147483648
        %v2261 = vxor.u32 %v1809, 2147483648
        %v2262 = vxor.u32 %v1814, 2147483648
        %v2263 = vxor.u32 %v1817, 2147483648
        %v2264 = vxor.u32 %v1822, 2147483648
        %v2265 = vxor.u32 %v1825, 2147483648
        %v2266 = vxor.u32 %v1830, 2147483648
        %v2267 = vxor.u32 %v1833, 2147483648
        %v2268 = vxor.u32 %v1838, 2147483648
        %v2269 = vxor.u32 %v1841, 2147483648
        %v2270 = vxor.u32 %v1846, 2147483648
        %v2271 = vxor.u32 %v1849, 2147483648
        %v2272 = vxor.u32 %v1854, 2147483648
        %v2273 = vxor.u32 %v1857, 2147483648
        %v2274 = vxor.u32 %v1862, 2147483648
        %v2275 = vxor.u32 %v1865, 2147483648
        %v2276 = vxor.u32 %v1870, 2147483648
        %v2277 = vxor.u32 %v1873, 2147483648
        %v2278 = vxor.u32 %v1878, 2147483648
        %v2279 = vxor.u32 %v1881, 2147483648
        %v2280 = vxor.u32 %v1886, 2147483648
        %v2281 = vxor.u32 %v1889, 2147483648
        %v2282 = vxor.u32 %v1894, 2147483648
        %v2283 = vxor.u32 %v1897, 2147483648
        %v2284 = vxor.u32 %v1902, 2147483648
        %v2285 = vxor.u32 %v1905, 2147483648
        %v2286 = vxor.u32 %v1910, 2147483648
        %v2287 = vxor.u32 %v1913, 2147483648
        %v2288 = vxor.u32 %v1918, 2147483648
        %v2289 = vxor.u32 %v1921, 2147483648
        %v2290 = vxor.u32 %v1926, 2147483648
        %v2291 = vxor.u32 %v1929, 2147483648
        %v2292 = vxor.u32 %v1934, 2147483648
        %v2293 = vxor.u32 %v1937, 2147483648
        %v2294 = vxor.u32 %v1942, 2147483648
        %v2295 = vxor.u32 %v1945, 2147483648
        %v2296 = vxor.u32 %v1950, 2147483648
        %v2297 = vxor.u32 %v1953, 2147483648
        %v2298 = vxor.u32 %v1958, 2147483648
        %v2299 = vxor.u32 %v1961, 2147483648
        %v2300 = vxor.u32 %v1966, 2147483648
        %v2301 = vxor.u32 %v1969, 2147483648
        %v2302 = vxor.u32 %v1974, 2147483648
        %v2303 = vxor.u32 %v1977, 2147483648
        %v2304 = vxor.u32 %v1982, 2147483648
        %v2305 = vxor.u32 %v1985, 2147483648
        %v2306 = vxor.u32 %v1990, 2147483648
        %v2307 = vxor.u32 %v1993, 2147483648
        %v2308 = vxor.u32 %v1998, 2147483648
        %v2309 = vxor.u32 %v2001, 2147483648
        %v2310 = vxor.u32 %v2006, 2147483648
        %v2311 = vxor.u32 %v2009, 2147483648
        %v2312 = vxor.u32 %v2014, 2147483648
        %v2313 = vxor.u32 %v2017, 2147483648
        %v2314 = vxor.u32 %v2022, 2147483648
        %v2315 = vxor.u32 %v2025, 2147483648
        %v2316 = vxor.u32 %v2030, 2147483648
        %v2317 = vxor.u32 %v2033, 2147483648
        %v2318 = vxor.u32 %v2038, 2147483648
        %v2319 = vxor.u32 %v2041, 2147483648
        %v2320 = vxor.u32 %v2046, 2147483648
        %v2321 = vxor.u32 %v2049, 2147483648
        %v2322 = vxor.u32 %v2054, 2147483648
        %v2323 = vxor.u32 %v2057, 2147483648
        %v2324 = vxor.u32 %v2062, 2147483648
        %v2325 = vxor.u32 %v2065, 2147483648
        %v2326 = vxor.u32 %v2070, 2147483648
        %v2327 = vxor.u32 %v2073, 2147483648
        %v2328 = vxor.u32 %v2078, 2147483648
        %v2329 = vxor.u32 %v2081, 2147483648
        %v2330 = vxor.u32 %v2086, 2147483648
        %v2331 = vxor.u32 %v2089, 2147483648
        %v2332 = vxor.u32 %v2094, 2147483648
        %v2333 = vxor.u32 %v2097, 2147483648
        %v2334 = vxor.u32 %v2102, 2147483648
        %v2335 = vxor.u32 %v2105, 2147483648
        %v2336 = vxor.u32 %v2110, 2147483648
        %v2337 = vxor.u32 %v2113, 2147483648
        %v2338 = vxor.u32 %v2118, 2147483648
        %v2339 = vxor.u32 %v2121, 2147483648
        %v2340 = vxor.u32 %v2126, 2147483648
        %v2341 = vxor.u32 %v2129, 2147483648
        %v2342 = vxor.u32 %v2134, 2147483648
        %v2343 = vxor.u32 %v2137, 2147483648
        %v2344 = vxor.u32 %v2142, 2147483648
        %v2345 = vxor.u32 %v2145, 2147483648
        %v2346 = vxor.u32 %v2150, 2147483648
        %v2347 = vxor.u32 %v2153, 2147483648
        %v2348 = vmul.f32 %v2156, 1.442695
        %v2349 = vpow.pop %v2348
        %v2350 = vmul.f32 %v2157, 1.442695
        %v2351 = vpow.pop %v2350
        %v2352 = vmul.f32 %v2158, 1.442695
        %v2353 = vpow.pop %v2352
        %v2354 = vmul.f32 %v2159, 1.442695
        %v2355 = vpow.pop %v2354
        %v2356 = vmul.f32 %v2160, 1.442695
        %v2357 = vpow.pop %v2356
        %v2358 = vmul.f32 %v2161, 1.442695
        %v2359 = vpow.pop %v2358
        %v2360 = vmul.f32 %v2162, 1.442695
        %v2361 = vpow.pop %v2360
        %v2362 = vmul.f32 %v2163, 1.442695
        %v2363 = vpow.pop %v2362
        %v2364 = vmul.f32 %v2164, 1.442695
        %v2365 = vpow.pop %v2364
        %v2366 = vmul.f32 %v2165, 1.442695
        %v2367 = vpow.pop %v2366
        %v2368 = vmul.f32 %v2166, 1.442695
        %v2369 = vpow.pop %v2368
        %v2370 = vmul.f32 %v2167, 1.442695
        %v2371 = vpow.pop %v2370
        %v2372 = vmul.f32 %v2168, 1.442695
        %v2373 = vpow.pop %v2372
        %v2374 = vmul.f32 %v2169, 1.442695
        %v2375 = vpow.pop %v2374
        %v2376 = vmul.f32 %v2170, 1.442695
        %v2377 = vpow.pop %v2376
        %v2378 = vmul.f32 %v2171, 1.442695
        %v2379 = vpow.pop %v2378
        %v2380 = vmul.f32 %v2172, 1.442695
        %v2381 = vpow.pop %v2380
        %v2382 = vmul.f32 %v2173, 1.442695
        %v2383 = vpow.pop %v2382
        %v2384 = vmul.f32 %v2174, 1.442695
        %v2385 = vpow.pop %v2384
        %v2386 = vmul.f32 %v2175, 1.442695
        %v2387 = vpow.pop %v2386
        %v2388 = vmul.f32 %v2176, 1.442695
        %v2389 = vpow.pop %v2388
        %v2390 = vmul.f32 %v2177, 1.442695
        %v2391 = vpow.pop %v2390
        %v2392 = vmul.f32 %v2178, 1.442695
        %v2393 = vpow.pop %v2392
        %v2394 = vmul.f32 %v2179, 1.442695
        %v2395 = vpow.pop %v2394
        %v2396 = vmul.f32 %v2180, 1.442695
        %v2397 = vpow.pop %v2396
        %v2398 = vmul.f32 %v2181, 1.442695
        %v2399 = vpow.pop %v2398
        %v2400 = vmul.f32 %v2182, 1.442695
        %v2401 = vpow.pop %v2400
        %v2402 = vmul.f32 %v2183, 1.442695
        %v2403 = vpow.pop %v2402
        %v2404 = vmul.f32 %v2184, 1.442695
        %v2405 = vpow.pop %v2404
        %v2406 = vmul.f32 %v2185, 1.442695
        %v2407 = vpow.pop %v2406
        %v2408 = vmul.f32 %v2186, 1.442695
        %v2409 = vpow.pop %v2408
        %v2410 = vmul.f32 %v2187, 1.442695
        %v2411 = vpow.pop %v2410
        %v2412 = vmul.f32 %v2188, 1.442695
        %v2413 = vpow.pop %v2412
        %v2414 = vmul.f32 %v2189, 1.442695
        %v2415 = vpow.pop %v2414
        %v2416 = vmul.f32 %v2190, 1.442695
        %v2417 = vpow.pop %v2416
        %v2418 = vmul.f32 %v2191, 1.442695
        %v2419 = vpow.pop %v2418
        %v2420 = vmul.f32 %v2192, 1.442695
        %v2421 = vpow.pop %v2420
        %v2422 = vmul.f32 %v2193, 1.442695
        %v2423 = vpow.pop %v2422
        %v2424 = vmul.f32 %v2194, 1.442695
        %v2425 = vpow.pop %v2424
        %v2426 = vmul.f32 %v2195, 1.442695
        %v2427 = vpow.pop %v2426
        %v2428 = vmul.f32 %v2196, 1.442695
        %v2429 = vpow.pop %v2428
        %v2430 = vmul.f32 %v2197, 1.442695
        %v2431 = vpow.pop %v2430
        %v2432 = vmul.f32 %v2198, 1.442695
        %v2433 = vpow.pop %v2432
        %v2434 = vmul.f32 %v2199, 1.442695
        %v2435 = vpow.pop %v2434
        %v2436 = vmul.f32 %v2200, 1.442695
        %v2437 = vpow.pop %v2436
        %v2438 = vmul.f32 %v2201, 1.442695
        %v2439 = vpow.pop %v2438
        %v2440 = vmul.f32 %v2202, 1.442695
        %v2441 = vpow.pop %v2440
        %v2442 = vmul.f32 %v2203, 1.442695
        %v2443 = vpow.pop %v2442
        %v2444 = vmul.f32 %v2204, 1.442695
        %v2445 = vpow.pop %v2444
        %v2446 = vmul.f32 %v2205, 1.442695
        %v2447 = vpow.pop %v2446
        %v2448 = vmul.f32 %v2206, 1.442695
        %v2449 = vpow.pop %v2448
        %v2450 = vmul.f32 %v2207, 1.442695
        %v2451 = vpow.pop %v2450
        %v2452 = vmul.f32 %v2208, 1.442695
        %v2453 = vpow.pop %v2452
        %v2454 = vmul.f32 %v2209, 1.442695
        %v2455 = vpow.pop %v2454
        %v2456 = vmul.f32 %v2210, 1.442695
        %v2457 = vpow.pop %v2456
        %v2458 = vmul.f32 %v2211, 1.442695
        %v2459 = vpow.pop %v2458
        %v2460 = vmul.f32 %v2212, 1.442695
        %v2461 = vpow.pop %v2460
        %v2462 = vmul.f32 %v2213, 1.442695
        %v2463 = vpow.pop %v2462
        %v2464 = vmul.f32 %v2214, 1.442695
        %v2465 = vpow.pop %v2464
        %v2466 = vmul.f32 %v2215, 1.442695
        %v2467 = vpow.pop %v2466
        %v2468 = vmul.f32 %v2216, 1.442695
        %v2469 = vpow.pop %v2468
        %v2470 = vmul.f32 %v2217, 1.442695
        %v2471 = vpow.pop %v2470
        %v2472 = vmul.f32 %v2218, 1.442695
        %v2473 = vpow.pop %v2472
        %v2474 = vmul.f32 %v2219, 1.442695
        %v2475 = vpow.pop %v2474
        %v2476 = vmul.f32 %v2220, 1.442695
        %v2477 = vpow.pop %v2476
        %v2478 = vmul.f32 %v2221, 1.442695
        %v2479 = vpow.pop %v2478
        %v2480 = vmul.f32 %v2222, 1.442695
        %v2481 = vpow.pop %v2480
        %v2482 = vmul.f32 %v2223, 1.442695
        %v2483 = vpow.pop %v2482
        %v2484 = vmul.f32 %v2224, 1.442695
        %v2485 = vpow.pop %v2484
        %v2486 = vmul.f32 %v2225, 1.442695
        %v2487 = vpow.pop %v2486
        %v2488 = vmul.f32 %v2226, 1.442695
        %v2489 = vpow.pop %v2488
        %v2490 = vmul.f32 %v2227, 1.442695
        %v2491 = vpow.pop %v2490
        %v2492 = vmul.f32 %v2228, 1.442695
        %v2493 = vpow.pop %v2492
        %v2494 = vmul.f32 %v2229, 1.442695
        %v2495 = vpow.pop %v2494
        %v2496 = vmul.f32 %v2230, 1.442695
        %v2497 = vpow.pop %v2496
        %v2498 = vmul.f32 %v2231, 1.442695
        %v2499 = vpow.pop %v2498
        %v2500 = vmul.f32 %v2232, 1.442695
        %v2501 = vpow.pop %v2500
        %v2502 = vmul.f32 %v2233, 1.442695
        %v2503 = vpow.pop %v2502
        %v2504 = vmul.f32 %v2234, 1.442695
        %v2505 = vpow.pop %v2504
        %v2506 = vmul.f32 %v2235, 1.442695
        %v2507 = vpow.pop %v2506
        %v2508 = vmul.f32 %v2236, 1.442695
        %v2509 = vpow.pop %v2508
        %v2510 = vmul.f32 %v2237, 1.442695
        %v2511 = vpow.pop %v2510
        %v2512 = vmul.f32 %v2238, 1.442695
        %v2513 = vpow.pop %v2512
        %v2514 = vmul.f32 %v2239, 1.442695
        %v2515 = vpow.pop %v2514
        %v2516 = vmul.f32 %v2240, 1.442695
        %v2517 = vpow.pop %v2516
        %v2518 = vmul.f32 %v2241, 1.442695
        %v2519 = vpow.pop %v2518
        %v2520 = vmul.f32 %v2242, 1.442695
        %v2521 = vpow.pop %v2520
        %v2522 = vmul.f32 %v2243, 1.442695
        %v2523 = vpow.pop %v2522
        %v2524 = vmul.f32 %v2244, 1.442695
        %v2525 = vpow.pop %v2524
        %v2526 = vmul.f32 %v2245, 1.442695
        %v2527 = vpow.pop %v2526
        %v2528 = vmul.f32 %v2246, 1.442695
        %v2529 = vpow.pop %v2528
        %v2530 = vmul.f32 %v2247, 1.442695
        %v2531 = vpow.pop %v2530
        %v2532 = vmul.f32 %v2248, 1.442695
        %v2533 = vpow.pop %v2532
        %v2534 = vmul.f32 %v2249, 1.442695
        %v2535 = vpow.pop %v2534
        %v2536 = vmul.f32 %v2250, 1.442695
        %v2537 = vpow.pop %v2536
        %v2538 = vmul.f32 %v2251, 1.442695
        %v2539 = vpow.pop %v2538
        %v2540 = vmul.f32 %v2252, 1.442695
        %v2541 = vpow.pop %v2540
        %v2542 = vmul.f32 %v2253, 1.442695
        %v2543 = vpow.pop %v2542
        %v2544 = vmul.f32 %v2254, 1.442695
        %v2545 = vpow.pop %v2544
        %v2546 = vmul.f32 %v2255, 1.442695
        %v2547 = vpow.pop %v2546
        %v2548 = vmul.f32 %v2256, 1.442695
        %v2549 = vpow.pop %v2548
        %v2550 = vmul.f32 %v2257, 1.442695
        %v2551 = vpow.pop %v2550
        %v2552 = vmul.f32 %v2258, 1.442695
        %v2553 = vpow.pop %v2552
        %v2554 = vmul.f32 %v2259, 1.442695
        %v2555 = vpow.pop %v2554
        %v2556 = vmul.f32 %v2260, 1.442695
        %v2557 = vpow.pop %v2556
        %v2558 = vmul.f32 %v2261, 1.442695
        %v2559 = vpow.pop %v2558
        %v2560 = vmul.f32 %v2262, 1.442695
        %v2561 = vpow.pop %v2560
        %v2562 = vmul.f32 %v2263, 1.442695
        %v2563 = vpow.pop %v2562
        %v2564 = vmul.f32 %v2264, 1.442695
        %v2565 = vpow.pop %v2564
        %v2566 = vmul.f32 %v2265, 1.442695
        %v2567 = vpow.pop %v2566
        %v2568 = vmul.f32 %v2266, 1.442695
        %v2569 = vpow.pop %v2568
        %v2570 = vmul.f32 %v2267, 1.442695
        %v2571 = vpow.pop %v2570
        %v2572 = vmul.f32 %v2268, 1.442695
        %v2573 = vpow.pop %v2572
        %v2574 = vmul.f32 %v2269, 1.442695
        %v2575 = vpow.pop %v2574
        %v2576 = vmul.f32 %v2270, 1.442695
        %v2577 = vpow.pop %v2576
        %v2578 = vmul.f32 %v2271, 1.442695
        %v2579 = vpow.pop %v2578
        %v2580 = vmul.f32 %v2272, 1.442695
        %v2581 = vpow.pop %v2580
        %v2582 = vmul.f32 %v2273, 1.442695
        %v2583 = vpow.pop %v2582
        %v2584 = vmul.f32 %v2274, 1.442695
        %v2585 = vpow.pop %v2584
        %v2586 = vmul.f32 %v2275, 1.442695
        %v2587 = vpow.pop %v2586
        %v2588 = vmul.f32 %v2276, 1.442695
        %v2589 = vpow.pop %v2588
        %v2590 = vmul.f32 %v2277, 1.442695
        %v2591 = vpow.pop %v2590
        %v2592 = vmul.f32 %v2278, 1.442695
        %v2593 = vpow.pop %v2592
        %v2594 = vmul.f32 %v2279, 1.442695
        %v2595 = vpow.pop %v2594
        %v2596 = vmul.f32 %v2280, 1.442695
        %v2597 = vpow.pop %v2596
        %v2598 = vmul.f32 %v2281, 1.442695
        %v2599 = vpow.pop %v2598
        %v2600 = vmul.f32 %v2282, 1.442695
        %v2601 = vpow.pop %v2600
        %v2602 = vmul.f32 %v2283, 1.442695
        %v2603 = vpow.pop %v2602
        %v2604 = vmul.f32 %v2284, 1.442695
        %v2605 = vpow.pop %v2604
        %v2606 = vmul.f32 %v2285, 1.442695
        %v2607 = vpow.pop %v2606
        %v2608 = vmul.f32 %v2286, 1.442695
        %v2609 = vpow.pop %v2608
        %v2610 = vmul.f32 %v2287, 1.442695
        %v2611 = vpow.pop %v2610
        %v2612 = vmul.f32 %v2288, 1.442695
        %v2613 = vpow.pop %v2612
        %v2614 = vmul.f32 %v2289, 1.442695
        %v2615 = vpow.pop %v2614
        %v2616 = vmul.f32 %v2290, 1.442695
        %v2617 = vpow.pop %v2616
        %v2618 = vmul.f32 %v2291, 1.442695
        %v2619 = vpow.pop %v2618
        %v2620 = vmul.f32 %v2292, 1.442695
        %v2621 = vpow.pop %v2620
        %v2622 = vmul.f32 %v2293, 1.442695
        %v2623 = vpow.pop %v2622
        %v2624 = vmul.f32 %v2294, 1.442695
        %v2625 = vpow.pop %v2624
        %v2626 = vmul.f32 %v2295, 1.442695
        %v2627 = vpow.pop %v2626
        %v2628 = vmul.f32 %v2296, 1.442695
        %v2629 = vpow.pop %v2628
        %v2630 = vmul.f32 %v2297, 1.442695
        %v2631 = vpow.pop %v2630
        %v2632 = vmul.f32 %v2298, 1.442695
        %v2633 = vpow.pop %v2632
        %v2634 = vmul.f32 %v2299, 1.442695
        %v2635 = vpow.pop %v2634
        %v2636 = vmul.f32 %v2300, 1.442695
        %v2637 = vpow.pop %v2636
        %v2638 = vmul.f32 %v2301, 1.442695
        %v2639 = vpow.pop %v2638
        %v2640 = vmul.f32 %v2302, 1.442695
        %v2641 = vpow.pop %v2640
        %v2642 = vmul.f32 %v2303, 1.442695
        %v2643 = vpow.pop %v2642
        %v2644 = vmul.f32 %v2304, 1.442695
        %v2645 = vpow.pop %v2644
        %v2646 = vmul.f32 %v2305, 1.442695
        %v2647 = vpow.pop %v2646
        %v2648 = vmul.f32 %v2306, 1.442695
        %v2649 = vpow.pop %v2648
        %v2650 = vmul.f32 %v2307, 1.442695
        %v2651 = vpow.pop %v2650
        %v2652 = vmul.f32 %v2308, 1.442695
        %v2653 = vpow.pop %v2652
        %v2654 = vmul.f32 %v2309, 1.442695
        %v2655 = vpow.pop %v2654
        %v2656 = vmul.f32 %v2310, 1.442695
        %v2657 = vpow.pop %v2656
        %v2658 = vmul.f32 %v2311, 1.442695
        %v2659 = vpow.pop %v2658
        %v2660 = vmul.f32 %v2312, 1.442695
        %v2661 = vpow.pop %v2660
        %v2662 = vmul.f32 %v2313, 1.442695
        %v2663 = vpow.pop %v2662
        %v2664 = vmul.f32 %v2314, 1.442695
        %v2665 = vpow.pop %v2664
        %v2666 = vmul.f32 %v2315, 1.442695
        %v2667 = vpow.pop %v2666
        %v2668 = vmul.f32 %v2316, 1.442695
        %v2669 = vpow.pop %v2668
        %v2670 = vmul.f32 %v2317, 1.442695
        %v2671 = vpow.pop %v2670
        %v2672 = vmul.f32 %v2318, 1.442695
        %v2673 = vpow.pop %v2672
        %v2674 = vmul.f32 %v2319, 1.442695
        %v2675 = vpow.pop %v2674
        %v2676 = vmul.f32 %v2320, 1.442695
        %v2677 = vpow.pop %v2676
        %v2678 = vmul.f32 %v2321, 1.442695
        %v2679 = vpow.pop %v2678
        %v2680 = vmul.f32 %v2322, 1.442695
        %v2681 = vpow.pop %v2680
        %v2682 = vmul.f32 %v2323, 1.442695
        %v2683 = vpow.pop %v2682
        %v2684 = vmul.f32 %v2324, 1.442695
        %v2685 = vpow.pop %v2684
        %v2686 = vmul.f32 %v2325, 1.442695
        %v2687 = vpow.pop %v2686
        %v2688 = vmul.f32 %v2326, 1.442695
        %v2689 = vpow.pop %v2688
        %v2690 = vmul.f32 %v2327, 1.442695
        %v2691 = vpow.pop %v2690
        %v2692 = vmul.f32 %v2328, 1.442695
        %v2693 = vpow.pop %v2692
        %v2694 = vmul.f32 %v2329, 1.442695
        %v2695 = vpow.pop %v2694
        %v2696 = vmul.f32 %v2330, 1.442695
        %v2697 = vpow.pop %v2696
        %v2698 = vmul.f32 %v2331, 1.442695
        %v2699 = vpow.pop %v2698
        %v2700 = vmul.f32 %v2332, 1.442695
        %v2701 = vpow.pop %v2700
        %v2702 = vmul.f32 %v2333, 1.442695
        %v2703 = vpow.pop %v2702
        %v2704 = vmul.f32 %v2334, 1.442695
        %v2705 = vpow.pop %v2704
        %v2706 = vmul.f32 %v2335, 1.442695
        %v2707 = vpow.pop %v2706
        %v2708 = vmul.f32 %v2336, 1.442695
        %v2709 = vpow.pop %v2708
        %v2710 = vmul.f32 %v2337, 1.442695
        %v2711 = vpow.pop %v2710
        %v2712 = vmul.f32 %v2338, 1.442695
        %v2713 = vpow.pop %v2712
        %v2714 = vmul.f32 %v2339, 1.442695
        %v2715 = vpow.pop %v2714
        %v2716 = vmul.f32 %v2340, 1.442695
        %v2717 = vpow.pop %v2716
        %v2718 = vmul.f32 %v2341, 1.442695
        %v2719 = vpow.pop %v2718
        %v2720 = vmul.f32 %v2342, 1.442695
        %v2721 = vpow.pop %v2720
        %v2722 = vmul.f32 %v2343, 1.442695
        %v2723 = vpow.pop %v2722
        %v2724 = vmul.f32 %v2344, 1.442695
        %v2725 = vpow.pop %v2724
        %v2726 = vmul.f32 %v2345, 1.442695
        %v2727 = vpow.pop %v2726
        %v2728 = vmul.f32 %v2346, 1.442695
        %v2729 = vpow.pop %v2728
        %v2730 = vmul.f32 %v2347, 1.442695
        %v2731 = vpow.pop %v2730
        %v2732 = vadd.f32 %v2349, 1.0
        %v2733 = vadd.f32 %v2351, 1.0
        %v2734 = vadd.f32 %v2353, 1.0
        %v2735 = vadd.f32 %v2355, 1.0
        %v2736 = vadd.f32 %v2357, 1.0
        %v2737 = vadd.f32 %v2359, 1.0
        %v2738 = vadd.f32 %v2361, 1.0
        %v2739 = vadd.f32 %v2363, 1.0
        %v2740 = vadd.f32 %v2365, 1.0
        %v2741 = vadd.f32 %v2367, 1.0
        %v2742 = vadd.f32 %v2369, 1.0
        %v2743 = vadd.f32 %v2371, 1.0
        %v2744 = vadd.f32 %v2373, 1.0
        %v2745 = vadd.f32 %v2375, 1.0
        %v2746 = vadd.f32 %v2377, 1.0
        %v2747 = vadd.f32 %v2379, 1.0
        %v2748 = vadd.f32 %v2381, 1.0
        %v2749 = vadd.f32 %v2383, 1.0
        %v2750 = vadd.f32 %v2385, 1.0
        %v2751 = vadd.f32 %v2387, 1.0
        %v2752 = vadd.f32 %v2389, 1.0
        %v2753 = vadd.f32 %v2391, 1.0
        %v2754 = vadd.f32 %v2393, 1.0
        %v2755 = vadd.f32 %v2395, 1.0
        %v2756 = vadd.f32 %v2397, 1.0
        %v2757 = vadd.f32 %v2399, 1.0
        %v2758 = vadd.f32 %v2401, 1.0
        %v2759 = vadd.f32 %v2403, 1.0
        %v2760 = vadd.f32 %v2405, 1.0
        %v2761 = vadd.f32 %v2407, 1.0
        %v2762 = vadd.f32 %v2409, 1.0
        %v2763 = vadd.f32 %v2411, 1.0
        %v2764 = vadd.f32 %v2413, 1.0
        %v2765 = vadd.f32 %v2415, 1.0
        %v2766 = vadd.f32 %v2417, 1.0
        %v2767 = vadd.f32 %v2419, 1.0
        %v2768 = vadd.f32 %v2421, 1.0
        %v2769 = vadd.f32 %v2423, 1.0
        %v2770 = vadd.f32 %v2425, 1.0
        %v2771 = vadd.f32 %v2427, 1.0
        %v2772 = vadd.f32 %v2429, 1.0
        %v2773 = vadd.f32 %v2431, 1.0
        %v2774 = vadd.f32 %v2433, 1.0
        %v2775 = vadd.f32 %v2435, 1.0
        %v2776 = vadd.f32 %v2437, 1.0
        %v2777 = vadd.f32 %v2439, 1.0
        %v2778 = vadd.f32 %v2441, 1.0
        %v2779 = vadd.f32 %v2443, 1.0
        %v2780 = vadd.f32 %v2445, 1.0
        %v2781 = vadd.f32 %v2447, 1.0
        %v2782 = vadd.f32 %v2449, 1.0
        %v2783 = vadd.f32 %v2451, 1.0
        %v2784 = vadd.f32 %v2453, 1.0
        %v2785 = vadd.f32 %v2455, 1.0
        %v2786 = vadd.f32 %v2457, 1.0
        %v2787 = vadd.f32 %v2459, 1.0
        %v2788 = vadd.f32 %v2461, 1.0
        %v2789 = vadd.f32 %v2463, 1.0
        %v2790 = vadd.f32 %v2465, 1.0
        %v2791 = vadd.f32 %v2467, 1.0
        %v2792 = vadd.f32 %v2469, 1.0
        %v2793 = vadd.f32 %v2471, 1.0
        %v2794 = vadd.f32 %v2473, 1.0
        %v2795 = vadd.f32 %v2475, 1.0
        %v2796 = vadd.f32 %v2477, 1.0
        %v2797 = vadd.f32 %v2479, 1.0
        %v2798 = vadd.f32 %v2481, 1.0
        %v2799 = vadd.f32 %v2483, 1.0
        %v2800 = vadd.f32 %v2485, 1.0
        %v2801 = vadd.f32 %v2487, 1.0
        %v2802 = vadd.f32 %v2489, 1.0
        %v2803 = vadd.f32 %v2491, 1.0
        %v2804 = vadd.f32 %v2493, 1.0
        %v2805 = vadd.f32 %v2495, 1.0
        %v2806 = vadd.f32 %v2497, 1.0
        %v2807 = vadd.f32 %v2499, 1.0
        %v2808 = vadd.f32 %v2501, 1.0
        %v2809 = vadd.f32 %v2503, 1.0
        %v2810 = vadd.f32 %v2505, 1.0
        %v2811 = vadd.f32 %v2507, 1.0
        %v2812 = vadd.f32 %v2509, 1.0
        %v2813 = vadd.f32 %v2511, 1.0
        %v2814 = vadd.f32 %v2513, 1.0
        %v2815 = vadd.f32 %v2515, 1.0
        %v2816 = vadd.f32 %v2517, 1.0
        %v2817 = vadd.f32 %v2519, 1.0
        %v2818 = vadd.f32 %v2521, 1.0
        %v2819 = vadd.f32 %v2523, 1.0
        %v2820 = vadd.f32 %v2525, 1.0
        %v2821 = vadd.f32 %v2527, 1.0
        %v2822 = vadd.f32 %v2529, 1.0
        %v2823 = vadd.f32 %v2531, 1.0
        %v2824 = vadd.f32 %v2533, 1.0
        %v2825 = vadd.f32 %v2535, 1.0
        %v2826 = vadd.f32 %v2537, 1.0
        %v2827 = vadd.f32 %v2539, 1.0
        %v2828 = vadd.f32 %v2541, 1.0
        %v2829 = vadd.f32 %v2543, 1.0
        %v2830 = vadd.f32 %v2545, 1.0
        %v2831 = vadd.f32 %v2547, 1.0
        %v2832 = vadd.f32 %v2549, 1.0
        %v2833 = vadd.f32 %v2551, 1.0
        %v2834 = vadd.f32 %v2553, 1.0
        %v2835 = vadd.f32 %v2555, 1.0
        %v2836 = vadd.f32 %v2557, 1.0
        %v2837 = vadd.f32 %v2559, 1.0
        %v2838 = vadd.f32 %v2561, 1.0
        %v2839 = vadd.f32 %v2563, 1.0
        %v2840 = vadd.f32 %v2565, 1.0
        %v2841 = vadd.f32 %v2567, 1.0
        %v2842 = vadd.f32 %v2569, 1.0
        %v2843 = vadd.f32 %v2571, 1.0
        %v2844 = vadd.f32 %v2573, 1.0
        %v2845 = vadd.f32 %v2575, 1.0
        %v2846 = vadd.f32 %v2577, 1.0
        %v2847 = vadd.f32 %v2579, 1.0
        %v2848 = vadd.f32 %v2581, 1.0
        %v2849 = vadd.f32 %v2583, 1.0
        %v2850 = vadd.f32 %v2585, 1.0
        %v2851 = vadd.f32 %v2587, 1.0
        %v2852 = vadd.f32 %v2589, 1.0
        %v2853 = vadd.f32 %v2591, 1.0
        %v2854 = vadd.f32 %v2593, 1.0
        %v2855 = vadd.f32 %v2595, 1.0
        %v2856 = vadd.f32 %v2597, 1.0
        %v2857 = vadd.f32 %v2599, 1.0
        %v2858 = vadd.f32 %v2601, 1.0
        %v2859 = vadd.f32 %v2603, 1.0
        %v2860 = vadd.f32 %v2605, 1.0
        %v2861 = vadd.f32 %v2607, 1.0
        %v2862 = vadd.f32 %v2609, 1.0
        %v2863 = vadd.f32 %v2611, 1.0
        %v2864 = vadd.f32 %v2613, 1.0
        %v2865 = vadd.f32 %v2615, 1.0
        %v2866 = vadd.f32 %v2617, 1.0
        %v2867 = vadd.f32 %v2619, 1.0
        %v2868 = vadd.f32 %v2621, 1.0
        %v2869 = vadd.f32 %v2623, 1.0
        %v2870 = vadd.f32 %v2625, 1.0
        %v2871 = vadd.f32 %v2627, 1.0
        %v2872 = vadd.f32 %v2629, 1.0
        %v2873 = vadd.f32 %v2631, 1.0
        %v2874 = vadd.f32 %v2633, 1.0
        %v2875 = vadd.f32 %v2635, 1.0
        %v2876 = vadd.f32 %v2637, 1.0
        %v2877 = vadd.f32 %v2639, 1.0
        %v2878 = vadd.f32 %v2641, 1.0
        %v2879 = vadd.f32 %v2643, 1.0
        %v2880 = vadd.f32 %v2645, 1.0
        %v2881 = vadd.f32 %v2647, 1.0
        %v2882 = vadd.f32 %v2649, 1.0
        %v2883 = vadd.f32 %v2651, 1.0
        %v2884 = vadd.f32 %v2653, 1.0
        %v2885 = vadd.f32 %v2655, 1.0
        %v2886 = vadd.f32 %v2657, 1.0
        %v2887 = vadd.f32 %v2659, 1.0
        %v2888 = vadd.f32 %v2661, 1.0
        %v2889 = vadd.f32 %v2663, 1.0
        %v2890 = vadd.f32 %v2665, 1.0
        %v2891 = vadd.f32 %v2667, 1.0
        %v2892 = vadd.f32 %v2669, 1.0
        %v2893 = vadd.f32 %v2671, 1.0
        %v2894 = vadd.f32 %v2673, 1.0
        %v2895 = vadd.f32 %v2675, 1.0
        %v2896 = vadd.f32 %v2677, 1.0
        %v2897 = vadd.f32 %v2679, 1.0
        %v2898 = vadd.f32 %v2681, 1.0
        %v2899 = vadd.f32 %v2683, 1.0
        %v2900 = vadd.f32 %v2685, 1.0
        %v2901 = vadd.f32 %v2687, 1.0
        %v2902 = vadd.f32 %v2689, 1.0
        %v2903 = vadd.f32 %v2691, 1.0
        %v2904 = vadd.f32 %v2693, 1.0
        %v2905 = vadd.f32 %v2695, 1.0
        %v2906 = vadd.f32 %v2697, 1.0
        %v2907 = vadd.f32 %v2699, 1.0
        %v2908 = vadd.f32 %v2701, 1.0
        %v2909 = vadd.f32 %v2703, 1.0
        %v2910 = vadd.f32 %v2705, 1.0
        %v2911 = vadd.f32 %v2707, 1.0
        %v2912 = vadd.f32 %v2709, 1.0
        %v2913 = vadd.f32 %v2711, 1.0
        %v2914 = vadd.f32 %v2713, 1.0
        %v2915 = vadd.f32 %v2715, 1.0
        %v2916 = vadd.f32 %v2717, 1.0
        %v2917 = vadd.f32 %v2719, 1.0
        %v2918 = vadd.f32 %v2721, 1.0
        %v2919 = vadd.f32 %v2723, 1.0
        %v2920 = vadd.f32 %v2725, 1.0
        %v2921 = vadd.f32 %v2727, 1.0
        %v2922 = vadd.f32 %v2729, 1.0
        %v2923 = vadd.f32 %v2731, 1.0
        %v2924 = vrcp.pop %v2732
        %v2925 = vmul.f32 1.0, %v2924
        %v2926 = vrcp.pop %v2733
        %v2927 = vmul.f32 1.0, %v2926
        %v2928 = vrcp.pop %v2734
        %v2929 = vmul.f32 1.0, %v2928
        %v2930 = vrcp.pop %v2735
        %v2931 = vmul.f32 1.0, %v2930
        %v2932 = vrcp.pop %v2736
        %v2933 = vmul.f32 1.0, %v2932
        %v2934 = vrcp.pop %v2737
        %v2935 = vmul.f32 1.0, %v2934
        %v2936 = vrcp.pop %v2738
        %v2937 = vmul.f32 1.0, %v2936
        %v2938 = vrcp.pop %v2739
        %v2939 = vmul.f32 1.0, %v2938
        %v2940 = vrcp.pop %v2740
        %v2941 = vmul.f32 1.0, %v2940
        %v2942 = vrcp.pop %v2741
        %v2943 = vmul.f32 1.0, %v2942
        %v2944 = vrcp.pop %v2742
        %v2945 = vmul.f32 1.0, %v2944
        %v2946 = vrcp.pop %v2743
        %v2947 = vmul.f32 1.0, %v2946
        %v2948 = vrcp.pop %v2744
        %v2949 = vmul.f32 1.0, %v2948
        %v2950 = vrcp.pop %v2745
        %v2951 = vmul.f32 1.0, %v2950
        %v2952 = vrcp.pop %v2746
        %v2953 = vmul.f32 1.0, %v2952
        %v2954 = vrcp.pop %v2747
        %v2955 = vmul.f32 1.0, %v2954
        %v2956 = vrcp.pop %v2748
        %v2957 = vmul.f32 1.0, %v2956
        %v2958 = vrcp.pop %v2749
        %v2959 = vmul.f32 1.0, %v2958
        %v2960 = vrcp.pop %v2750
        %v2961 = vmul.f32 1.0, %v2960
        %v2962 = vrcp.pop %v2751
        %v2963 = vmul.f32 1.0, %v2962
        %v2964 = vrcp.pop %v2752
        %v2965 = vmul.f32 1.0, %v2964
        %v2966 = vrcp.pop %v2753
        %v2967 = vmul.f32 1.0, %v2966
        %v2968 = vrcp.pop %v2754
        %v2969 = vmul.f32 1.0, %v2968
        %v2970 = vrcp.pop %v2755
        %v2971 = vmul.f32 1.0, %v2970
        %v2972 = vrcp.pop %v2756
        %v2973 = vmul.f32 1.0, %v2972
        %v2974 = vrcp.pop %v2757
        %v2975 = vmul.f32 1.0, %v2974
        %v2976 = vrcp.pop %v2758
        %v2977 = vmul.f32 1.0, %v2976
        %v2978 = vrcp.pop %v2759
        %v2979 = vmul.f32 1.0, %v2978
        %v2980 = vrcp.pop %v2760
        %v2981 = vmul.f32 1.0, %v2980
        %v2982 = vrcp.pop %v2761
        %v2983 = vmul.f32 1.0, %v2982
        %v2984 = vrcp.pop %v2762
        %v2985 = vmul.f32 1.0, %v2984
        %v2986 = vrcp.pop %v2763
        %v2987 = vmul.f32 1.0, %v2986
        %v2988 = vrcp.pop %v2764
        %v2989 = vmul.f32 1.0, %v2988
        %v2990 = vrcp.pop %v2765
        %v2991 = vmul.f32 1.0, %v2990
        %v2992 = vrcp.pop %v2766
        %v2993 = vmul.f32 1.0, %v2992
        %v2994 = vrcp.pop %v2767
        %v2995 = vmul.f32 1.0, %v2994
        %v2996 = vrcp.pop %v2768
        %v2997 = vmul.f32 1.0, %v2996
        %v2998 = vrcp.pop %v2769
        %v2999 = vmul.f32 1.0, %v2998
        %v3000 = vrcp.pop %v2770
        %v3001 = vmul.f32 1.0, %v3000
        %v3002 = vrcp.pop %v2771
        %v3003 = vmul.f32 1.0, %v3002
        %v3004 = vrcp.pop %v2772
        %v3005 = vmul.f32 1.0, %v3004
        %v3006 = vrcp.pop %v2773
        %v3007 = vmul.f32 1.0, %v3006
        %v3008 = vrcp.pop %v2774
        %v3009 = vmul.f32 1.0, %v3008
        %v3010 = vrcp.pop %v2775
        %v3011 = vmul.f32 1.0, %v3010
        %v3012 = vrcp.pop %v2776
        %v3013 = vmul.f32 1.0, %v3012
        %v3014 = vrcp.pop %v2777
        %v3015 = vmul.f32 1.0, %v3014
        %v3016 = vrcp.pop %v2778
        %v3017 = vmul.f32 1.0, %v3016
        %v3018 = vrcp.pop %v2779
        %v3019 = vmul.f32 1.0, %v3018
        %v3020 = vrcp.pop %v2780
        %v3021 = vmul.f32 1.0, %v3020
        %v3022 = vrcp.pop %v2781
        %v3023 = vmul.f32 1.0, %v3022
        %v3024 = vrcp.pop %v2782
        %v3025 = vmul.f32 1.0, %v3024
        %v3026 = vrcp.pop %v2783
        %v3027 = vmul.f32 1.0, %v3026
        %v3028 = vrcp.pop %v2784
        %v3029 = vmul.f32 1.0, %v3028
        %v3030 = vrcp.pop %v2785
        %v3031 = vmul.f32 1.0, %v3030
        %v3032 = vrcp.pop %v2786
        %v3033 = vmul.f32 1.0, %v3032
        %v3034 = vrcp.pop %v2787
        %v3035 = vmul.f32 1.0, %v3034
        %v3036 = vrcp.pop %v2788
        %v3037 = vmul.f32 1.0, %v3036
        %v3038 = vrcp.pop %v2789
        %v3039 = vmul.f32 1.0, %v3038
        %v3040 = vrcp.pop %v2790
        %v3041 = vmul.f32 1.0, %v3040
        %v3042 = vrcp.pop %v2791
        %v3043 = vmul.f32 1.0, %v3042
        %v3044 = vrcp.pop %v2792
        %v3045 = vmul.f32 1.0, %v3044
        %v3046 = vrcp.pop %v2793
        %v3047 = vmul.f32 1.0, %v3046
        %v3048 = vrcp.pop %v2794
        %v3049 = vmul.f32 1.0, %v3048
        %v3050 = vrcp.pop %v2795
        %v3051 = vmul.f32 1.0, %v3050
        %v3052 = vrcp.pop %v2796
        %v3053 = vmul.f32 1.0, %v3052
        %v3054 = vrcp.pop %v2797
        %v3055 = vmul.f32 1.0, %v3054
        %v3056 = vrcp.pop %v2798
        %v3057 = vmul.f32 1.0, %v3056
        %v3058 = vrcp.pop %v2799
        %v3059 = vmul.f32 1.0, %v3058
        %v3060 = vrcp.pop %v2800
        %v3061 = vmul.f32 1.0, %v3060
        %v3062 = vrcp.pop %v2801
        %v3063 = vmul.f32 1.0, %v3062
        %v3064 = vrcp.pop %v2802
        %v3065 = vmul.f32 1.0, %v3064
        %v3066 = vrcp.pop %v2803
        %v3067 = vmul.f32 1.0, %v3066
        %v3068 = vrcp.pop %v2804
        %v3069 = vmul.f32 1.0, %v3068
        %v3070 = vrcp.pop %v2805
        %v3071 = vmul.f32 1.0, %v3070
        %v3072 = vrcp.pop %v2806
        %v3073 = vmul.f32 1.0, %v3072
        %v3074 = vrcp.pop %v2807
        %v3075 = vmul.f32 1.0, %v3074
        %v3076 = vrcp.pop %v2808
        %v3077 = vmul.f32 1.0, %v3076
        %v3078 = vrcp.pop %v2809
        %v3079 = vmul.f32 1.0, %v3078
        %v3080 = vrcp.pop %v2810
        %v3081 = vmul.f32 1.0, %v3080
        %v3082 = vrcp.pop %v2811
        %v3083 = vmul.f32 1.0, %v3082
        %v3084 = vrcp.pop %v2812
        %v3085 = vmul.f32 1.0, %v3084
        %v3086 = vrcp.pop %v2813
        %v3087 = vmul.f32 1.0, %v3086
        %v3088 = vrcp.pop %v2814
        %v3089 = vmul.f32 1.0, %v3088
        %v3090 = vrcp.pop %v2815
        %v3091 = vmul.f32 1.0, %v3090
        %v3092 = vrcp.pop %v2816
        %v3093 = vmul.f32 1.0, %v3092
        %v3094 = vrcp.pop %v2817
        %v3095 = vmul.f32 1.0, %v3094
        %v3096 = vrcp.pop %v2818
        %v3097 = vmul.f32 1.0, %v3096
        %v3098 = vrcp.pop %v2819
        %v3099 = vmul.f32 1.0, %v3098
        %v3100 = vrcp.pop %v2820
        %v3101 = vmul.f32 1.0, %v3100
        %v3102 = vrcp.pop %v2821
        %v3103 = vmul.f32 1.0, %v3102
        %v3104 = vrcp.pop %v2822
        %v3105 = vmul.f32 1.0, %v3104
        %v3106 = vrcp.pop %v2823
        %v3107 = vmul.f32 1.0, %v3106
        %v3108 = vrcp.pop %v2824
        %v3109 = vmul.f32 1.0, %v3108
        %v3110 = vrcp.pop %v2825
        %v3111 = vmul.f32 1.0, %v3110
        %v3112 = vrcp.pop %v2826
        %v3113 = vmul.f32 1.0, %v3112
        %v3114 = vrcp.pop %v2827
        %v3115 = vmul.f32 1.0, %v3114
        %v3116 = vrcp.pop %v2828
        %v3117 = vmul.f32 1.0, %v3116
        %v3118 = vrcp.pop %v2829
        %v3119 = vmul.f32 1.0, %v3118
        %v3120 = vrcp.pop %v2830
        %v3121 = vmul.f32 1.0, %v3120
        %v3122 = vrcp.pop %v2831
        %v3123 = vmul.f32 1.0, %v3122
        %v3124 = vrcp.pop %v2832
        %v3125 = vmul.f32 1.0, %v3124
        %v3126 = vrcp.pop %v2833
        %v3127 = vmul.f32 1.0, %v3126
        %v3128 = vrcp.pop %v2834
        %v3129 = vmul.f32 1.0, %v3128
        %v3130 = vrcp.pop %v2835
        %v3131 = vmul.f32 1.0, %v3130
        %v3132 = vrcp.pop %v2836
        %v3133 = vmul.f32 1.0, %v3132
        %v3134 = vrcp.pop %v2837
        %v3135 = vmul.f32 1.0, %v3134
        %v3136 = vrcp.pop %v2838
        %v3137 = vmul.f32 1.0, %v3136
        %v3138 = vrcp.pop %v2839
        %v3139 = vmul.f32 1.0, %v3138
        %v3140 = vrcp.pop %v2840
        %v3141 = vmul.f32 1.0, %v3140
        %v3142 = vrcp.pop %v2841
        %v3143 = vmul.f32 1.0, %v3142
        %v3144 = vrcp.pop %v2842
        %v3145 = vmul.f32 1.0, %v3144
        %v3146 = vrcp.pop %v2843
        %v3147 = vmul.f32 1.0, %v3146
        %v3148 = vrcp.pop %v2844
        %v3149 = vmul.f32 1.0, %v3148
        %v3150 = vrcp.pop %v2845
        %v3151 = vmul.f32 1.0, %v3150
        %v3152 = vrcp.pop %v2846
        %v3153 = vmul.f32 1.0, %v3152
        %v3154 = vrcp.pop %v2847
        %v3155 = vmul.f32 1.0, %v3154
        %v3156 = vrcp.pop %v2848
        %v3157 = vmul.f32 1.0, %v3156
        %v3158 = vrcp.pop %v2849
        %v3159 = vmul.f32 1.0, %v3158
        %v3160 = vrcp.pop %v2850
        %v3161 = vmul.f32 1.0, %v3160
        %v3162 = vrcp.pop %v2851
        %v3163 = vmul.f32 1.0, %v3162
        %v3164 = vrcp.pop %v2852
        %v3165 = vmul.f32 1.0, %v3164
        %v3166 = vrcp.pop %v2853
        %v3167 = vmul.f32 1.0, %v3166
        %v3168 = vrcp.pop %v2854
        %v3169 = vmul.f32 1.0, %v3168
        %v3170 = vrcp.pop %v2855
        %v3171 = vmul.f32 1.0, %v3170
        %v3172 = vrcp.pop %v2856
        %v3173 = vmul.f32 1.0, %v3172
        %v3174 = vrcp.pop %v2857
        %v3175 = vmul.f32 1.0, %v3174
        %v3176 = vrcp.pop %v2858
        %v3177 = vmul.f32 1.0, %v3176
        %v3178 = vrcp.pop %v2859
        %v3179 = vmul.f32 1.0, %v3178
        %v3180 = vrcp.pop %v2860
        %v3181 = vmul.f32 1.0, %v3180
        %v3182 = vrcp.pop %v2861
        %v3183 = vmul.f32 1.0, %v3182
        %v3184 = vrcp.pop %v2862
        %v3185 = vmul.f32 1.0, %v3184
        %v3186 = vrcp.pop %v2863
        %v3187 = vmul.f32 1.0, %v3186
        %v3188 = vrcp.pop %v2864
        %v3189 = vmul.f32 1.0, %v3188
        %v3190 = vrcp.pop %v2865
        %v3191 = vmul.f32 1.0, %v3190
        %v3192 = vrcp.pop %v2866
        %v3193 = vmul.f32 1.0, %v3192
        %v3194 = vrcp.pop %v2867
        %v3195 = vmul.f32 1.0, %v3194
        %v3196 = vrcp.pop %v2868
        %v3197 = vmul.f32 1.0, %v3196
        %v3198 = vrcp.pop %v2869
        %v3199 = vmul.f32 1.0, %v3198
        %v3200 = vrcp.pop %v2870
        %v3201 = vmul.f32 1.0, %v3200
        %v3202 = vrcp.pop %v2871
        %v3203 = vmul.f32 1.0, %v3202
        %v3204 = vrcp.pop %v2872
        %v3205 = vmul.f32 1.0, %v3204
        %v3206 = vrcp.pop %v2873
        %v3207 = vmul.f32 1.0, %v3206
        %v3208 = vrcp.pop %v2874
        %v3209 = vmul.f32 1.0, %v3208
        %v3210 = vrcp.pop %v2875
        %v3211 = vmul.f32 1.0, %v3210
        %v3212 = vrcp.pop %v2876
        %v3213 = vmul.f32 1.0, %v3212
        %v3214 = vrcp.pop %v2877
        %v3215 = vmul.f32 1.0, %v3214
        %v3216 = vrcp.pop %v2878
        %v3217 = vmul.f32 1.0, %v3216
        %v3218 = vrcp.pop %v2879
        %v3219 = vmul.f32 1.0, %v3218
        %v3220 = vrcp.pop %v2880
        %v3221 = vmul.f32 1.0, %v3220
        %v3222 = vrcp.pop %v2881
        %v3223 = vmul.f32 1.0, %v3222
        %v3224 = vrcp.pop %v2882
        %v3225 = vmul.f32 1.0, %v3224
        %v3226 = vrcp.pop %v2883
        %v3227 = vmul.f32 1.0, %v3226
        %v3228 = vrcp.pop %v2884
        %v3229 = vmul.f32 1.0, %v3228
        %v3230 = vrcp.pop %v2885
        %v3231 = vmul.f32 1.0, %v3230
        %v3232 = vrcp.pop %v2886
        %v3233 = vmul.f32 1.0, %v3232
        %v3234 = vrcp.pop %v2887
        %v3235 = vmul.f32 1.0, %v3234
        %v3236 = vrcp.pop %v2888
        %v3237 = vmul.f32 1.0, %v3236
        %v3238 = vrcp.pop %v2889
        %v3239 = vmul.f32 1.0, %v3238
        %v3240 = vrcp.pop %v2890
        %v3241 = vmul.f32 1.0, %v3240
        %v3242 = vrcp.pop %v2891
        %v3243 = vmul.f32 1.0, %v3242
        %v3244 = vrcp.pop %v2892
        %v3245 = vmul.f32 1.0, %v3244
        %v3246 = vrcp.pop %v2893
        %v3247 = vmul.f32 1.0, %v3246
        %v3248 = vrcp.pop %v2894
        %v3249 = vmul.f32 1.0, %v3248
        %v3250 = vrcp.pop %v2895
        %v3251 = vmul.f32 1.0, %v3250
        %v3252 = vrcp.pop %v2896
        %v3253 = vmul.f32 1.0, %v3252
        %v3254 = vrcp.pop %v2897
        %v3255 = vmul.f32 1.0, %v3254
        %v3256 = vrcp.pop %v2898
        %v3257 = vmul.f32 1.0, %v3256
        %v3258 = vrcp.pop %v2899
        %v3259 = vmul.f32 1.0, %v3258
        %v3260 = vrcp.pop %v2900
        %v3261 = vmul.f32 1.0, %v3260
        %v3262 = vrcp.pop %v2901
        %v3263 = vmul.f32 1.0, %v3262
        %v3264 = vrcp.pop %v2902
        %v3265 = vmul.f32 1.0, %v3264
        %v3266 = vrcp.pop %v2903
        %v3267 = vmul.f32 1.0, %v3266
        %v3268 = vrcp.pop %v2904
        %v3269 = vmul.f32 1.0, %v3268
        %v3270 = vrcp.pop %v2905
        %v3271 = vmul.f32 1.0, %v3270
        %v3272 = vrcp.pop %v2906
        %v3273 = vmul.f32 1.0, %v3272
        %v3274 = vrcp.pop %v2907
        %v3275 = vmul.f32 1.0, %v3274
        %v3276 = vrcp.pop %v2908
        %v3277 = vmul.f32 1.0, %v3276
        %v3278 = vrcp.pop %v2909
        %v3279 = vmul.f32 1.0, %v3278
        %v3280 = vrcp.pop %v2910
        %v3281 = vmul.f32 1.0, %v3280
        %v3282 = vrcp.pop %v2911
        %v3283 = vmul.f32 1.0, %v3282
        %v3284 = vrcp.pop %v2912
        %v3285 = vmul.f32 1.0, %v3284
        %v3286 = vrcp.pop %v2913
        %v3287 = vmul.f32 1.0, %v3286
        %v3288 = vrcp.pop %v2914
        %v3289 = vmul.f32 1.0, %v3288
        %v3290 = vrcp.pop %v2915
        %v3291 = vmul.f32 1.0, %v3290
        %v3292 = vrcp.pop %v2916
        %v3293 = vmul.f32 1.0, %v3292
        %v3294 = vrcp.pop %v2917
        %v3295 = vmul.f32 1.0, %v3294
        %v3296 = vrcp.pop %v2918
        %v3297 = vmul.f32 1.0, %v3296
        %v3298 = vrcp.pop %v2919
        %v3299 = vmul.f32 1.0, %v3298
        %v3300 = vrcp.pop %v2920
        %v3301 = vmul.f32 1.0, %v3300
        %v3302 = vrcp.pop %v2921
        %v3303 = vmul.f32 1.0, %v3302
        %v3304 = vrcp.pop %v2922
        %v3305 = vmul.f32 1.0, %v3304
        %v3306 = vrcp.pop %v2923
        %v3307 = vmul.f32 1.0, %v3306
        %v3308 = vmul.f32 %v1390, %v2925
        %v3309 = vmul.f32 %v1393, %v2927
        %v3310 = vmul.f32 %v1398, %v2929
        %v3311 = vmul.f32 %v1401, %v2931
        %v3312 = vmul.f32 %v1406, %v2933
        %v3313 = vmul.f32 %v1409, %v2935
        %v3314 = vmul.f32 %v1414, %v2937
        %v3315 = vmul.f32 %v1417, %v2939
        %v3316 = vmul.f32 %v1422, %v2941
        %v3317 = vmul.f32 %v1425, %v2943
        %v3318 = vmul.f32 %v1430, %v2945
        %v3319 = vmul.f32 %v1433, %v2947
        %v3320 = vmul.f32 %v1438, %v2949
        %v3321 = vmul.f32 %v1441, %v2951
        %v3322 = vmul.f32 %v1446, %v2953
        %v3323 = vmul.f32 %v1449, %v2955
        %v3324 = vmul.f32 %v1454, %v2957
        %v3325 = vmul.f32 %v1457, %v2959
        %v3326 = vmul.f32 %v1462, %v2961
        %v3327 = vmul.f32 %v1465, %v2963
        %v3328 = vmul.f32 %v1470, %v2965
        %v3329 = vmul.f32 %v1473, %v2967
        %v3330 = vmul.f32 %v1478, %v2969
        %v3331 = vmul.f32 %v1481, %v2971
        %v3332 = vmul.f32 %v1486, %v2973
        %v3333 = vmul.f32 %v1489, %v2975
        %v3334 = vmul.f32 %v1494, %v2977
        %v3335 = vmul.f32 %v1497, %v2979
        %v3336 = vmul.f32 %v1502, %v2981
        %v3337 = vmul.f32 %v1505, %v2983
        %v3338 = vmul.f32 %v1510, %v2985
        %v3339 = vmul.f32 %v1513, %v2987
        %v3340 = vmul.f32 %v1518, %v2989
        %v3341 = vmul.f32 %v1521, %v2991
        %v3342 = vmul.f32 %v1526, %v2993
        %v3343 = vmul.f32 %v1529, %v2995
        %v3344 = vmul.f32 %v1534, %v2997
        %v3345 = vmul.f32 %v1537, %v2999
        %v3346 = vmul.f32 %v1542, %v3001
        %v3347 = vmul.f32 %v1545, %v3003
        %v3348 = vmul.f32 %v1550, %v3005
        %v3349 = vmul.f32 %v1553, %v3007
        %v3350 = vmul.f32 %v1558, %v3009
        %v3351 = vmul.f32 %v1561, %v3011
        %v3352 = vmul.f32 %v1566, %v3013
        %v3353 = vmul.f32 %v1569, %v3015
        %v3354 = vmul.f32 %v1574, %v3017
        %v3355 = vmul.f32 %v1577, %v3019
        %v3356 = vmul.f32 %v1582, %v3021
        %v3357 = vmul.f32 %v1585, %v3023
        %v3358 = vmul.f32 %v1590, %v3025
        %v3359 = vmul.f32 %v1593, %v3027
        %v3360 = vmul.f32 %v1598, %v3029
        %v3361 = vmul.f32 %v1601, %v3031
        %v3362 = vmul.f32 %v1606, %v3033
        %v3363 = vmul.f32 %v1609, %v3035
        %v3364 = vmul.f32 %v1614, %v3037
        %v3365 = vmul.f32 %v1617, %v3039
        %v3366 = vmul.f32 %v1622, %v3041
        %v3367 = vmul.f32 %v1625, %v3043
        %v3368 = vmul.f32 %v1630, %v3045
        %v3369 = vmul.f32 %v1633, %v3047
        %v3370 = vmul.f32 %v1638, %v3049
        %v3371 = vmul.f32 %v1641, %v3051
        %v3372 = vmul.f32 %v1646, %v3053
        %v3373 = vmul.f32 %v1649, %v3055
        %v3374 = vmul.f32 %v1654, %v3057
        %v3375 = vmul.f32 %v1657, %v3059
        %v3376 = vmul.f32 %v1662, %v3061
        %v3377 = vmul.f32 %v1665, %v3063
        %v3378 = vmul.f32 %v1670, %v3065
        %v3379 = vmul.f32 %v1673, %v3067
        %v3380 = vmul.f32 %v1678, %v3069
        %v3381 = vmul.f32 %v1681, %v3071
        %v3382 = vmul.f32 %v1686, %v3073
        %v3383 = vmul.f32 %v1689, %v3075
        %v3384 = vmul.f32 %v1694, %v3077
        %v3385 = vmul.f32 %v1697, %v3079
        %v3386 = vmul.f32 %v1702, %v3081
        %v3387 = vmul.f32 %v1705, %v3083
        %v3388 = vmul.f32 %v1710, %v3085
        %v3389 = vmul.f32 %v1713, %v3087
        %v3390 = vmul.f32 %v1718, %v3089
        %v3391 = vmul.f32 %v1721, %v3091
        %v3392 = vmul.f32 %v1726, %v3093
        %v3393 = vmul.f32 %v1729, %v3095
        %v3394 = vmul.f32 %v1734, %v3097
        %v3395 = vmul.f32 %v1737, %v3099
        %v3396 = vmul.f32 %v1742, %v3101
        %v3397 = vmul.f32 %v1745, %v3103
        %v3398 = vmul.f32 %v1750, %v3105
        %v3399 = vmul.f32 %v1753, %v3107
        %v3400 = vmul.f32 %v1758, %v3109
        %v3401 = vmul.f32 %v1761, %v3111
        %v3402 = vmul.f32 %v1766, %v3113
        %v3403 = vmul.f32 %v1769, %v3115
        %v3404 = vmul.f32 %v1774, %v3117
        %v3405 = vmul.f32 %v1777, %v3119
        %v3406 = vmul.f32 %v1782, %v3121
        %v3407 = vmul.f32 %v1785, %v3123
        %v3408 = vmul.f32 %v1790, %v3125
        %v3409 = vmul.f32 %v1793, %v3127
        %v3410 = vmul.f32 %v1798, %v3129
        %v3411 = vmul.f32 %v1801, %v3131
        %v3412 = vmul.f32 %v1806, %v3133
        %v3413 = vmul.f32 %v1809, %v3135
        %v3414 = vmul.f32 %v1814, %v3137
        %v3415 = vmul.f32 %v1817, %v3139
        %v3416 = vmul.f32 %v1822, %v3141
        %v3417 = vmul.f32 %v1825, %v3143
        %v3418 = vmul.f32 %v1830, %v3145
        %v3419 = vmul.f32 %v1833, %v3147
        %v3420 = vmul.f32 %v1838, %v3149
        %v3421 = vmul.f32 %v1841, %v3151
        %v3422 = vmul.f32 %v1846, %v3153
        %v3423 = vmul.f32 %v1849, %v3155
        %v3424 = vmul.f32 %v1854, %v3157
        %v3425 = vmul.f32 %v1857, %v3159
        %v3426 = vmul.f32 %v1862, %v3161
        %v3427 = vmul.f32 %v1865, %v3163
        %v3428 = vmul.f32 %v1870, %v3165
        %v3429 = vmul.f32 %v1873, %v3167
        %v3430 = vmul.f32 %v1878, %v3169
        %v3431 = vmul.f32 %v1881, %v3171
        %v3432 = vmul.f32 %v1886, %v3173
        %v3433 = vmul.f32 %v1889, %v3175
        %v3434 = vmul.f32 %v1894, %v3177
        %v3435 = vmul.f32 %v1897, %v3179
        %v3436 = vmul.f32 %v1902, %v3181
        %v3437 = vmul.f32 %v1905, %v3183
        %v3438 = vmul.f32 %v1910, %v3185
        %v3439 = vmul.f32 %v1913, %v3187
        %v3440 = vmul.f32 %v1918, %v3189
        %v3441 = vmul.f32 %v1921, %v3191
        %v3442 = vmul.f32 %v1926, %v3193
        %v3443 = vmul.f32 %v1929, %v3195
        %v3444 = vmul.f32 %v1934, %v3197
        %v3445 = vmul.f32 %v1937, %v3199
        %v3446 = vmul.f32 %v1942, %v3201
        %v3447 = vmul.f32 %v1945, %v3203
        %v3448 = vmul.f32 %v1950, %v3205
        %v3449 = vmul.f32 %v1953, %v3207
        %v3450 = vmul.f32 %v1958, %v3209
        %v3451 = vmul.f32 %v1961, %v3211
        %v3452 = vmul.f32 %v1966, %v3213
        %v3453 = vmul.f32 %v1969, %v3215
        %v3454 = vmul.f32 %v1974, %v3217
        %v3455 = vmul.f32 %v1977, %v3219
        %v3456 = vmul.f32 %v1982, %v3221
        %v3457 = vmul.f32 %v1985, %v3223
        %v3458 = vmul.f32 %v1990, %v3225
        %v3459 = vmul.f32 %v1993, %v3227
        %v3460 = vmul.f32 %v1998, %v3229
        %v3461 = vmul.f32 %v2001, %v3231
        %v3462 = vmul.f32 %v2006, %v3233
        %v3463 = vmul.f32 %v2009, %v3235
        %v3464 = vmul.f32 %v2014, %v3237
        %v3465 = vmul.f32 %v2017, %v3239
        %v3466 = vmul.f32 %v2022, %v3241
        %v3467 = vmul.f32 %v2025, %v3243
        %v3468 = vmul.f32 %v2030, %v3245
        %v3469 = vmul.f32 %v2033, %v3247
        %v3470 = vmul.f32 %v2038, %v3249
        %v3471 = vmul.f32 %v2041, %v3251
        %v3472 = vmul.f32 %v2046, %v3253
        %v3473 = vmul.f32 %v2049, %v3255
        %v3474 = vmul.f32 %v2054, %v3257
        %v3475 = vmul.f32 %v2057, %v3259
        %v3476 = vmul.f32 %v2062, %v3261
        %v3477 = vmul.f32 %v2065, %v3263
        %v3478 = vmul.f32 %v2070, %v3265
        %v3479 = vmul.f32 %v2073, %v3267
        %v3480 = vmul.f32 %v2078, %v3269
        %v3481 = vmul.f32 %v2081, %v3271
        %v3482 = vmul.f32 %v2086, %v3273
        %v3483 = vmul.f32 %v2089, %v3275
        %v3484 = vmul.f32 %v2094, %v3277
        %v3485 = vmul.f32 %v2097, %v3279
        %v3486 = vmul.f32 %v2102, %v3281
        %v3487 = vmul.f32 %v2105, %v3283
        %v3488 = vmul.f32 %v2110, %v3285
        %v3489 = vmul.f32 %v2113, %v3287
        %v3490 = vmul.f32 %v2118, %v3289
        %v3491 = vmul.f32 %v2121, %v3291
        %v3492 = vmul.f32 %v2126, %v3293
        %v3493 = vmul.f32 %v2129, %v3295
        %v3494 = vmul.f32 %v2134, %v3297
        %v3495 = vmul.f32 %v2137, %v3299
        %v3496 = vmul.f32 %v2142, %v3301
        %v3497 = vmul.f32 %v2145, %v3303
        %v3498 = vmul.f32 %v2150, %v3305
        %v3499 = vmul.f32 %v2153, %v3307
        %v3500 = vld [vmem:[%s4] sm:$0xff]
        %v3501 = vld [vmem:[%s4 + $0x8] sm:$0xff]
        %v3502 = vld [vmem:[%s4 + $0x10] sm:$0xff]
        %v3503 = vld [vmem:[%s4 + $0x18] sm:$0xff]
        %v3504 = vlaneseq
        %v3505 = vshrl.u32 %v3504, 7
        %v3506 = vsub.s32 0, %v3505
        %v3507 = vrot.slane %v360, %v3506
        %vm3508 = vcmask 261120
        %v3510 = vsel %vm3508, %v3308, 0
        %v3513 = vsel %vm3508, %v3309, 0
        %v3516 = vsel %vm3508, %v3310, 0
        %v3519 = vsel %vm3508, %v3311, 0
        %v3522 = vsel %vm3508, %v3312, 0
        %v3525 = vsel %vm3508, %v3313, 0
        %v3528 = vsel %vm3508, %v3314, 0
        %v3531 = vsel %vm3508, %v3315, 0
        %v3534 = vsel %vm3508, %v3316, 0
        %v3537 = vsel %vm3508, %v3317, 0
        %v3540 = vsel %vm3508, %v3318, 0
        %v3543 = vsel %vm3508, %v3319, 0
        %v3546 = vsel %vm3508, %v3320, 0
        %v3549 = vsel %vm3508, %v3321, 0
        %v3552 = vsel %vm3508, %v3322, 0
        %v3555 = vsel %vm3508, %v3323, 0
        %v3558 = vsel %vm3508, %v3324, 0
        %v3561 = vsel %vm3508, %v3325, 0
        %v3564 = vsel %vm3508, %v3326, 0
        %v3567 = vsel %vm3508, %v3327, 0
        %v3570 = vsel %vm3508, %v3328, 0
        %v3573 = vsel %vm3508, %v3329, 0
        %v3576 = vsel %vm3508, %v3330, 0
        %v3579 = vsel %vm3508, %v3331, 0
        %v3582 = vsel %vm3508, %v3332, 0
        %v3585 = vsel %vm3508, %v3333, 0
        %v3588 = vsel %vm3508, %v3334, 0
        %v3591 = vsel %vm3508, %v3335, 0
        %v3594 = vsel %vm3508, %v3336, 0
        %v3597 = vsel %vm3508, %v3337, 0
        %v3600 = vsel %vm3508, %v3338, 0
        %v3603 = vsel %vm3508, %v3339, 0
        %v3606 = vsel %vm3508, %v3340, 0
        %v3609 = vsel %vm3508, %v3341, 0
        %v3612 = vsel %vm3508, %v3342, 0
        %v3615 = vsel %vm3508, %v3343, 0
        %v3618 = vsel %vm3508, %v3344, 0
        %v3621 = vsel %vm3508, %v3345, 0
        %v3624 = vsel %vm3508, %v3346, 0
        %v3627 = vsel %vm3508, %v3347, 0
        %v3630 = vsel %vm3508, %v3348, 0
        %v3633 = vsel %vm3508, %v3349, 0
        %v3636 = vsel %vm3508, %v3350, 0
        %v3639 = vsel %vm3508, %v3351, 0
        %v3642 = vsel %vm3508, %v3352, 0
        %v3645 = vsel %vm3508, %v3353, 0
        %v3648 = vsel %vm3508, %v3354, 0
        %v3651 = vsel %vm3508, %v3355, 0
        %v3654 = vsel %vm3508, %v3356, 0
        %v3657 = vsel %vm3508, %v3357, 0
        %v3660 = vsel %vm3508, %v3358, 0
        %v3663 = vsel %vm3508, %v3359, 0
        %v3666 = vsel %vm3508, %v3360, 0
        %v3669 = vsel %vm3508, %v3361, 0
        %v3672 = vsel %vm3508, %v3362, 0
        %v3675 = vsel %vm3508, %v3363, 0
        %v3678 = vsel %vm3508, %v3364, 0
        %v3681 = vsel %vm3508, %v3365, 0
        %v3684 = vsel %vm3508, %v3366, 0
        %v3687 = vsel %vm3508, %v3367, 0
        %v3690 = vsel %vm3508, %v3368, 0
        %v3693 = vsel %vm3508, %v3369, 0
        %v3696 = vsel %vm3508, %v3370, 0
        %v3699 = vsel %vm3508, %v3371, 0
        %v3702 = vsel %vm3508, %v3372, 0
        %v3705 = vsel %vm3508, %v3373, 0
        %v3708 = vsel %vm3508, %v3374, 0
        %v3711 = vsel %vm3508, %v3375, 0
        %v3714 = vsel %vm3508, %v3376, 0
        %v3717 = vsel %vm3508, %v3377, 0
        %v3720 = vsel %vm3508, %v3378, 0
        %v3723 = vsel %vm3508, %v3379, 0
        %v3726 = vsel %vm3508, %v3380, 0
        %v3729 = vsel %vm3508, %v3381, 0
        %v3732 = vsel %vm3508, %v3382, 0
        %v3735 = vsel %vm3508, %v3383, 0
        %v3738 = vsel %vm3508, %v3384, 0
        %v3741 = vsel %vm3508, %v3385, 0
        %v3744 = vsel %vm3508, %v3386, 0
        %v3747 = vsel %vm3508, %v3387, 0
        %v3750 = vsel %vm3508, %v3388, 0
        %v3753 = vsel %vm3508, %v3389, 0
        %v3756 = vsel %vm3508, %v3390, 0
        %v3759 = vsel %vm3508, %v3391, 0
        %v3762 = vsel %vm3508, %v3392, 0
        %v3765 = vsel %vm3508, %v3393, 0
        %v3768 = vsel %vm3508, %v3394, 0
        %v3771 = vsel %vm3508, %v3395, 0
        %v3774 = vsel %vm3508, %v3396, 0
        %v3777 = vsel %vm3508, %v3397, 0
        %v3780 = vsel %vm3508, %v3398, 0
        %v3783 = vsel %vm3508, %v3399, 0
        %v3786 = vsel %vm3508, %v3400, 0
        %v3789 = vsel %vm3508, %v3401, 0
        %v3792 = vsel %vm3508, %v3402, 0
        %v3795 = vsel %vm3508, %v3403, 0
        %v3798 = vsel %vm3508, %v3404, 0
        %v3801 = vsel %vm3508, %v3405, 0
        %v3804 = vsel %vm3508, %v3406, 0
        %v3807 = vsel %vm3508, %v3407, 0
        %v3810 = vsel %vm3508, %v3408, 0
        %v3813 = vsel %vm3508, %v3409, 0
        %v3816 = vsel %vm3508, %v3410, 0
        %v3819 = vsel %vm3508, %v3411, 0
        %v3822 = vsel %vm3508, %v3412, 0
        %v3825 = vsel %vm3508, %v3413, 0
        %v3828 = vsel %vm3508, %v3414, 0
        %v3831 = vsel %vm3508, %v3415, 0
        %v3834 = vsel %vm3508, %v3416, 0
        %v3837 = vsel %vm3508, %v3417, 0
        %v3840 = vsel %vm3508, %v3418, 0
        %v3843 = vsel %vm3508, %v3419, 0
        %v3846 = vsel %vm3508, %v3420, 0
        %v3849 = vsel %vm3508, %v3421, 0
        %v3852 = vsel %vm3508, %v3422, 0
        %v3855 = vsel %vm3508, %v3423, 0
        %v3858 = vsel %vm3508, %v3424, 0
        %v3861 = vsel %vm3508, %v3425, 0
        %v3864 = vsel %vm3508, %v3426, 0
        %v3867 = vsel %vm3508, %v3427, 0
        %v3870 = vsel %vm3508, %v3428, 0
        %v3873 = vsel %vm3508, %v3429, 0
        %v3876 = vsel %vm3508, %v3430, 0
        %v3879 = vsel %vm3508, %v3431, 0
        %v3882 = vsel %vm3508, %v3432, 0
        %v3885 = vsel %vm3508, %v3433, 0
        %v3888 = vsel %vm3508, %v3434, 0
        %v3891 = vsel %vm3508, %v3435, 0
        %v3894 = vsel %vm3508, %v3436, 0
        %v3897 = vsel %vm3508, %v3437, 0
        %v3900 = vsel %vm3508, %v3438, 0
        %v3903 = vsel %vm3508, %v3439, 0
        %v3906 = vsel %vm3508, %v3440, 0
        %v3909 = vsel %vm3508, %v3441, 0
        %v3912 = vsel %vm3508, %v3442, 0
        %v3915 = vsel %vm3508, %v3443, 0
        %v3918 = vsel %vm3508, %v3444, 0
        %v3921 = vsel %vm3508, %v3445, 0
        %v3924 = vsel %vm3508, %v3446, 0
        %v3927 = vsel %vm3508, %v3447, 0
        %v3930 = vsel %vm3508, %v3448, 0
        %v3933 = vsel %vm3508, %v3449, 0
        %v3936 = vsel %vm3508, %v3450, 0
        %v3939 = vsel %vm3508, %v3451, 0
        %v3942 = vsel %vm3508, %v3452, 0
        %v3945 = vsel %vm3508, %v3453, 0
        %v3948 = vsel %vm3508, %v3454, 0
        %v3951 = vsel %vm3508, %v3455, 0
        %v3954 = vsel %vm3508, %v3456, 0
        %v3957 = vsel %vm3508, %v3457, 0
        %v3960 = vsel %vm3508, %v3458, 0
        %v3963 = vsel %vm3508, %v3459, 0
        %v3966 = vsel %vm3508, %v3460, 0
        %v3969 = vsel %vm3508, %v3461, 0
        %v3972 = vsel %vm3508, %v3462, 0
        %v3975 = vsel %vm3508, %v3463, 0
        %v3978 = vsel %vm3508, %v3464, 0
        %v3981 = vsel %vm3508, %v3465, 0
        %v3984 = vsel %vm3508, %v3466, 0
        %v3987 = vsel %vm3508, %v3467, 0
        %v3990 = vsel %vm3508, %v3468, 0
        %v3993 = vsel %vm3508, %v3469, 0
        %v3996 = vsel %vm3508, %v3470, 0
        %v3999 = vsel %vm3508, %v3471, 0
        %v4002 = vsel %vm3508, %v3472, 0
        %v4005 = vsel %vm3508, %v3473, 0
        %v4008 = vsel %vm3508, %v3474, 0
        %v4011 = vsel %vm3508, %v3475, 0
        %v4014 = vsel %vm3508, %v3476, 0
        %v4017 = vsel %vm3508, %v3477, 0
        %v4020 = vsel %vm3508, %v3478, 0
        %v4023 = vsel %vm3508, %v3479, 0
        %v4026 = vsel %vm3508, %v3480, 0
        %v4029 = vsel %vm3508, %v3481, 0
        %v4032 = vsel %vm3508, %v3482, 0
        %v4035 = vsel %vm3508, %v3483, 0
        %v4038 = vsel %vm3508, %v3484, 0
        %v4041 = vsel %vm3508, %v3485, 0
        %v4044 = vsel %vm3508, %v3486, 0
        %v4047 = vsel %vm3508, %v3487, 0
        %v4050 = vsel %vm3508, %v3488, 0
        %v4053 = vsel %vm3508, %v3489, 0
        %v4056 = vsel %vm3508, %v3490, 0
        %v4059 = vsel %vm3508, %v3491, 0
        %v4062 = vsel %vm3508, %v3492, 0
        %v4065 = vsel %vm3508, %v3493, 0
        %v4068 = vsel %vm3508, %v3494, 0
        %v4071 = vsel %vm3508, %v3495, 0
        %v4074 = vsel %vm3508, %v3496, 0
        %v4077 = vsel %vm3508, %v3497, 0
        %v4080 = vsel %vm3508, %v3498, 0
        %v4083 = vsel %vm3508, %v3499, 0
        %4085 = vmatprep.subr.mxu0 0.0
        %4086 = vmatpush1.msra.mxu0 %v3500
        %4087 = vmatprep.subr.mxu0 0.0
        %4088 = vmatpush1.msra.mxu0 %v3501
        %4089 = vmatprep.subr.mxu0 0.0
        %4090 = vmatpush1.msra.mxu0 %v3502
        %4091 = vmatprep.subr.mxu0 0.0
        %4092 = vmatpush1.msra.mxu0 %v3503
        %4093 = vmatprep.subr.mxu0 0.0
        %4094 = vmatpush1.msra.mxu0 0.0
        %4095 = vmatprep.subr.mxu0 0.0
        %4096 = vmatpush1.msra.mxu0 0.0
        %4097 = vmatprep.subr.mxu0 0.0
        %4098 = vmatpush1.msra.mxu0 0.0
        %4099 = vmatprep.subr.mxu0 0.0
        %4100 = vmatpush1.msra.mxu0 0.0
        %4101 = vmatprep.subr.mxu0 0.0
        %4102 = vmatpush1.msra.mxu0 0.0
        %4103 = vmatprep.subr.mxu0 0.0
        %4104 = vmatpush1.msra.mxu0 0.0
        %4105 = vmatprep.subr.mxu0 0.0
        %4106 = vmatpush1.msra.mxu0 0.0
        %4107 = vmatprep.subr.mxu0 0.0
        %4108 = vmatpush1.msra.mxu0 0.0
        %4109 = vmatprep.subr.mxu0 0.0
        %4110 = vmatpush1.msra.mxu0 0.0
        %4111 = vmatprep.subr.mxu0 0.0
        %4112 = vmatpush1.msra.mxu0 0.0
        %4113 = vmatprep.subr.mxu0 0.0
        %4114 = vmatpush1.msra.mxu0 0.0
        %4115 = vmatprep.subr.mxu0 0.0
        %4116 = vmatpush1.msra.mxu0 0.0
        %4117 = vmatprep.subr.mxu0 0.0
        %4118 = vmatpush1.msra.mxu0 0.0
        %4119 = vmatprep.subr.mxu0 0.0
        %4120 = vmatpush1.msra.mxu0 0.0
        %4121 = vmatprep.subr.mxu0 0.0
        %4122 = vmatpush1.msra.mxu0 0.0
        %4123 = vmatprep.subr.mxu0 0.0
        %4124 = vmatpush1.msra.mxu0 0.0
        %4125 = vmatprep.subr.mxu0 0.0
        %4126 = vmatpush1.msra.mxu0 0.0
        %4127 = vmatprep.subr.mxu0 0.0
        %4128 = vmatpush1.msra.mxu0 0.0
        %4129 = vmatprep.subr.mxu0 0.0
        %4130 = vmatpush1.msra.mxu0 0.0
        %4131 = vmatprep.subr.mxu0 0.0
        %4132 = vmatpush1.msra.mxu0 0.0
        %4133 = vmatprep.subr.mxu0 0.0
        %4134 = vmatpush1.msra.mxu0 0.0
        %4135 = vmatprep.subr.mxu0 0.0
        %4136 = vmatpush1.msra.mxu0 0.0
        %4137 = vmatprep.subr.mxu0 0.0
        %4138 = vmatpush1.msra.mxu0 0.0
        %4139 = vmatprep.subr.mxu0 0.0
        %4140 = vmatpush1.msra.mxu0 0.0
        %4141 = vmatprep.subr.mxu0 0.0
        %4142 = vmatpush1.msra.mxu0 0.0
        %4143 = vmatprep.subr.mxu0 0.0
        %4144 = vmatpush1.msra.mxu0 0.0
        %4145 = vmatprep.subr.mxu0 0.0
        %4146 = vmatpush1.msra.mxu0 0.0
        %4147 = vmatprep.subr.mxu0 0.0
        %4148 = vmatpush1.msra.mxu0 0.0
        %4149 = vmatprep.mubr.f32.mxu0 0.0
        %4150 = vmatmul.mubr.f32.gmra.mrb[0].mxu0 %v3510
        %v4151 = vpop.f32.mrb[0].mxu0
        %v4152 = vadd.f32 %v3507, %v4151
        %v4153 = vpop.f32.mrb[0].mxu0
        %4154 = vmatprep.mubr.f32.mxu0 0.0
        %4155 = vmatmul.mubr.f32.gmra.mrb[0].mxu0 %v3513
        %v4156 = vpop.f32.mrb[0].mxu0
        %v4157 = vadd.f32 %v3507, %v4156
        %v4158 = vpop.f32.mrb[0].mxu0
        %4159 = vmatprep.mubr.f32.mxu0 0.0
        %4160 = vmatmul.mubr.f32.gmra.mrb[0].mxu0 %v3516
        %v4161 = vpop.f32.mrb[0].mxu0
        %v4162 = vadd.f32 %v3507, %v4161
        %v4163 = vpop.f32.mrb[0].mxu0
        %4164 = vmatprep.mubr.f32.mxu0 0.0
        %4165 = vmatmul.mubr.f32.gmra.mrb[0].mxu0 %v3519
        %v4166 = vpop.f32.mrb[0].mxu0
        %v4167 = vadd.f32 %v3507, %v4166
        %v4168 = vpop.f32.mrb[0].mxu0
        %4169 = vmatprep.mubr.f32.mxu0 0.0
        %4170 = vmatmul.mubr.f32.gmra.mrb[0].mxu0 %v3522
        %v4171 = vpop.f32.mrb[0].mxu0
        %v4172 = vadd.f32 %v3507, %v4171
        %v4173 = vpop.f32.mrb[0].mxu0
        %4174 = vmatprep.mubr.f32.mxu0 0.0
        %4175 = vmatmul.mubr.f32.gmra.mrb[0].mxu0 %v3525
        %v4176 = vpop.f32.mrb[0].mxu0
        %v4177 = vadd.f32 %v3507, %v4176
        %v4178 = vpop.f32.mrb[0].mxu0
        %4179 = vmatprep.mubr.f32.mxu0 0.0
        %4180 = vmatmul.mubr.f32.gmra.mrb[0].mxu0 %v3528
        %v4181 = vpop.f32.mrb[0].mxu0
        %v4182 = vadd.f32 %v3507, %v4181
        %v4183 = vpop.f32.mrb[0].mxu0
        %4184 = vmatprep.mubr.f32.mxu0 0.0
        %4185 = vmatmul.mubr.f32.gmra.mrb[0].mxu0 %v3531
        %v4186 = vpop.f32.mrb[0].mxu0
        %v4187 = vadd.f32 %v3507, %v4186
        %v4188 = vpop.f32.mrb[0].mxu0
        %4189 = vmatprep.mubr.f32.mxu0 0.0
        %4190 = vmatmul.mubr.f32.gmra.mrb[0].mxu0 %v3534
        %v4191 = vpop.f32.mrb[0].mxu0
        %v4192 = vadd.f32 %v3507, %v4191
        %v4193 = vpop.f32.mrb[0].mxu0
        %4194 = vmatprep.mubr.f32.mxu0 0.0
        %4195 = vmatmul.mubr.f32.gmra.mrb[0].mxu0 %v3537
        %v4196 = vpop.f32.mrb[0].mxu0
        %v4197 = vadd.f32 %v3507, %v4196
        %v4198 = vpop.f32.mrb[0].mxu0
        %4199 = vmatprep.mubr.f32.mxu0 0.0
        %4200 = vmatmul.mubr.f32.gmra.mrb[0].mxu0 %v3540
        %v4201 = vpop.f32.mrb[0].mxu0
        %v4202 = vadd.f32 %v3507, %v4201
        %v4203 = vpop.f32.mrb[0].mxu0
        %4204 = vmatprep.mubr.f32.mxu0 0.0
        %4205 = vmatmul.mubr.f32.gmra.mrb[0].mxu0 %v3543
        %v4206 = vpop.f32.mrb[0].mxu0
        %v4207 = vadd.f32 %v3507, %v4206
        %v4208 = vpop.f32.mrb[0].mxu0
        %4209 = vmatprep.mubr.f32.mxu0 0.0
        %4210 = vmatmul.mubr.f32.gmra.mrb[0].mxu0 %v3546
        %v4211 = vpop.f32.mrb[0].mxu0
        %v4212 = vadd.f32 %v3507, %v4211
        %v4213 = vpop.f32.mrb[0].mxu0
        %4214 = vmatprep.mubr.f32.mxu0 0.0
        %4215 = vmatmul.mubr.f32.gmra.mrb[0].mxu0 %v3549
        %v4216 = vpop.f32.mrb[0].mxu0
        %v4217 = vadd.f32 %v3507, %v4216
        %v4218 = vpop.f32.mrb[0].mxu0
        %4219 = vmatprep.mubr.f32.mxu0 0.0
        %4220 = vmatmul.mubr.f32.gmra.mrb[0].mxu0 %v3552
        %v4221 = vpop.f32.mrb[0].mxu0
        %v4222 = vadd.f32 %v3507, %v4221
        %v4223 = vpop.f32.mrb[0].mxu0
        %4224 = vmatprep.mubr.f32.mxu0 0.0
        %4225 = vmatmul.mubr.f32.gmra.mrb[0].mxu0 %v3555
        %v4226 = vpop.f32.mrb[0].mxu0
        %v4227 = vadd.f32 %v3507, %v4226
        %v4228 = vpop.f32.mrb[0].mxu0
        %4229 = vmatprep.mubr.f32.mxu0 0.0
        %4230 = vmatmul.mubr.f32.gmra.mrb[0].mxu0 %v3558
        %v4231 = vpop.f32.mrb[0].mxu0
        %v4232 = vadd.f32 %v3507, %v4231
        %v4233 = vpop.f32.mrb[0].mxu0
        %4234 = vmatprep.mubr.f32.mxu0 0.0
        %4235 = vmatmul.mubr.f32.gmra.mrb[0].mxu0 %v3561
        %v4236 = vpop.f32.mrb[0].mxu0
        %v4237 = vadd.f32 %v3507, %v4236
        %v4238 = vpop.f32.mrb[0].mxu0
        %4239 = vmatprep.mubr.f32.mxu0 0.0
        %4240 = vmatmul.mubr.f32.gmra.mrb[0].mxu0 %v3564
        %v4241 = vpop.f32.mrb[0].mxu0
        %v4242 = vadd.f32 %v3507, %v4241
        %v4243 = vpop.f32.mrb[0].mxu0
        %4244 = vmatprep.mubr.f32.mxu0 0.0
        %4245 = vmatmul.mubr.f32.gmra.mrb[0].mxu0 %v3567
        %v4246 = vpop.f32.mrb[0].mxu0
        %v4247 = vadd.f32 %v3507, %v4246
        %v4248 = vpop.f32.mrb[0].mxu0
        %4249 = vmatprep.mubr.f32.mxu0 0.0
        %4250 = vmatmul.mubr.f32.gmra.mrb[0].mxu0 %v3570
        %v4251 = vpop.f32.mrb[0].mxu0
        %v4252 = vadd.f32 %v3507, %v4251
        %v4253 = vpop.f32.mrb[0].mxu0
        %4254 = vmatprep.mubr.f32.mxu0 0.0
        %4255 = vmatmul.mubr.f32.gmra.mrb[0].mxu0 %v3573
        %v4256 = vpop.f32.mrb[0].mxu0
        %v4257 = vadd.f32 %v3507, %v4256
        %v4258 = vpop.f32.mrb[0].mxu0
        %4259 = vmatprep.mubr.f32.mxu0 0.0
        %4260 = vmatmul.mubr.f32.gmra.mrb[0].mxu0 %v3576
        %v4261 = vpop.f32.mrb[0].mxu0
        %v4262 = vadd.f32 %v3507, %v4261
        %v4263 = vpop.f32.mrb[0].mxu0
        %4264 = vmatprep.mubr.f32.mxu0 0.0
        %4265 = vmatmul.mubr.f32.gmra.mrb[0].mxu0 %v3579
        %v4266 = vpop.f32.mrb[0].mxu0
        %v4267 = vadd.f32 %v3507, %v4266
        %v4268 = vpop.f32.mrb[0].mxu0
        %4269 = vmatprep.mubr.f32.mxu0 0.0
        %4270 = vmatmul.mubr.f32.gmra.mrb[0].mxu0 %v3582
        %v4271 = vpop.f32.mrb[0].mxu0
        %v4272 = vadd.f32 %v3507, %v4271
        %v4273 = vpop.f32.mrb[0].mxu0
        %4274 = vmatprep.mubr.f32.mxu0 0.0
        %4275 = vmatmul.mubr.f32.gmra.mrb[0].mxu0 %v3585
        %v4276 = vpop.f32.mrb[0].mxu0
        %v4277 = vadd.f32 %v3507, %v4276
        %v4278 = vpop.f32.mrb[0].mxu0
        %4279 = vmatprep.mubr.f32.mxu0 0.0
        %4280 = vmatmul.mubr.f32.gmra.mrb[0].mxu0 %v3588
        %v4281 = vpop.f32.mrb[0].mxu0
        %v4282 = vadd.f32 %v3507, %v4281
        %v4283 = vpop.f32.mrb[0].mxu0
        %4284 = vmatprep.mubr.f32.mxu0 0.0
        %4285 = vmatmul.mubr.f32.gmra.mrb[0].mxu0 %v3591
        %v4286 = vpop.f32.mrb[0].mxu0
        %v4287 = vadd.f32 %v3507, %v4286
        %v4288 = vpop.f32.mrb[0].mxu0
        %4289 = vmatprep.mubr.f32.mxu0 0.0
        %4290 = vmatmul.mubr.f32.gmra.mrb[0].mxu0 %v3594
        %v4291 = vpop.f32.mrb[0].mxu0
        %v4292 = vadd.f32 %v3507, %v4291
        %v4293 = vpop.f32.mrb[0].mxu0
        %4294 = vmatprep.mubr.f32.mxu0 0.0
        %4295 = vmatmul.mubr.f32.gmra.mrb[0].mxu0 %v3597
        %v4296 = vpop.f32.mrb[0].mxu0
        %v4297 = vadd.f32 %v3507, %v4296
        %v4298 = vpop.f32.mrb[0].mxu0
        %4299 = vmatprep.mubr.f32.mxu0 0.0
        %4300 = vmatmul.mubr.f32.gmra.mrb[0].mxu0 %v3600
        %v4301 = vpop.f32.mrb[0].mxu0
        %v4302 = vadd.f32 %v3507, %v4301
        %v4303 = vpop.f32.mrb[0].mxu0
        %4304 = vmatprep.mubr.f32.mxu0 0.0
        %4305 = vmatmul.mubr.f32.gmra.mrb[0].mxu0 %v3603
        %v4306 = vpop.f32.mrb[0].mxu0
        %v4307 = vadd.f32 %v3507, %v4306
        %v4308 = vpop.f32.mrb[0].mxu0
        %4309 = vmatprep.mubr.f32.mxu0 0.0
        %4310 = vmatmul.mubr.f32.gmra.mrb[0].mxu0 %v3606
        %v4311 = vpop.f32.mrb[0].mxu0
        %v4312 = vadd.f32 %v3507, %v4311
        %v4313 = vpop.f32.mrb[0].mxu0
        %4314 = vmatprep.mubr.f32.mxu0 0.0
        %4315 = vmatmul.mubr.f32.gmra.mrb[0].mxu0 %v3609
        %v4316 = vpop.f32.mrb[0].mxu0
        %v4317 = vadd.f32 %v3507, %v4316
        %v4318 = vpop.f32.mrb[0].mxu0
        %4319 = vmatprep.mubr.f32.mxu0 0.0
        %4320 = vmatmul.mubr.f32.gmra.mrb[0].mxu0 %v3612
        %v4321 = vpop.f32.mrb[0].mxu0
        %v4322 = vadd.f32 %v3507, %v4321
        %v4323 = vpop.f32.mrb[0].mxu0
        %4324 = vmatprep.mubr.f32.mxu0 0.0
        %4325 = vmatmul.mubr.f32.gmra.mrb[0].mxu0 %v3615
        %v4326 = vpop.f32.mrb[0].mxu0
        %v4327 = vadd.f32 %v3507, %v4326
        %v4328 = vpop.f32.mrb[0].mxu0
        %4329 = vmatprep.mubr.f32.mxu0 0.0
        %4330 = vmatmul.mubr.f32.gmra.mrb[0].mxu0 %v3618
        %v4331 = vpop.f32.mrb[0].mxu0
        %v4332 = vadd.f32 %v3507, %v4331
        %v4333 = vpop.f32.mrb[0].mxu0
        %4334 = vmatprep.mubr.f32.mxu0 0.0
        %4335 = vmatmul.mubr.f32.gmra.mrb[0].mxu0 %v3621
        %v4336 = vpop.f32.mrb[0].mxu0
        %v4337 = vadd.f32 %v3507, %v4336
        %v4338 = vpop.f32.mrb[0].mxu0
        %4339 = vmatprep.mubr.f32.mxu0 0.0
        %4340 = vmatmul.mubr.f32.gmra.mrb[0].mxu0 %v3624
        %v4341 = vpop.f32.mrb[0].mxu0
        %v4342 = vadd.f32 %v3507, %v4341
        %v4343 = vpop.f32.mrb[0].mxu0
        %4344 = vmatprep.mubr.f32.mxu0 0.0
        %4345 = vmatmul.mubr.f32.gmra.mrb[0].mxu0 %v3627
        %v4346 = vpop.f32.mrb[0].mxu0
        %v4347 = vadd.f32 %v3507, %v4346
        %v4348 = vpop.f32.mrb[0].mxu0
        %4349 = vmatprep.mubr.f32.mxu0 0.0
        %4350 = vmatmul.mubr.f32.gmra.mrb[0].mxu0 %v3630
        %v4351 = vpop.f32.mrb[0].mxu0
        %v4352 = vadd.f32 %v3507, %v4351
        %v4353 = vpop.f32.mrb[0].mxu0
        %4354 = vmatprep.mubr.f32.mxu0 0.0
        %4355 = vmatmul.mubr.f32.gmra.mrb[0].mxu0 %v3633
        %v4356 = vpop.f32.mrb[0].mxu0
        %v4357 = vadd.f32 %v3507, %v4356
        %v4358 = vpop.f32.mrb[0].mxu0
        %4359 = vmatprep.mubr.f32.mxu0 0.0
        %4360 = vmatmul.mubr.f32.gmra.mrb[0].mxu0 %v3636
        %v4361 = vpop.f32.mrb[0].mxu0
        %v4362 = vadd.f32 %v3507, %v4361
        %v4363 = vpop.f32.mrb[0].mxu0
        %4364 = vmatprep.mubr.f32.mxu0 0.0
        %4365 = vmatmul.mubr.f32.gmra.mrb[0].mxu0 %v3639
        %v4366 = vpop.f32.mrb[0].mxu0
        %v4367 = vadd.f32 %v3507, %v4366
        %v4368 = vpop.f32.mrb[0].mxu0
        %4369 = vmatprep.mubr.f32.mxu0 0.0
        %4370 = vmatmul.mubr.f32.gmra.mrb[0].mxu0 %v3642
        %v4371 = vpop.f32.mrb[0].mxu0
        %v4372 = vadd.f32 %v3507, %v4371
        %v4373 = vpop.f32.mrb[0].mxu0
        %4374 = vmatprep.mubr.f32.mxu0 0.0
        %4375 = vmatmul.mubr.f32.gmra.mrb[0].mxu0 %v3645
        %v4376 = vpop.f32.mrb[0].mxu0
        %v4377 = vadd.f32 %v3507, %v4376
        %v4378 = vpop.f32.mrb[0].mxu0
        %4379 = vmatprep.mubr.f32.mxu0 0.0
        %4380 = vmatmul.mubr.f32.gmra.mrb[0].mxu0 %v3648
        %v4381 = vpop.f32.mrb[0].mxu0
        %v4382 = vadd.f32 %v3507, %v4381
        %v4383 = vpop.f32.mrb[0].mxu0
        %4384 = vmatprep.mubr.f32.mxu0 0.0
        %4385 = vmatmul.mubr.f32.gmra.mrb[0].mxu0 %v3651
        %v4386 = vpop.f32.mrb[0].mxu0
        %v4387 = vadd.f32 %v3507, %v4386
        %v4388 = vpop.f32.mrb[0].mxu0
        %4389 = vmatprep.mubr.f32.mxu0 0.0
        %4390 = vmatmul.mubr.f32.gmra.mrb[0].mxu0 %v3654
        %v4391 = vpop.f32.mrb[0].mxu0
        %v4392 = vadd.f32 %v3507, %v4391
        %v4393 = vpop.f32.mrb[0].mxu0
        %4394 = vmatprep.mubr.f32.mxu0 0.0
        %4395 = vmatmul.mubr.f32.gmra.mrb[0].mxu0 %v3657
        %v4396 = vpop.f32.mrb[0].mxu0
        %v4397 = vadd.f32 %v3507, %v4396
        %v4398 = vpop.f32.mrb[0].mxu0
        %4399 = vmatprep.mubr.f32.mxu0 0.0
        %4400 = vmatmul.mubr.f32.gmra.mrb[0].mxu0 %v3660
        %v4401 = vpop.f32.mrb[0].mxu0
        %v4402 = vadd.f32 %v3507, %v4401
        %v4403 = vpop.f32.mrb[0].mxu0
        %4404 = vmatprep.mubr.f32.mxu0 0.0
        %4405 = vmatmul.mubr.f32.gmra.mrb[0].mxu0 %v3663
        %v4406 = vpop.f32.mrb[0].mxu0
        %v4407 = vadd.f32 %v3507, %v4406
        %v4408 = vpop.f32.mrb[0].mxu0
        %4409 = vmatprep.mubr.f32.mxu0 0.0
        %4410 = vmatmul.mubr.f32.gmra.mrb[0].mxu0 %v3666
        %v4411 = vpop.f32.mrb[0].mxu0
        %v4412 = vadd.f32 %v3507, %v4411
        %v4413 = vpop.f32.mrb[0].mxu0
        %4414 = vmatprep.mubr.f32.mxu0 0.0
        %4415 = vmatmul.mubr.f32.gmra.mrb[0].mxu0 %v3669
        %v4416 = vpop.f32.mrb[0].mxu0
        %v4417 = vadd.f32 %v3507, %v4416
        %v4418 = vpop.f32.mrb[0].mxu0
        %4419 = vmatprep.mubr.f32.mxu0 0.0
        %4420 = vmatmul.mubr.f32.gmra.mrb[0].mxu0 %v3672
        %v4421 = vpop.f32.mrb[0].mxu0
        %v4422 = vadd.f32 %v3507, %v4421
        %v4423 = vpop.f32.mrb[0].mxu0
        %4424 = vmatprep.mubr.f32.mxu0 0.0
        %4425 = vmatmul.mubr.f32.gmra.mrb[0].mxu0 %v3675
        %v4426 = vpop.f32.mrb[0].mxu0
        %v4427 = vadd.f32 %v3507, %v4426
        %v4428 = vpop.f32.mrb[0].mxu0
        %4429 = vmatprep.mubr.f32.mxu0 0.0
        %4430 = vmatmul.mubr.f32.gmra.mrb[0].mxu0 %v3678
        %v4431 = vpop.f32.mrb[0].mxu0
        %v4432 = vadd.f32 %v3507, %v4431
        %v4433 = vpop.f32.mrb[0].mxu0
        %4434 = vmatprep.mubr.f32.mxu0 0.0
        %4435 = vmatmul.mubr.f32.gmra.mrb[0].mxu0 %v3681
        %v4436 = vpop.f32.mrb[0].mxu0
        %v4437 = vadd.f32 %v3507, %v4436
        %v4438 = vpop.f32.mrb[0].mxu0
        %4439 = vmatprep.mubr.f32.mxu0 0.0
        %4440 = vmatmul.mubr.f32.gmra.mrb[0].mxu0 %v3684
        %v4441 = vpop.f32.mrb[0].mxu0
        %v4442 = vadd.f32 %v3507, %v4441
        %v4443 = vpop.f32.mrb[0].mxu0
        %4444 = vmatprep.mubr.f32.mxu0 0.0
        %4445 = vmatmul.mubr.f32.gmra.mrb[0].mxu0 %v3687
        %v4446 = vpop.f32.mrb[0].mxu0
        %v4447 = vadd.f32 %v3507, %v4446
        %v4448 = vpop.f32.mrb[0].mxu0
        %4449 = vmatprep.mubr.f32.mxu0 0.0
        %4450 = vmatmul.mubr.f32.gmra.mrb[0].mxu0 %v3690
        %v4451 = vpop.f32.mrb[0].mxu0
        %v4452 = vadd.f32 %v3507, %v4451
        %v4453 = vpop.f32.mrb[0].mxu0
        %4454 = vmatprep.mubr.f32.mxu0 0.0
        %4455 = vmatmul.mubr.f32.gmra.mrb[0].mxu0 %v3693
        %v4456 = vpop.f32.mrb[0].mxu0
        %v4457 = vadd.f32 %v3507, %v4456
        %v4458 = vpop.f32.mrb[0].mxu0
        %4459 = vmatprep.mubr.f32.mxu0 0.0
        %4460 = vmatmul.mubr.f32.gmra.mrb[0].mxu0 %v3696
        %v4461 = vpop.f32.mrb[0].mxu0
        %v4462 = vadd.f32 %v3507, %v4461
        %v4463 = vpop.f32.mrb[0].mxu0
        %4464 = vmatprep.mubr.f32.mxu0 0.0
        %4465 = vmatmul.mubr.f32.gmra.mrb[0].mxu0 %v3699
        %v4466 = vpop.f32.mrb[0].mxu0
        %v4467 = vadd.f32 %v3507, %v4466
        %v4468 = vpop.f32.mrb[0].mxu0
        %4469 = vmatprep.mubr.f32.mxu0 0.0
        %4470 = vmatmul.mubr.f32.gmra.mrb[0].mxu0 %v3702
        %v4471 = vpop.f32.mrb[0].mxu0
        %v4472 = vadd.f32 %v3507, %v4471
        %v4473 = vpop.f32.mrb[0].mxu0
        %4474 = vmatprep.mubr.f32.mxu0 0.0
        %4475 = vmatmul.mubr.f32.gmra.mrb[0].mxu0 %v3705
        %v4476 = vpop.f32.mrb[0].mxu0
        %v4477 = vadd.f32 %v3507, %v4476
        %v4478 = vpop.f32.mrb[0].mxu0
        %4479 = vmatprep.mubr.f32.mxu0 0.0
        %4480 = vmatmul.mubr.f32.gmra.mrb[0].mxu0 %v3708
        %v4481 = vpop.f32.mrb[0].mxu0
        %v4482 = vadd.f32 %v3507, %v4481
        %v4483 = vpop.f32.mrb[0].mxu0
        %4484 = vmatprep.mubr.f32.mxu0 0.0
        %4485 = vmatmul.mubr.f32.gmra.mrb[0].mxu0 %v3711
        %v4486 = vpop.f32.mrb[0].mxu0
        %v4487 = vadd.f32 %v3507, %v4486
        %v4488 = vpop.f32.mrb[0].mxu0
        %4489 = vmatprep.mubr.f32.mxu0 0.0
        %4490 = vmatmul.mubr.f32.gmra.mrb[0].mxu0 %v3714
        %v4491 = vpop.f32.mrb[0].mxu0
        %v4492 = vadd.f32 %v3507, %v4491
        %v4493 = vpop.f32.mrb[0].mxu0
        %4494 = vmatprep.mubr.f32.mxu0 0.0
        %4495 = vmatmul.mubr.f32.gmra.mrb[0].mxu0 %v3717
        %v4496 = vpop.f32.mrb[0].mxu0
        %v4497 = vadd.f32 %v3507, %v4496
        %v4498 = vpop.f32.mrb[0].mxu0
        %4499 = vmatprep.mubr.f32.mxu0 0.0
        %4500 = vmatmul.mubr.f32.gmra.mrb[0].mxu0 %v3720
        %v4501 = vpop.f32.mrb[0].mxu0
        %v4502 = vadd.f32 %v3507, %v4501
        %v4503 = vpop.f32.mrb[0].mxu0
        %4504 = vmatprep.mubr.f32.mxu0 0.0
        %4505 = vmatmul.mubr.f32.gmra.mrb[0].mxu0 %v3723
        %v4506 = vpop.f32.mrb[0].mxu0
        %v4507 = vadd.f32 %v3507, %v4506
        %v4508 = vpop.f32.mrb[0].mxu0
        %4509 = vmatprep.mubr.f32.mxu0 0.0
        %4510 = vmatmul.mubr.f32.gmra.mrb[0].mxu0 %v3726
        %v4511 = vpop.f32.mrb[0].mxu0
        %v4512 = vadd.f32 %v3507, %v4511
        %v4513 = vpop.f32.mrb[0].mxu0
        %4514 = vmatprep.mubr.f32.mxu0 0.0
        %4515 = vmatmul.mubr.f32.gmra.mrb[0].mxu0 %v3729
        %v4516 = vpop.f32.mrb[0].mxu0
        %v4517 = vadd.f32 %v3507, %v4516
        %v4518 = vpop.f32.mrb[0].mxu0
        %4519 = vmatprep.mubr.f32.mxu0 0.0
        %4520 = vmatmul.mubr.f32.gmra.mrb[0].mxu0 %v3732
        %v4521 = vpop.f32.mrb[0].mxu0
        %v4522 = vadd.f32 %v3507, %v4521
        %v4523 = vpop.f32.mrb[0].mxu0
        %4524 = vmatprep.mubr.f32.mxu0 0.0
        %4525 = vmatmul.mubr.f32.gmra.mrb[0].mxu0 %v3735
        %v4526 = vpop.f32.mrb[0].mxu0
        %v4527 = vadd.f32 %v3507, %v4526
        %v4528 = vpop.f32.mrb[0].mxu0
        %4529 = vmatprep.mubr.f32.mxu0 0.0
        %4530 = vmatmul.mubr.f32.gmra.mrb[0].mxu0 %v3738
        %v4531 = vpop.f32.mrb[0].mxu0
        %v4532 = vadd.f32 %v3507, %v4531
        %v4533 = vpop.f32.mrb[0].mxu0
        %4534 = vmatprep.mubr.f32.mxu0 0.0
        %4535 = vmatmul.mubr.f32.gmra.mrb[0].mxu0 %v3741
        %v4536 = vpop.f32.mrb[0].mxu0
        %v4537 = vadd.f32 %v3507, %v4536
        %v4538 = vpop.f32.mrb[0].mxu0
        %4539 = vmatprep.mubr.f32.mxu0 0.0
        %4540 = vmatmul.mubr.f32.gmra.mrb[0].mxu0 %v3744
        %v4541 = vpop.f32.mrb[0].mxu0
        %v4542 = vadd.f32 %v3507, %v4541
        %v4543 = vpop.f32.mrb[0].mxu0
        %4544 = vmatprep.mubr.f32.mxu0 0.0
        %4545 = vmatmul.mubr.f32.gmra.mrb[0].mxu0 %v3747
        %v4546 = vpop.f32.mrb[0].mxu0
        %v4547 = vadd.f32 %v3507, %v4546
        %v4548 = vpop.f32.mrb[0].mxu0
        %4549 = vmatprep.mubr.f32.mxu0 0.0
        %4550 = vmatmul.mubr.f32.gmra.mrb[0].mxu0 %v3750
        %v4551 = vpop.f32.mrb[0].mxu0
        %v4552 = vadd.f32 %v3507, %v4551
        %v4553 = vpop.f32.mrb[0].mxu0
        %4554 = vmatprep.mubr.f32.mxu0 0.0
        %4555 = vmatmul.mubr.f32.gmra.mrb[0].mxu0 %v3753
        %v4556 = vpop.f32.mrb[0].mxu0
        %v4557 = vadd.f32 %v3507, %v4556
        %v4558 = vpop.f32.mrb[0].mxu0
        %4559 = vmatprep.mubr.f32.mxu0 0.0
        %4560 = vmatmul.mubr.f32.gmra.mrb[0].mxu0 %v3756
        %v4561 = vpop.f32.mrb[0].mxu0
        %v4562 = vadd.f32 %v3507, %v4561
        %v4563 = vpop.f32.mrb[0].mxu0
        %4564 = vmatprep.mubr.f32.mxu0 0.0
        %4565 = vmatmul.mubr.f32.gmra.mrb[0].mxu0 %v3759
        %v4566 = vpop.f32.mrb[0].mxu0
        %v4567 = vadd.f32 %v3507, %v4566
        %v4568 = vpop.f32.mrb[0].mxu0
        %4569 = vmatprep.mubr.f32.mxu0 0.0
        %4570 = vmatmul.mubr.f32.gmra.mrb[0].mxu0 %v3762
        %v4571 = vpop.f32.mrb[0].mxu0
        %v4572 = vadd.f32 %v3507, %v4571
        %v4573 = vpop.f32.mrb[0].mxu0
        %4574 = vmatprep.mubr.f32.mxu0 0.0
        %4575 = vmatmul.mubr.f32.gmra.mrb[0].mxu0 %v3765
        %v4576 = vpop.f32.mrb[0].mxu0
        %v4577 = vadd.f32 %v3507, %v4576
        %v4578 = vpop.f32.mrb[0].mxu0
        %4579 = vmatprep.mubr.f32.mxu0 0.0
        %4580 = vmatmul.mubr.f32.gmra.mrb[0].mxu0 %v3768
        %v4581 = vpop.f32.mrb[0].mxu0
        %v4582 = vadd.f32 %v3507, %v4581
        %v4583 = vpop.f32.mrb[0].mxu0
        %4584 = vmatprep.mubr.f32.mxu0 0.0
        %4585 = vmatmul.mubr.f32.gmra.mrb[0].mxu0 %v3771
        %v4586 = vpop.f32.mrb[0].mxu0
        %v4587 = vadd.f32 %v3507, %v4586
        %v4588 = vpop.f32.mrb[0].mxu0
        %4589 = vmatprep.mubr.f32.mxu0 0.0
        %4590 = vmatmul.mubr.f32.gmra.mrb[0].mxu0 %v3774
        %v4591 = vpop.f32.mrb[0].mxu0
        %v4592 = vadd.f32 %v3507, %v4591
        %v4593 = vpop.f32.mrb[0].mxu0
        %4594 = vmatprep.mubr.f32.mxu0 0.0
        %4595 = vmatmul.mubr.f32.gmra.mrb[0].mxu0 %v3777
        %v4596 = vpop.f32.mrb[0].mxu0
        %v4597 = vadd.f32 %v3507, %v4596
        %v4598 = vpop.f32.mrb[0].mxu0
        %4599 = vmatprep.mubr.f32.mxu0 0.0
        %4600 = vmatmul.mubr.f32.gmra.mrb[0].mxu0 %v3780
        %v4601 = vpop.f32.mrb[0].mxu0
        %v4602 = vadd.f32 %v3507, %v4601
        %v4603 = vpop.f32.mrb[0].mxu0
        %4604 = vmatprep.mubr.f32.mxu0 0.0
        %4605 = vmatmul.mubr.f32.gmra.mrb[0].mxu0 %v3783
        %v4606 = vpop.f32.mrb[0].mxu0
        %v4607 = vadd.f32 %v3507, %v4606
        %v4608 = vpop.f32.mrb[0].mxu0
        %4609 = vmatprep.mubr.f32.mxu0 0.0
        %4610 = vmatmul.mubr.f32.gmra.mrb[0].mxu0 %v3786
        %v4611 = vpop.f32.mrb[0].mxu0
        %v4612 = vadd.f32 %v3507, %v4611
        %v4613 = vpop.f32.mrb[0].mxu0
        %4614 = vmatprep.mubr.f32.mxu0 0.0
        %4615 = vmatmul.mubr.f32.gmra.mrb[0].mxu0 %v3789
        %v4616 = vpop.f32.mrb[0].mxu0
        %v4617 = vadd.f32 %v3507, %v4616
        %v4618 = vpop.f32.mrb[0].mxu0
        %4619 = vmatprep.mubr.f32.mxu0 0.0
        %4620 = vmatmul.mubr.f32.gmra.mrb[0].mxu0 %v3792
        %v4621 = vpop.f32.mrb[0].mxu0
        %v4622 = vadd.f32 %v3507, %v4621
        %v4623 = vpop.f32.mrb[0].mxu0
        %4624 = vmatprep.mubr.f32.mxu0 0.0
        %4625 = vmatmul.mubr.f32.gmra.mrb[0].mxu0 %v3795
        %v4626 = vpop.f32.mrb[0].mxu0
        %v4627 = vadd.f32 %v3507, %v4626
        %v4628 = vpop.f32.mrb[0].mxu0
        %4629 = vmatprep.mubr.f32.mxu0 0.0
        %4630 = vmatmul.mubr.f32.gmra.mrb[0].mxu0 %v3798
        %v4631 = vpop.f32.mrb[0].mxu0
        %v4632 = vadd.f32 %v3507, %v4631
        %v4633 = vpop.f32.mrb[0].mxu0
        %4634 = vmatprep.mubr.f32.mxu0 0.0
        %4635 = vmatmul.mubr.f32.gmra.mrb[0].mxu0 %v3801
        %v4636 = vpop.f32.mrb[0].mxu0
        %v4637 = vadd.f32 %v3507, %v4636
        %v4638 = vpop.f32.mrb[0].mxu0
        %4639 = vmatprep.mubr.f32.mxu0 0.0
        %4640 = vmatmul.mubr.f32.gmra.mrb[0].mxu0 %v3804
        %v4641 = vpop.f32.mrb[0].mxu0
        %v4642 = vadd.f32 %v3507, %v4641
        %v4643 = vpop.f32.mrb[0].mxu0
        %4644 = vmatprep.mubr.f32.mxu0 0.0
        %4645 = vmatmul.mubr.f32.gmra.mrb[0].mxu0 %v3807
        %v4646 = vpop.f32.mrb[0].mxu0
        %v4647 = vadd.f32 %v3507, %v4646
        %v4648 = vpop.f32.mrb[0].mxu0
        %4649 = vmatprep.mubr.f32.mxu0 0.0
        %4650 = vmatmul.mubr.f32.gmra.mrb[0].mxu0 %v3810
        %v4651 = vpop.f32.mrb[0].mxu0
        %v4652 = vadd.f32 %v3507, %v4651
        %v4653 = vpop.f32.mrb[0].mxu0
        %4654 = vmatprep.mubr.f32.mxu0 0.0
        %4655 = vmatmul.mubr.f32.gmra.mrb[0].mxu0 %v3813
        %v4656 = vpop.f32.mrb[0].mxu0
        %v4657 = vadd.f32 %v3507, %v4656
        %v4658 = vpop.f32.mrb[0].mxu0
        %4659 = vmatprep.mubr.f32.mxu0 0.0
        %4660 = vmatmul.mubr.f32.gmra.mrb[0].mxu0 %v3816
        %v4661 = vpop.f32.mrb[0].mxu0
        %v4662 = vadd.f32 %v3507, %v4661
        %v4663 = vpop.f32.mrb[0].mxu0
        %4664 = vmatprep.mubr.f32.mxu0 0.0
        %4665 = vmatmul.mubr.f32.gmra.mrb[0].mxu0 %v3819
        %v4666 = vpop.f32.mrb[0].mxu0
        %v4667 = vadd.f32 %v3507, %v4666
        %v4668 = vpop.f32.mrb[0].mxu0
        %4669 = vmatprep.mubr.f32.mxu0 0.0
        %4670 = vmatmul.mubr.f32.gmra.mrb[0].mxu0 %v3822
        %v4671 = vpop.f32.mrb[0].mxu0
        %v4672 = vadd.f32 %v3507, %v4671
        %v4673 = vpop.f32.mrb[0].mxu0
        %4674 = vmatprep.mubr.f32.mxu0 0.0
        %4675 = vmatmul.mubr.f32.gmra.mrb[0].mxu0 %v3825
        %v4676 = vpop.f32.mrb[0].mxu0
        %v4677 = vadd.f32 %v3507, %v4676
        %v4678 = vpop.f32.mrb[0].mxu0
        %4679 = vmatprep.mubr.f32.mxu0 0.0
        %4680 = vmatmul.mubr.f32.gmra.mrb[0].mxu0 %v3828
        %v4681 = vpop.f32.mrb[0].mxu0
        %v4682 = vadd.f32 %v3507, %v4681
        %v4683 = vpop.f32.mrb[0].mxu0
        %4684 = vmatprep.mubr.f32.mxu0 0.0
        %4685 = vmatmul.mubr.f32.gmra.mrb[0].mxu0 %v3831
        %v4686 = vpop.f32.mrb[0].mxu0
        %v4687 = vadd.f32 %v3507, %v4686
        %v4688 = vpop.f32.mrb[0].mxu0
        %4689 = vmatprep.mubr.f32.mxu0 0.0
        %4690 = vmatmul.mubr.f32.gmra.mrb[0].mxu0 %v3834
        %v4691 = vpop.f32.mrb[0].mxu0
        %v4692 = vadd.f32 %v3507, %v4691
        %v4693 = vpop.f32.mrb[0].mxu0
        %4694 = vmatprep.mubr.f32.mxu0 0.0
        %4695 = vmatmul.mubr.f32.gmra.mrb[0].mxu0 %v3837
        %v4696 = vpop.f32.mrb[0].mxu0
        %v4697 = vadd.f32 %v3507, %v4696
        %v4698 = vpop.f32.mrb[0].mxu0
        %4699 = vmatprep.mubr.f32.mxu0 0.0
        %4700 = vmatmul.mubr.f32.gmra.mrb[0].mxu0 %v3840
        %v4701 = vpop.f32.mrb[0].mxu0
        %v4702 = vadd.f32 %v3507, %v4701
        %v4703 = vpop.f32.mrb[0].mxu0
        %4704 = vmatprep.mubr.f32.mxu0 0.0
        %4705 = vmatmul.mubr.f32.gmra.mrb[0].mxu0 %v3843
        %v4706 = vpop.f32.mrb[0].mxu0
        %v4707 = vadd.f32 %v3507, %v4706
        %v4708 = vpop.f32.mrb[0].mxu0
        %4709 = vmatprep.mubr.f32.mxu0 0.0
        %4710 = vmatmul.mubr.f32.gmra.mrb[0].mxu0 %v3846
        %v4711 = vpop.f32.mrb[0].mxu0
        %v4712 = vadd.f32 %v3507, %v4711
        %v4713 = vpop.f32.mrb[0].mxu0
        %4714 = vmatprep.mubr.f32.mxu0 0.0
        %4715 = vmatmul.mubr.f32.gmra.mrb[0].mxu0 %v3849
        %v4716 = vpop.f32.mrb[0].mxu0
        %v4717 = vadd.f32 %v3507, %v4716
        %v4718 = vpop.f32.mrb[0].mxu0
        %4719 = vmatprep.mubr.f32.mxu0 0.0
        %4720 = vmatmul.mubr.f32.gmra.mrb[0].mxu0 %v3852
        %v4721 = vpop.f32.mrb[0].mxu0
        %v4722 = vadd.f32 %v3507, %v4721
        %v4723 = vpop.f32.mrb[0].mxu0
        %4724 = vmatprep.mubr.f32.mxu0 0.0
        %4725 = vmatmul.mubr.f32.gmra.mrb[0].mxu0 %v3855
        %v4726 = vpop.f32.mrb[0].mxu0
        %v4727 = vadd.f32 %v3507, %v4726
        %v4728 = vpop.f32.mrb[0].mxu0
        %4729 = vmatprep.mubr.f32.mxu0 0.0
        %4730 = vmatmul.mubr.f32.gmra.mrb[0].mxu0 %v3858
        %v4731 = vpop.f32.mrb[0].mxu0
        %v4732 = vadd.f32 %v3507, %v4731
        %v4733 = vpop.f32.mrb[0].mxu0
        %4734 = vmatprep.mubr.f32.mxu0 0.0
        %4735 = vmatmul.mubr.f32.gmra.mrb[0].mxu0 %v3861
        %v4736 = vpop.f32.mrb[0].mxu0
        %v4737 = vadd.f32 %v3507, %v4736
        %v4738 = vpop.f32.mrb[0].mxu0
        %4739 = vmatprep.mubr.f32.mxu0 0.0
        %4740 = vmatmul.mubr.f32.gmra.mrb[0].mxu0 %v3864
        %v4741 = vpop.f32.mrb[0].mxu0
        %v4742 = vadd.f32 %v3507, %v4741
        %v4743 = vpop.f32.mrb[0].mxu0
        %4744 = vmatprep.mubr.f32.mxu0 0.0
        %4745 = vmatmul.mubr.f32.gmra.mrb[0].mxu0 %v3867
        %v4746 = vpop.f32.mrb[0].mxu0
        %v4747 = vadd.f32 %v3507, %v4746
        %v4748 = vpop.f32.mrb[0].mxu0
        %4749 = vmatprep.mubr.f32.mxu0 0.0
        %4750 = vmatmul.mubr.f32.gmra.mrb[0].mxu0 %v3870
        %v4751 = vpop.f32.mrb[0].mxu0
        %v4752 = vadd.f32 %v3507, %v4751
        %v4753 = vpop.f32.mrb[0].mxu0
        %4754 = vmatprep.mubr.f32.mxu0 0.0
        %4755 = vmatmul.mubr.f32.gmra.mrb[0].mxu0 %v3873
        %v4756 = vpop.f32.mrb[0].mxu0
        %v4757 = vadd.f32 %v3507, %v4756
        %v4758 = vpop.f32.mrb[0].mxu0
        %4759 = vmatprep.mubr.f32.mxu0 0.0
        %4760 = vmatmul.mubr.f32.gmra.mrb[0].mxu0 %v3876
        %v4761 = vpop.f32.mrb[0].mxu0
        %v4762 = vadd.f32 %v3507, %v4761
        %v4763 = vpop.f32.mrb[0].mxu0
        %4764 = vmatprep.mubr.f32.mxu0 0.0
        %4765 = vmatmul.mubr.f32.gmra.mrb[0].mxu0 %v3879
        %v4766 = vpop.f32.mrb[0].mxu0
        %v4767 = vadd.f32 %v3507, %v4766
        %v4768 = vpop.f32.mrb[0].mxu0
        %4769 = vmatprep.mubr.f32.mxu0 0.0
        %4770 = vmatmul.mubr.f32.gmra.mrb[0].mxu0 %v3882
        %v4771 = vpop.f32.mrb[0].mxu0
        %v4772 = vadd.f32 %v3507, %v4771
        %v4773 = vpop.f32.mrb[0].mxu0
        %4774 = vmatprep.mubr.f32.mxu0 0.0
        %4775 = vmatmul.mubr.f32.gmra.mrb[0].mxu0 %v3885
        %v4776 = vpop.f32.mrb[0].mxu0
        %v4777 = vadd.f32 %v3507, %v4776
        %v4778 = vpop.f32.mrb[0].mxu0
        %4779 = vmatprep.mubr.f32.mxu0 0.0
        %4780 = vmatmul.mubr.f32.gmra.mrb[0].mxu0 %v3888
        %v4781 = vpop.f32.mrb[0].mxu0
        %v4782 = vadd.f32 %v3507, %v4781
        %v4783 = vpop.f32.mrb[0].mxu0
        %4784 = vmatprep.mubr.f32.mxu0 0.0
        %4785 = vmatmul.mubr.f32.gmra.mrb[0].mxu0 %v3891
        %v4786 = vpop.f32.mrb[0].mxu0
        %v4787 = vadd.f32 %v3507, %v4786
        %v4788 = vpop.f32.mrb[0].mxu0
        %4789 = vmatprep.mubr.f32.mxu0 0.0
        %4790 = vmatmul.mubr.f32.gmra.mrb[0].mxu0 %v3894
        %v4791 = vpop.f32.mrb[0].mxu0
        %v4792 = vadd.f32 %v3507, %v4791
        %v4793 = vpop.f32.mrb[0].mxu0
        %4794 = vmatprep.mubr.f32.mxu0 0.0
        %4795 = vmatmul.mubr.f32.gmra.mrb[0].mxu0 %v3897
        %v4796 = vpop.f32.mrb[0].mxu0
        %v4797 = vadd.f32 %v3507, %v4796
        %v4798 = vpop.f32.mrb[0].mxu0
        %4799 = vmatprep.mubr.f32.mxu0 0.0
        %4800 = vmatmul.mubr.f32.gmra.mrb[0].mxu0 %v3900
        %v4801 = vpop.f32.mrb[0].mxu0
        %v4802 = vadd.f32 %v3507, %v4801
        %v4803 = vpop.f32.mrb[0].mxu0
        %4804 = vmatprep.mubr.f32.mxu0 0.0
        %4805 = vmatmul.mubr.f32.gmra.mrb[0].mxu0 %v3903
        %v4806 = vpop.f32.mrb[0].mxu0
        %v4807 = vadd.f32 %v3507, %v4806
        %v4808 = vpop.f32.mrb[0].mxu0
        %4809 = vmatprep.mubr.f32.mxu0 0.0
        %4810 = vmatmul.mubr.f32.gmra.mrb[0].mxu0 %v3906
        %v4811 = vpop.f32.mrb[0].mxu0
        %v4812 = vadd.f32 %v3507, %v4811
        %v4813 = vpop.f32.mrb[0].mxu0
        %4814 = vmatprep.mubr.f32.mxu0 0.0
        %4815 = vmatmul.mubr.f32.gmra.mrb[0].mxu0 %v3909
        %v4816 = vpop.f32.mrb[0].mxu0
        %v4817 = vadd.f32 %v3507, %v4816
        %v4818 = vpop.f32.mrb[0].mxu0
        %4819 = vmatprep.mubr.f32.mxu0 0.0
        %4820 = vmatmul.mubr.f32.gmra.mrb[0].mxu0 %v3912
        %v4821 = vpop.f32.mrb[0].mxu0
        %v4822 = vadd.f32 %v3507, %v4821
        %v4823 = vpop.f32.mrb[0].mxu0
        %4824 = vmatprep.mubr.f32.mxu0 0.0
        %4825 = vmatmul.mubr.f32.gmra.mrb[0].mxu0 %v3915
        %v4826 = vpop.f32.mrb[0].mxu0
        %v4827 = vadd.f32 %v3507, %v4826
        %v4828 = vpop.f32.mrb[0].mxu0
        %4829 = vmatprep.mubr.f32.mxu0 0.0
        %4830 = vmatmul.mubr.f32.gmra.mrb[0].mxu0 %v3918
        %v4831 = vpop.f32.mrb[0].mxu0
        %v4832 = vadd.f32 %v3507, %v4831
        %v4833 = vpop.f32.mrb[0].mxu0
        %4834 = vmatprep.mubr.f32.mxu0 0.0
        %4835 = vmatmul.mubr.f32.gmra.mrb[0].mxu0 %v3921
        %v4836 = vpop.f32.mrb[0].mxu0
        %v4837 = vadd.f32 %v3507, %v4836
        %v4838 = vpop.f32.mrb[0].mxu0
        %4839 = vmatprep.mubr.f32.mxu0 0.0
        %4840 = vmatmul.mubr.f32.gmra.mrb[0].mxu0 %v3924
        %v4841 = vpop.f32.mrb[0].mxu0
        %v4842 = vadd.f32 %v3507, %v4841
        %v4843 = vpop.f32.mrb[0].mxu0
        %4844 = vmatprep.mubr.f32.mxu0 0.0
        %4845 = vmatmul.mubr.f32.gmra.mrb[0].mxu0 %v3927
        %v4846 = vpop.f32.mrb[0].mxu0
        %v4847 = vadd.f32 %v3507, %v4846
        %v4848 = vpop.f32.mrb[0].mxu0
        %4849 = vmatprep.mubr.f32.mxu0 0.0
        %4850 = vmatmul.mubr.f32.gmra.mrb[0].mxu0 %v3930
        %v4851 = vpop.f32.mrb[0].mxu0
        %v4852 = vadd.f32 %v3507, %v4851
        %v4853 = vpop.f32.mrb[0].mxu0
        %4854 = vmatprep.mubr.f32.mxu0 0.0
        %4855 = vmatmul.mubr.f32.gmra.mrb[0].mxu0 %v3933
        %v4856 = vpop.f32.mrb[0].mxu0
        %v4857 = vadd.f32 %v3507, %v4856
        %v4858 = vpop.f32.mrb[0].mxu0
        %4859 = vmatprep.mubr.f32.mxu0 0.0
        %4860 = vmatmul.mubr.f32.gmra.mrb[0].mxu0 %v3936
        %v4861 = vpop.f32.mrb[0].mxu0
        %v4862 = vadd.f32 %v3507, %v4861
        %v4863 = vpop.f32.mrb[0].mxu0
        %4864 = vmatprep.mubr.f32.mxu0 0.0
        %4865 = vmatmul.mubr.f32.gmra.mrb[0].mxu0 %v3939
        %v4866 = vpop.f32.mrb[0].mxu0
        %v4867 = vadd.f32 %v3507, %v4866
        %v4868 = vpop.f32.mrb[0].mxu0
        %4869 = vmatprep.mubr.f32.mxu0 0.0
        %4870 = vmatmul.mubr.f32.gmra.mrb[0].mxu0 %v3942
        %v4871 = vpop.f32.mrb[0].mxu0
        %v4872 = vadd.f32 %v3507, %v4871
        %v4873 = vpop.f32.mrb[0].mxu0
        %4874 = vmatprep.mubr.f32.mxu0 0.0
        %4875 = vmatmul.mubr.f32.gmra.mrb[0].mxu0 %v3945
        %v4876 = vpop.f32.mrb[0].mxu0
        %v4877 = vadd.f32 %v3507, %v4876
        %v4878 = vpop.f32.mrb[0].mxu0
        %4879 = vmatprep.mubr.f32.mxu0 0.0
        %4880 = vmatmul.mubr.f32.gmra.mrb[0].mxu0 %v3948
        %v4881 = vpop.f32.mrb[0].mxu0
        %v4882 = vadd.f32 %v3507, %v4881
        %v4883 = vpop.f32.mrb[0].mxu0
        %4884 = vmatprep.mubr.f32.mxu0 0.0
        %4885 = vmatmul.mubr.f32.gmra.mrb[0].mxu0 %v3951
        %v4886 = vpop.f32.mrb[0].mxu0
        %v4887 = vadd.f32 %v3507, %v4886
        %v4888 = vpop.f32.mrb[0].mxu0
        %4889 = vmatprep.mubr.f32.mxu0 0.0
        %4890 = vmatmul.mubr.f32.gmra.mrb[0].mxu0 %v3954
        %v4891 = vpop.f32.mrb[0].mxu0
        %v4892 = vadd.f32 %v3507, %v4891
        %v4893 = vpop.f32.mrb[0].mxu0
        %4894 = vmatprep.mubr.f32.mxu0 0.0
        %4895 = vmatmul.mubr.f32.gmra.mrb[0].mxu0 %v3957
        %v4896 = vpop.f32.mrb[0].mxu0
        %v4897 = vadd.f32 %v3507, %v4896
        %v4898 = vpop.f32.mrb[0].mxu0
        %4899 = vmatprep.mubr.f32.mxu0 0.0
        %4900 = vmatmul.mubr.f32.gmra.mrb[0].mxu0 %v3960
        %v4901 = vpop.f32.mrb[0].mxu0
        %v4902 = vadd.f32 %v3507, %v4901
        %v4903 = vpop.f32.mrb[0].mxu0
        %4904 = vmatprep.mubr.f32.mxu0 0.0
        %4905 = vmatmul.mubr.f32.gmra.mrb[0].mxu0 %v3963
        %v4906 = vpop.f32.mrb[0].mxu0
        %v4907 = vadd.f32 %v3507, %v4906
        %v4908 = vpop.f32.mrb[0].mxu0
        %4909 = vmatprep.mubr.f32.mxu0 0.0
        %4910 = vmatmul.mubr.f32.gmra.mrb[0].mxu0 %v3966
        %v4911 = vpop.f32.mrb[0].mxu0
        %v4912 = vadd.f32 %v3507, %v4911
        %v4913 = vpop.f32.mrb[0].mxu0
        %4914 = vmatprep.mubr.f32.mxu0 0.0
        %4915 = vmatmul.mubr.f32.gmra.mrb[0].mxu0 %v3969
        %v4916 = vpop.f32.mrb[0].mxu0
        %v4917 = vadd.f32 %v3507, %v4916
        %v4918 = vpop.f32.mrb[0].mxu0
        %4919 = vmatprep.mubr.f32.mxu0 0.0
        %4920 = vmatmul.mubr.f32.gmra.mrb[0].mxu0 %v3972
        %v4921 = vpop.f32.mrb[0].mxu0
        %v4922 = vadd.f32 %v3507, %v4921
        %v4923 = vpop.f32.mrb[0].mxu0
        %4924 = vmatprep.mubr.f32.mxu0 0.0
        %4925 = vmatmul.mubr.f32.gmra.mrb[0].mxu0 %v3975
        %v4926 = vpop.f32.mrb[0].mxu0
        %v4927 = vadd.f32 %v3507, %v4926
        %v4928 = vpop.f32.mrb[0].mxu0
        %4929 = vmatprep.mubr.f32.mxu0 0.0
        %4930 = vmatmul.mubr.f32.gmra.mrb[0].mxu0 %v3978
        %v4931 = vpop.f32.mrb[0].mxu0
        %v4932 = vadd.f32 %v3507, %v4931
        %v4933 = vpop.f32.mrb[0].mxu0
        %4934 = vmatprep.mubr.f32.mxu0 0.0
        %4935 = vmatmul.mubr.f32.gmra.mrb[0].mxu0 %v3981
        %v4936 = vpop.f32.mrb[0].mxu0
        %v4937 = vadd.f32 %v3507, %v4936
        %v4938 = vpop.f32.mrb[0].mxu0
        %4939 = vmatprep.mubr.f32.mxu0 0.0
        %4940 = vmatmul.mubr.f32.gmra.mrb[0].mxu0 %v3984
        %v4941 = vpop.f32.mrb[0].mxu0
        %v4942 = vadd.f32 %v3507, %v4941
        %v4943 = vpop.f32.mrb[0].mxu0
        %4944 = vmatprep.mubr.f32.mxu0 0.0
        %4945 = vmatmul.mubr.f32.gmra.mrb[0].mxu0 %v3987
        %v4946 = vpop.f32.mrb[0].mxu0
        %v4947 = vadd.f32 %v3507, %v4946
        %v4948 = vpop.f32.mrb[0].mxu0
        %4949 = vmatprep.mubr.f32.mxu0 0.0
        %4950 = vmatmul.mubr.f32.gmra.mrb[0].mxu0 %v3990
        %v4951 = vpop.f32.mrb[0].mxu0
        %v4952 = vadd.f32 %v3507, %v4951
        %v4953 = vpop.f32.mrb[0].mxu0
        %4954 = vmatprep.mubr.f32.mxu0 0.0
        %4955 = vmatmul.mubr.f32.gmra.mrb[0].mxu0 %v3993
        %v4956 = vpop.f32.mrb[0].mxu0
        %v4957 = vadd.f32 %v3507, %v4956
        %v4958 = vpop.f32.mrb[0].mxu0
        %4959 = vmatprep.mubr.f32.mxu0 0.0
        %4960 = vmatmul.mubr.f32.gmra.mrb[0].mxu0 %v3996
        %v4961 = vpop.f32.mrb[0].mxu0
        %v4962 = vadd.f32 %v3507, %v4961
        %v4963 = vpop.f32.mrb[0].mxu0
        %4964 = vmatprep.mubr.f32.mxu0 0.0
        %4965 = vmatmul.mubr.f32.gmra.mrb[0].mxu0 %v3999
        %v4966 = vpop.f32.mrb[0].mxu0
        %v4967 = vadd.f32 %v3507, %v4966
        %v4968 = vpop.f32.mrb[0].mxu0
        %4969 = vmatprep.mubr.f32.mxu0 0.0
        %4970 = vmatmul.mubr.f32.gmra.mrb[0].mxu0 %v4002
        %v4971 = vpop.f32.mrb[0].mxu0
        %v4972 = vadd.f32 %v3507, %v4971
        %v4973 = vpop.f32.mrb[0].mxu0
        %4974 = vmatprep.mubr.f32.mxu0 0.0
        %4975 = vmatmul.mubr.f32.gmra.mrb[0].mxu0 %v4005
        %v4976 = vpop.f32.mrb[0].mxu0
        %v4977 = vadd.f32 %v3507, %v4976
        %v4978 = vpop.f32.mrb[0].mxu0
        %4979 = vmatprep.mubr.f32.mxu0 0.0
        %4980 = vmatmul.mubr.f32.gmra.mrb[0].mxu0 %v4008
        %v4981 = vpop.f32.mrb[0].mxu0
        %v4982 = vadd.f32 %v3507, %v4981
        %v4983 = vpop.f32.mrb[0].mxu0
        %4984 = vmatprep.mubr.f32.mxu0 0.0
        %4985 = vmatmul.mubr.f32.gmra.mrb[0].mxu0 %v4011
        %v4986 = vpop.f32.mrb[0].mxu0
        %v4987 = vadd.f32 %v3507, %v4986
        %v4988 = vpop.f32.mrb[0].mxu0
        %4989 = vmatprep.mubr.f32.mxu0 0.0
        %4990 = vmatmul.mubr.f32.gmra.mrb[0].mxu0 %v4014
        %v4991 = vpop.f32.mrb[0].mxu0
        %v4992 = vadd.f32 %v3507, %v4991
        %v4993 = vpop.f32.mrb[0].mxu0
        %4994 = vmatprep.mubr.f32.mxu0 0.0
        %4995 = vmatmul.mubr.f32.gmra.mrb[0].mxu0 %v4017
        %v4996 = vpop.f32.mrb[0].mxu0
        %v4997 = vadd.f32 %v3507, %v4996
        %v4998 = vpop.f32.mrb[0].mxu0
        %4999 = vmatprep.mubr.f32.mxu0 0.0
        %5000 = vmatmul.mubr.f32.gmra.mrb[0].mxu0 %v4020
        %v5001 = vpop.f32.mrb[0].mxu0
        %v5002 = vadd.f32 %v3507, %v5001
        %v5003 = vpop.f32.mrb[0].mxu0
        %5004 = vmatprep.mubr.f32.mxu0 0.0
        %5005 = vmatmul.mubr.f32.gmra.mrb[0].mxu0 %v4023
        %v5006 = vpop.f32.mrb[0].mxu0
        %v5007 = vadd.f32 %v3507, %v5006
        %v5008 = vpop.f32.mrb[0].mxu0
        %5009 = vmatprep.mubr.f32.mxu0 0.0
        %5010 = vmatmul.mubr.f32.gmra.mrb[0].mxu0 %v4026
        %v5011 = vpop.f32.mrb[0].mxu0
        %v5012 = vadd.f32 %v3507, %v5011
        %v5013 = vpop.f32.mrb[0].mxu0
        %5014 = vmatprep.mubr.f32.mxu0 0.0
        %5015 = vmatmul.mubr.f32.gmra.mrb[0].mxu0 %v4029
        %v5016 = vpop.f32.mrb[0].mxu0
        %v5017 = vadd.f32 %v3507, %v5016
        %v5018 = vpop.f32.mrb[0].mxu0
        %5019 = vmatprep.mubr.f32.mxu0 0.0
        %5020 = vmatmul.mubr.f32.gmra.mrb[0].mxu0 %v4032
        %v5021 = vpop.f32.mrb[0].mxu0
        %v5022 = vadd.f32 %v3507, %v5021
        %v5023 = vpop.f32.mrb[0].mxu0
        %5024 = vmatprep.mubr.f32.mxu0 0.0
        %5025 = vmatmul.mubr.f32.gmra.mrb[0].mxu0 %v4035
        %v5026 = vpop.f32.mrb[0].mxu0
        %v5027 = vadd.f32 %v3507, %v5026
        %v5028 = vpop.f32.mrb[0].mxu0
        %5029 = vmatprep.mubr.f32.mxu0 0.0
        %5030 = vmatmul.mubr.f32.gmra.mrb[0].mxu0 %v4038
        %v5031 = vpop.f32.mrb[0].mxu0
        %v5032 = vadd.f32 %v3507, %v5031
        %v5033 = vpop.f32.mrb[0].mxu0
        %5034 = vmatprep.mubr.f32.mxu0 0.0
        %5035 = vmatmul.mubr.f32.gmra.mrb[0].mxu0 %v4041
        %v5036 = vpop.f32.mrb[0].mxu0
        %v5037 = vadd.f32 %v3507, %v5036
        %v5038 = vpop.f32.mrb[0].mxu0
        %5039 = vmatprep.mubr.f32.mxu0 0.0
        %5040 = vmatmul.mubr.f32.gmra.mrb[0].mxu0 %v4044
        %v5041 = vpop.f32.mrb[0].mxu0
        %v5042 = vadd.f32 %v3507, %v5041
        %v5043 = vpop.f32.mrb[0].mxu0
        %5044 = vmatprep.mubr.f32.mxu0 0.0
        %5045 = vmatmul.mubr.f32.gmra.mrb[0].mxu0 %v4047
        %v5046 = vpop.f32.mrb[0].mxu0
        %v5047 = vadd.f32 %v3507, %v5046
        %v5048 = vpop.f32.mrb[0].mxu0
        %5049 = vmatprep.mubr.f32.mxu0 0.0
        %5050 = vmatmul.mubr.f32.gmra.mrb[0].mxu0 %v4050
        %v5051 = vpop.f32.mrb[0].mxu0
        %v5052 = vadd.f32 %v3507, %v5051
        %v5053 = vpop.f32.mrb[0].mxu0
        %5054 = vmatprep.mubr.f32.mxu0 0.0
        %5055 = vmatmul.mubr.f32.gmra.mrb[0].mxu0 %v4053
        %v5056 = vpop.f32.mrb[0].mxu0
        %v5057 = vadd.f32 %v3507, %v5056
        %v5058 = vpop.f32.mrb[0].mxu0
        %5059 = vmatprep.mubr.f32.mxu0 0.0
        %5060 = vmatmul.mubr.f32.gmra.mrb[0].mxu0 %v4056
        %v5061 = vpop.f32.mrb[0].mxu0
        %v5062 = vadd.f32 %v3507, %v5061
        %v5063 = vpop.f32.mrb[0].mxu0
        %5064 = vmatprep.mubr.f32.mxu0 0.0
        %5065 = vmatmul.mubr.f32.gmra.mrb[0].mxu0 %v4059
        %v5066 = vpop.f32.mrb[0].mxu0
        %v5067 = vadd.f32 %v3507, %v5066
        %v5068 = vpop.f32.mrb[0].mxu0
        %5069 = vmatprep.mubr.f32.mxu0 0.0
        %5070 = vmatmul.mubr.f32.gmra.mrb[0].mxu0 %v4062
        %v5071 = vpop.f32.mrb[0].mxu0
        %v5072 = vadd.f32 %v3507, %v5071
        %v5073 = vpop.f32.mrb[0].mxu0
        %5074 = vmatprep.mubr.f32.mxu0 0.0
        %5075 = vmatmul.mubr.f32.gmra.mrb[0].mxu0 %v4065
        %v5076 = vpop.f32.mrb[0].mxu0
        %v5077 = vadd.f32 %v3507, %v5076
        %v5078 = vpop.f32.mrb[0].mxu0
        %5079 = vmatprep.mubr.f32.mxu0 0.0
        %5080 = vmatmul.mubr.f32.gmra.mrb[0].mxu0 %v4068
        %v5081 = vpop.f32.mrb[0].mxu0
        %v5082 = vadd.f32 %v3507, %v5081
        %v5083 = vpop.f32.mrb[0].mxu0
        %5084 = vmatprep.mubr.f32.mxu0 0.0
        %5085 = vmatmul.mubr.f32.gmra.mrb[0].mxu0 %v4071
        %v5086 = vpop.f32.mrb[0].mxu0
        %v5087 = vadd.f32 %v3507, %v5086
        %v5088 = vpop.f32.mrb[0].mxu0
        %5089 = vmatprep.mubr.f32.mxu0 0.0
        %5090 = vmatmul.mubr.f32.gmra.mrb[0].mxu0 %v4074
        %v5091 = vpop.f32.mrb[0].mxu0
        %v5092 = vadd.f32 %v3507, %v5091
        %v5093 = vpop.f32.mrb[0].mxu0
        %5094 = vmatprep.mubr.f32.mxu0 0.0
        %5095 = vmatmul.mubr.f32.gmra.mrb[0].mxu0 %v4077
        %v5096 = vpop.f32.mrb[0].mxu0
        %v5097 = vadd.f32 %v3507, %v5096
        %v5098 = vpop.f32.mrb[0].mxu0
        %5099 = vmatprep.mubr.f32.mxu0 0.0
        %5100 = vmatmul.mubr.f32.gmra.mrb[0].mxu0 %v4080
        %v5101 = vpop.f32.mrb[0].mxu0
        %v5102 = vadd.f32 %v3507, %v5101
        %v5103 = vpop.f32.mrb[0].mxu0
        %5104 = vmatprep.mubr.f32.mxu0 0.0
        %5105 = vmatmul.mubr.f32.gmra.mrb[0].mxu0 %v4083
        %v5106 = vpop.f32.mrb[0].mxu0
        %v5107 = vadd.f32 %v3507, %v5106
        %v5108 = vpop.f32.mrb[0].mxu0
        %5109 = vdwg.mxu0
        %v5110 = vld [vmem:[%s353] sm:$0xff]
        %v5111 = vld [vmem:[%s353 + $0x8] sm:$0xff]
        %v5112 = vld [vmem:[%s353 + $0x10] sm:$0xff]
        %v5113 = vld [vmem:[%s353 + $0x18] sm:$0xff]
        %v5114 = vld [vmem:[%s353 + $0x20] sm:$0xff]
        %v5115 = vld [vmem:[%s353 + $0x28] sm:$0xff]
        %v5116 = vld [vmem:[%s353 + $0x30] sm:$0xff]
        %v5117 = vld [vmem:[%s353 + $0x38] sm:$0xff]
        %v5118 = vsub.f32 0.0, %v5110
        %v5119 = vsub.f32 0.0, %v5111
        %v5120 = vsub.f32 0.0, %v5112
        %v5121 = vsub.f32 0.0, %v5113
        %v5122 = vsub.f32 0.0, %v5114
        %v5123 = vsub.f32 0.0, %v5115
        %v5124 = vsub.f32 0.0, %v5116
        %v5125 = vsub.f32 0.0, %v5117
        %v5126 = vmul.f32 %v5118, 1.442695
        %v5127 = vpow.pop %v5126
        %v5128 = vmul.f32 %v5119, 1.442695
        %v5129 = vpow.pop %v5128
        %v5130 = vmul.f32 %v5120, 1.442695
        %v5131 = vpow.pop %v5130
        %v5132 = vmul.f32 %v5121, 1.442695
        %v5133 = vpow.pop %v5132
        %v5134 = vmul.f32 %v5122, 1.442695
        %v5135 = vpow.pop %v5134
        %v5136 = vmul.f32 %v5123, 1.442695
        %v5137 = vpow.pop %v5136
        %v5138 = vmul.f32 %v5124, 1.442695
        %v5139 = vpow.pop %v5138
        %v5140 = vmul.f32 %v5125, 1.442695
        %v5141 = vpow.pop %v5140
        %v5142 = vsub.f32 1.0, %v5127
        %v5143 = vsub.f32 1.0, %v5129
        %v5144 = vsub.f32 1.0, %v5131
        %v5145 = vsub.f32 1.0, %v5133
        %v5146 = vsub.f32 1.0, %v5135
        %v5147 = vsub.f32 1.0, %v5137
        %v5148 = vsub.f32 1.0, %v5139
        %v5149 = vsub.f32 1.0, %v5141
        %v5150 = vld [vmem:[%s2] sm:$0xff]
        %v5151 = vld [vmem:[%s2 + $0x8] sm:$0xff]
        %v5152 = vld [vmem:[%s2 + $0x10] sm:$0xff]
        %vm5153 = vcmask 195584
        %v5155 = vsel %vm5153, %v5110, 0
        %v5158 = vsel %vm5153, %v5111, 0
        %v5161 = vsel %vm5153, %v5112, 0
        %v5164 = vsel %vm5153, %v5113, 0
        %v5167 = vsel %vm5153, %v5114, 0
        %v5170 = vsel %vm5153, %v5115, 0
        %v5173 = vsel %vm5153, %v5116, 0
        %v5176 = vsel %vm5153, %v5117, 0
        %5178 = vmatprep.subr.mxu0 0.0
        %5179 = vmatpush1.msra.mxu0 %v5150
        %5180 = vmatprep.subr.mxu0 0.0
        %5181 = vmatpush1.msra.mxu0 %v5151
        %5182 = vmatprep.subr.mxu0 0.0
        %5183 = vmatpush1.msra.mxu0 %v5152
        %5184 = vmatprep.subr.mxu0 0.0
        %5185 = vmatpush1.msra.mxu0 0.0
        %5186 = vmatprep.subr.mxu0 0.0
        %5187 = vmatpush1.msra.mxu0 0.0
        %5188 = vmatprep.subr.mxu0 0.0
        %5189 = vmatpush1.msra.mxu0 0.0
        %5190 = vmatprep.subr.mxu0 0.0
        %5191 = vmatpush1.msra.mxu0 0.0
        %5192 = vmatprep.subr.mxu0 0.0
        %5193 = vmatpush1.msra.mxu0 0.0
        %5194 = vmatprep.subr.mxu0 0.0
        %5195 = vmatpush1.msra.mxu0 0.0
        %5196 = vmatprep.subr.mxu0 0.0
        %5197 = vmatpush1.msra.mxu0 0.0
        %5198 = vmatprep.subr.mxu0 0.0
        %5199 = vmatpush1.msra.mxu0 0.0
        %5200 = vmatprep.subr.mxu0 0.0
        %5201 = vmatpush1.msra.mxu0 0.0
        %5202 = vmatprep.subr.mxu0 0.0
        %5203 = vmatpush1.msra.mxu0 0.0
        %5204 = vmatprep.subr.mxu0 0.0
        %5205 = vmatpush1.msra.mxu0 0.0
        %5206 = vmatprep.subr.mxu0 0.0
        %5207 = vmatpush1.msra.mxu0 0.0
        %5208 = vmatprep.subr.mxu0 0.0
        %5209 = vmatpush1.msra.mxu0 0.0
        %5210 = vmatprep.subr.mxu0 0.0
        %5211 = vmatpush1.msra.mxu0 0.0
        %5212 = vmatprep.subr.mxu0 0.0
        %5213 = vmatpush1.msra.mxu0 0.0
        %5214 = vmatprep.subr.mxu0 0.0
        %5215 = vmatpush1.msra.mxu0 0.0
        %5216 = vmatprep.subr.mxu0 0.0
        %5217 = vmatpush1.msra.mxu0 0.0
        %5218 = vmatprep.subr.mxu0 0.0
        %5219 = vmatpush1.msra.mxu0 0.0
        %5220 = vmatprep.subr.mxu0 0.0
        %5221 = vmatpush1.msra.mxu0 0.0
        %5222 = vmatprep.subr.mxu0 0.0
        %5223 = vmatpush1.msra.mxu0 0.0
        %5224 = vmatprep.subr.mxu0 0.0
        %5225 = vmatpush1.msra.mxu0 0.0
        %5226 = vmatprep.subr.mxu0 0.0
        %5227 = vmatpush1.msra.mxu0 0.0
        %5228 = vmatprep.subr.mxu0 0.0
        %5229 = vmatpush1.msra.mxu0 0.0
        %5230 = vmatprep.subr.mxu0 0.0
        %5231 = vmatpush1.msra.mxu0 0.0
        %5232 = vmatprep.subr.mxu0 0.0
        %5233 = vmatpush1.msra.mxu0 0.0
        %5234 = vmatprep.subr.mxu0 0.0
        %5235 = vmatpush1.msra.mxu0 0.0
        %5236 = vmatprep.subr.mxu0 0.0
        %5237 = vmatpush1.msra.mxu0 0.0
        %5238 = vmatprep.subr.mxu0 0.0
        %5239 = vmatpush1.msra.mxu0 0.0
        %5240 = vmatprep.subr.mxu0 0.0
        %5241 = vmatpush1.msra.mxu0 0.0
        %5242 = vmatprep.mubr.f32.mxu0 0.0
        %5243 = vmatmul.mubr.f32.gmra.mrb[0].mxu0 %v5155
        %v5244 = vpop.f32.mrb[0].mxu0
        %v5245 = vadd.f32 0.0, %v5244
        %v5246 = vpop.f32.mrb[0].mxu0
        %5247 = vmatprep.mubr.f32.mxu0 0.0
        %5248 = vmatmul.mubr.f32.gmra.mrb[0].mxu0 %v5158
        %v5249 = vpop.f32.mrb[0].mxu0
        %v5250 = vadd.f32 0.0, %v5249
        %v5251 = vpop.f32.mrb[0].mxu0
        %5252 = vmatprep.mubr.f32.mxu0 0.0
        %5253 = vmatmul.mubr.f32.gmra.mrb[0].mxu0 %v5161
        %v5254 = vpop.f32.mrb[0].mxu0
        %v5255 = vadd.f32 0.0, %v5254
        %v5256 = vpop.f32.mrb[0].mxu0
        %5257 = vmatprep.mubr.f32.mxu0 0.0
        %5258 = vmatmul.mubr.f32.gmra.mrb[0].mxu0 %v5164
        %v5259 = vpop.f32.mrb[0].mxu0
        %v5260 = vadd.f32 0.0, %v5259
        %v5261 = vpop.f32.mrb[0].mxu0
        %5262 = vmatprep.mubr.f32.mxu0 0.0
        %5263 = vmatmul.mubr.f32.gmra.mrb[0].mxu0 %v5167
        %v5264 = vpop.f32.mrb[0].mxu0
        %v5265 = vadd.f32 0.0, %v5264
        %v5266 = vpop.f32.mrb[0].mxu0
        %5267 = vmatprep.mubr.f32.mxu0 0.0
        %5268 = vmatmul.mubr.f32.gmra.mrb[0].mxu0 %v5170
        %v5269 = vpop.f32.mrb[0].mxu0
        %v5270 = vadd.f32 0.0, %v5269
        %v5271 = vpop.f32.mrb[0].mxu0
        %5272 = vmatprep.mubr.f32.mxu0 0.0
        %5273 = vmatmul.mubr.f32.gmra.mrb[0].mxu0 %v5173
        %v5274 = vpop.f32.mrb[0].mxu0
        %v5275 = vadd.f32 0.0, %v5274
        %v5276 = vpop.f32.mrb[0].mxu0
        %5277 = vmatprep.mubr.f32.mxu0 0.0
        %5278 = vmatmul.mubr.f32.gmra.mrb[0].mxu0 %v5176
        %v5279 = vpop.f32.mrb[0].mxu0
        %v5280 = vadd.f32 0.0, %v5279
        %v5281 = vpop.f32.mrb[0].mxu0
        %5282 = vdwg.mxu0
        %v5283 = vsub.f32 0.0, %v5245
        %v5284 = vsub.f32 0.0, %v5250
        %v5285 = vsub.f32 0.0, %v5255
        %v5286 = vsub.f32 0.0, %v5260
        %v5287 = vsub.f32 0.0, %v5265
        %v5288 = vsub.f32 0.0, %v5270
        %v5289 = vsub.f32 0.0, %v5275
        %v5290 = vsub.f32 0.0, %v5280
        %v5291 = vmul.f32 %v5283, 1.442695
        %v5292 = vpow.pop %v5291
        %v5293 = vmul.f32 %v5284, 1.442695
        %v5294 = vpow.pop %v5293
        %v5295 = vmul.f32 %v5285, 1.442695
        %v5296 = vpow.pop %v5295
        %v5297 = vmul.f32 %v5286, 1.442695
        %v5298 = vpow.pop %v5297
        %v5299 = vmul.f32 %v5287, 1.442695
        %v5300 = vpow.pop %v5299
        %v5301 = vmul.f32 %v5288, 1.442695
        %v5302 = vpow.pop %v5301
        %v5303 = vmul.f32 %v5289, 1.442695
        %v5304 = vpow.pop %v5303
        %v5305 = vmul.f32 %v5290, 1.442695
        %v5306 = vpow.pop %v5305
        %v5307 = vmul.f32 %v5142, %v5292
        %v5308 = vmul.f32 %v5143, %v5294
        %v5309 = vmul.f32 %v5144, %v5296
        %v5310 = vmul.f32 %v5145, %v5298
        %v5311 = vmul.f32 %v5146, %v5300
        %v5312 = vmul.f32 %v5147, %v5302
        %v5313 = vmul.f32 %v5148, %v5304
        %v5314 = vmul.f32 %v5149, %v5306
        %v5315 = vsel %vm5153, %v5307, 0.0
        %5316 = vadd.xlane.f32.xlu0 %v5315
        %v5317 = vpop.xlane.xlu0 %5316
        %v5318 = vsel %vm5153, %v5308, 0.0
        %5319 = vadd.xlane.f32.xlu0 %v5318
        %v5320 = vpop.xlane.xlu0 %5319
        %v5321 = vsel %vm5153, %v5309, 0.0
        %5322 = vadd.xlane.f32.xlu0 %v5321
        %v5323 = vpop.xlane.xlu0 %5322
        %v5324 = vsel %vm5153, %v5310, 0.0
        %5325 = vadd.xlane.f32.xlu0 %v5324
        %v5326 = vpop.xlane.xlu0 %5325
        %v5327 = vsel %vm5153, %v5311, 0.0
        %5328 = vadd.xlane.f32.xlu0 %v5327
        %v5329 = vpop.xlane.xlu0 %5328
        %v5330 = vsel %vm5153, %v5312, 0.0
        %5331 = vadd.xlane.f32.xlu0 %v5330
        %v5332 = vpop.xlane.xlu0 %5331
        %v5333 = vsel %vm5153, %v5313, 0.0
        %5334 = vadd.xlane.f32.xlu0 %v5333
        %v5335 = vpop.xlane.xlu0 %5334
        %v5336 = vsel %vm5153, %v5314, 0.0
        %5337 = vadd.xlane.f32.xlu0 %v5336
        %v5338 = vpop.xlane.xlu0 %5337
        %v5339 = vlaneseq
        %v5340 = vshrl.u32 %v5339, 7
        %v5341 = vsub.s32 0, %v5340
        %v5342 = vrot.slane %v5307, %v5341
        %5344 = vbcast.lane.b32.xlu0 %v5342, 256
        %v5345 = vpop.permute.xlu0 %5344
        %s5347 = sor.u32 256, 8
        %5348 = vbcast.lane.b32.xlu0 %v5342, %s5347
        %v5349 = vpop.permute.xlu0 %5348
        %s5351 = sor.u32 256, 16
        %5352 = vbcast.lane.b32.xlu0 %v5342, %s5351
        %v5353 = vpop.permute.xlu0 %5352
        %v5354 = vlaneseq
        %v5355 = vshrl.u32 %v5354, 7
        %v5356 = vsub.s32 1, %v5355
        %v5357 = vrot.slane %v5307, %v5356
        %5359 = vbcast.lane.b32.xlu0 %v5357, 256
        %v5360 = vpop.permute.xlu0 %5359
        %s5362 = sor.u32 256, 8
        %5363 = vbcast.lane.b32.xlu0 %v5357, %s5362
        %v5364 = vpop.permute.xlu0 %5363
        %s5366 = sor.u32 256, 16
        %5367 = vbcast.lane.b32.xlu0 %v5357, %s5366
        %v5368 = vpop.permute.xlu0 %5367
        %v5369 = vlaneseq
        %v5370 = vshrl.u32 %v5369, 7
        %v5371 = vsub.s32 2, %v5370
        %v5372 = vrot.slane %v5307, %v5371
        %5374 = vbcast.lane.b32.xlu0 %v5372, 256
        %v5375 = vpop.permute.xlu0 %5374
        %s5377 = sor.u32 256, 8
        %5378 = vbcast.lane.b32.xlu0 %v5372, %s5377
        %v5379 = vpop.permute.xlu0 %5378
        %s5381 = sor.u32 256, 16
        %5382 = vbcast.lane.b32.xlu0 %v5372, %s5381
        %v5383 = vpop.permute.xlu0 %5382
        %v5384 = vlaneseq
        %v5385 = vshrl.u32 %v5384, 7
        %v5386 = vsub.s32 3, %v5385
        %v5387 = vrot.slane %v5307, %v5386
        %5389 = vbcast.lane.b32.xlu0 %v5387, 256
        %v5390 = vpop.permute.xlu0 %5389
        %s5392 = sor.u32 256, 8
        %5393 = vbcast.lane.b32.xlu0 %v5387, %s5392
        %v5394 = vpop.permute.xlu0 %5393
        %s5396 = sor.u32 256, 16
        %5397 = vbcast.lane.b32.xlu0 %v5387, %s5396
        %v5398 = vpop.permute.xlu0 %5397
        %v5399 = vlaneseq
        %v5400 = vshrl.u32 %v5399, 7
        %v5401 = vsub.s32 4, %v5400
        %v5402 = vrot.slane %v5307, %v5401
        %5404 = vbcast.lane.b32.xlu0 %v5402, 256
        %v5405 = vpop.permute.xlu0 %5404
        %s5407 = sor.u32 256, 8
        %5408 = vbcast.lane.b32.xlu0 %v5402, %s5407
        %v5409 = vpop.permute.xlu0 %5408
        %s5411 = sor.u32 256, 16
        %5412 = vbcast.lane.b32.xlu0 %v5402, %s5411
        %v5413 = vpop.permute.xlu0 %5412
        %v5414 = vlaneseq
        %v5415 = vshrl.u32 %v5414, 7
        %v5416 = vsub.s32 5, %v5415
        %v5417 = vrot.slane %v5307, %v5416
        %5419 = vbcast.lane.b32.xlu0 %v5417, 256
        %v5420 = vpop.permute.xlu0 %5419
        %s5422 = sor.u32 256, 8
        %5423 = vbcast.lane.b32.xlu0 %v5417, %s5422
        %v5424 = vpop.permute.xlu0 %5423
        %s5426 = sor.u32 256, 16
        %5427 = vbcast.lane.b32.xlu0 %v5417, %s5426
        %v5428 = vpop.permute.xlu0 %5427
        %v5429 = vlaneseq
        %v5430 = vshrl.u32 %v5429, 7
        %v5431 = vsub.s32 6, %v5430
        %v5432 = vrot.slane %v5307, %v5431
        %5434 = vbcast.lane.b32.xlu0 %v5432, 256
        %v5435 = vpop.permute.xlu0 %5434
        %s5437 = sor.u32 256, 8
        %5438 = vbcast.lane.b32.xlu0 %v5432, %s5437
        %v5439 = vpop.permute.xlu0 %5438
        %s5441 = sor.u32 256, 16
        %5442 = vbcast.lane.b32.xlu0 %v5432, %s5441
        %v5443 = vpop.permute.xlu0 %5442
        %v5444 = vlaneseq
        %v5445 = vshrl.u32 %v5444, 7
        %v5446 = vsub.s32 7, %v5445
        %v5447 = vrot.slane %v5307, %v5446
        %5449 = vbcast.lane.b32.xlu0 %v5447, 256
        %v5450 = vpop.permute.xlu0 %5449
        %s5452 = sor.u32 256, 8
        %5453 = vbcast.lane.b32.xlu0 %v5447, %s5452
        %v5454 = vpop.permute.xlu0 %5453
        %s5456 = sor.u32 256, 16
        %5457 = vbcast.lane.b32.xlu0 %v5447, %s5456
        %v5458 = vpop.permute.xlu0 %5457
        %v5459 = vlaneseq
        %v5460 = vshrl.u32 %v5459, 7
        %v5461 = vsub.s32 0, %v5460
        %v5462 = vrot.slane %v5308, %v5461
        %5464 = vbcast.lane.b32.xlu0 %v5462, 256
        %v5465 = vpop.permute.xlu0 %5464
        %s5467 = sor.u32 256, 8
        %5468 = vbcast.lane.b32.xlu0 %v5462, %s5467
        %v5469 = vpop.permute.xlu0 %5468
        %s5471 = sor.u32 256, 16
        %5472 = vbcast.lane.b32.xlu0 %v5462, %s5471
        %v5473 = vpop.permute.xlu0 %5472
        %v5474 = vlaneseq
        %v5475 = vshrl.u32 %v5474, 7
        %v5476 = vsub.s32 1, %v5475
        %v5477 = vrot.slane %v5308, %v5476
        %5479 = vbcast.lane.b32.xlu0 %v5477, 256
        %v5480 = vpop.permute.xlu0 %5479
        %s5482 = sor.u32 256, 8
        %5483 = vbcast.lane.b32.xlu0 %v5477, %s5482
        %v5484 = vpop.permute.xlu0 %5483
        %s5486 = sor.u32 256, 16
        %5487 = vbcast.lane.b32.xlu0 %v5477, %s5486
        %v5488 = vpop.permute.xlu0 %5487
        %v5489 = vlaneseq
        %v5490 = vshrl.u32 %v5489, 7
        %v5491 = vsub.s32 2, %v5490
        %v5492 = vrot.slane %v5308, %v5491
        %5494 = vbcast.lane.b32.xlu0 %v5492, 256
        %v5495 = vpop.permute.xlu0 %5494
        %s5497 = sor.u32 256, 8
        %5498 = vbcast.lane.b32.xlu0 %v5492, %s5497
        %v5499 = vpop.permute.xlu0 %5498
        %s5501 = sor.u32 256, 16
        %5502 = vbcast.lane.b32.xlu0 %v5492, %s5501
        %v5503 = vpop.permute.xlu0 %5502
        %v5504 = vlaneseq
        %v5505 = vshrl.u32 %v5504, 7
        %v5506 = vsub.s32 3, %v5505
        %v5507 = vrot.slane %v5308, %v5506
        %5509 = vbcast.lane.b32.xlu0 %v5507, 256
        %v5510 = vpop.permute.xlu0 %5509
        %s5512 = sor.u32 256, 8
        %5513 = vbcast.lane.b32.xlu0 %v5507, %s5512
        %v5514 = vpop.permute.xlu0 %5513
        %s5516 = sor.u32 256, 16
        %5517 = vbcast.lane.b32.xlu0 %v5507, %s5516
        %v5518 = vpop.permute.xlu0 %5517
        %v5519 = vlaneseq
        %v5520 = vshrl.u32 %v5519, 7
        %v5521 = vsub.s32 4, %v5520
        %v5522 = vrot.slane %v5308, %v5521
        %5524 = vbcast.lane.b32.xlu0 %v5522, 256
        %v5525 = vpop.permute.xlu0 %5524
        %s5527 = sor.u32 256, 8
        %5528 = vbcast.lane.b32.xlu0 %v5522, %s5527
        %v5529 = vpop.permute.xlu0 %5528
        %s5531 = sor.u32 256, 16
        %5532 = vbcast.lane.b32.xlu0 %v5522, %s5531
        %v5533 = vpop.permute.xlu0 %5532
        %v5534 = vlaneseq
        %v5535 = vshrl.u32 %v5534, 7
        %v5536 = vsub.s32 5, %v5535
        %v5537 = vrot.slane %v5308, %v5536
        %5539 = vbcast.lane.b32.xlu0 %v5537, 256
        %v5540 = vpop.permute.xlu0 %5539
        %s5542 = sor.u32 256, 8
        %5543 = vbcast.lane.b32.xlu0 %v5537, %s5542
        %v5544 = vpop.permute.xlu0 %5543
        %s5546 = sor.u32 256, 16
        %5547 = vbcast.lane.b32.xlu0 %v5537, %s5546
        %v5548 = vpop.permute.xlu0 %5547
        %v5549 = vlaneseq
        %v5550 = vshrl.u32 %v5549, 7
        %v5551 = vsub.s32 6, %v5550
        %v5552 = vrot.slane %v5308, %v5551
        %5554 = vbcast.lane.b32.xlu0 %v5552, 256
        %v5555 = vpop.permute.xlu0 %5554
        %s5557 = sor.u32 256, 8
        %5558 = vbcast.lane.b32.xlu0 %v5552, %s5557
        %v5559 = vpop.permute.xlu0 %5558
        %s5561 = sor.u32 256, 16
        %5562 = vbcast.lane.b32.xlu0 %v5552, %s5561
        %v5563 = vpop.permute.xlu0 %5562
        %v5564 = vlaneseq
        %v5565 = vshrl.u32 %v5564, 7
        %v5566 = vsub.s32 7, %v5565
        %v5567 = vrot.slane %v5308, %v5566
        %5569 = vbcast.lane.b32.xlu0 %v5567, 256
        %v5570 = vpop.permute.xlu0 %5569
        %s5572 = sor.u32 256, 8
        %5573 = vbcast.lane.b32.xlu0 %v5567, %s5572
        %v5574 = vpop.permute.xlu0 %5573
        %s5576 = sor.u32 256, 16
        %5577 = vbcast.lane.b32.xlu0 %v5567, %s5576
        %v5578 = vpop.permute.xlu0 %5577
        %v5579 = vlaneseq
        %v5580 = vshrl.u32 %v5579, 7
        %v5581 = vsub.s32 0, %v5580
        %v5582 = vrot.slane %v5309, %v5581
        %5584 = vbcast.lane.b32.xlu0 %v5582, 256
        %v5585 = vpop.permute.xlu0 %5584
        %s5587 = sor.u32 256, 8
        %5588 = vbcast.lane.b32.xlu0 %v5582, %s5587
        %v5589 = vpop.permute.xlu0 %5588
        %s5591 = sor.u32 256, 16
        %5592 = vbcast.lane.b32.xlu0 %v5582, %s5591
        %v5593 = vpop.permute.xlu0 %5592
        %v5594 = vlaneseq
        %v5595 = vshrl.u32 %v5594, 7
        %v5596 = vsub.s32 1, %v5595
        %v5597 = vrot.slane %v5309, %v5596
        %5599 = vbcast.lane.b32.xlu0 %v5597, 256
        %v5600 = vpop.permute.xlu0 %5599
        %s5602 = sor.u32 256, 8
        %5603 = vbcast.lane.b32.xlu0 %v5597, %s5602
        %v5604 = vpop.permute.xlu0 %5603
        %s5606 = sor.u32 256, 16
        %5607 = vbcast.lane.b32.xlu0 %v5597, %s5606
        %v5608 = vpop.permute.xlu0 %5607
        %v5609 = vlaneseq
        %v5610 = vshrl.u32 %v5609, 7
        %v5611 = vsub.s32 2, %v5610
        %v5612 = vrot.slane %v5309, %v5611
        %5614 = vbcast.lane.b32.xlu0 %v5612, 256
        %v5615 = vpop.permute.xlu0 %5614
        %s5617 = sor.u32 256, 8
        %5618 = vbcast.lane.b32.xlu0 %v5612, %s5617
        %v5619 = vpop.permute.xlu0 %5618
        %s5621 = sor.u32 256, 16
        %5622 = vbcast.lane.b32.xlu0 %v5612, %s5621
        %v5623 = vpop.permute.xlu0 %5622
        %v5624 = vlaneseq
        %v5625 = vshrl.u32 %v5624, 7
        %v5626 = vsub.s32 3, %v5625
        %v5627 = vrot.slane %v5309, %v5626
        %5629 = vbcast.lane.b32.xlu0 %v5627, 256
        %v5630 = vpop.permute.xlu0 %5629
        %s5632 = sor.u32 256, 8
        %5633 = vbcast.lane.b32.xlu0 %v5627, %s5632
        %v5634 = vpop.permute.xlu0 %5633
        %s5636 = sor.u32 256, 16
        %5637 = vbcast.lane.b32.xlu0 %v5627, %s5636
        %v5638 = vpop.permute.xlu0 %5637
        %v5639 = vlaneseq
        %v5640 = vshrl.u32 %v5639, 7
        %v5641 = vsub.s32 4, %v5640
        %v5642 = vrot.slane %v5309, %v5641
        %5644 = vbcast.lane.b32.xlu0 %v5642, 256
        %v5645 = vpop.permute.xlu0 %5644
        %s5647 = sor.u32 256, 8
        %5648 = vbcast.lane.b32.xlu0 %v5642, %s5647
        %v5649 = vpop.permute.xlu0 %5648
        %s5651 = sor.u32 256, 16
        %5652 = vbcast.lane.b32.xlu0 %v5642, %s5651
        %v5653 = vpop.permute.xlu0 %5652
        %v5654 = vlaneseq
        %v5655 = vshrl.u32 %v5654, 7
        %v5656 = vsub.s32 5, %v5655
        %v5657 = vrot.slane %v5309, %v5656
        %5659 = vbcast.lane.b32.xlu0 %v5657, 256
        %v5660 = vpop.permute.xlu0 %5659
        %s5662 = sor.u32 256, 8
        %5663 = vbcast.lane.b32.xlu0 %v5657, %s5662
        %v5664 = vpop.permute.xlu0 %5663
        %s5666 = sor.u32 256, 16
        %5667 = vbcast.lane.b32.xlu0 %v5657, %s5666
        %v5668 = vpop.permute.xlu0 %5667
        %v5669 = vlaneseq
        %v5670 = vshrl.u32 %v5669, 7
        %v5671 = vsub.s32 6, %v5670
        %v5672 = vrot.slane %v5309, %v5671
        %5674 = vbcast.lane.b32.xlu0 %v5672, 256
        %v5675 = vpop.permute.xlu0 %5674
        %s5677 = sor.u32 256, 8
        %5678 = vbcast.lane.b32.xlu0 %v5672, %s5677
        %v5679 = vpop.permute.xlu0 %5678
        %s5681 = sor.u32 256, 16
        %5682 = vbcast.lane.b32.xlu0 %v5672, %s5681
        %v5683 = vpop.permute.xlu0 %5682
        %v5684 = vlaneseq
        %v5685 = vshrl.u32 %v5684, 7
        %v5686 = vsub.s32 7, %v5685
        %v5687 = vrot.slane %v5309, %v5686
        %5689 = vbcast.lane.b32.xlu0 %v5687, 256
        %v5690 = vpop.permute.xlu0 %5689
        %s5692 = sor.u32 256, 8
        %5693 = vbcast.lane.b32.xlu0 %v5687, %s5692
        %v5694 = vpop.permute.xlu0 %5693
        %s5696 = sor.u32 256, 16
        %5697 = vbcast.lane.b32.xlu0 %v5687, %s5696
        %v5698 = vpop.permute.xlu0 %5697
        %v5699 = vlaneseq
        %v5700 = vshrl.u32 %v5699, 7
        %v5701 = vsub.s32 0, %v5700
        %v5702 = vrot.slane %v5310, %v5701
        %5704 = vbcast.lane.b32.xlu0 %v5702, 256
        %v5705 = vpop.permute.xlu0 %5704
        %s5707 = sor.u32 256, 8
        %5708 = vbcast.lane.b32.xlu0 %v5702, %s5707
        %v5709 = vpop.permute.xlu0 %5708
        %s5711 = sor.u32 256, 16
        %5712 = vbcast.lane.b32.xlu0 %v5702, %s5711
        %v5713 = vpop.permute.xlu0 %5712
        %v5714 = vlaneseq
        %v5715 = vshrl.u32 %v5714, 7
        %v5716 = vsub.s32 1, %v5715
        %v5717 = vrot.slane %v5310, %v5716
        %5719 = vbcast.lane.b32.xlu0 %v5717, 256
        %v5720 = vpop.permute.xlu0 %5719
        %s5722 = sor.u32 256, 8
        %5723 = vbcast.lane.b32.xlu0 %v5717, %s5722
        %v5724 = vpop.permute.xlu0 %5723
        %s5726 = sor.u32 256, 16
        %5727 = vbcast.lane.b32.xlu0 %v5717, %s5726
        %v5728 = vpop.permute.xlu0 %5727
        %v5729 = vlaneseq
        %v5730 = vshrl.u32 %v5729, 7
        %v5731 = vsub.s32 2, %v5730
        %v5732 = vrot.slane %v5310, %v5731
        %5734 = vbcast.lane.b32.xlu0 %v5732, 256
        %v5735 = vpop.permute.xlu0 %5734
        %s5737 = sor.u32 256, 8
        %5738 = vbcast.lane.b32.xlu0 %v5732, %s5737
        %v5739 = vpop.permute.xlu0 %5738
        %s5741 = sor.u32 256, 16
        %5742 = vbcast.lane.b32.xlu0 %v5732, %s5741
        %v5743 = vpop.permute.xlu0 %5742
        %v5744 = vlaneseq
        %v5745 = vshrl.u32 %v5744, 7
        %v5746 = vsub.s32 3, %v5745
        %v5747 = vrot.slane %v5310, %v5746
        %5749 = vbcast.lane.b32.xlu0 %v5747, 256
        %v5750 = vpop.permute.xlu0 %5749
        %s5752 = sor.u32 256, 8
        %5753 = vbcast.lane.b32.xlu0 %v5747, %s5752
        %v5754 = vpop.permute.xlu0 %5753
        %s5756 = sor.u32 256, 16
        %5757 = vbcast.lane.b32.xlu0 %v5747, %s5756
        %v5758 = vpop.permute.xlu0 %5757
        %v5759 = vlaneseq
        %v5760 = vshrl.u32 %v5759, 7
        %v5761 = vsub.s32 4, %v5760
        %v5762 = vrot.slane %v5310, %v5761
        %5764 = vbcast.lane.b32.xlu0 %v5762, 256
        %v5765 = vpop.permute.xlu0 %5764
        %s5767 = sor.u32 256, 8
        %5768 = vbcast.lane.b32.xlu0 %v5762, %s5767
        %v5769 = vpop.permute.xlu0 %5768
        %s5771 = sor.u32 256, 16
        %5772 = vbcast.lane.b32.xlu0 %v5762, %s5771
        %v5773 = vpop.permute.xlu0 %5772
        %v5774 = vlaneseq
        %v5775 = vshrl.u32 %v5774, 7
        %v5776 = vsub.s32 5, %v5775
        %v5777 = vrot.slane %v5310, %v5776
        %5779 = vbcast.lane.b32.xlu0 %v5777, 256
        %v5780 = vpop.permute.xlu0 %5779
        %s5782 = sor.u32 256, 8
        %5783 = vbcast.lane.b32.xlu0 %v5777, %s5782
        %v5784 = vpop.permute.xlu0 %5783
        %s5786 = sor.u32 256, 16
        %5787 = vbcast.lane.b32.xlu0 %v5777, %s5786
        %v5788 = vpop.permute.xlu0 %5787
        %v5789 = vlaneseq
        %v5790 = vshrl.u32 %v5789, 7
        %v5791 = vsub.s32 6, %v5790
        %v5792 = vrot.slane %v5310, %v5791
        %5794 = vbcast.lane.b32.xlu0 %v5792, 256
        %v5795 = vpop.permute.xlu0 %5794
        %s5797 = sor.u32 256, 8
        %5798 = vbcast.lane.b32.xlu0 %v5792, %s5797
        %v5799 = vpop.permute.xlu0 %5798
        %s5801 = sor.u32 256, 16
        %5802 = vbcast.lane.b32.xlu0 %v5792, %s5801
        %v5803 = vpop.permute.xlu0 %5802
        %v5804 = vlaneseq
        %v5805 = vshrl.u32 %v5804, 7
        %v5806 = vsub.s32 7, %v5805
        %v5807 = vrot.slane %v5310, %v5806
        %5809 = vbcast.lane.b32.xlu0 %v5807, 256
        %v5810 = vpop.permute.xlu0 %5809
        %s5812 = sor.u32 256, 8
        %5813 = vbcast.lane.b32.xlu0 %v5807, %s5812
        %v5814 = vpop.permute.xlu0 %5813
        %s5816 = sor.u32 256, 16
        %5817 = vbcast.lane.b32.xlu0 %v5807, %s5816
        %v5818 = vpop.permute.xlu0 %5817
        %v5819 = vlaneseq
        %v5820 = vshrl.u32 %v5819, 7
        %v5821 = vsub.s32 0, %v5820
        %v5822 = vrot.slane %v5311, %v5821
        %5824 = vbcast.lane.b32.xlu0 %v5822, 256
        %v5825 = vpop.permute.xlu0 %5824
        %s5827 = sor.u32 256, 8
        %5828 = vbcast.lane.b32.xlu0 %v5822, %s5827
        %v5829 = vpop.permute.xlu0 %5828
        %s5831 = sor.u32 256, 16
        %5832 = vbcast.lane.b32.xlu0 %v5822, %s5831
        %v5833 = vpop.permute.xlu0 %5832
        %v5834 = vlaneseq
        %v5835 = vshrl.u32 %v5834, 7
        %v5836 = vsub.s32 1, %v5835
        %v5837 = vrot.slane %v5311, %v5836
        %5839 = vbcast.lane.b32.xlu0 %v5837, 256
        %v5840 = vpop.permute.xlu0 %5839
        %s5842 = sor.u32 256, 8
        %5843 = vbcast.lane.b32.xlu0 %v5837, %s5842
        %v5844 = vpop.permute.xlu0 %5843
        %s5846 = sor.u32 256, 16
        %5847 = vbcast.lane.b32.xlu0 %v5837, %s5846
        %v5848 = vpop.permute.xlu0 %5847
        %v5849 = vlaneseq
        %v5850 = vshrl.u32 %v5849, 7
        %v5851 = vsub.s32 2, %v5850
        %v5852 = vrot.slane %v5311, %v5851
        %5854 = vbcast.lane.b32.xlu0 %v5852, 256
        %v5855 = vpop.permute.xlu0 %5854
        %s5857 = sor.u32 256, 8
        %5858 = vbcast.lane.b32.xlu0 %v5852, %s5857
        %v5859 = vpop.permute.xlu0 %5858
        %s5861 = sor.u32 256, 16
        %5862 = vbcast.lane.b32.xlu0 %v5852, %s5861
        %v5863 = vpop.permute.xlu0 %5862
        %v5864 = vlaneseq
        %v5865 = vshrl.u32 %v5864, 7
        %v5866 = vsub.s32 3, %v5865
        %v5867 = vrot.slane %v5311, %v5866
        %5869 = vbcast.lane.b32.xlu0 %v5867, 256
        %v5870 = vpop.permute.xlu0 %5869
        %s5872 = sor.u32 256, 8
        %5873 = vbcast.lane.b32.xlu0 %v5867, %s5872
        %v5874 = vpop.permute.xlu0 %5873
        %s5876 = sor.u32 256, 16
        %5877 = vbcast.lane.b32.xlu0 %v5867, %s5876
        %v5878 = vpop.permute.xlu0 %5877
        %v5879 = vlaneseq
        %v5880 = vshrl.u32 %v5879, 7
        %v5881 = vsub.s32 4, %v5880
        %v5882 = vrot.slane %v5311, %v5881
        %5884 = vbcast.lane.b32.xlu0 %v5882, 256
        %v5885 = vpop.permute.xlu0 %5884
        %s5887 = sor.u32 256, 8
        %5888 = vbcast.lane.b32.xlu0 %v5882, %s5887
        %v5889 = vpop.permute.xlu0 %5888
        %s5891 = sor.u32 256, 16
        %5892 = vbcast.lane.b32.xlu0 %v5882, %s5891
        %v5893 = vpop.permute.xlu0 %5892
        %v5894 = vlaneseq
        %v5895 = vshrl.u32 %v5894, 7
        %v5896 = vsub.s32 5, %v5895
        %v5897 = vrot.slane %v5311, %v5896
        %5899 = vbcast.lane.b32.xlu0 %v5897, 256
        %v5900 = vpop.permute.xlu0 %5899
        %s5902 = sor.u32 256, 8
        %5903 = vbcast.lane.b32.xlu0 %v5897, %s5902
        %v5904 = vpop.permute.xlu0 %5903
        %s5906 = sor.u32 256, 16
        %5907 = vbcast.lane.b32.xlu0 %v5897, %s5906
        %v5908 = vpop.permute.xlu0 %5907
        %v5909 = vlaneseq
        %v5910 = vshrl.u32 %v5909, 7
        %v5911 = vsub.s32 6, %v5910
        %v5912 = vrot.slane %v5311, %v5911
        %5914 = vbcast.lane.b32.xlu0 %v5912, 256
        %v5915 = vpop.permute.xlu0 %5914
        %s5917 = sor.u32 256, 8
        %5918 = vbcast.lane.b32.xlu0 %v5912, %s5917
        %v5919 = vpop.permute.xlu0 %5918
        %s5921 = sor.u32 256, 16
        %5922 = vbcast.lane.b32.xlu0 %v5912, %s5921
        %v5923 = vpop.permute.xlu0 %5922
        %v5924 = vlaneseq
        %v5925 = vshrl.u32 %v5924, 7
        %v5926 = vsub.s32 7, %v5925
        %v5927 = vrot.slane %v5311, %v5926
        %5929 = vbcast.lane.b32.xlu0 %v5927, 256
        %v5930 = vpop.permute.xlu0 %5929
        %s5932 = sor.u32 256, 8
        %5933 = vbcast.lane.b32.xlu0 %v5927, %s5932
        %v5934 = vpop.permute.xlu0 %5933
        %s5936 = sor.u32 256, 16
        %5937 = vbcast.lane.b32.xlu0 %v5927, %s5936
        %v5938 = vpop.permute.xlu0 %5937
        %v5939 = vlaneseq
        %v5940 = vshrl.u32 %v5939, 7
        %v5941 = vsub.s32 0, %v5940
        %v5942 = vrot.slane %v5312, %v5941
        %5944 = vbcast.lane.b32.xlu0 %v5942, 256
        %v5945 = vpop.permute.xlu0 %5944
        %s5947 = sor.u32 256, 8
        %5948 = vbcast.lane.b32.xlu0 %v5942, %s5947
        %v5949 = vpop.permute.xlu0 %5948
        %s5951 = sor.u32 256, 16
        %5952 = vbcast.lane.b32.xlu0 %v5942, %s5951
        %v5953 = vpop.permute.xlu0 %5952
        %v5954 = vlaneseq
        %v5955 = vshrl.u32 %v5954, 7
        %v5956 = vsub.s32 1, %v5955
        %v5957 = vrot.slane %v5312, %v5956
        %5959 = vbcast.lane.b32.xlu0 %v5957, 256
        %v5960 = vpop.permute.xlu0 %5959
        %s5962 = sor.u32 256, 8
        %5963 = vbcast.lane.b32.xlu0 %v5957, %s5962
        %v5964 = vpop.permute.xlu0 %5963
        %s5966 = sor.u32 256, 16
        %5967 = vbcast.lane.b32.xlu0 %v5957, %s5966
        %v5968 = vpop.permute.xlu0 %5967
        %v5969 = vlaneseq
        %v5970 = vshrl.u32 %v5969, 7
        %v5971 = vsub.s32 2, %v5970
        %v5972 = vrot.slane %v5312, %v5971
        %5974 = vbcast.lane.b32.xlu0 %v5972, 256
        %v5975 = vpop.permute.xlu0 %5974
        %s5977 = sor.u32 256, 8
        %5978 = vbcast.lane.b32.xlu0 %v5972, %s5977
        %v5979 = vpop.permute.xlu0 %5978
        %s5981 = sor.u32 256, 16
        %5982 = vbcast.lane.b32.xlu0 %v5972, %s5981
        %v5983 = vpop.permute.xlu0 %5982
        %v5984 = vlaneseq
        %v5985 = vshrl.u32 %v5984, 7
        %v5986 = vsub.s32 3, %v5985
        %v5987 = vrot.slane %v5312, %v5986
        %5989 = vbcast.lane.b32.xlu0 %v5987, 256
        %v5990 = vpop.permute.xlu0 %5989
        %s5992 = sor.u32 256, 8
        %5993 = vbcast.lane.b32.xlu0 %v5987, %s5992
        %v5994 = vpop.permute.xlu0 %5993
        %s5996 = sor.u32 256, 16
        %5997 = vbcast.lane.b32.xlu0 %v5987, %s5996
        %v5998 = vpop.permute.xlu0 %5997
        %v5999 = vlaneseq
        %v6000 = vshrl.u32 %v5999, 7
        %v6001 = vsub.s32 4, %v6000
        %v6002 = vrot.slane %v5312, %v6001
        %6004 = vbcast.lane.b32.xlu0 %v6002, 256
        %v6005 = vpop.permute.xlu0 %6004
        %s6007 = sor.u32 256, 8
        %6008 = vbcast.lane.b32.xlu0 %v6002, %s6007
        %v6009 = vpop.permute.xlu0 %6008
        %s6011 = sor.u32 256, 16
        %6012 = vbcast.lane.b32.xlu0 %v6002, %s6011
        %v6013 = vpop.permute.xlu0 %6012
        %v6014 = vlaneseq
        %v6015 = vshrl.u32 %v6014, 7
        %v6016 = vsub.s32 5, %v6015
        %v6017 = vrot.slane %v5312, %v6016
        %6019 = vbcast.lane.b32.xlu0 %v6017, 256
        %v6020 = vpop.permute.xlu0 %6019
        %s6022 = sor.u32 256, 8
        %6023 = vbcast.lane.b32.xlu0 %v6017, %s6022
        %v6024 = vpop.permute.xlu0 %6023
        %s6026 = sor.u32 256, 16
        %6027 = vbcast.lane.b32.xlu0 %v6017, %s6026
        %v6028 = vpop.permute.xlu0 %6027
        %v6029 = vlaneseq
        %v6030 = vshrl.u32 %v6029, 7
        %v6031 = vsub.s32 6, %v6030
        %v6032 = vrot.slane %v5312, %v6031
        %6034 = vbcast.lane.b32.xlu0 %v6032, 256
        %v6035 = vpop.permute.xlu0 %6034
        %s6037 = sor.u32 256, 8
        %6038 = vbcast.lane.b32.xlu0 %v6032, %s6037
        %v6039 = vpop.permute.xlu0 %6038
        %s6041 = sor.u32 256, 16
        %6042 = vbcast.lane.b32.xlu0 %v6032, %s6041
        %v6043 = vpop.permute.xlu0 %6042
        %v6044 = vlaneseq
        %v6045 = vshrl.u32 %v6044, 7
        %v6046 = vsub.s32 7, %v6045
        %v6047 = vrot.slane %v5312, %v6046
        %6049 = vbcast.lane.b32.xlu0 %v6047, 256
        %v6050 = vpop.permute.xlu0 %6049
        %s6052 = sor.u32 256, 8
        %6053 = vbcast.lane.b32.xlu0 %v6047, %s6052
        %v6054 = vpop.permute.xlu0 %6053
        %s6056 = sor.u32 256, 16
        %6057 = vbcast.lane.b32.xlu0 %v6047, %s6056
        %v6058 = vpop.permute.xlu0 %6057
        %v6059 = vlaneseq
        %v6060 = vshrl.u32 %v6059, 7
        %v6061 = vsub.s32 0, %v6060
        %v6062 = vrot.slane %v5313, %v6061
        %6064 = vbcast.lane.b32.xlu0 %v6062, 256
        %v6065 = vpop.permute.xlu0 %6064
        %s6067 = sor.u32 256, 8
        %6068 = vbcast.lane.b32.xlu0 %v6062, %s6067
        %v6069 = vpop.permute.xlu0 %6068
        %s6071 = sor.u32 256, 16
        %6072 = vbcast.lane.b32.xlu0 %v6062, %s6071
        %v6073 = vpop.permute.xlu0 %6072
        %v6074 = vlaneseq
        %v6075 = vshrl.u32 %v6074, 7
        %v6076 = vsub.s32 1, %v6075
        %v6077 = vrot.slane %v5313, %v6076
        %6079 = vbcast.lane.b32.xlu0 %v6077, 256
        %v6080 = vpop.permute.xlu0 %6079
        %s6082 = sor.u32 256, 8
        %6083 = vbcast.lane.b32.xlu0 %v6077, %s6082
        %v6084 = vpop.permute.xlu0 %6083
        %s6086 = sor.u32 256, 16
        %6087 = vbcast.lane.b32.xlu0 %v6077, %s6086
        %v6088 = vpop.permute.xlu0 %6087
        %v6089 = vlaneseq
        %v6090 = vshrl.u32 %v6089, 7
        %v6091 = vsub.s32 2, %v6090
        %v6092 = vrot.slane %v5313, %v6091
        %6094 = vbcast.lane.b32.xlu0 %v6092, 256
        %v6095 = vpop.permute.xlu0 %6094
        %s6097 = sor.u32 256, 8
        %6098 = vbcast.lane.b32.xlu0 %v6092, %s6097
        %v6099 = vpop.permute.xlu0 %6098
        %s6101 = sor.u32 256, 16
        %6102 = vbcast.lane.b32.xlu0 %v6092, %s6101
        %v6103 = vpop.permute.xlu0 %6102
        %v6104 = vlaneseq
        %v6105 = vshrl.u32 %v6104, 7
        %v6106 = vsub.s32 3, %v6105
        %v6107 = vrot.slane %v5313, %v6106
        %6109 = vbcast.lane.b32.xlu0 %v6107, 256
        %v6110 = vpop.permute.xlu0 %6109
        %s6112 = sor.u32 256, 8
        %6113 = vbcast.lane.b32.xlu0 %v6107, %s6112
        %v6114 = vpop.permute.xlu0 %6113
        %s6116 = sor.u32 256, 16
        %6117 = vbcast.lane.b32.xlu0 %v6107, %s6116
        %v6118 = vpop.permute.xlu0 %6117
        %v6119 = vlaneseq
        %v6120 = vshrl.u32 %v6119, 7
        %v6121 = vsub.s32 4, %v6120
        %v6122 = vrot.slane %v5313, %v6121
        %6124 = vbcast.lane.b32.xlu0 %v6122, 256
        %v6125 = vpop.permute.xlu0 %6124
        %s6127 = sor.u32 256, 8
        %6128 = vbcast.lane.b32.xlu0 %v6122, %s6127
        %v6129 = vpop.permute.xlu0 %6128
        %s6131 = sor.u32 256, 16
        %6132 = vbcast.lane.b32.xlu0 %v6122, %s6131
        %v6133 = vpop.permute.xlu0 %6132
        %v6134 = vlaneseq
        %v6135 = vshrl.u32 %v6134, 7
        %v6136 = vsub.s32 5, %v6135
        %v6137 = vrot.slane %v5313, %v6136
        %6139 = vbcast.lane.b32.xlu0 %v6137, 256
        %v6140 = vpop.permute.xlu0 %6139
        %s6142 = sor.u32 256, 8
        %6143 = vbcast.lane.b32.xlu0 %v6137, %s6142
        %v6144 = vpop.permute.xlu0 %6143
        %s6146 = sor.u32 256, 16
        %6147 = vbcast.lane.b32.xlu0 %v6137, %s6146
        %v6148 = vpop.permute.xlu0 %6147
        %v6149 = vlaneseq
        %v6150 = vshrl.u32 %v6149, 7
        %v6151 = vsub.s32 6, %v6150
        %v6152 = vrot.slane %v5313, %v6151
        %6154 = vbcast.lane.b32.xlu0 %v6152, 256
        %v6155 = vpop.permute.xlu0 %6154
        %s6157 = sor.u32 256, 8
        %6158 = vbcast.lane.b32.xlu0 %v6152, %s6157
        %v6159 = vpop.permute.xlu0 %6158
        %s6161 = sor.u32 256, 16
        %6162 = vbcast.lane.b32.xlu0 %v6152, %s6161
        %v6163 = vpop.permute.xlu0 %6162
        %v6164 = vlaneseq
        %v6165 = vshrl.u32 %v6164, 7
        %v6166 = vsub.s32 7, %v6165
        %v6167 = vrot.slane %v5313, %v6166
        %6169 = vbcast.lane.b32.xlu0 %v6167, 256
        %v6170 = vpop.permute.xlu0 %6169
        %s6172 = sor.u32 256, 8
        %6173 = vbcast.lane.b32.xlu0 %v6167, %s6172
        %v6174 = vpop.permute.xlu0 %6173
        %s6176 = sor.u32 256, 16
        %6177 = vbcast.lane.b32.xlu0 %v6167, %s6176
        %v6178 = vpop.permute.xlu0 %6177
        %v6179 = vlaneseq
        %v6180 = vshrl.u32 %v6179, 7
        %v6181 = vsub.s32 0, %v6180
        %v6182 = vrot.slane %v5314, %v6181
        %6184 = vbcast.lane.b32.xlu0 %v6182, 256
        %v6185 = vpop.permute.xlu0 %6184
        %s6187 = sor.u32 256, 8
        %6188 = vbcast.lane.b32.xlu0 %v6182, %s6187
        %v6189 = vpop.permute.xlu0 %6188
        %s6191 = sor.u32 256, 16
        %6192 = vbcast.lane.b32.xlu0 %v6182, %s6191
        %v6193 = vpop.permute.xlu0 %6192
        %v6194 = vlaneseq
        %v6195 = vshrl.u32 %v6194, 7
        %v6196 = vsub.s32 1, %v6195
        %v6197 = vrot.slane %v5314, %v6196
        %6199 = vbcast.lane.b32.xlu0 %v6197, 256
        %v6200 = vpop.permute.xlu0 %6199
        %s6202 = sor.u32 256, 8
        %6203 = vbcast.lane.b32.xlu0 %v6197, %s6202
        %v6204 = vpop.permute.xlu0 %6203
        %s6206 = sor.u32 256, 16
        %6207 = vbcast.lane.b32.xlu0 %v6197, %s6206
        %v6208 = vpop.permute.xlu0 %6207
        %v6209 = vlaneseq
        %v6210 = vshrl.u32 %v6209, 7
        %v6211 = vsub.s32 2, %v6210
        %v6212 = vrot.slane %v5314, %v6211
        %6214 = vbcast.lane.b32.xlu0 %v6212, 256
        %v6215 = vpop.permute.xlu0 %6214
        %s6217 = sor.u32 256, 8
        %6218 = vbcast.lane.b32.xlu0 %v6212, %s6217
        %v6219 = vpop.permute.xlu0 %6218
        %s6221 = sor.u32 256, 16
        %6222 = vbcast.lane.b32.xlu0 %v6212, %s6221
        %v6223 = vpop.permute.xlu0 %6222
        %v6224 = vlaneseq
        %v6225 = vshrl.u32 %v6224, 7
        %v6226 = vsub.s32 3, %v6225
        %v6227 = vrot.slane %v5314, %v6226
        %6229 = vbcast.lane.b32.xlu0 %v6227, 256
        %v6230 = vpop.permute.xlu0 %6229
        %s6232 = sor.u32 256, 8
        %6233 = vbcast.lane.b32.xlu0 %v6227, %s6232
        %v6234 = vpop.permute.xlu0 %6233
        %s6236 = sor.u32 256, 16
        %6237 = vbcast.lane.b32.xlu0 %v6227, %s6236
        %v6238 = vpop.permute.xlu0 %6237
        %v6239 = vlaneseq
        %v6240 = vshrl.u32 %v6239, 7
        %v6241 = vsub.s32 4, %v6240
        %v6242 = vrot.slane %v5314, %v6241
        %6244 = vbcast.lane.b32.xlu0 %v6242, 256
        %v6245 = vpop.permute.xlu0 %6244
        %s6247 = sor.u32 256, 8
        %6248 = vbcast.lane.b32.xlu0 %v6242, %s6247
        %v6249 = vpop.permute.xlu0 %6248
        %s6251 = sor.u32 256, 16
        %6252 = vbcast.lane.b32.xlu0 %v6242, %s6251
        %v6253 = vpop.permute.xlu0 %6252
        %v6254 = vlaneseq
        %v6255 = vshrl.u32 %v6254, 7
        %v6256 = vsub.s32 5, %v6255
        %v6257 = vrot.slane %v5314, %v6256
        %6259 = vbcast.lane.b32.xlu0 %v6257, 256
        %v6260 = vpop.permute.xlu0 %6259
        %s6262 = sor.u32 256, 8
        %6263 = vbcast.lane.b32.xlu0 %v6257, %s6262
        %v6264 = vpop.permute.xlu0 %6263
        %s6266 = sor.u32 256, 16
        %6267 = vbcast.lane.b32.xlu0 %v6257, %s6266
        %v6268 = vpop.permute.xlu0 %6267
        %v6269 = vlaneseq
        %v6270 = vshrl.u32 %v6269, 7
        %v6271 = vsub.s32 6, %v6270
        %v6272 = vrot.slane %v5314, %v6271
        %6274 = vbcast.lane.b32.xlu0 %v6272, 256
        %v6275 = vpop.permute.xlu0 %6274
        %s6277 = sor.u32 256, 8
        %6278 = vbcast.lane.b32.xlu0 %v6272, %s6277
        %v6279 = vpop.permute.xlu0 %6278
        %s6281 = sor.u32 256, 16
        %6282 = vbcast.lane.b32.xlu0 %v6272, %s6281
        %v6283 = vpop.permute.xlu0 %6282
        %v6284 = vlaneseq
        %v6285 = vshrl.u32 %v6284, 7
        %v6286 = vsub.s32 7, %v6285
        %v6287 = vrot.slane %v5314, %v6286
        %6289 = vbcast.lane.b32.xlu0 %v6287, 256
        %v6290 = vpop.permute.xlu0 %6289
        %s6292 = sor.u32 256, 8
        %6293 = vbcast.lane.b32.xlu0 %v6287, %s6292
        %v6294 = vpop.permute.xlu0 %6293
        %s6296 = sor.u32 256, 16
        %6297 = vbcast.lane.b32.xlu0 %v6287, %s6296
        %v6298 = vpop.permute.xlu0 %6297
        %v6299 = vmul.f32 %v5345, %v4152
        %v6300 = vmul.f32 %v5349, %v4157
        %v6301 = vmul.f32 %v5353, %v4162
        %v6302 = vmul.f32 %v5360, %v4167
        %v6303 = vmul.f32 %v5364, %v4172
        %v6304 = vmul.f32 %v5368, %v4177
        %v6305 = vmul.f32 %v5375, %v4182
        %v6306 = vmul.f32 %v5379, %v4187
        %v6307 = vmul.f32 %v5383, %v4192
        %v6308 = vmul.f32 %v5390, %v4197
        %v6309 = vmul.f32 %v5394, %v4202
        %v6310 = vmul.f32 %v5398, %v4207
        %v6311 = vmul.f32 %v5405, %v4212
        %v6312 = vmul.f32 %v5409, %v4217
        %v6313 = vmul.f32 %v5413, %v4222
        %v6314 = vmul.f32 %v5420, %v4227
        %v6315 = vmul.f32 %v5424, %v4232
        %v6316 = vmul.f32 %v5428, %v4237
        %v6317 = vmul.f32 %v5435, %v4242
        %v6318 = vmul.f32 %v5439, %v4247
        %v6319 = vmul.f32 %v5443, %v4252
        %v6320 = vmul.f32 %v5450, %v4257
        %v6321 = vmul.f32 %v5454, %v4262
        %v6322 = vmul.f32 %v5458, %v4267
        %v6323 = vmul.f32 %v5465, %v4272
        %v6324 = vmul.f32 %v5469, %v4277
        %v6325 = vmul.f32 %v5473, %v4282
        %v6326 = vmul.f32 %v5480, %v4287
        %v6327 = vmul.f32 %v5484, %v4292
        %v6328 = vmul.f32 %v5488, %v4297
        %v6329 = vmul.f32 %v5495, %v4302
        %v6330 = vmul.f32 %v5499, %v4307
        %v6331 = vmul.f32 %v5503, %v4312
        %v6332 = vmul.f32 %v5510, %v4317
        %v6333 = vmul.f32 %v5514, %v4322
        %v6334 = vmul.f32 %v5518, %v4327
        %v6335 = vmul.f32 %v5525, %v4332
        %v6336 = vmul.f32 %v5529, %v4337
        %v6337 = vmul.f32 %v5533, %v4342
        %v6338 = vmul.f32 %v5540, %v4347
        %v6339 = vmul.f32 %v5544, %v4352
        %v6340 = vmul.f32 %v5548, %v4357
        %v6341 = vmul.f32 %v5555, %v4362
        %v6342 = vmul.f32 %v5559, %v4367
        %v6343 = vmul.f32 %v5563, %v4372
        %v6344 = vmul.f32 %v5570, %v4377
        %v6345 = vmul.f32 %v5574, %v4382
        %v6346 = vmul.f32 %v5578, %v4387
        %v6347 = vmul.f32 %v5585, %v4392
        %v6348 = vmul.f32 %v5589, %v4397
        %v6349 = vmul.f32 %v5593, %v4402
        %v6350 = vmul.f32 %v5600, %v4407
        %v6351 = vmul.f32 %v5604, %v4412
        %v6352 = vmul.f32 %v5608, %v4417
        %v6353 = vmul.f32 %v5615, %v4422
        %v6354 = vmul.f32 %v5619, %v4427
        %v6355 = vmul.f32 %v5623, %v4432
        %v6356 = vmul.f32 %v5630, %v4437
        %v6357 = vmul.f32 %v5634, %v4442
        %v6358 = vmul.f32 %v5638, %v4447
        %v6359 = vmul.f32 %v5645, %v4452
        %v6360 = vmul.f32 %v5649, %v4457
        %v6361 = vmul.f32 %v5653, %v4462
        %v6362 = vmul.f32 %v5660, %v4467
        %v6363 = vmul.f32 %v5664, %v4472
        %v6364 = vmul.f32 %v5668, %v4477
        %v6365 = vmul.f32 %v5675, %v4482
        %v6366 = vmul.f32 %v5679, %v4487
        %v6367 = vmul.f32 %v5683, %v4492
        %v6368 = vmul.f32 %v5690, %v4497
        %v6369 = vmul.f32 %v5694, %v4502
        %v6370 = vmul.f32 %v5698, %v4507
        %v6371 = vmul.f32 %v5705, %v4512
        %v6372 = vmul.f32 %v5709, %v4517
        %v6373 = vmul.f32 %v5713, %v4522
        %v6374 = vmul.f32 %v5720, %v4527
        %v6375 = vmul.f32 %v5724, %v4532
        %v6376 = vmul.f32 %v5728, %v4537
        %v6377 = vmul.f32 %v5735, %v4542
        %v6378 = vmul.f32 %v5739, %v4547
        %v6379 = vmul.f32 %v5743, %v4552
        %v6380 = vmul.f32 %v5750, %v4557
        %v6381 = vmul.f32 %v5754, %v4562
        %v6382 = vmul.f32 %v5758, %v4567
        %v6383 = vmul.f32 %v5765, %v4572
        %v6384 = vmul.f32 %v5769, %v4577
        %v6385 = vmul.f32 %v5773, %v4582
        %v6386 = vmul.f32 %v5780, %v4587
        %v6387 = vmul.f32 %v5784, %v4592
        %v6388 = vmul.f32 %v5788, %v4597
        %v6389 = vmul.f32 %v5795, %v4602
        %v6390 = vmul.f32 %v5799, %v4607
        %v6391 = vmul.f32 %v5803, %v4612
        %v6392 = vmul.f32 %v5810, %v4617
        %v6393 = vmul.f32 %v5814, %v4622
        %v6394 = vmul.f32 %v5818, %v4627
        %v6395 = vmul.f32 %v5825, %v4632
        %v6396 = vmul.f32 %v5829, %v4637
        %v6397 = vmul.f32 %v5833, %v4642
        %v6398 = vmul.f32 %v5840, %v4647
        %v6399 = vmul.f32 %v5844, %v4652
        %v6400 = vmul.f32 %v5848, %v4657
        %v6401 = vmul.f32 %v5855, %v4662
        %v6402 = vmul.f32 %v5859, %v4667
        %v6403 = vmul.f32 %v5863, %v4672
        %v6404 = vmul.f32 %v5870, %v4677
        %v6405 = vmul.f32 %v5874, %v4682
        %v6406 = vmul.f32 %v5878, %v4687
        %v6407 = vmul.f32 %v5885, %v4692
        %v6408 = vmul.f32 %v5889, %v4697
        %v6409 = vmul.f32 %v5893, %v4702
        %v6410 = vmul.f32 %v5900, %v4707
        %v6411 = vmul.f32 %v5904, %v4712
        %v6412 = vmul.f32 %v5908, %v4717
        %v6413 = vmul.f32 %v5915, %v4722
        %v6414 = vmul.f32 %v5919, %v4727
        %v6415 = vmul.f32 %v5923, %v4732
        %v6416 = vmul.f32 %v5930, %v4737
        %v6417 = vmul.f32 %v5934, %v4742
        %v6418 = vmul.f32 %v5938, %v4747
        %v6419 = vmul.f32 %v5945, %v4752
        %v6420 = vmul.f32 %v5949, %v4757
        %v6421 = vmul.f32 %v5953, %v4762
        %v6422 = vmul.f32 %v5960, %v4767
        %v6423 = vmul.f32 %v5964, %v4772
        %v6424 = vmul.f32 %v5968, %v4777
        %v6425 = vmul.f32 %v5975, %v4782
        %v6426 = vmul.f32 %v5979, %v4787
        %v6427 = vmul.f32 %v5983, %v4792
        %v6428 = vmul.f32 %v5990, %v4797
        %v6429 = vmul.f32 %v5994, %v4802
        %v6430 = vmul.f32 %v5998, %v4807
        %v6431 = vmul.f32 %v6005, %v4812
        %v6432 = vmul.f32 %v6009, %v4817
        %v6433 = vmul.f32 %v6013, %v4822
        %v6434 = vmul.f32 %v6020, %v4827
        %v6435 = vmul.f32 %v6024, %v4832
        %v6436 = vmul.f32 %v6028, %v4837
        %v6437 = vmul.f32 %v6035, %v4842
        %v6438 = vmul.f32 %v6039, %v4847
        %v6439 = vmul.f32 %v6043, %v4852
        %v6440 = vmul.f32 %v6050, %v4857
        %v6441 = vmul.f32 %v6054, %v4862
        %v6442 = vmul.f32 %v6058, %v4867
        %v6443 = vmul.f32 %v6065, %v4872
        %v6444 = vmul.f32 %v6069, %v4877
        %v6445 = vmul.f32 %v6073, %v4882
        %v6446 = vmul.f32 %v6080, %v4887
        %v6447 = vmul.f32 %v6084, %v4892
        %v6448 = vmul.f32 %v6088, %v4897
        %v6449 = vmul.f32 %v6095, %v4902
        %v6450 = vmul.f32 %v6099, %v4907
        %v6451 = vmul.f32 %v6103, %v4912
        %v6452 = vmul.f32 %v6110, %v4917
        %v6453 = vmul.f32 %v6114, %v4922
        %v6454 = vmul.f32 %v6118, %v4927
        %v6455 = vmul.f32 %v6125, %v4932
        %v6456 = vmul.f32 %v6129, %v4937
        %v6457 = vmul.f32 %v6133, %v4942
        %v6458 = vmul.f32 %v6140, %v4947
        %v6459 = vmul.f32 %v6144, %v4952
        %v6460 = vmul.f32 %v6148, %v4957
        %v6461 = vmul.f32 %v6155, %v4962
        %v6462 = vmul.f32 %v6159, %v4967
        %v6463 = vmul.f32 %v6163, %v4972
        %v6464 = vmul.f32 %v6170, %v4977
        %v6465 = vmul.f32 %v6174, %v4982
        %v6466 = vmul.f32 %v6178, %v4987
        %v6467 = vmul.f32 %v6185, %v4992
        %v6468 = vmul.f32 %v6189, %v4997
        %v6469 = vmul.f32 %v6193, %v5002
        %v6470 = vmul.f32 %v6200, %v5007
        %v6471 = vmul.f32 %v6204, %v5012
        %v6472 = vmul.f32 %v6208, %v5017
        %v6473 = vmul.f32 %v6215, %v5022
        %v6474 = vmul.f32 %v6219, %v5027
        %v6475 = vmul.f32 %v6223, %v5032
        %v6476 = vmul.f32 %v6230, %v5037
        %v6477 = vmul.f32 %v6234, %v5042
        %v6478 = vmul.f32 %v6238, %v5047
        %v6479 = vmul.f32 %v6245, %v5052
        %v6480 = vmul.f32 %v6249, %v5057
        %v6481 = vmul.f32 %v6253, %v5062
        %v6482 = vmul.f32 %v6260, %v5067
        %v6483 = vmul.f32 %v6264, %v5072
        %v6484 = vmul.f32 %v6268, %v5077
        %v6485 = vmul.f32 %v6275, %v5082
        %v6486 = vmul.f32 %v6279, %v5087
        %v6487 = vmul.f32 %v6283, %v5092
        %v6488 = vmul.f32 %v6290, %v5097
        %v6489 = vmul.f32 %v6294, %v5102
        %v6490 = vmul.f32 %v6298, %v5107
        %v6491 = vsel %vm3508, %v6299, 0.0
        %v6492 = vsel %vm3508, %v6300, 0.0
        %v6493 = vadd.f32 %v6491, %v6492
        %v6494 = vsel %vm3508, %v6301, 0.0
        %v6495 = vadd.f32 %v6493, %v6494
        %v6496 = vrot.slane %v6495, 4
        %v6497 = vadd.f32 %v6495, %v6496
        %v6498 = vrot.slane %v6497, 2
        %v6499 = vadd.f32 %v6497, %v6498
        %v6500 = vrot.slane %v6499, 1
        %v6501 = vadd.f32 %v6499, %v6500
        %v6502 = vsel %vm3508, %v6302, 0.0
        %v6503 = vsel %vm3508, %v6303, 0.0
        %v6504 = vadd.f32 %v6502, %v6503
        %v6505 = vsel %vm3508, %v6304, 0.0
        %v6506 = vadd.f32 %v6504, %v6505
        %v6507 = vrot.slane %v6506, 4
        %v6508 = vadd.f32 %v6506, %v6507
        %v6509 = vrot.slane %v6508, 2
        %v6510 = vadd.f32 %v6508, %v6509
        %v6511 = vrot.slane %v6510, 1
        %v6512 = vadd.f32 %v6510, %v6511
        %v6513 = vsel %vm3508, %v6305, 0.0
        %v6514 = vsel %vm3508, %v6306, 0.0
        %v6515 = vadd.f32 %v6513, %v6514
        %v6516 = vsel %vm3508, %v6307, 0.0
        %v6517 = vadd.f32 %v6515, %v6516
        %v6518 = vrot.slane %v6517, 4
        %v6519 = vadd.f32 %v6517, %v6518
        %v6520 = vrot.slane %v6519, 2
        %v6521 = vadd.f32 %v6519, %v6520
        %v6522 = vrot.slane %v6521, 1
        %v6523 = vadd.f32 %v6521, %v6522
        %v6524 = vsel %vm3508, %v6308, 0.0
        %v6525 = vsel %vm3508, %v6309, 0.0
        %v6526 = vadd.f32 %v6524, %v6525
        %v6527 = vsel %vm3508, %v6310, 0.0
        %v6528 = vadd.f32 %v6526, %v6527
        %v6529 = vrot.slane %v6528, 4
        %v6530 = vadd.f32 %v6528, %v6529
        %v6531 = vrot.slane %v6530, 2
        %v6532 = vadd.f32 %v6530, %v6531
        %v6533 = vrot.slane %v6532, 1
        %v6534 = vadd.f32 %v6532, %v6533
        %v6535 = vsel %vm3508, %v6311, 0.0
        %v6536 = vsel %vm3508, %v6312, 0.0
        %v6537 = vadd.f32 %v6535, %v6536
        %v6538 = vsel %vm3508, %v6313, 0.0
        %v6539 = vadd.f32 %v6537, %v6538
        %v6540 = vrot.slane %v6539, 4
        %v6541 = vadd.f32 %v6539, %v6540
        %v6542 = vrot.slane %v6541, 2
        %v6543 = vadd.f32 %v6541, %v6542
        %v6544 = vrot.slane %v6543, 1
        %v6545 = vadd.f32 %v6543, %v6544
        %v6546 = vsel %vm3508, %v6314, 0.0
        %v6547 = vsel %vm3508, %v6315, 0.0
        %v6548 = vadd.f32 %v6546, %v6547
        %v6549 = vsel %vm3508, %v6316, 0.0
        %v6550 = vadd.f32 %v6548, %v6549
        %v6551 = vrot.slane %v6550, 4
        %v6552 = vadd.f32 %v6550, %v6551
        %v6553 = vrot.slane %v6552, 2
        %v6554 = vadd.f32 %v6552, %v6553
        %v6555 = vrot.slane %v6554, 1
        %v6556 = vadd.f32 %v6554, %v6555
        %v6557 = vsel %vm3508, %v6317, 0.0
        %v6558 = vsel %vm3508, %v6318, 0.0
        %v6559 = vadd.f32 %v6557, %v6558
        %v6560 = vsel %vm3508, %v6319, 0.0
        %v6561 = vadd.f32 %v6559, %v6560
        %v6562 = vrot.slane %v6561, 4
        %v6563 = vadd.f32 %v6561, %v6562
        %v6564 = vrot.slane %v6563, 2
        %v6565 = vadd.f32 %v6563, %v6564
        %v6566 = vrot.slane %v6565, 1
        %v6567 = vadd.f32 %v6565, %v6566
        %v6568 = vsel %vm3508, %v6320, 0.0
        %v6569 = vsel %vm3508, %v6321, 0.0
        %v6570 = vadd.f32 %v6568, %v6569
        %v6571 = vsel %vm3508, %v6322, 0.0
        %v6572 = vadd.f32 %v6570, %v6571
        %v6573 = vrot.slane %v6572, 4
        %v6574 = vadd.f32 %v6572, %v6573
        %v6575 = vrot.slane %v6574, 2
        %v6576 = vadd.f32 %v6574, %v6575
        %v6577 = vrot.slane %v6576, 1
        %v6578 = vadd.f32 %v6576, %v6577
        %v6579 = vsel %vm3508, %v6323, 0.0
        %v6580 = vsel %vm3508, %v6324, 0.0
        %v6581 = vadd.f32 %v6579, %v6580
        %v6582 = vsel %vm3508, %v6325, 0.0
        %v6583 = vadd.f32 %v6581, %v6582
        %v6584 = vrot.slane %v6583, 4
        %v6585 = vadd.f32 %v6583, %v6584
        %v6586 = vrot.slane %v6585, 2
        %v6587 = vadd.f32 %v6585, %v6586
        %v6588 = vrot.slane %v6587, 1
        %v6589 = vadd.f32 %v6587, %v6588
        %v6590 = vsel %vm3508, %v6326, 0.0
        %v6591 = vsel %vm3508, %v6327, 0.0
        %v6592 = vadd.f32 %v6590, %v6591
        %v6593 = vsel %vm3508, %v6328, 0.0
        %v6594 = vadd.f32 %v6592, %v6593
        %v6595 = vrot.slane %v6594, 4
        %v6596 = vadd.f32 %v6594, %v6595
        %v6597 = vrot.slane %v6596, 2
        %v6598 = vadd.f32 %v6596, %v6597
        %v6599 = vrot.slane %v6598, 1
        %v6600 = vadd.f32 %v6598, %v6599
        %v6601 = vsel %vm3508, %v6329, 0.0
        %v6602 = vsel %vm3508, %v6330, 0.0
        %v6603 = vadd.f32 %v6601, %v6602
        %v6604 = vsel %vm3508, %v6331, 0.0
        %v6605 = vadd.f32 %v6603, %v6604
        %v6606 = vrot.slane %v6605, 4
        %v6607 = vadd.f32 %v6605, %v6606
        %v6608 = vrot.slane %v6607, 2
        %v6609 = vadd.f32 %v6607, %v6608
        %v6610 = vrot.slane %v6609, 1
        %v6611 = vadd.f32 %v6609, %v6610
        %v6612 = vsel %vm3508, %v6332, 0.0
        %v6613 = vsel %vm3508, %v6333, 0.0
        %v6614 = vadd.f32 %v6612, %v6613
        %v6615 = vsel %vm3508, %v6334, 0.0
        %v6616 = vadd.f32 %v6614, %v6615
        %v6617 = vrot.slane %v6616, 4
        %v6618 = vadd.f32 %v6616, %v6617
        %v6619 = vrot.slane %v6618, 2
        %v6620 = vadd.f32 %v6618, %v6619
        %v6621 = vrot.slane %v6620, 1
        %v6622 = vadd.f32 %v6620, %v6621
        %v6623 = vsel %vm3508, %v6335, 0.0
        %v6624 = vsel %vm3508, %v6336, 0.0
        %v6625 = vadd.f32 %v6623, %v6624
        %v6626 = vsel %vm3508, %v6337, 0.0
        %v6627 = vadd.f32 %v6625, %v6626
        %v6628 = vrot.slane %v6627, 4
        %v6629 = vadd.f32 %v6627, %v6628
        %v6630 = vrot.slane %v6629, 2
        %v6631 = vadd.f32 %v6629, %v6630
        %v6632 = vrot.slane %v6631, 1
        %v6633 = vadd.f32 %v6631, %v6632
        %v6634 = vsel %vm3508, %v6338, 0.0
        %v6635 = vsel %vm3508, %v6339, 0.0
        %v6636 = vadd.f32 %v6634, %v6635
        %v6637 = vsel %vm3508, %v6340, 0.0
        %v6638 = vadd.f32 %v6636, %v6637
        %v6639 = vrot.slane %v6638, 4
        %v6640 = vadd.f32 %v6638, %v6639
        %v6641 = vrot.slane %v6640, 2
        %v6642 = vadd.f32 %v6640, %v6641
        %v6643 = vrot.slane %v6642, 1
        %v6644 = vadd.f32 %v6642, %v6643
        %v6645 = vsel %vm3508, %v6341, 0.0
        %v6646 = vsel %vm3508, %v6342, 0.0
        %v6647 = vadd.f32 %v6645, %v6646
        %v6648 = vsel %vm3508, %v6343, 0.0
        %v6649 = vadd.f32 %v6647, %v6648
        %v6650 = vrot.slane %v6649, 4
        %v6651 = vadd.f32 %v6649, %v6650
        %v6652 = vrot.slane %v6651, 2
        %v6653 = vadd.f32 %v6651, %v6652
        %v6654 = vrot.slane %v6653, 1
        %v6655 = vadd.f32 %v6653, %v6654
        %v6656 = vsel %vm3508, %v6344, 0.0
        %v6657 = vsel %vm3508, %v6345, 0.0
        %v6658 = vadd.f32 %v6656, %v6657
        %v6659 = vsel %vm3508, %v6346, 0.0
        %v6660 = vadd.f32 %v6658, %v6659
        %v6661 = vrot.slane %v6660, 4
        %v6662 = vadd.f32 %v6660, %v6661
        %v6663 = vrot.slane %v6662, 2
        %v6664 = vadd.f32 %v6662, %v6663
        %v6665 = vrot.slane %v6664, 1
        %v6666 = vadd.f32 %v6664, %v6665
        %v6667 = vsel %vm3508, %v6347, 0.0
        %v6668 = vsel %vm3508, %v6348, 0.0
        %v6669 = vadd.f32 %v6667, %v6668
        %v6670 = vsel %vm3508, %v6349, 0.0
        %v6671 = vadd.f32 %v6669, %v6670
        %v6672 = vrot.slane %v6671, 4
        %v6673 = vadd.f32 %v6671, %v6672
        %v6674 = vrot.slane %v6673, 2
        %v6675 = vadd.f32 %v6673, %v6674
        %v6676 = vrot.slane %v6675, 1
        %v6677 = vadd.f32 %v6675, %v6676
        %v6678 = vsel %vm3508, %v6350, 0.0
        %v6679 = vsel %vm3508, %v6351, 0.0
        %v6680 = vadd.f32 %v6678, %v6679
        %v6681 = vsel %vm3508, %v6352, 0.0
        %v6682 = vadd.f32 %v6680, %v6681
        %v6683 = vrot.slane %v6682, 4
        %v6684 = vadd.f32 %v6682, %v6683
        %v6685 = vrot.slane %v6684, 2
        %v6686 = vadd.f32 %v6684, %v6685
        %v6687 = vrot.slane %v6686, 1
        %v6688 = vadd.f32 %v6686, %v6687
        %v6689 = vsel %vm3508, %v6353, 0.0
        %v6690 = vsel %vm3508, %v6354, 0.0
        %v6691 = vadd.f32 %v6689, %v6690
        %v6692 = vsel %vm3508, %v6355, 0.0
        %v6693 = vadd.f32 %v6691, %v6692
        %v6694 = vrot.slane %v6693, 4
        %v6695 = vadd.f32 %v6693, %v6694
        %v6696 = vrot.slane %v6695, 2
        %v6697 = vadd.f32 %v6695, %v6696
        %v6698 = vrot.slane %v6697, 1
        %v6699 = vadd.f32 %v6697, %v6698
        %v6700 = vsel %vm3508, %v6356, 0.0
        %v6701 = vsel %vm3508, %v6357, 0.0
        %v6702 = vadd.f32 %v6700, %v6701
        %v6703 = vsel %vm3508, %v6358, 0.0
        %v6704 = vadd.f32 %v6702, %v6703
        %v6705 = vrot.slane %v6704, 4
        %v6706 = vadd.f32 %v6704, %v6705
        %v6707 = vrot.slane %v6706, 2
        %v6708 = vadd.f32 %v6706, %v6707
        %v6709 = vrot.slane %v6708, 1
        %v6710 = vadd.f32 %v6708, %v6709
        %v6711 = vsel %vm3508, %v6359, 0.0
        %v6712 = vsel %vm3508, %v6360, 0.0
        %v6713 = vadd.f32 %v6711, %v6712
        %v6714 = vsel %vm3508, %v6361, 0.0
        %v6715 = vadd.f32 %v6713, %v6714
        %v6716 = vrot.slane %v6715, 4
        %v6717 = vadd.f32 %v6715, %v6716
        %v6718 = vrot.slane %v6717, 2
        %v6719 = vadd.f32 %v6717, %v6718
        %v6720 = vrot.slane %v6719, 1
        %v6721 = vadd.f32 %v6719, %v6720
        %v6722 = vsel %vm3508, %v6362, 0.0
        %v6723 = vsel %vm3508, %v6363, 0.0
        %v6724 = vadd.f32 %v6722, %v6723
        %v6725 = vsel %vm3508, %v6364, 0.0
        %v6726 = vadd.f32 %v6724, %v6725
        %v6727 = vrot.slane %v6726, 4
        %v6728 = vadd.f32 %v6726, %v6727
        %v6729 = vrot.slane %v6728, 2
        %v6730 = vadd.f32 %v6728, %v6729
        %v6731 = vrot.slane %v6730, 1
        %v6732 = vadd.f32 %v6730, %v6731
        %v6733 = vsel %vm3508, %v6365, 0.0
        %v6734 = vsel %vm3508, %v6366, 0.0
        %v6735 = vadd.f32 %v6733, %v6734
        %v6736 = vsel %vm3508, %v6367, 0.0
        %v6737 = vadd.f32 %v6735, %v6736
        %v6738 = vrot.slane %v6737, 4
        %v6739 = vadd.f32 %v6737, %v6738
        %v6740 = vrot.slane %v6739, 2
        %v6741 = vadd.f32 %v6739, %v6740
        %v6742 = vrot.slane %v6741, 1
        %v6743 = vadd.f32 %v6741, %v6742
        %v6744 = vsel %vm3508, %v6368, 0.0
        %v6745 = vsel %vm3508, %v6369, 0.0
        %v6746 = vadd.f32 %v6744, %v6745
        %v6747 = vsel %vm3508, %v6370, 0.0
        %v6748 = vadd.f32 %v6746, %v6747
        %v6749 = vrot.slane %v6748, 4
        %v6750 = vadd.f32 %v6748, %v6749
        %v6751 = vrot.slane %v6750, 2
        %v6752 = vadd.f32 %v6750, %v6751
        %v6753 = vrot.slane %v6752, 1
        %v6754 = vadd.f32 %v6752, %v6753
        %v6755 = vsel %vm3508, %v6371, 0.0
        %v6756 = vsel %vm3508, %v6372, 0.0
        %v6757 = vadd.f32 %v6755, %v6756
        %v6758 = vsel %vm3508, %v6373, 0.0
        %v6759 = vadd.f32 %v6757, %v6758
        %v6760 = vrot.slane %v6759, 4
        %v6761 = vadd.f32 %v6759, %v6760
        %v6762 = vrot.slane %v6761, 2
        %v6763 = vadd.f32 %v6761, %v6762
        %v6764 = vrot.slane %v6763, 1
        %v6765 = vadd.f32 %v6763, %v6764
        %v6766 = vsel %vm3508, %v6374, 0.0
        %v6767 = vsel %vm3508, %v6375, 0.0
        %v6768 = vadd.f32 %v6766, %v6767
        %v6769 = vsel %vm3508, %v6376, 0.0
        %v6770 = vadd.f32 %v6768, %v6769
        %v6771 = vrot.slane %v6770, 4
        %v6772 = vadd.f32 %v6770, %v6771
        %v6773 = vrot.slane %v6772, 2
        %v6774 = vadd.f32 %v6772, %v6773
        %v6775 = vrot.slane %v6774, 1
        %v6776 = vadd.f32 %v6774, %v6775
        %v6777 = vsel %vm3508, %v6377, 0.0
        %v6778 = vsel %vm3508, %v6378, 0.0
        %v6779 = vadd.f32 %v6777, %v6778
        %v6780 = vsel %vm3508, %v6379, 0.0
        %v6781 = vadd.f32 %v6779, %v6780
        %v6782 = vrot.slane %v6781, 4
        %v6783 = vadd.f32 %v6781, %v6782
        %v6784 = vrot.slane %v6783, 2
        %v6785 = vadd.f32 %v6783, %v6784
        %v6786 = vrot.slane %v6785, 1
        %v6787 = vadd.f32 %v6785, %v6786
        %v6788 = vsel %vm3508, %v6380, 0.0
        %v6789 = vsel %vm3508, %v6381, 0.0
        %v6790 = vadd.f32 %v6788, %v6789
        %v6791 = vsel %vm3508, %v6382, 0.0
        %v6792 = vadd.f32 %v6790, %v6791
        %v6793 = vrot.slane %v6792, 4
        %v6794 = vadd.f32 %v6792, %v6793
        %v6795 = vrot.slane %v6794, 2
        %v6796 = vadd.f32 %v6794, %v6795
        %v6797 = vrot.slane %v6796, 1
        %v6798 = vadd.f32 %v6796, %v6797
        %v6799 = vsel %vm3508, %v6383, 0.0
        %v6800 = vsel %vm3508, %v6384, 0.0
        %v6801 = vadd.f32 %v6799, %v6800
        %v6802 = vsel %vm3508, %v6385, 0.0
        %v6803 = vadd.f32 %v6801, %v6802
        %v6804 = vrot.slane %v6803, 4
        %v6805 = vadd.f32 %v6803, %v6804
        %v6806 = vrot.slane %v6805, 2
        %v6807 = vadd.f32 %v6805, %v6806
        %v6808 = vrot.slane %v6807, 1
        %v6809 = vadd.f32 %v6807, %v6808
        %v6810 = vsel %vm3508, %v6386, 0.0
        %v6811 = vsel %vm3508, %v6387, 0.0
        %v6812 = vadd.f32 %v6810, %v6811
        %v6813 = vsel %vm3508, %v6388, 0.0
        %v6814 = vadd.f32 %v6812, %v6813
        %v6815 = vrot.slane %v6814, 4
        %v6816 = vadd.f32 %v6814, %v6815
        %v6817 = vrot.slane %v6816, 2
        %v6818 = vadd.f32 %v6816, %v6817
        %v6819 = vrot.slane %v6818, 1
        %v6820 = vadd.f32 %v6818, %v6819
        %v6821 = vsel %vm3508, %v6389, 0.0
        %v6822 = vsel %vm3508, %v6390, 0.0
        %v6823 = vadd.f32 %v6821, %v6822
        %v6824 = vsel %vm3508, %v6391, 0.0
        %v6825 = vadd.f32 %v6823, %v6824
        %v6826 = vrot.slane %v6825, 4
        %v6827 = vadd.f32 %v6825, %v6826
        %v6828 = vrot.slane %v6827, 2
        %v6829 = vadd.f32 %v6827, %v6828
        %v6830 = vrot.slane %v6829, 1
        %v6831 = vadd.f32 %v6829, %v6830
        %v6832 = vsel %vm3508, %v6392, 0.0
        %v6833 = vsel %vm3508, %v6393, 0.0
        %v6834 = vadd.f32 %v6832, %v6833
        %v6835 = vsel %vm3508, %v6394, 0.0
        %v6836 = vadd.f32 %v6834, %v6835
        %v6837 = vrot.slane %v6836, 4
        %v6838 = vadd.f32 %v6836, %v6837
        %v6839 = vrot.slane %v6838, 2
        %v6840 = vadd.f32 %v6838, %v6839
        %v6841 = vrot.slane %v6840, 1
        %v6842 = vadd.f32 %v6840, %v6841
        %v6843 = vsel %vm3508, %v6395, 0.0
        %v6844 = vsel %vm3508, %v6396, 0.0
        %v6845 = vadd.f32 %v6843, %v6844
        %v6846 = vsel %vm3508, %v6397, 0.0
        %v6847 = vadd.f32 %v6845, %v6846
        %v6848 = vrot.slane %v6847, 4
        %v6849 = vadd.f32 %v6847, %v6848
        %v6850 = vrot.slane %v6849, 2
        %v6851 = vadd.f32 %v6849, %v6850
        %v6852 = vrot.slane %v6851, 1
        %v6853 = vadd.f32 %v6851, %v6852
        %v6854 = vsel %vm3508, %v6398, 0.0
        %v6855 = vsel %vm3508, %v6399, 0.0
        %v6856 = vadd.f32 %v6854, %v6855
        %v6857 = vsel %vm3508, %v6400, 0.0
        %v6858 = vadd.f32 %v6856, %v6857
        %v6859 = vrot.slane %v6858, 4
        %v6860 = vadd.f32 %v6858, %v6859
        %v6861 = vrot.slane %v6860, 2
        %v6862 = vadd.f32 %v6860, %v6861
        %v6863 = vrot.slane %v6862, 1
        %v6864 = vadd.f32 %v6862, %v6863
        %v6865 = vsel %vm3508, %v6401, 0.0
        %v6866 = vsel %vm3508, %v6402, 0.0
        %v6867 = vadd.f32 %v6865, %v6866
        %v6868 = vsel %vm3508, %v6403, 0.0
        %v6869 = vadd.f32 %v6867, %v6868
        %v6870 = vrot.slane %v6869, 4
        %v6871 = vadd.f32 %v6869, %v6870
        %v6872 = vrot.slane %v6871, 2
        %v6873 = vadd.f32 %v6871, %v6872
        %v6874 = vrot.slane %v6873, 1
        %v6875 = vadd.f32 %v6873, %v6874
        %v6876 = vsel %vm3508, %v6404, 0.0
        %v6877 = vsel %vm3508, %v6405, 0.0
        %v6878 = vadd.f32 %v6876, %v6877
        %v6879 = vsel %vm3508, %v6406, 0.0
        %v6880 = vadd.f32 %v6878, %v6879
        %v6881 = vrot.slane %v6880, 4
        %v6882 = vadd.f32 %v6880, %v6881
        %v6883 = vrot.slane %v6882, 2
        %v6884 = vadd.f32 %v6882, %v6883
        %v6885 = vrot.slane %v6884, 1
        %v6886 = vadd.f32 %v6884, %v6885
        %v6887 = vsel %vm3508, %v6407, 0.0
        %v6888 = vsel %vm3508, %v6408, 0.0
        %v6889 = vadd.f32 %v6887, %v6888
        %v6890 = vsel %vm3508, %v6409, 0.0
        %v6891 = vadd.f32 %v6889, %v6890
        %v6892 = vrot.slane %v6891, 4
        %v6893 = vadd.f32 %v6891, %v6892
        %v6894 = vrot.slane %v6893, 2
        %v6895 = vadd.f32 %v6893, %v6894
        %v6896 = vrot.slane %v6895, 1
        %v6897 = vadd.f32 %v6895, %v6896
        %v6898 = vsel %vm3508, %v6410, 0.0
        %v6899 = vsel %vm3508, %v6411, 0.0
        %v6900 = vadd.f32 %v6898, %v6899
        %v6901 = vsel %vm3508, %v6412, 0.0
        %v6902 = vadd.f32 %v6900, %v6901
        %v6903 = vrot.slane %v6902, 4
        %v6904 = vadd.f32 %v6902, %v6903
        %v6905 = vrot.slane %v6904, 2
        %v6906 = vadd.f32 %v6904, %v6905
        %v6907 = vrot.slane %v6906, 1
        %v6908 = vadd.f32 %v6906, %v6907
        %v6909 = vsel %vm3508, %v6413, 0.0
        %v6910 = vsel %vm3508, %v6414, 0.0
        %v6911 = vadd.f32 %v6909, %v6910
        %v6912 = vsel %vm3508, %v6415, 0.0
        %v6913 = vadd.f32 %v6911, %v6912
        %v6914 = vrot.slane %v6913, 4
        %v6915 = vadd.f32 %v6913, %v6914
        %v6916 = vrot.slane %v6915, 2
        %v6917 = vadd.f32 %v6915, %v6916
        %v6918 = vrot.slane %v6917, 1
        %v6919 = vadd.f32 %v6917, %v6918
        %v6920 = vsel %vm3508, %v6416, 0.0
        %v6921 = vsel %vm3508, %v6417, 0.0
        %v6922 = vadd.f32 %v6920, %v6921
        %v6923 = vsel %vm3508, %v6418, 0.0
        %v6924 = vadd.f32 %v6922, %v6923
        %v6925 = vrot.slane %v6924, 4
        %v6926 = vadd.f32 %v6924, %v6925
        %v6927 = vrot.slane %v6926, 2
        %v6928 = vadd.f32 %v6926, %v6927
        %v6929 = vrot.slane %v6928, 1
        %v6930 = vadd.f32 %v6928, %v6929
        %v6931 = vsel %vm3508, %v6419, 0.0
        %v6932 = vsel %vm3508, %v6420, 0.0
        %v6933 = vadd.f32 %v6931, %v6932
        %v6934 = vsel %vm3508, %v6421, 0.0
        %v6935 = vadd.f32 %v6933, %v6934
        %v6936 = vrot.slane %v6935, 4
        %v6937 = vadd.f32 %v6935, %v6936
        %v6938 = vrot.slane %v6937, 2
        %v6939 = vadd.f32 %v6937, %v6938
        %v6940 = vrot.slane %v6939, 1
        %v6941 = vadd.f32 %v6939, %v6940
        %v6942 = vsel %vm3508, %v6422, 0.0
        %v6943 = vsel %vm3508, %v6423, 0.0
        %v6944 = vadd.f32 %v6942, %v6943
        %v6945 = vsel %vm3508, %v6424, 0.0
        %v6946 = vadd.f32 %v6944, %v6945
        %v6947 = vrot.slane %v6946, 4
        %v6948 = vadd.f32 %v6946, %v6947
        %v6949 = vrot.slane %v6948, 2
        %v6950 = vadd.f32 %v6948, %v6949
        %v6951 = vrot.slane %v6950, 1
        %v6952 = vadd.f32 %v6950, %v6951
        %v6953 = vsel %vm3508, %v6425, 0.0
        %v6954 = vsel %vm3508, %v6426, 0.0
        %v6955 = vadd.f32 %v6953, %v6954
        %v6956 = vsel %vm3508, %v6427, 0.0
        %v6957 = vadd.f32 %v6955, %v6956
        %v6958 = vrot.slane %v6957, 4
        %v6959 = vadd.f32 %v6957, %v6958
        %v6960 = vrot.slane %v6959, 2
        %v6961 = vadd.f32 %v6959, %v6960
        %v6962 = vrot.slane %v6961, 1
        %v6963 = vadd.f32 %v6961, %v6962
        %v6964 = vsel %vm3508, %v6428, 0.0
        %v6965 = vsel %vm3508, %v6429, 0.0
        %v6966 = vadd.f32 %v6964, %v6965
        %v6967 = vsel %vm3508, %v6430, 0.0
        %v6968 = vadd.f32 %v6966, %v6967
        %v6969 = vrot.slane %v6968, 4
        %v6970 = vadd.f32 %v6968, %v6969
        %v6971 = vrot.slane %v6970, 2
        %v6972 = vadd.f32 %v6970, %v6971
        %v6973 = vrot.slane %v6972, 1
        %v6974 = vadd.f32 %v6972, %v6973
        %v6975 = vsel %vm3508, %v6431, 0.0
        %v6976 = vsel %vm3508, %v6432, 0.0
        %v6977 = vadd.f32 %v6975, %v6976
        %v6978 = vsel %vm3508, %v6433, 0.0
        %v6979 = vadd.f32 %v6977, %v6978
        %v6980 = vrot.slane %v6979, 4
        %v6981 = vadd.f32 %v6979, %v6980
        %v6982 = vrot.slane %v6981, 2
        %v6983 = vadd.f32 %v6981, %v6982
        %v6984 = vrot.slane %v6983, 1
        %v6985 = vadd.f32 %v6983, %v6984
        %v6986 = vsel %vm3508, %v6434, 0.0
        %v6987 = vsel %vm3508, %v6435, 0.0
        %v6988 = vadd.f32 %v6986, %v6987
        %v6989 = vsel %vm3508, %v6436, 0.0
        %v6990 = vadd.f32 %v6988, %v6989
        %v6991 = vrot.slane %v6990, 4
        %v6992 = vadd.f32 %v6990, %v6991
        %v6993 = vrot.slane %v6992, 2
        %v6994 = vadd.f32 %v6992, %v6993
        %v6995 = vrot.slane %v6994, 1
        %v6996 = vadd.f32 %v6994, %v6995
        %v6997 = vsel %vm3508, %v6437, 0.0
        %v6998 = vsel %vm3508, %v6438, 0.0
        %v6999 = vadd.f32 %v6997, %v6998
        %v7000 = vsel %vm3508, %v6439, 0.0
        %v7001 = vadd.f32 %v6999, %v7000
        %v7002 = vrot.slane %v7001, 4
        %v7003 = vadd.f32 %v7001, %v7002
        %v7004 = vrot.slane %v7003, 2
        %v7005 = vadd.f32 %v7003, %v7004
        %v7006 = vrot.slane %v7005, 1
        %v7007 = vadd.f32 %v7005, %v7006
        %v7008 = vsel %vm3508, %v6440, 0.0
        %v7009 = vsel %vm3508, %v6441, 0.0
        %v7010 = vadd.f32 %v7008, %v7009
        %v7011 = vsel %vm3508, %v6442, 0.0
        %v7012 = vadd.f32 %v7010, %v7011
        %v7013 = vrot.slane %v7012, 4
        %v7014 = vadd.f32 %v7012, %v7013
        %v7015 = vrot.slane %v7014, 2
        %v7016 = vadd.f32 %v7014, %v7015
        %v7017 = vrot.slane %v7016, 1
        %v7018 = vadd.f32 %v7016, %v7017
        %v7019 = vsel %vm3508, %v6443, 0.0
        %v7020 = vsel %vm3508, %v6444, 0.0
        %v7021 = vadd.f32 %v7019, %v7020
        %v7022 = vsel %vm3508, %v6445, 0.0
        %v7023 = vadd.f32 %v7021, %v7022
        %v7024 = vrot.slane %v7023, 4
        %v7025 = vadd.f32 %v7023, %v7024
        %v7026 = vrot.slane %v7025, 2
        %v7027 = vadd.f32 %v7025, %v7026
        %v7028 = vrot.slane %v7027, 1
        %v7029 = vadd.f32 %v7027, %v7028
        %v7030 = vsel %vm3508, %v6446, 0.0
        %v7031 = vsel %vm3508, %v6447, 0.0
        %v7032 = vadd.f32 %v7030, %v7031
        %v7033 = vsel %vm3508, %v6448, 0.0
        %v7034 = vadd.f32 %v7032, %v7033
        %v7035 = vrot.slane %v7034, 4
        %v7036 = vadd.f32 %v7034, %v7035
        %v7037 = vrot.slane %v7036, 2
        %v7038 = vadd.f32 %v7036, %v7037
        %v7039 = vrot.slane %v7038, 1
        %v7040 = vadd.f32 %v7038, %v7039
        %v7041 = vsel %vm3508, %v6449, 0.0
        %v7042 = vsel %vm3508, %v6450, 0.0
        %v7043 = vadd.f32 %v7041, %v7042
        %v7044 = vsel %vm3508, %v6451, 0.0
        %v7045 = vadd.f32 %v7043, %v7044
        %v7046 = vrot.slane %v7045, 4
        %v7047 = vadd.f32 %v7045, %v7046
        %v7048 = vrot.slane %v7047, 2
        %v7049 = vadd.f32 %v7047, %v7048
        %v7050 = vrot.slane %v7049, 1
        %v7051 = vadd.f32 %v7049, %v7050
        %v7052 = vsel %vm3508, %v6452, 0.0
        %v7053 = vsel %vm3508, %v6453, 0.0
        %v7054 = vadd.f32 %v7052, %v7053
        %v7055 = vsel %vm3508, %v6454, 0.0
        %v7056 = vadd.f32 %v7054, %v7055
        %v7057 = vrot.slane %v7056, 4
        %v7058 = vadd.f32 %v7056, %v7057
        %v7059 = vrot.slane %v7058, 2
        %v7060 = vadd.f32 %v7058, %v7059
        %v7061 = vrot.slane %v7060, 1
        %v7062 = vadd.f32 %v7060, %v7061
        %v7063 = vsel %vm3508, %v6455, 0.0
        %v7064 = vsel %vm3508, %v6456, 0.0
        %v7065 = vadd.f32 %v7063, %v7064
        %v7066 = vsel %vm3508, %v6457, 0.0
        %v7067 = vadd.f32 %v7065, %v7066
        %v7068 = vrot.slane %v7067, 4
        %v7069 = vadd.f32 %v7067, %v7068
        %v7070 = vrot.slane %v7069, 2
        %v7071 = vadd.f32 %v7069, %v7070
        %v7072 = vrot.slane %v7071, 1
        %v7073 = vadd.f32 %v7071, %v7072
        %v7074 = vsel %vm3508, %v6458, 0.0
        %v7075 = vsel %vm3508, %v6459, 0.0
        %v7076 = vadd.f32 %v7074, %v7075
        %v7077 = vsel %vm3508, %v6460, 0.0
        %v7078 = vadd.f32 %v7076, %v7077
        %v7079 = vrot.slane %v7078, 4
        %v7080 = vadd.f32 %v7078, %v7079
        %v7081 = vrot.slane %v7080, 2
        %v7082 = vadd.f32 %v7080, %v7081
        %v7083 = vrot.slane %v7082, 1
        %v7084 = vadd.f32 %v7082, %v7083
        %v7085 = vsel %vm3508, %v6461, 0.0
        %v7086 = vsel %vm3508, %v6462, 0.0
        %v7087 = vadd.f32 %v7085, %v7086
        %v7088 = vsel %vm3508, %v6463, 0.0
        %v7089 = vadd.f32 %v7087, %v7088
        %v7090 = vrot.slane %v7089, 4
        %v7091 = vadd.f32 %v7089, %v7090
        %v7092 = vrot.slane %v7091, 2
        %v7093 = vadd.f32 %v7091, %v7092
        %v7094 = vrot.slane %v7093, 1
        %v7095 = vadd.f32 %v7093, %v7094
        %v7096 = vsel %vm3508, %v6464, 0.0
        %v7097 = vsel %vm3508, %v6465, 0.0
        %v7098 = vadd.f32 %v7096, %v7097
        %v7099 = vsel %vm3508, %v6466, 0.0
        %v7100 = vadd.f32 %v7098, %v7099
        %v7101 = vrot.slane %v7100, 4
        %v7102 = vadd.f32 %v7100, %v7101
        %v7103 = vrot.slane %v7102, 2
        %v7104 = vadd.f32 %v7102, %v7103
        %v7105 = vrot.slane %v7104, 1
        %v7106 = vadd.f32 %v7104, %v7105
        %v7107 = vsel %vm3508, %v6467, 0.0
        %v7108 = vsel %vm3508, %v6468, 0.0
        %v7109 = vadd.f32 %v7107, %v7108
        %v7110 = vsel %vm3508, %v6469, 0.0
        %v7111 = vadd.f32 %v7109, %v7110
        %v7112 = vrot.slane %v7111, 4
        %v7113 = vadd.f32 %v7111, %v7112
        %v7114 = vrot.slane %v7113, 2
        %v7115 = vadd.f32 %v7113, %v7114
        %v7116 = vrot.slane %v7115, 1
        %v7117 = vadd.f32 %v7115, %v7116
        %v7118 = vsel %vm3508, %v6470, 0.0
        %v7119 = vsel %vm3508, %v6471, 0.0
        %v7120 = vadd.f32 %v7118, %v7119
        %v7121 = vsel %vm3508, %v6472, 0.0
        %v7122 = vadd.f32 %v7120, %v7121
        %v7123 = vrot.slane %v7122, 4
        %v7124 = vadd.f32 %v7122, %v7123
        %v7125 = vrot.slane %v7124, 2
        %v7126 = vadd.f32 %v7124, %v7125
        %v7127 = vrot.slane %v7126, 1
        %v7128 = vadd.f32 %v7126, %v7127
        %v7129 = vsel %vm3508, %v6473, 0.0
        %v7130 = vsel %vm3508, %v6474, 0.0
        %v7131 = vadd.f32 %v7129, %v7130
        %v7132 = vsel %vm3508, %v6475, 0.0
        %v7133 = vadd.f32 %v7131, %v7132
        %v7134 = vrot.slane %v7133, 4
        %v7135 = vadd.f32 %v7133, %v7134
        %v7136 = vrot.slane %v7135, 2
        %v7137 = vadd.f32 %v7135, %v7136
        %v7138 = vrot.slane %v7137, 1
        %v7139 = vadd.f32 %v7137, %v7138
        %v7140 = vsel %vm3508, %v6476, 0.0
        %v7141 = vsel %vm3508, %v6477, 0.0
        %v7142 = vadd.f32 %v7140, %v7141
        %v7143 = vsel %vm3508, %v6478, 0.0
        %v7144 = vadd.f32 %v7142, %v7143
        %v7145 = vrot.slane %v7144, 4
        %v7146 = vadd.f32 %v7144, %v7145
        %v7147 = vrot.slane %v7146, 2
        %v7148 = vadd.f32 %v7146, %v7147
        %v7149 = vrot.slane %v7148, 1
        %v7150 = vadd.f32 %v7148, %v7149
        %v7151 = vsel %vm3508, %v6479, 0.0
        %v7152 = vsel %vm3508, %v6480, 0.0
        %v7153 = vadd.f32 %v7151, %v7152
        %v7154 = vsel %vm3508, %v6481, 0.0
        %v7155 = vadd.f32 %v7153, %v7154
        %v7156 = vrot.slane %v7155, 4
        %v7157 = vadd.f32 %v7155, %v7156
        %v7158 = vrot.slane %v7157, 2
        %v7159 = vadd.f32 %v7157, %v7158
        %v7160 = vrot.slane %v7159, 1
        %v7161 = vadd.f32 %v7159, %v7160
        %v7162 = vsel %vm3508, %v6482, 0.0
        %v7163 = vsel %vm3508, %v6483, 0.0
        %v7164 = vadd.f32 %v7162, %v7163
        %v7165 = vsel %vm3508, %v6484, 0.0
        %v7166 = vadd.f32 %v7164, %v7165
        %v7167 = vrot.slane %v7166, 4
        %v7168 = vadd.f32 %v7166, %v7167
        %v7169 = vrot.slane %v7168, 2
        %v7170 = vadd.f32 %v7168, %v7169
        %v7171 = vrot.slane %v7170, 1
        %v7172 = vadd.f32 %v7170, %v7171
        %v7173 = vsel %vm3508, %v6485, 0.0
        %v7174 = vsel %vm3508, %v6486, 0.0
        %v7175 = vadd.f32 %v7173, %v7174
        %v7176 = vsel %vm3508, %v6487, 0.0
        %v7177 = vadd.f32 %v7175, %v7176
        %v7178 = vrot.slane %v7177, 4
        %v7179 = vadd.f32 %v7177, %v7178
        %v7180 = vrot.slane %v7179, 2
        %v7181 = vadd.f32 %v7179, %v7180
        %v7182 = vrot.slane %v7181, 1
        %v7183 = vadd.f32 %v7181, %v7182
        %v7184 = vsel %vm3508, %v6488, 0.0
        %v7185 = vsel %vm3508, %v6489, 0.0
        %v7186 = vadd.f32 %v7184, %v7185
        %v7187 = vsel %vm3508, %v6490, 0.0
        %v7188 = vadd.f32 %v7186, %v7187
        %v7189 = vrot.slane %v7188, 4
        %v7190 = vadd.f32 %v7188, %v7189
        %v7191 = vrot.slane %v7190, 2
        %v7192 = vadd.f32 %v7190, %v7191
        %v7193 = vrot.slane %v7192, 1
        %v7194 = vadd.f32 %v7192, %v7193
        %v7195 = vsub.f32 1.0, %v5317
        %v7196 = vsub.f32 1.0, %v5320
        %v7197 = vsub.f32 1.0, %v5323
        %v7198 = vsub.f32 1.0, %v5326
        %v7199 = vsub.f32 1.0, %v5329
        %v7200 = vsub.f32 1.0, %v5332
        %v7201 = vsub.f32 1.0, %v5335
        %v7202 = vsub.f32 1.0, %v5338
        %v7203 = vlaneseq
        %v7204 = vshrl.u32 %v7203, 7
        %v7205 = vsub.s32 0, %v7204
        %v7206 = vrot.slane %v362, %v7205
        %v7207 = vmul.f32 %v7195, %v7206
        %v7208 = vmul.f32 %v7196, %v7206
        %v7209 = vmul.f32 %v7197, %v7206
        %v7210 = vmul.f32 %v7198, %v7206
        %v7211 = vmul.f32 %v7199, %v7206
        %v7212 = vmul.f32 %v7200, %v7206
        %v7213 = vmul.f32 %v7201, %v7206
        %v7214 = vmul.f32 %v7202, %v7206
        %v7223 = vrot.slane %v7207, 1
        %v7224 = vrot.slane %v7207, 2
        %v7225 = vrot.slane %v7207, 3
        %v7226 = vrot.slane %v7207, 4
        %v7227 = vrot.slane %v7207, 5
        %v7228 = vrot.slane %v7207, 6
        %v7229 = vrot.slane %v7207, 7
        %v7230 = vrot.slane %v7208, 1
        %v7231 = vrot.slane %v7208, 2
        %v7232 = vrot.slane %v7208, 3
        %v7233 = vrot.slane %v7208, 4
        %v7234 = vrot.slane %v7208, 5
        %v7235 = vrot.slane %v7208, 6
        %v7236 = vrot.slane %v7208, 7
        %v7237 = vrot.slane %v7209, 1
        %v7238 = vrot.slane %v7209, 2
        %v7239 = vrot.slane %v7209, 3
        %v7240 = vrot.slane %v7209, 4
        %v7241 = vrot.slane %v7209, 5
        %v7242 = vrot.slane %v7209, 6
        %v7243 = vrot.slane %v7209, 7
        %v7244 = vrot.slane %v7210, 1
        %v7245 = vrot.slane %v7210, 2
        %v7246 = vrot.slane %v7210, 3
        %v7247 = vrot.slane %v7210, 4
        %v7248 = vrot.slane %v7210, 5
        %v7249 = vrot.slane %v7210, 6
        %v7250 = vrot.slane %v7210, 7
        %v7251 = vrot.slane %v7211, 1
        %v7252 = vrot.slane %v7211, 2
        %v7253 = vrot.slane %v7211, 3
        %v7254 = vrot.slane %v7211, 4
        %v7255 = vrot.slane %v7211, 5
        %v7256 = vrot.slane %v7211, 6
        %v7257 = vrot.slane %v7211, 7
        %v7258 = vrot.slane %v7212, 1
        %v7259 = vrot.slane %v7212, 2
        %v7260 = vrot.slane %v7212, 3
        %v7261 = vrot.slane %v7212, 4
        %v7262 = vrot.slane %v7212, 5
        %v7263 = vrot.slane %v7212, 6
        %v7264 = vrot.slane %v7212, 7
        %v7265 = vrot.slane %v7213, 1
        %v7266 = vrot.slane %v7213, 2
        %v7267 = vrot.slane %v7213, 3
        %v7268 = vrot.slane %v7213, 4
        %v7269 = vrot.slane %v7213, 5
        %v7270 = vrot.slane %v7213, 6
        %v7271 = vrot.slane %v7213, 7
        %v7272 = vrot.slane %v7214, 1
        %v7273 = vrot.slane %v7214, 2
        %v7274 = vrot.slane %v7214, 3
        %v7275 = vrot.slane %v7214, 4
        %v7276 = vrot.slane %v7214, 5
        %v7277 = vrot.slane %v7214, 6
        %v7278 = vrot.slane %v7214, 7
        %v7343 = vadd.f32 %v6501, %v7207
        %v7344 = vadd.f32 %v6512, %v7223
        %v7345 = vadd.f32 %v6523, %v7224
        %v7346 = vadd.f32 %v6534, %v7225
        %v7347 = vadd.f32 %v6545, %v7226
        %v7348 = vadd.f32 %v6556, %v7227
        %v7349 = vadd.f32 %v6567, %v7228
        %v7350 = vadd.f32 %v6578, %v7229
        %v7351 = vadd.f32 %v6589, %v7208
        %v7352 = vadd.f32 %v6600, %v7230
        %v7353 = vadd.f32 %v6611, %v7231
        %v7354 = vadd.f32 %v6622, %v7232
        %v7355 = vadd.f32 %v6633, %v7233
        %v7356 = vadd.f32 %v6644, %v7234
        %v7357 = vadd.f32 %v6655, %v7235
        %v7358 = vadd.f32 %v6666, %v7236
        %v7359 = vadd.f32 %v6677, %v7209
        %v7360 = vadd.f32 %v6688, %v7237
        %v7361 = vadd.f32 %v6699, %v7238
        %v7362 = vadd.f32 %v6710, %v7239
        %v7363 = vadd.f32 %v6721, %v7240
        %v7364 = vadd.f32 %v6732, %v7241
        %v7365 = vadd.f32 %v6743, %v7242
        %v7366 = vadd.f32 %v6754, %v7243
        %v7367 = vadd.f32 %v6765, %v7210
        %v7368 = vadd.f32 %v6776, %v7244
        %v7369 = vadd.f32 %v6787, %v7245
        %v7370 = vadd.f32 %v6798, %v7246
        %v7371 = vadd.f32 %v6809, %v7247
        %v7372 = vadd.f32 %v6820, %v7248
        %v7373 = vadd.f32 %v6831, %v7249
        %v7374 = vadd.f32 %v6842, %v7250
        %v7375 = vadd.f32 %v6853, %v7211
        %v7376 = vadd.f32 %v6864, %v7251
        %v7377 = vadd.f32 %v6875, %v7252
        %v7378 = vadd.f32 %v6886, %v7253
        %v7379 = vadd.f32 %v6897, %v7254
        %v7380 = vadd.f32 %v6908, %v7255
        %v7381 = vadd.f32 %v6919, %v7256
        %v7382 = vadd.f32 %v6930, %v7257
        %v7383 = vadd.f32 %v6941, %v7212
        %v7384 = vadd.f32 %v6952, %v7258
        %v7385 = vadd.f32 %v6963, %v7259
        %v7386 = vadd.f32 %v6974, %v7260
        %v7387 = vadd.f32 %v6985, %v7261
        %v7388 = vadd.f32 %v6996, %v7262
        %v7389 = vadd.f32 %v7007, %v7263
        %v7390 = vadd.f32 %v7018, %v7264
        %v7391 = vadd.f32 %v7029, %v7213
        %v7392 = vadd.f32 %v7040, %v7265
        %v7393 = vadd.f32 %v7051, %v7266
        %v7394 = vadd.f32 %v7062, %v7267
        %v7395 = vadd.f32 %v7073, %v7268
        %v7396 = vadd.f32 %v7084, %v7269
        %v7397 = vadd.f32 %v7095, %v7270
        %v7398 = vadd.f32 %v7106, %v7271
        %v7399 = vadd.f32 %v7117, %v7214
        %v7400 = vadd.f32 %v7128, %v7272
        %v7401 = vadd.f32 %v7139, %v7273
        %v7402 = vadd.f32 %v7150, %v7274
        %v7403 = vadd.f32 %v7161, %v7275
        %v7404 = vadd.f32 %v7172, %v7276
        %v7405 = vadd.f32 %v7183, %v7277
        %v7406 = vadd.f32 %v7194, %v7278
        %s7407 = scalar_lea.vmem %s4, 32
        %v7408 = vld [vmem:[%s7407] sm:$0xff]
        %v7409 = vld [vmem:[%s7407 + $0x8] sm:$0xff]
        %v7410 = vld [vmem:[%s7407 + $0x10] sm:$0xff]
        %v7411 = vld [vmem:[%s7407 + $0x18] sm:$0xff]
        %v7412 = vlaneseq
        %v7413 = vshrl.u32 %v7412, 7
        %v7414 = vsub.s32 0, %v7413
        %v7415 = vrot.slane %v361, %v7414
        %v7480 = vrot.slane %v7344, 7
        %vm7481 = vcmask 1041409
        %v7482 = vsel %vm7481, %v7480, %v7343
        %v7483 = vrot.slane %v7345, 6
        %vm7484 = vcmask 1042434
        %v7485 = vsel %vm7484, %v7483, %v7482
        %v7486 = vrot.slane %v7346, 5
        %vm7487 = vcmask 1043459
        %v7488 = vsel %vm7487, %v7486, %v7485
        %v7489 = vrot.slane %v7347, 4
        %vm7490 = vcmask 1044484
        %v7491 = vsel %vm7490, %v7489, %v7488
        %v7492 = vrot.slane %v7348, 3
        %vm7493 = vcmask 1045509
        %v7494 = vsel %vm7493, %v7492, %v7491
        %v7495 = vrot.slane %v7349, 2
        %vm7496 = vcmask 1046534
        %v7497 = vsel %vm7496, %v7495, %v7494
        %v7498 = vrot.slane %v7350, 1
        %vm7499 = vcmask 1047559
        %v7500 = vsel %vm7499, %v7498, %v7497
        %v7501 = vrot.slane %v7352, 7
        %v7502 = vsel %vm7481, %v7501, %v7351
        %v7503 = vrot.slane %v7353, 6
        %v7504 = vsel %vm7484, %v7503, %v7502
        %v7505 = vrot.slane %v7354, 5
        %v7506 = vsel %vm7487, %v7505, %v7504
        %v7507 = vrot.slane %v7355, 4
        %v7508 = vsel %vm7490, %v7507, %v7506
        %v7509 = vrot.slane %v7356, 3
        %v7510 = vsel %vm7493, %v7509, %v7508
        %v7511 = vrot.slane %v7357, 2
        %v7512 = vsel %vm7496, %v7511, %v7510
        %v7513 = vrot.slane %v7358, 1
        %v7514 = vsel %vm7499, %v7513, %v7512
        %v7515 = vrot.slane %v7360, 7
        %v7516 = vsel %vm7481, %v7515, %v7359
        %v7517 = vrot.slane %v7361, 6
        %v7518 = vsel %vm7484, %v7517, %v7516
        %v7519 = vrot.slane %v7362, 5
        %v7520 = vsel %vm7487, %v7519, %v7518
        %v7521 = vrot.slane %v7363, 4
        %v7522 = vsel %vm7490, %v7521, %v7520
        %v7523 = vrot.slane %v7364, 3
        %v7524 = vsel %vm7493, %v7523, %v7522
        %v7525 = vrot.slane %v7365, 2
        %v7526 = vsel %vm7496, %v7525, %v7524
        %v7527 = vrot.slane %v7366, 1
        %v7528 = vsel %vm7499, %v7527, %v7526
        %v7529 = vrot.slane %v7368, 7
        %v7530 = vsel %vm7481, %v7529, %v7367
        %v7531 = vrot.slane %v7369, 6
        %v7532 = vsel %vm7484, %v7531, %v7530
        %v7533 = vrot.slane %v7370, 5
        %v7534 = vsel %vm7487, %v7533, %v7532
        %v7535 = vrot.slane %v7371, 4
        %v7536 = vsel %vm7490, %v7535, %v7534
        %v7537 = vrot.slane %v7372, 3
        %v7538 = vsel %vm7493, %v7537, %v7536
        %v7539 = vrot.slane %v7373, 2
        %v7540 = vsel %vm7496, %v7539, %v7538
        %v7541 = vrot.slane %v7374, 1
        %v7542 = vsel %vm7499, %v7541, %v7540
        %v7543 = vrot.slane %v7376, 7
        %v7544 = vsel %vm7481, %v7543, %v7375
        %v7545 = vrot.slane %v7377, 6
        %v7546 = vsel %vm7484, %v7545, %v7544
        %v7547 = vrot.slane %v7378, 5
        %v7548 = vsel %vm7487, %v7547, %v7546
        %v7549 = vrot.slane %v7379, 4
        %v7550 = vsel %vm7490, %v7549, %v7548
        %v7551 = vrot.slane %v7380, 3
        %v7552 = vsel %vm7493, %v7551, %v7550
        %v7553 = vrot.slane %v7381, 2
        %v7554 = vsel %vm7496, %v7553, %v7552
        %v7555 = vrot.slane %v7382, 1
        %v7556 = vsel %vm7499, %v7555, %v7554
        %v7557 = vrot.slane %v7384, 7
        %v7558 = vsel %vm7481, %v7557, %v7383
        %v7559 = vrot.slane %v7385, 6
        %v7560 = vsel %vm7484, %v7559, %v7558
        %v7561 = vrot.slane %v7386, 5
        %v7562 = vsel %vm7487, %v7561, %v7560
        %v7563 = vrot.slane %v7387, 4
        %v7564 = vsel %vm7490, %v7563, %v7562
        %v7565 = vrot.slane %v7388, 3
        %v7566 = vsel %vm7493, %v7565, %v7564
        %v7567 = vrot.slane %v7389, 2
        %v7568 = vsel %vm7496, %v7567, %v7566
        %v7569 = vrot.slane %v7390, 1
        %v7570 = vsel %vm7499, %v7569, %v7568
        %v7571 = vrot.slane %v7392, 7
        %v7572 = vsel %vm7481, %v7571, %v7391
        %v7573 = vrot.slane %v7393, 6
        %v7574 = vsel %vm7484, %v7573, %v7572
        %v7575 = vrot.slane %v7394, 5
        %v7576 = vsel %vm7487, %v7575, %v7574
        %v7577 = vrot.slane %v7395, 4
        %v7578 = vsel %vm7490, %v7577, %v7576
        %v7579 = vrot.slane %v7396, 3
        %v7580 = vsel %vm7493, %v7579, %v7578
        %v7581 = vrot.slane %v7397, 2
        %v7582 = vsel %vm7496, %v7581, %v7580
        %v7583 = vrot.slane %v7398, 1
        %v7584 = vsel %vm7499, %v7583, %v7582
        %v7585 = vrot.slane %v7400, 7
        %v7586 = vsel %vm7481, %v7585, %v7399
        %v7587 = vrot.slane %v7401, 6
        %v7588 = vsel %vm7484, %v7587, %v7586
        %v7589 = vrot.slane %v7402, 5
        %v7590 = vsel %vm7487, %v7589, %v7588
        %v7591 = vrot.slane %v7403, 4
        %v7592 = vsel %vm7490, %v7591, %v7590
        %v7593 = vrot.slane %v7404, 3
        %v7594 = vsel %vm7493, %v7593, %v7592
        %v7595 = vrot.slane %v7405, 2
        %v7596 = vsel %vm7496, %v7595, %v7594
        %v7597 = vrot.slane %v7406, 1
        %v7598 = vsel %vm7499, %v7597, %v7596
        %v7599 = vsel %vm3508, %v7500, 0
        %v7601 = vsel %vm3508, %v7514, 0
        %v7603 = vsel %vm3508, %v7528, 0
        %v7605 = vsel %vm3508, %v7542, 0
        %v7607 = vsel %vm3508, %v7556, 0
        %v7609 = vsel %vm3508, %v7570, 0
        %v7611 = vsel %vm3508, %v7584, 0
        %v7613 = vsel %vm3508, %v7598, 0
        %7615 = vmatprep.subr.mxu0 0.0
        %7616 = vmatpush1.msra.mxu0 %v7408
        %7617 = vmatprep.subr.mxu0 0.0
        %7618 = vmatpush1.msra.mxu0 %v7409
        %7619 = vmatprep.subr.mxu0 0.0
        %7620 = vmatpush1.msra.mxu0 %v7410
        %7621 = vmatprep.subr.mxu0 0.0
        %7622 = vmatpush1.msra.mxu0 %v7411
        %7623 = vmatprep.subr.mxu0 0.0
        %7624 = vmatpush1.msra.mxu0 0.0
        %7625 = vmatprep.subr.mxu0 0.0
        %7626 = vmatpush1.msra.mxu0 0.0
        %7627 = vmatprep.subr.mxu0 0.0
        %7628 = vmatpush1.msra.mxu0 0.0
        %7629 = vmatprep.subr.mxu0 0.0
        %7630 = vmatpush1.msra.mxu0 0.0
        %7631 = vmatprep.subr.mxu0 0.0
        %7632 = vmatpush1.msra.mxu0 0.0
        %7633 = vmatprep.subr.mxu0 0.0
        %7634 = vmatpush1.msra.mxu0 0.0
        %7635 = vmatprep.subr.mxu0 0.0
        %7636 = vmatpush1.msra.mxu0 0.0
        %7637 = vmatprep.subr.mxu0 0.0
        %7638 = vmatpush1.msra.mxu0 0.0
        %7639 = vmatprep.subr.mxu0 0.0
        %7640 = vmatpush1.msra.mxu0 0.0
        %7641 = vmatprep.subr.mxu0 0.0
        %7642 = vmatpush1.msra.mxu0 0.0
        %7643 = vmatprep.subr.mxu0 0.0
        %7644 = vmatpush1.msra.mxu0 0.0
        %7645 = vmatprep.subr.mxu0 0.0
        %7646 = vmatpush1.msra.mxu0 0.0
        %7647 = vmatprep.subr.mxu0 0.0
        %7648 = vmatpush1.msra.mxu0 0.0
        %7649 = vmatprep.subr.mxu0 0.0
        %7650 = vmatpush1.msra.mxu0 0.0
        %7651 = vmatprep.subr.mxu0 0.0
        %7652 = vmatpush1.msra.mxu0 0.0
        %7653 = vmatprep.subr.mxu0 0.0
        %7654 = vmatpush1.msra.mxu0 0.0
        %7655 = vmatprep.subr.mxu0 0.0
        %7656 = vmatpush1.msra.mxu0 0.0
        %7657 = vmatprep.subr.mxu0 0.0
        %7658 = vmatpush1.msra.mxu0 0.0
        %7659 = vmatprep.subr.mxu0 0.0
        %7660 = vmatpush1.msra.mxu0 0.0
        %7661 = vmatprep.subr.mxu0 0.0
        %7662 = vmatpush1.msra.mxu0 0.0
        %7663 = vmatprep.subr.mxu0 0.0
        %7664 = vmatpush1.msra.mxu0 0.0
        %7665 = vmatprep.subr.mxu0 0.0
        %7666 = vmatpush1.msra.mxu0 0.0
        %7667 = vmatprep.subr.mxu0 0.0
        %7668 = vmatpush1.msra.mxu0 0.0
        %7669 = vmatprep.subr.mxu0 0.0
        %7670 = vmatpush1.msra.mxu0 0.0
        %7671 = vmatprep.subr.mxu0 0.0
        %7672 = vmatpush1.msra.mxu0 0.0
        %7673 = vmatprep.subr.mxu0 0.0
        %7674 = vmatpush1.msra.mxu0 0.0
        %7675 = vmatprep.subr.mxu0 0.0
        %7676 = vmatpush1.msra.mxu0 0.0
        %7677 = vmatprep.subr.mxu0 0.0
        %7678 = vmatpush1.msra.mxu0 0.0
        %7679 = vmatprep.mubr.f32.mxu0 0.0
        %7680 = vmatmul.mubr.f32.gmra.mrb[0].mxu0 %v7599
        %v7681 = vpop.f32.mrb[0].mxu0
        %v7682 = vadd.f32 %v7415, %v7681
        %v7683 = vpop.f32.mrb[0].mxu0
        %7684 = vmatprep.mubr.f32.mxu0 0.0
        %7685 = vmatmul.mubr.f32.gmra.mrb[0].mxu0 %v7601
        %v7686 = vpop.f32.mrb[0].mxu0
        %v7687 = vadd.f32 %v7415, %v7686
        %v7688 = vpop.f32.mrb[0].mxu0
        %7689 = vmatprep.mubr.f32.mxu0 0.0
        %7690 = vmatmul.mubr.f32.gmra.mrb[0].mxu0 %v7603
        %v7691 = vpop.f32.mrb[0].mxu0
        %v7692 = vadd.f32 %v7415, %v7691
        %v7693 = vpop.f32.mrb[0].mxu0
        %7694 = vmatprep.mubr.f32.mxu0 0.0
        %7695 = vmatmul.mubr.f32.gmra.mrb[0].mxu0 %v7605
        %v7696 = vpop.f32.mrb[0].mxu0
        %v7697 = vadd.f32 %v7415, %v7696
        %v7698 = vpop.f32.mrb[0].mxu0
        %7699 = vmatprep.mubr.f32.mxu0 0.0
        %7700 = vmatmul.mubr.f32.gmra.mrb[0].mxu0 %v7607
        %v7701 = vpop.f32.mrb[0].mxu0
        %v7702 = vadd.f32 %v7415, %v7701
        %v7703 = vpop.f32.mrb[0].mxu0
        %7704 = vmatprep.mubr.f32.mxu0 0.0
        %7705 = vmatmul.mubr.f32.gmra.mrb[0].mxu0 %v7609
        %v7706 = vpop.f32.mrb[0].mxu0
        %v7707 = vadd.f32 %v7415, %v7706
        %v7708 = vpop.f32.mrb[0].mxu0
        %7709 = vmatprep.mubr.f32.mxu0 0.0
        %7710 = vmatmul.mubr.f32.gmra.mrb[0].mxu0 %v7611
        %v7711 = vpop.f32.mrb[0].mxu0
        %v7712 = vadd.f32 %v7415, %v7711
        %v7713 = vpop.f32.mrb[0].mxu0
        %7714 = vmatprep.mubr.f32.mxu0 0.0
        %7715 = vmatmul.mubr.f32.gmra.mrb[0].mxu0 %v7613
        %v7716 = vpop.f32.mrb[0].mxu0
        %v7717 = vadd.f32 %v7415, %v7716
        %v7718 = vpop.f32.mrb[0].mxu0
        %7719 = vdwg.mxu0
        %v7720 = vxor.u32 %v7682, 2147483648
        %v7721 = vxor.u32 %v7687, 2147483648
        %v7722 = vxor.u32 %v7692, 2147483648
        %v7723 = vxor.u32 %v7697, 2147483648
        %v7724 = vxor.u32 %v7702, 2147483648
        %v7725 = vxor.u32 %v7707, 2147483648
        %v7726 = vxor.u32 %v7712, 2147483648
        %v7727 = vxor.u32 %v7717, 2147483648
        %v7728 = vmul.f32 %v7720, 1.442695
        %v7729 = vpow.pop %v7728
        %v7730 = vmul.f32 %v7721, 1.442695
        %v7731 = vpow.pop %v7730
        %v7732 = vmul.f32 %v7722, 1.442695
        %v7733 = vpow.pop %v7732
        %v7734 = vmul.f32 %v7723, 1.442695
        %v7735 = vpow.pop %v7734
        %v7736 = vmul.f32 %v7724, 1.442695
        %v7737 = vpow.pop %v7736
        %v7738 = vmul.f32 %v7725, 1.442695
        %v7739 = vpow.pop %v7738
        %v7740 = vmul.f32 %v7726, 1.442695
        %v7741 = vpow.pop %v7740
        %v7742 = vmul.f32 %v7727, 1.442695
        %v7743 = vpow.pop %v7742
        %v7744 = vadd.f32 %v7729, 1.0
        %v7745 = vadd.f32 %v7731, 1.0
        %v7746 = vadd.f32 %v7733, 1.0
        %v7747 = vadd.f32 %v7735, 1.0
        %v7748 = vadd.f32 %v7737, 1.0
        %v7749 = vadd.f32 %v7739, 1.0
        %v7750 = vadd.f32 %v7741, 1.0
        %v7751 = vadd.f32 %v7743, 1.0
        %v7752 = vrcp.pop %v7744
        %v7753 = vmul.f32 1.0, %v7752
        %v7754 = vrcp.pop %v7745
        %v7755 = vmul.f32 1.0, %v7754
        %v7756 = vrcp.pop %v7746
        %v7757 = vmul.f32 1.0, %v7756
        %v7758 = vrcp.pop %v7747
        %v7759 = vmul.f32 1.0, %v7758
        %v7760 = vrcp.pop %v7748
        %v7761 = vmul.f32 1.0, %v7760
        %v7762 = vrcp.pop %v7749
        %v7763 = vmul.f32 1.0, %v7762
        %v7764 = vrcp.pop %v7750
        %v7765 = vmul.f32 1.0, %v7764
        %v7766 = vrcp.pop %v7751
        %v7767 = vmul.f32 1.0, %v7766
        %v7768 = vmul.f32 %v7682, %v7753
        %v7769 = vmul.f32 %v7687, %v7755
        %v7770 = vmul.f32 %v7692, %v7757
        %v7771 = vmul.f32 %v7697, %v7759
        %v7772 = vmul.f32 %v7702, %v7761
        %v7773 = vmul.f32 %v7707, %v7763
        %v7774 = vmul.f32 %v7712, %v7765
        %v7775 = vmul.f32 %v7717, %v7767
        %v7776 = vld [vmem:[%s6] sm:$0xff]
        %v7777 = vld [vmem:[%s6 + $0x8] sm:$0xff]
        %v7778 = vld [vmem:[%s6 + $0x10] sm:$0xff]
        %v7779 = vld [vmem:[%s6 + $0x18] sm:$0xff]
        %v7780 = vld [vmem:[%s7] sm:$0x1]
        %v7782 = vlaneseq
        %v7783 = vshrl.u32 %v7782, 7
        %v7784 = vsub.s32 0, %v7783
        %v7785 = vrot.slane %v7780, %v7784
        %v7788 = vsel %vm3508, %v7768, 0
        %v7791 = vsel %vm3508, %v7769, 0
        %v7794 = vsel %vm3508, %v7770, 0
        %v7797 = vsel %vm3508, %v7771, 0
        %v7800 = vsel %vm3508, %v7772, 0
        %v7803 = vsel %vm3508, %v7773, 0
        %v7806 = vsel %vm3508, %v7774, 0
        %v7809 = vsel %vm3508, %v7775, 0
        %7811 = vmatprep.subr.mxu0 0.0
        %7812 = vmatpush1.msra.mxu0 %v7776
        %7813 = vmatprep.subr.mxu0 0.0
        %7814 = vmatpush1.msra.mxu0 %v7777
        %7815 = vmatprep.subr.mxu0 0.0
        %7816 = vmatpush1.msra.mxu0 %v7778
        %7817 = vmatprep.subr.mxu0 0.0
        %7818 = vmatpush1.msra.mxu0 %v7779
        %7819 = vmatprep.subr.mxu0 0.0
        %7820 = vmatpush1.msra.mxu0 0.0
        %7821 = vmatprep.subr.mxu0 0.0
        %7822 = vmatpush1.msra.mxu0 0.0
        %7823 = vmatprep.subr.mxu0 0.0
        %7824 = vmatpush1.msra.mxu0 0.0
        %7825 = vmatprep.subr.mxu0 0.0
        %7826 = vmatpush1.msra.mxu0 0.0
        %7827 = vmatprep.subr.mxu0 0.0
        %7828 = vmatpush1.msra.mxu0 0.0
        %7829 = vmatprep.subr.mxu0 0.0
        %7830 = vmatpush1.msra.mxu0 0.0
        %7831 = vmatprep.subr.mxu0 0.0
        %7832 = vmatpush1.msra.mxu0 0.0
        %7833 = vmatprep.subr.mxu0 0.0
        %7834 = vmatpush1.msra.mxu0 0.0
        %7835 = vmatprep.subr.mxu0 0.0
        %7836 = vmatpush1.msra.mxu0 0.0
        %7837 = vmatprep.subr.mxu0 0.0
        %7838 = vmatpush1.msra.mxu0 0.0
        %7839 = vmatprep.subr.mxu0 0.0
        %7840 = vmatpush1.msra.mxu0 0.0
        %7841 = vmatprep.subr.mxu0 0.0
        %7842 = vmatpush1.msra.mxu0 0.0
        %7843 = vmatprep.subr.mxu0 0.0
        %7844 = vmatpush1.msra.mxu0 0.0
        %7845 = vmatprep.subr.mxu0 0.0
        %7846 = vmatpush1.msra.mxu0 0.0
        %7847 = vmatprep.subr.mxu0 0.0
        %7848 = vmatpush1.msra.mxu0 0.0
        %7849 = vmatprep.subr.mxu0 0.0
        %7850 = vmatpush1.msra.mxu0 0.0
        %7851 = vmatprep.subr.mxu0 0.0
        %7852 = vmatpush1.msra.mxu0 0.0
        %7853 = vmatprep.subr.mxu0 0.0
        %7854 = vmatpush1.msra.mxu0 0.0
        %7855 = vmatprep.subr.mxu0 0.0
        %7856 = vmatpush1.msra.mxu0 0.0
        %7857 = vmatprep.subr.mxu0 0.0
        %7858 = vmatpush1.msra.mxu0 0.0
        %7859 = vmatprep.subr.mxu0 0.0
        %7860 = vmatpush1.msra.mxu0 0.0
        %7861 = vmatprep.subr.mxu0 0.0
        %7862 = vmatpush1.msra.mxu0 0.0
        %7863 = vmatprep.subr.mxu0 0.0
        %7864 = vmatpush1.msra.mxu0 0.0
        %7865 = vmatprep.subr.mxu0 0.0
        %7866 = vmatpush1.msra.mxu0 0.0
        %7867 = vmatprep.subr.mxu0 0.0
        %7868 = vmatpush1.msra.mxu0 0.0
        %7869 = vmatprep.subr.mxu0 0.0
        %7870 = vmatpush1.msra.mxu0 0.0
        %7871 = vmatprep.subr.mxu0 0.0
        %7872 = vmatpush1.msra.mxu0 0.0
        %7873 = vmatprep.subr.mxu0 0.0
        %7874 = vmatpush1.msra.mxu0 0.0
        %7875 = vmatprep.mubr.f32.mxu0 0.0
        %7876 = vmatmul.mubr.f32.gmra.mrb[0].mxu0 %v7788
        %v7877 = vpop.f32.mrb[0].mxu0
        %v7878 = vadd.f32 %v7785, %v7877
        %v7879 = vpop.f32.mrb[0].mxu0
        %7880 = vmatprep.mubr.f32.mxu0 0.0
        %7881 = vmatmul.mubr.f32.gmra.mrb[0].mxu0 %v7791
        %v7882 = vpop.f32.mrb[0].mxu0
        %v7883 = vadd.f32 %v7785, %v7882
        %v7884 = vpop.f32.mrb[0].mxu0
        %7885 = vmatprep.mubr.f32.mxu0 0.0
        %7886 = vmatmul.mubr.f32.gmra.mrb[0].mxu0 %v7794
        %v7887 = vpop.f32.mrb[0].mxu0
        %v7888 = vadd.f32 %v7785, %v7887
        %v7889 = vpop.f32.mrb[0].mxu0
        %7890 = vmatprep.mubr.f32.mxu0 0.0
        %7891 = vmatmul.mubr.f32.gmra.mrb[0].mxu0 %v7797
        %v7892 = vpop.f32.mrb[0].mxu0
        %v7893 = vadd.f32 %v7785, %v7892
        %v7894 = vpop.f32.mrb[0].mxu0
        %7895 = vmatprep.mubr.f32.mxu0 0.0
        %7896 = vmatmul.mubr.f32.gmra.mrb[0].mxu0 %v7800
        %v7897 = vpop.f32.mrb[0].mxu0
        %v7898 = vadd.f32 %v7785, %v7897
        %v7899 = vpop.f32.mrb[0].mxu0
        %7900 = vmatprep.mubr.f32.mxu0 0.0
        %7901 = vmatmul.mubr.f32.gmra.mrb[0].mxu0 %v7803
        %v7902 = vpop.f32.mrb[0].mxu0
        %v7903 = vadd.f32 %v7785, %v7902
        %v7904 = vpop.f32.mrb[0].mxu0
        %7905 = vmatprep.mubr.f32.mxu0 0.0
        %7906 = vmatmul.mubr.f32.gmra.mrb[0].mxu0 %v7806
        %v7907 = vpop.f32.mrb[0].mxu0
        %v7908 = vadd.f32 %v7785, %v7907
        %v7909 = vpop.f32.mrb[0].mxu0
        %7910 = vmatprep.mubr.f32.mxu0 0.0
        %7911 = vmatmul.mubr.f32.gmra.mrb[0].mxu0 %v7809
        %v7912 = vpop.f32.mrb[0].mxu0
        %v7913 = vadd.f32 %v7785, %v7912
        %v7914 = vpop.f32.mrb[0].mxu0
        %7915 = vdwg.mxu0
        %7916 = vst [vmem:[%s339] sm:$0xff] %v7878
        %7917 = vst [vmem:[%s339 + $0x8] sm:$0xff] %v7883
        %7918 = vst [vmem:[%s339 + $0x10] sm:$0xff] %v7888
        %7919 = vst [vmem:[%s339 + $0x18] sm:$0xff] %v7893
        %7920 = vst [vmem:[%s339 + $0x20] sm:$0xff] %v7898
        %7921 = vst [vmem:[%s339 + $0x28] sm:$0xff] %v7903
        %7922 = vst [vmem:[%s339 + $0x30] sm:$0xff] %v7908
        %7923 = vst [vmem:[%s339 + $0x38] sm:$0xff] %v7913
        %7932 = vst.msk [vmem:[%s339] sm:$0xff] %vm3508, %v7500
        %7933 = vst.msk [vmem:[%s339 + $0x8] sm:$0xff] %vm3508, %v7514
        %7934 = vst.msk [vmem:[%s339 + $0x10] sm:$0xff] %vm3508, %v7528
        %7935 = vst.msk [vmem:[%s339 + $0x18] sm:$0xff] %vm3508, %v7542
        %7936 = vst.msk [vmem:[%s339 + $0x20] sm:$0xff] %vm3508, %v7556
        %7937 = vst.msk [vmem:[%s339 + $0x28] sm:$0xff] %vm3508, %v7570
        %7938 = vst.msk [vmem:[%s339 + $0x30] sm:$0xff] %vm3508, %v7584
        %7939 = vst.msk [vmem:[%s339 + $0x38] sm:$0xff] %vm3508, %v7598
        %s7940 = sand.u32 %s226, 1
        %s7941 = scalar_lea.sflag [#allocation3], %s7940
        %s7942 = sand.u32 %s226, 1
        %s7943 = smul.addr %s7942, 64
        %s7944 = scalar_lea.vmem [#allocation2], %s7943
        // Predicated region
        $region53: #{tpu_custom_call.1} parent=51 // pred_check
          %p7945 = pneg %p236
        $region54: #{tpu_custom_call.1} parent=51 // pred_check_branch
          %7947 = sbr.rel (%p7945) target = $region56
        $region55: #{tpu_custom_call.1} parent=51 // pred_region
          %s7948 = sadd.s32 %s26, %s27
          %s7949 = smul.u32 8, %s7948
          %s7951 = ssub.s32 1024, 1024
          %7952 = vsyncadd %s7941, %s7951
          %s7953 = smul.addr %s7949, 128
          %s7954 = scalar_lea.hbm %s8, %s7953
          %s7955 = sshll.u32 %s7944, 4
          %s7956 = int_to_ptr.vmem [resolvable:$true] %s7955
          %7961 = dma.vmem_to_hbm [thread:$0]  %s7956, 1024, %s7954, %s7941, 128, 128, 8
        $region56: #{tpu_custom_call.1} parent=51 // pred_fallthru
          _
      $region52: #{tpu_custom_call.1} parent=5 // pred_fallthru
        _
      %p7962 = scmp.le.s32.totalorder 2, %s17
      // Predicated region
      $region57: #{tpu_custom_call.1} parent=5 // pred_check
        %p7963 = pneg %p7962
      $region58: #{tpu_custom_call.1} parent=5 // pred_check_branch
        %7965 = sbr.rel (%p7963) target = $region60
      $region59: #{tpu_custom_call.1} parent=5 // pred_region
        %s7966 = ssub.s32 %s17, 2
        // Predicated region
        $region61: #{tpu_custom_call.1} parent=59 // pred_check
          %p7967 = pneg %p242
        $region62: #{tpu_custom_call.1} parent=59 // pred_check_branch
          %7969 = sbr.rel (%p7967) target = $region64
        $region63: #{tpu_custom_call.1} parent=59 // pred_region
          %s7970 = sand.u32 %s227, 1
          %s7971 = scalar_lea.sflag [#allocation3], %s7970
          %s7972 = sand.u32 %s227, 1
          %s7973 = smul.addr %s7972, 64
          %s7974 = scalar_lea.vmem [#allocation2], %s7973
          %7975 = dma.done %s7971, 1024
        $region64: #{tpu_custom_call.1} parent=59 // pred_fallthru
          _
      $region60: #{tpu_custom_call.1} parent=5 // pred_fallthru
        _
    $region6: #{tpu_custom_call.1} parent=1 // loop_footer
      %s21 = sadd.s32 1, %s17
    $region7: #{tpu_custom_call.1} parent=1 // loop_footer_branch
      %16 = sbr.rel target = $region3
    $region8: #{tpu_custom_call.1} parent=1 // loop_exit
      _
    %7976 = vsyncpa [#allocation3], 1
    %s7977 = scalar_lea.sflag [#allocation3], 1
    %7978 = vsyncpa %s7977, 1

</llo_original>
